<compile_context>
chip_gen: v5e
topology: v5e:2x2
jax: 0.10.0
libtpu: 0.0.40
codegen_flags: <defaults>
</compile_context>

<pallas_src>
import functools

import jax
import jax.numpy as jnp
from jax.experimental import pallas as pl
from jax.experimental.pallas import tpu as pltpu


_LANE = 128  # TPU lane width; all section boundaries / outputs are lane aligned.


def _round_up(x, m):
    return (x + m - 1) // m * m


def _graph_conv_kernel(gui_hbm, ggi_hbm, ui0_ref, grp_ref,
                       ui_mean_ref, gi_mean_ref, g_mean_ref,
                       gui_vmem, ggi_vmem, dma_sem,
                       ui_hop_ref, mix_ref, gi_rhs_ref,
                       *, layers, nu_p, ng_p, ni_p, dp):
    """Fused GraphConvolution forward (grid=(), everything VMEM-resident).

    gui_hbm : (Nui_p, Nui_p) bf16 HBM  padded normalized user-item adjacency
    ggi_hbm : (Ngi_p, Ngi_p) bf16 HBM  padded normalized group-item adjacency
    ui0_ref : (Nui_p, Dp)    bf16      cat([user_emb, item_emb]) (128-aligned sections)
    grp_ref : (Ngi_p, Dp)    bf16      group_emb rows on top, zeros below
    ui_mean_ref : (Nui_p, Dp) f32  mean over UI hops  (rows [:num_user]       -> user out)
    gi_mean_ref : (Ngi_p, Dp) f32  mean over GI hops  (rows [ng_p:ng_p+Ni]    -> item out)
    g_mean_ref  : (Ngi_p, Dp) f32  g-path mean        (rows [:num_group]      -> group out)
    gui_vmem / ggi_vmem : single-buffered VMEM copies of the graphs
    ui_hop_ref  : (Nui_p, Dp) bf16       current UI hop (MXU operand)
    mix_ref     : (n_odd, Ngi_p, Dp) bf16 stashed RHS slabs for the odd g layers
    gi_rhs_ref  : (Ngi_p, 2*Dp) bf16     fused GI RHS: [GI hop | odd g-layer RHS]
    """
    f32 = jnp.float32
    bf16 = jnp.bfloat16
    inv = f32(1.0 / (layers + 1))
    n_odd = (layers + 1) // 2

    # Single-buffered graph loads; ggi's DMA hides behind the UI loop.
    gui_cp = pltpu.make_async_copy(gui_hbm, gui_vmem, dma_sem.at[0])
    ggi_cp = pltpu.make_async_copy(ggi_hbm, ggi_vmem, dma_sem.at[1])
    gui_cp.start()
    ggi_cp.start()

    # Hoisted loop-invariant init: group rows (and zero pad rows) of every odd
    # g-layer RHS slab written once; only item rows are stored per hop below.
    for s in range(n_odd):
        mix_ref[s] = grp_ref[...]

    ui_hop_ref[...] = ui0_ref[...]
    ui_mean_ref[...] = ui0_ref[...].astype(f32)

    gui_cp.wait()

    # ---- user-item propagation ----------------------------------------------------
    # TODO(synk): switch the unrolled hop loops to lax.fori_loop with ref carries if
    # `layers` ever grows beyond a handful.
    for j in range(layers):
        if j % 2 == 0:
            # Stash item rows of UI hop j: RHS for odd g layer j+1, consumed later
            # inside the GI loop's fused 256-wide MXU pass.
            mix_ref[j // 2, pl.ds(ng_p, ni_p), :] = ui_hop_ref[pl.ds(nu_p, ni_p), :]
        nxt = jnp.dot(gui_vmem[...], ui_hop_ref[...], preferred_element_type=f32)
        ui_mean_ref[...] += nxt
        ui_hop_ref[...] = nxt.astype(bf16)
    ui_mean_ref[...] = ui_mean_ref[...] * inv

    # ---- group-item propagation ---------------------------------------------------
    # GI hop 0 = cat([group_emb, item part of ui_mean]); staged in the f32 gi_mean
    # output ref (safe only because grid=() writes each output exactly once).
    gi_mean_ref[...] = grp_ref[...].astype(f32)
    gi_mean_ref[pl.ds(ng_p, ni_p), :] = ui_mean_ref[pl.ds(nu_p, ni_p), :]
    g_mean_ref[...] = gi_mean_ref[...]                       # g layer 0 (even)
    gi_rhs_ref[:, pl.ds(0, dp)] = gi_mean_ref[...].astype(bf16)

    ggi_cp.wait()

    # TODO(synk): the ggi[:, :group_cols] @ group_emb part of the odd g layers is
    # loop-invariant; split it out if num_group becomes a large fraction of Ngi.
    for t in range(1, layers + 1):
        if t % 2 == 1:
            # Fused 256-wide RHS: [GI hop t-1 | cat(group, UI-hop t-1 items)] in a
            # single MXU pass (fills the 256-lane MXU on v6e/v7x).
            gi_rhs_ref[:, pl.ds(dp, dp)] = mix_ref[(t - 1) // 2]
            both = jnp.dot(ggi_vmem[...], gi_rhs_ref[...],
                           preferred_element_type=f32)
            hop = both[:, :dp]
            gi_mean_ref[...] += hop
            g_mean_ref[...] += both[:, dp:]                  # g layer t (odd)
        else:
            hop = jnp.dot(ggi_vmem[...], gi_rhs_ref[:, pl.ds(0, dp)],
                          preferred_element_type=f32)
            gi_mean_ref[...] += hop
            g_mean_ref[...] += hop                           # g layer t (even) = GI hop t
        if t < layers:
            gi_rhs_ref[:, pl.ds(0, dp)] = hop.astype(bf16)

    gi_mean_ref[...] = gi_mean_ref[...] * inv
    g_mean_ref[...] = g_mean_ref[...] * inv


def prepare_graphs(user_item_graph, group_item_graph, num_user, num_group, num_item):
    """Pad + cast the dense normalized adjacencies once (outside the per-call path).

    Sections (user/group vs item) are placed at 128-aligned row/col offsets so every
    in-kernel section slice is lane/sublane-pack aligned.
    """
    nu_p = _round_up(num_user, _LANE)
    ng_p = _round_up(num_group, _LANE)
    ni_p = _round_up(num_item, _LANE)
    bf16 = jnp.bfloat16

    def pad(graph, n_a, na_p):
        n_p = na_p + ni_p
        g = jnp.zeros((n_p, n_p), bf16)
        g = g.at[:n_a, :n_a].set(graph[:n_a, :n_a].astype(bf16))
        g = g.at[:n_a, na_p:na_p + num_item].set(graph[:n_a, n_a:].astype(bf16))
        g = g.at[na_p:na_p + num_item, :n_a].set(graph[n_a:, :n_a].astype(bf16))
        g = g.at[na_p:na_p + num_item, na_p:na_p + num_item].set(
            graph[n_a:, n_a:].astype(bf16))
        return g

    return (pad(user_item_graph, num_user, nu_p),
            pad(group_item_graph, num_group, ng_p))


@functools.partial(jax.jit, static_argnames=("layers",))
def graph_convolution_forward(gui_padded, ggi_padded,
                              user_emb, group_emb, item_emb, layers):
    """JAX/Pallas port of GraphConvolution.forward -> (user_out, g_out, i_out)."""
    assert layers >= 1
    num_user, dim = user_emb.shape
    num_group = group_emb.shape[0]
    num_item = item_emb.shape[0]

    nu_p = _round_up(num_user, _LANE)
    ng_p = _round_up(num_group, _LANE)
    ni_p = _round_up(num_item, _LANE)
    dp = _round_up(dim, _LANE)
    nui_p = nu_p + ni_p
    ngi_p = ng_p + ni_p
    n_odd = (layers + 1) // 2
    assert gui_padded.shape == (nui_p, nui_p) and gui_padded.dtype == jnp.bfloat16
    assert ggi_padded.shape == (ngi_p, ngi_p) and ggi_padded.dtype == jnp.bfloat16

    bf16 = jnp.bfloat16
    ui0 = (jnp.zeros((nui_p, dp), bf16)
           .at[:num_user, :dim].set(user_emb.astype(bf16))
           .at[nu_p:nu_p + num_item, :dim].set(item_emb.astype(bf16)))
    grp = jnp.zeros((ngi_p, dp), bf16).at[:num_group, :dim].set(
        group_emb.astype(bf16))

    # VMEM budget from the actual working set: single-buffered graph scratch,
    # double-buffered small (N, Dp) inputs, single outputs + small scratch.
    graph_bytes = 2 * (nui_p * nui_p + ngi_p * ngi_p)           # bf16, single copy
    emb_in_bytes = 2 * 2 * (nui_p + ngi_p) * dp                 # bf16, double-buffered
    out_bytes = 4 * (nui_p + 2 * ngi_p) * dp                    # f32 outputs
    small_scratch = 2 * (nui_p * dp + n_odd * ngi_p * dp + 2 * ngi_p * dp)
    working = graph_bytes + emb_in_bytes + out_bytes + small_scratch
    vmem_limit = int(min(64 << 20, max(16 << 20, working + (2 << 20))))
    # TODO(synk): for production graphs that exceed VMEM, replace this fused kernel
    # with a row-tiled pipelined per-hop matmul (grid over output rows marked
    # "parallel" so v7x's second TensorCore is used, hop axis "arbitrary") over a
    # block-sparse scalar-prefetched adjacency instead of densifying.

    flops = (2 * layers * nui_p * nui_p * dp
             + 2 * ngi_p * ngi_p * (n_odd * 2 * dp + (layers - n_odd) * dp))
    bytes_accessed = graph_bytes + 2 * (nui_p + ngi_p) * dp + out_bytes
    cost = pl.CostEstimate(flops=flops, transcendentals=0,
                           bytes_accessed=bytes_accessed)

    kernel = functools.partial(_graph_conv_kernel, layers=layers,
                               nu_p=nu_p, ng_p=ng_p, ni_p=ni_p, dp=dp)
    ui_mean, gi_mean, g_mean = pl.pallas_call(
        kernel,
        out_shape=(jax.ShapeDtypeStruct((nui_p, dp), jnp.float32),
                   jax.ShapeDtypeStruct((ngi_p, dp), jnp.float32),
                   jax.ShapeDtypeStruct((ngi_p, dp), jnp.float32)),
        in_specs=[pl.BlockSpec(memory_space=pl.ANY),        # gui (HBM, manual DMA)
                  pl.BlockSpec(memory_space=pl.ANY),        # ggi (HBM, manual DMA)
                  pl.BlockSpec((nui_p, dp), lambda: (0, 0)),
                  pl.BlockSpec((ngi_p, dp), lambda: (0, 0))],
        out_specs=(pl.BlockSpec((nui_p, dp), lambda: (0, 0)),
                   pl.BlockSpec((ngi_p, dp), lambda: (0, 0)),
                   pl.BlockSpec((ngi_p, dp), lambda: (0, 0))),
        scratch_shapes=[pltpu.VMEM((nui_p, nui_p), bf16),        # gui, single copy
                        pltpu.VMEM((ngi_p, ngi_p), bf16),        # ggi, single copy
                        pltpu.SemaphoreType.DMA((2,)),
                        pltpu.VMEM((nui_p, dp), bf16),           # current UI hop
                        pltpu.VMEM((n_odd, ngi_p, dp), bf16),    # odd g-layer RHS slabs
                        pltpu.VMEM((ngi_p, 2 * dp), bf16)],      # fused GI RHS
        compiler_params=pltpu.CompilerParams(vmem_limit_bytes=vmem_limit),
        cost_estimate=cost,
    )(gui_padded, ggi_padded, ui0, grp)

    user_out = ui_mean[:num_user, :dim]
    g_out = g_mean[:num_group, :dim]
    i_out = gi_mean[ng_p:ng_p + num_item, :dim]
    return user_out, g_out, i_out


# ----------------------------- test utilities ---------------------------------------


def _build_normalized_bipartite(key, n_a, n_b):
    """Dense D^-1/2 [[0, R], [R^T, 0]] D^-1/2 bipartite adjacency (deterministic)."""
    r = (jax.random.uniform(key, (n_a, n_b)) > 0.5).astype(jnp.float32)
    n = n_a + n_b
    adj = jnp.zeros((n, n), jnp.float32)
    adj = adj.at[:n_a, n_a:].set(r)
    adj = adj.at[n_a:, :n_a].set(r.T)
    deg = adj.sum(axis=1)
    d_inv_sqrt = jnp.where(deg > 0, 1.0 / jnp.sqrt(deg), 0.0)
    return adj * d_inv_sqrt[:, None] * d_inv_sqrt[None, :]


def _reference_forward(user_item_graph, group_item_graph,
                       user_emb, group_emb, item_emb, layers, matmul_dtype):
    """Pure-JAX port of the PyTorch forward (dense graphs).

    matmul_dtype=float32  -> faithful f32 reference of the original module.
    matmul_dtype=bfloat16 -> mirrors the kernel's numerics (bf16 MXU operands,
                             f32 accumulation) for a tight comparison.
    """
    dt = matmul_dtype
    f32 = jnp.float32
    num_user, num_group = user_emb.shape[0], group_emb.shape[0]

    def mm(graph, x):
        return jnp.dot(graph.astype(dt), x.astype(dt),
                       preferred_element_type=f32,
                       precision=jax.lax.Precision.HIGHEST)

    user_emb = user_emb.astype(dt).astype(f32)
    group_emb = group_emb.astype(dt).astype(f32)
    item_emb = item_emb.astype(dt).astype(f32)

    ui_emb = jnp.concatenate([user_emb, item_emb], axis=0)
    embeddings_ui = [ui_emb]
    for _ in range(layers):
        ui_emb = mm(user_item_graph, ui_emb)
        embeddings_ui.append(ui_emb)
    user_layers = [e[:num_user] for e in embeddings_ui]
    item_layers_ui = [e[num_user:] for e in embeddings_ui]
    user_emb_for_user = jnp.mean(jnp.stack(user_layers, axis=1), axis=1)
    item_emb_for_user = jnp.mean(jnp.stack(item_layers_ui, axis=1), axis=1)

    gi_emb = jnp.concatenate([group_emb, item_emb_for_user], axis=0)
    embeddings_gi = [gi_emb]
    for _ in range(layers):
        gi_emb = mm(group_item_graph, gi_emb)
        embeddings_gi.append(gi_emb)
    group_layers = [e[:num_group] for e in embeddings_gi]
    item_layers_gi = [e[num_group:] for e in embeddings_gi]
    i_emb = jnp.mean(jnp.stack(item_layers_gi, axis=1), axis=1)

    g_layers = []
    for i in range(layers + 1):
        if i % 2 == 0:
            g_layers.append(group_layers[i])
        else:
            emb_in = jnp.concatenate([group_emb, item_layers_ui[i - 1]], axis=0)
            g_layers.append(mm(group_item_graph, emb_in)[:num_group])
    g_emb = jnp.mean(jnp.stack(g_layers, axis=1), axis=1)
    return user_emb_for_user, g_emb, i_emb


if __name__ == "__main__":
    num_user, num_group, num_item = 40, 24, 72
    dim, layers = 32, 3

    key = jax.random.PRNGKey(0)
    k_ui, k_gi, k_u, k_g, k_i = jax.random.split(key, 5)
    user_item_graph = _build_normalized_bipartite(k_ui, num_user, num_item)
    group_item_graph = _build_normalized_bipartite(k_gi, num_group, num_item)
    user_emb = jax.random.normal(k_u, (num_user, dim), dtype=jnp.float32)
    group_emb = jax.random.normal(k_g, (num_group, dim), dtype=jnp.float32)
    item_emb = jax.random.normal(k_i, (num_item, dim), dtype=jnp.float32)

    # One-time graph pad/cast (the graphs are constructor state in the module).
    gui_p, ggi_p = prepare_graphs(user_item_graph, group_item_graph,
                                  num_user, num_group, num_item)

    user_out, g_out, i_out = jax.block_until_ready(
        graph_convolution_forward(gui_p, ggi_p, user_emb, group_emb, item_emb,
                                  layers=layers))

    assert user_out.shape == (num_user, dim)
    assert g_out.shape == (num_group, dim)
    assert i_out.shape == (num_item, dim)

    # Tight check vs a reference that mirrors the kernel's bf16-operand / f32-acc
    # numerics.
    ref_bf = _reference_forward(user_item_graph, group_item_graph,
                                user_emb, group_emb, item_emb, layers,
                                matmul_dtype=jnp.bfloat16)
    for got, ref in zip((user_out, g_out, i_out), ref_bf):
        assert jnp.allclose(got, ref, atol=1e-3, rtol=1e-3), \
            float(jnp.max(jnp.abs(got - ref)))

    # Loose check vs the full-f32 semantics of the original module (only difference
    # is the documented bf16 quantization of graphs / embeddings).
    ref_f32 = _reference_forward(user_item_graph, group_item_graph,
                                 user_emb, group_emb, item_emb, layers,
                                 matmul_dtype=jnp.float32)
    for got, ref in zip((user_out, g_out, i_out), ref_f32):
        assert jnp.allclose(got, ref, atol=3e-2, rtol=3e-2), \
            float(jnp.max(jnp.abs(got - ref)))

    print("KERNEL_OK")
</pallas_src>

<mosaic_0001>
module attributes {stable_mosaic.version = 11 : i64} {
  func.func @_graph_conv_kernel(%arg0: memref<256x256xbf16, #tpu.memory_space<any>>, %arg1: memref<256x256xbf16, #tpu.memory_space<any>>, %arg2: memref<256x128xbf16, #tpu.memory_space<vmem>>, %arg3: memref<256x128xbf16, #tpu.memory_space<vmem>>, %arg4: memref<256x128xf32, #tpu.memory_space<vmem>>, %arg5: memref<256x128xf32, #tpu.memory_space<vmem>>, %arg6: memref<256x128xf32, #tpu.memory_space<vmem>>, %arg7: memref<256x256xbf16, #tpu.memory_space<vmem>>, %arg8: memref<256x256xbf16, #tpu.memory_space<vmem>>, %arg9: memref<2x!tpu.dma_semaphore, #tpu.memory_space<semaphore_mem>>, %arg10: memref<256x128xbf16, #tpu.memory_space<vmem>>, %arg11: memref<2x256x128xbf16, #tpu.memory_space<vmem>>, %arg12: memref<256x256xbf16, #tpu.memory_space<vmem>>) attributes {dimension_semantics = [], scalar_prefetch = 0 : i64, scratch_operands = 6 : i64, tpu.core_type = #tpu.core_type<tc>} {
    %c0_i32 = arith.constant 0 : i32
    %0 = tpu.memref_slice %arg9[%c0_i32] : memref<2x!tpu.dma_semaphore, #tpu.memory_space<semaphore_mem>> -> memref<1x!tpu.dma_semaphore, #tpu.memory_space<semaphore_mem>>
    %1 = tpu.memref_squeeze %0 : memref<1x!tpu.dma_semaphore, #tpu.memory_space<semaphore_mem>> -> memref<!tpu.dma_semaphore, #tpu.memory_space<semaphore_mem>>
    tpu.enqueue_dma source(%arg0 : memref<256x256xbf16, #tpu.memory_space<any>>) target(%arg7 : memref<256x256xbf16, #tpu.memory_space<vmem>>) target_semaphore(%1 : memref<!tpu.dma_semaphore, #tpu.memory_space<semaphore_mem>>)
    %c1_i32 = arith.constant 1 : i32
    %2 = tpu.memref_slice %arg9[%c1_i32] : memref<2x!tpu.dma_semaphore, #tpu.memory_space<semaphore_mem>> -> memref<1x!tpu.dma_semaphore, #tpu.memory_space<semaphore_mem>>
    %3 = tpu.memref_squeeze %2 : memref<1x!tpu.dma_semaphore, #tpu.memory_space<semaphore_mem>> -> memref<!tpu.dma_semaphore, #tpu.memory_space<semaphore_mem>>
    tpu.enqueue_dma source(%arg1 : memref<256x256xbf16, #tpu.memory_space<any>>) target(%arg8 : memref<256x256xbf16, #tpu.memory_space<vmem>>) target_semaphore(%3 : memref<!tpu.dma_semaphore, #tpu.memory_space<semaphore_mem>>)
    %c0 = arith.constant 0 : index
    %c0_0 = arith.constant 0 : index
    %4 = vector.load %arg3[%c0, %c0_0] : memref<256x128xbf16, #tpu.memory_space<vmem>>, vector<256x128xbf16>
    %c0_1 = arith.constant 0 : index
    %c0_2 = arith.constant 0 : index
    %c0_3 = arith.constant 0 : index
    %5 = vector.load %arg11[%c0_1, %c0_2, %c0_3] : memref<2x256x128xbf16, #tpu.memory_space<vmem>>, vector<1x256x128xbf16>
    %6 = vector.shape_cast %5 : vector<1x256x128xbf16> to vector<256x128xbf16>
    %7 = vector.shape_cast %4 : vector<256x128xbf16> to vector<1x256x128xbf16>
    tpu.vector_store %arg11[%c0_1, %c0_2, %c0_3], %7 {strides = array<i32>} : memref<2x256x128xbf16, #tpu.memory_space<vmem>>, vector<1x256x128xbf16>,
    %c0_4 = arith.constant 0 : index
    %c0_5 = arith.constant 0 : index
    %8 = vector.load %arg3[%c0_4, %c0_5] : memref<256x128xbf16, #tpu.memory_space<vmem>>, vector<256x128xbf16>
    %c1 = arith.constant 1 : index
    %c0_6 = arith.constant 0 : index
    %c0_7 = arith.constant 0 : index
    %9 = vector.load %arg11[%c1, %c0_6, %c0_7] : memref<2x256x128xbf16, #tpu.memory_space<vmem>>, vector<1x256x128xbf16>
    %10 = vector.shape_cast %9 : vector<1x256x128xbf16> to vector<256x128xbf16>
    %11 = vector.shape_cast %8 : vector<256x128xbf16> to vector<1x256x128xbf16>
    tpu.vector_store %arg11[%c1, %c0_6, %c0_7], %11 {strides = array<i32>} : memref<2x256x128xbf16, #tpu.memory_space<vmem>>, vector<1x256x128xbf16>,
    %c0_8 = arith.constant 0 : index
    %c0_9 = arith.constant 0 : index
    %12 = vector.load %arg2[%c0_8, %c0_9] : memref<256x128xbf16, #tpu.memory_space<vmem>>, vector<256x128xbf16>
    %c0_10 = arith.constant 0 : index
    %c0_11 = arith.constant 0 : index
    %13 = vector.load %arg10[%c0_10, %c0_11] : memref<256x128xbf16, #tpu.memory_space<vmem>>, vector<256x128xbf16>
    tpu.vector_store %arg10[%c0_10, %c0_11], %12 {strides = array<i32>} : memref<256x128xbf16, #tpu.memory_space<vmem>>, vector<256x128xbf16>,
    %c0_12 = arith.constant 0 : index
    %c0_13 = arith.constant 0 : index
    %14 = vector.load %arg2[%c0_12, %c0_13] : memref<256x128xbf16, #tpu.memory_space<vmem>>, vector<256x128xbf16>
    %15 = arith.extf %14 : vector<256x128xbf16> to vector<256x128xf32>
    %c0_14 = arith.constant 0 : index
    %c0_15 = arith.constant 0 : index
    %16 = vector.load %arg4[%c0_14, %c0_15] : memref<256x128xf32, #tpu.memory_space<vmem>>, vector<256x128xf32>
    tpu.vector_store %arg4[%c0_14, %c0_15], %15 {strides = array<i32>} : memref<256x128xf32, #tpu.memory_space<vmem>>, vector<256x128xf32>,
    %c0_i32_16 = arith.constant 0 : i32
    %17 = tpu.memref_slice %arg9[%c0_i32_16] : memref<2x!tpu.dma_semaphore, #tpu.memory_space<semaphore_mem>> -> memref<1x!tpu.dma_semaphore, #tpu.memory_space<semaphore_mem>>
    %18 = tpu.memref_squeeze %17 : memref<1x!tpu.dma_semaphore, #tpu.memory_space<semaphore_mem>> -> memref<!tpu.dma_semaphore, #tpu.memory_space<semaphore_mem>>
    tpu.wait_dma2 semaphore(%18 : memref<!tpu.dma_semaphore, #tpu.memory_space<semaphore_mem>>) src(%arg0 : memref<256x256xbf16, #tpu.memory_space<any>>) dst(%arg7 : memref<256x256xbf16, #tpu.memory_space<vmem>>)
    %c128 = arith.constant 128 : index
    %c0_17 = arith.constant 0 : index
    %19 = vector.load %arg10[%c128, %c0_17] : memref<256x128xbf16, #tpu.memory_space<vmem>>, vector<128x128xbf16>
    %c0_18 = arith.constant 0 : index
    %c128_19 = arith.constant 128 : index
    %c0_20 = arith.constant 0 : index
    %20 = vector.load %arg11[%c0_18, %c128_19, %c0_20] : memref<2x256x128xbf16, #tpu.memory_space<vmem>>, vector<1x128x128xbf16>
    %21 = vector.shape_cast %20 : vector<1x128x128xbf16> to vector<128x128xbf16>
    %22 = vector.shape_cast %19 : vector<128x128xbf16> to vector<1x128x128xbf16>
    tpu.vector_store %arg11[%c0_18, %c128_19, %c0_20], %22 {strides = array<i32>} : memref<2x256x128xbf16, #tpu.memory_space<vmem>>, vector<1x128x128xbf16>,
    %c0_21 = arith.constant 0 : index
    %c0_22 = arith.constant 0 : index
    %23 = vector.load %arg7[%c0_21, %c0_22] : memref<256x256xbf16, #tpu.memory_space<vmem>>, vector<256x256xbf16>
    %c0_23 = arith.constant 0 : index
    %c0_24 = arith.constant 0 : index
    %24 = vector.load %arg10[%c0_23, %c0_24] : memref<256x128xbf16, #tpu.memory_space<vmem>>, vector<256x128xbf16>
    %cst = arith.constant dense<0.000000e+00> : vector<256x128xf32>
    %25 = tpu.matmul %23, %24, %cst {dimension_numbers = #tpu.dot_dimension_numbers<[1], [0], [0], [1], [0, 0, 1, 1], [], []>} : vector<256x256xbf16>, vector<256x128xbf16>, vector<256x128xf32> -> vector<256x128xf32>
    %c0_25 = arith.constant 0 : index
    %c0_26 = arith.constant 0 : index
    %26 = vector.load %arg4[%c0_25, %c0_26] : memref<256x128xf32, #tpu.memory_space<vmem>>, vector<256x128xf32>
    %27 = arith.addf %26, %25 : vector<256x128xf32>
    %c0_27 = arith.constant 0 : index
    %c0_28 = arith.constant 0 : index
    %28 = vector.load %arg4[%c0_27, %c0_28] : memref<256x128xf32, #tpu.memory_space<vmem>>, vector<256x128xf32>
    tpu.vector_store %arg4[%c0_27, %c0_28], %27 {strides = array<i32>} : memref<256x128xf32, #tpu.memory_space<vmem>>, vector<256x128xf32>,
    %29 = arith.truncf %25 : vector<256x128xf32> to vector<256x128xbf16>
    %c0_29 = arith.constant 0 : index
    %c0_30 = arith.constant 0 : index
    %30 = vector.load %arg10[%c0_29, %c0_30] : memref<256x128xbf16, #tpu.memory_space<vmem>>, vector<256x128xbf16>
    tpu.vector_store %arg10[%c0_29, %c0_30], %29 {strides = array<i32>} : memref<256x128xbf16, #tpu.memory_space<vmem>>, vector<256x128xbf16>,
    %c0_31 = arith.constant 0 : index
    %c0_32 = arith.constant 0 : index
    %31 = vector.load %arg7[%c0_31, %c0_32] : memref<256x256xbf16, #tpu.memory_space<vmem>>, vector<256x256xbf16>
    %c0_33 = arith.constant 0 : index
    %c0_34 = arith.constant 0 : index
    %32 = vector.load %arg10[%c0_33, %c0_34] : memref<256x128xbf16, #tpu.memory_space<vmem>>, vector<256x128xbf16>
    %cst_35 = arith.constant dense<0.000000e+00> : vector<256x128xf32>
    %33 = tpu.matmul %31, %32, %cst_35 {dimension_numbers = #tpu.dot_dimension_numbers<[1], [0], [0], [1], [0, 0, 1, 1], [], []>} : vector<256x256xbf16>, vector<256x128xbf16>, vector<256x128xf32> -> vector<256x128xf32>
    %c0_36 = arith.constant 0 : index
    %c0_37 = arith.constant 0 : index
    %34 = vector.load %arg4[%c0_36, %c0_37] : memref<256x128xf32, #tpu.memory_space<vmem>>, vector<256x128xf32>
    %35 = arith.addf %34, %33 : vector<256x128xf32>
    %c0_38 = arith.constant 0 : index
    %c0_39 = arith.constant 0 : index
    %36 = vector.load %arg4[%c0_38, %c0_39] : memref<256x128xf32, #tpu.memory_space<vmem>>, vector<256x128xf32>
    tpu.vector_store %arg4[%c0_38, %c0_39], %35 {strides = array<i32>} : memref<256x128xf32, #tpu.memory_space<vmem>>, vector<256x128xf32>,
    %37 = arith.truncf %33 : vector<256x128xf32> to vector<256x128xbf16>
    %c0_40 = arith.constant 0 : index
    %c0_41 = arith.constant 0 : index
    %38 = vector.load %arg10[%c0_40, %c0_41] : memref<256x128xbf16, #tpu.memory_space<vmem>>, vector<256x128xbf16>
    tpu.vector_store %arg10[%c0_40, %c0_41], %37 {strides = array<i32>} : memref<256x128xbf16, #tpu.memory_space<vmem>>, vector<256x128xbf16>,
    %c128_42 = arith.constant 128 : index
    %c0_43 = arith.constant 0 : index
    %39 = vector.load %arg10[%c128_42, %c0_43] : memref<256x128xbf16, #tpu.memory_space<vmem>>, vector<128x128xbf16>
    %c1_44 = arith.constant 1 : index
    %c128_45 = arith.constant 128 : index
    %c0_46 = arith.constant 0 : index
    %40 = vector.load %arg11[%c1_44, %c128_45, %c0_46] : memref<2x256x128xbf16, #tpu.memory_space<vmem>>, vector<1x128x128xbf16>
    %41 = vector.shape_cast %40 : vector<1x128x128xbf16> to vector<128x128xbf16>
    %42 = vector.shape_cast %39 : vector<128x128xbf16> to vector<1x128x128xbf16>
    tpu.vector_store %arg11[%c1_44, %c128_45, %c0_46], %42 {strides = array<i32>} : memref<2x256x128xbf16, #tpu.memory_space<vmem>>, vector<1x128x128xbf16>,
    %c0_47 = arith.constant 0 : index
    %c0_48 = arith.constant 0 : index
    %43 = vector.load %arg7[%c0_47, %c0_48] : memref<256x256xbf16, #tpu.memory_space<vmem>>, vector<256x256xbf16>
    %c0_49 = arith.constant 0 : index
    %c0_50 = arith.constant 0 : index
    %44 = vector.load %arg10[%c0_49, %c0_50] : memref<256x128xbf16, #tpu.memory_space<vmem>>, vector<256x128xbf16>
    %cst_51 = arith.constant dense<0.000000e+00> : vector<256x128xf32>
    %45 = tpu.matmul %43, %44, %cst_51 {dimension_numbers = #tpu.dot_dimension_numbers<[1], [0], [0], [1], [0, 0, 1, 1], [], []>} : vector<256x256xbf16>, vector<256x128xbf16>, vector<256x128xf32> -> vector<256x128xf32>
    %c0_52 = arith.constant 0 : index
    %c0_53 = arith.constant 0 : index
    %46 = vector.load %arg4[%c0_52, %c0_53] : memref<256x128xf32, #tpu.memory_space<vmem>>, vector<256x128xf32>
    %47 = arith.addf %46, %45 : vector<256x128xf32>
    %c0_54 = arith.constant 0 : index
    %c0_55 = arith.constant 0 : index
    %48 = vector.load %arg4[%c0_54, %c0_55] : memref<256x128xf32, #tpu.memory_space<vmem>>, vector<256x128xf32>
    tpu.vector_store %arg4[%c0_54, %c0_55], %47 {strides = array<i32>} : memref<256x128xf32, #tpu.memory_space<vmem>>, vector<256x128xf32>,
    %49 = arith.truncf %45 : vector<256x128xf32> to vector<256x128xbf16>
    %c0_56 = arith.constant 0 : index
    %c0_57 = arith.constant 0 : index
    %50 = vector.load %arg10[%c0_56, %c0_57] : memref<256x128xbf16, #tpu.memory_space<vmem>>, vector<256x128xbf16>
    tpu.vector_store %arg10[%c0_56, %c0_57], %49 {strides = array<i32>} : memref<256x128xbf16, #tpu.memory_space<vmem>>, vector<256x128xbf16>,
    %c0_58 = arith.constant 0 : index
    %c0_59 = arith.constant 0 : index
    %51 = vector.load %arg4[%c0_58, %c0_59] : memref<256x128xf32, #tpu.memory_space<vmem>>, vector<256x128xf32>
    %cst_60 = arith.constant 2.500000e-01 : f32
    %52 = vector.broadcast %cst_60 : f32 to vector<256x128xf32>
    %53 = arith.mulf %51, %52 : vector<256x128xf32>
    %c0_61 = arith.constant 0 : index
    %c0_62 = arith.constant 0 : index
    %54 = vector.load %arg4[%c0_61, %c0_62] : memref<256x128xf32, #tpu.memory_space<vmem>>, vector<256x128xf32>
    tpu.vector_store %arg4[%c0_61, %c0_62], %53 {strides = array<i32>} : memref<256x128xf32, #tpu.memory_space<vmem>>, vector<256x128xf32>,
    %c0_63 = arith.constant 0 : index
    %c0_64 = arith.constant 0 : index
    %55 = vector.load %arg3[%c0_63, %c0_64] : memref<256x128xbf16, #tpu.memory_space<vmem>>, vector<256x128xbf16>
    %56 = arith.extf %55 : vector<256x128xbf16> to vector<256x128xf32>
    %c0_65 = arith.constant 0 : index
    %c0_66 = arith.constant 0 : index
    %57 = vector.load %arg5[%c0_65, %c0_66] : memref<256x128xf32, #tpu.memory_space<vmem>>, vector<256x128xf32>
    tpu.vector_store %arg5[%c0_65, %c0_66], %56 {strides = array<i32>} : memref<256x128xf32, #tpu.memory_space<vmem>>, vector<256x128xf32>,
    %c128_67 = arith.constant 128 : index
    %c0_68 = arith.constant 0 : index
    %58 = vector.load %arg4[%c128_67, %c0_68] : memref<256x128xf32, #tpu.memory_space<vmem>>, vector<128x128xf32>
    %c128_69 = arith.constant 128 : index
    %c0_70 = arith.constant 0 : index
    %59 = vector.load %arg5[%c128_69, %c0_70] : memref<256x128xf32, #tpu.memory_space<vmem>>, vector<128x128xf32>
    tpu.vector_store %arg5[%c128_69, %c0_70], %58 {strides = array<i32>} : memref<256x128xf32, #tpu.memory_space<vmem>>, vector<128x128xf32>,
    %c0_71 = arith.constant 0 : index
    %c0_72 = arith.constant 0 : index
    %60 = vector.load %arg5[%c0_71, %c0_72] : memref<256x128xf32, #tpu.memory_space<vmem>>, vector<256x128xf32>
    %c0_73 = arith.constant 0 : index
    %c0_74 = arith.constant 0 : index
    %61 = vector.load %arg6[%c0_73, %c0_74] : memref<256x128xf32, #tpu.memory_space<vmem>>, vector<256x128xf32>
    tpu.vector_store %arg6[%c0_73, %c0_74], %60 {strides = array<i32>} : memref<256x128xf32, #tpu.memory_space<vmem>>, vector<256x128xf32>,
    %c0_75 = arith.constant 0 : index
    %c0_76 = arith.constant 0 : index
    %62 = vector.load %arg5[%c0_75, %c0_76] : memref<256x128xf32, #tpu.memory_space<vmem>>, vector<256x128xf32>
    %63 = arith.truncf %62 : vector<256x128xf32> to vector<256x128xbf16>
    %c0_77 = arith.constant 0 : index
    %c0_78 = arith.constant 0 : index
    %64 = vector.load %arg12[%c0_77, %c0_78] : memref<256x256xbf16, #tpu.memory_space<vmem>>, vector<256x128xbf16>
    tpu.vector_store %arg12[%c0_77, %c0_78], %63 {strides = array<i32>} : memref<256x256xbf16, #tpu.memory_space<vmem>>, vector<256x128xbf16>,
    %c1_i32_79 = arith.constant 1 : i32
    %65 = tpu.memref_slice %arg9[%c1_i32_79] : memref<2x!tpu.dma_semaphore, #tpu.memory_space<semaphore_mem>> -> memref<1x!tpu.dma_semaphore, #tpu.memory_space<semaphore_mem>>
    %66 = tpu.memref_squeeze %65 : memref<1x!tpu.dma_semaphore, #tpu.memory_space<semaphore_mem>> -> memref<!tpu.dma_semaphore, #tpu.memory_space<semaphore_mem>>
    tpu.wait_dma2 semaphore(%66 : memref<!tpu.dma_semaphore, #tpu.memory_space<semaphore_mem>>) src(%arg1 : memref<256x256xbf16, #tpu.memory_space<any>>) dst(%arg8 : memref<256x256xbf16, #tpu.memory_space<vmem>>)
    %c0_80 = arith.constant 0 : index
    %c0_81 = arith.constant 0 : index
    %c0_82 = arith.constant 0 : index
    %67 = vector.load %arg11[%c0_80, %c0_81, %c0_82] : memref<2x256x128xbf16, #tpu.memory_space<vmem>>, vector<1x256x128xbf16>
    %68 = vector.shape_cast %67 : vector<1x256x128xbf16> to vector<256x128xbf16>
    %c0_83 = arith.constant 0 : index
    %c128_84 = arith.constant 128 : index
    %69 = vector.load %arg12[%c0_83, %c128_84] : memref<256x256xbf16, #tpu.memory_space<vmem>>, vector<256x128xbf16>
    tpu.vector_store %arg12[%c0_83, %c128_84], %68 {strides = array<i32>} : memref<256x256xbf16, #tpu.memory_space<vmem>>, vector<256x128xbf16>,
    %c0_85 = arith.constant 0 : index
    %c0_86 = arith.constant 0 : index
    %70 = vector.load %arg8[%c0_85, %c0_86] : memref<256x256xbf16, #tpu.memory_space<vmem>>, vector<256x256xbf16>
    %c0_87 = arith.constant 0 : index
    %c0_88 = arith.constant 0 : index
    %71 = vector.load %arg12[%c0_87, %c0_88] : memref<256x256xbf16, #tpu.memory_space<vmem>>, vector<256x256xbf16>
    %cst_89 = arith.constant dense<0.000000e+00> : vector<256x256xf32>
    %72 = tpu.matmul %70, %71, %cst_89 {dimension_numbers = #tpu.dot_dimension_numbers<[1], [0], [0], [1], [0, 0, 1, 1], [], []>} : vector<256x256xbf16>, vector<256x256xbf16>, vector<256x256xf32> -> vector<256x256xf32>
    %73 = vector.extract_strided_slice %72 {offsets = [0, 0], sizes = [256, 128], strides = [1, 1]} : vector<256x256xf32> to vector<256x128xf32>
    %c0_90 = arith.constant 0 : index
    %c0_91 = arith.constant 0 : index
    %74 = vector.load %arg5[%c0_90, %c0_91] : memref<256x128xf32, #tpu.memory_space<vmem>>, vector<256x128xf32>
    %75 = arith.addf %74, %73 : vector<256x128xf32>
    %c0_92 = arith.constant 0 : index
    %c0_93 = arith.constant 0 : index
    %76 = vector.load %arg5[%c0_92, %c0_93] : memref<256x128xf32, #tpu.memory_space<vmem>>, vector<256x128xf32>
    tpu.vector_store %arg5[%c0_92, %c0_93], %75 {strides = array<i32>} : memref<256x128xf32, #tpu.memory_space<vmem>>, vector<256x128xf32>,
    %c0_94 = arith.constant 0 : index
    %c0_95 = arith.constant 0 : index
    %77 = vector.load %arg6[%c0_94, %c0_95] : memref<256x128xf32, #tpu.memory_space<vmem>>, vector<256x128xf32>
    %78 = vector.extract_strided_slice %72 {offsets = [0, 128], sizes = [256, 128], strides = [1, 1]} : vector<256x256xf32> to vector<256x128xf32>
    %79 = arith.addf %77, %78 : vector<256x128xf32>
    %c0_96 = arith.constant 0 : index
    %c0_97 = arith.constant 0 : index
    %80 = vector.load %arg6[%c0_96, %c0_97] : memref<256x128xf32, #tpu.memory_space<vmem>>, vector<256x128xf32>
    tpu.vector_store %arg6[%c0_96, %c0_97], %79 {strides = array<i32>} : memref<256x128xf32, #tpu.memory_space<vmem>>, vector<256x128xf32>,
    %81 = arith.truncf %73 : vector<256x128xf32> to vector<256x128xbf16>
    %c0_98 = arith.constant 0 : index
    %c0_99 = arith.constant 0 : index
    %82 = vector.load %arg12[%c0_98, %c0_99] : memref<256x256xbf16, #tpu.memory_space<vmem>>, vector<256x128xbf16>
    tpu.vector_store %arg12[%c0_98, %c0_99], %81 {strides = array<i32>} : memref<256x256xbf16, #tpu.memory_space<vmem>>, vector<256x128xbf16>,
    %c0_100 = arith.constant 0 : index
    %c0_101 = arith.constant 0 : index
    %83 = vector.load %arg8[%c0_100, %c0_101] : memref<256x256xbf16, #tpu.memory_space<vmem>>, vector<256x256xbf16>
    %c0_102 = arith.constant 0 : index
    %c0_103 = arith.constant 0 : index
    %84 = vector.load %arg12[%c0_102, %c0_103] : memref<256x256xbf16, #tpu.memory_space<vmem>>, vector<256x128xbf16>
    %cst_104 = arith.constant dense<0.000000e+00> : vector<256x128xf32>
    %85 = tpu.matmul %83, %84, %cst_104 {dimension_numbers = #tpu.dot_dimension_numbers<[1], [0], [0], [1], [0, 0, 1, 1], [], []>} : vector<256x256xbf16>, vector<256x128xbf16>, vector<256x128xf32> -> vector<256x128xf32>
    %c0_105 = arith.constant 0 : index
    %c0_106 = arith.constant 0 : index
    %86 = vector.load %arg5[%c0_105, %c0_106] : memref<256x128xf32, #tpu.memory_space<vmem>>, vector<256x128xf32>
    %87 = arith.addf %86, %85 : vector<256x128xf32>
    %c0_107 = arith.constant 0 : index
    %c0_108 = arith.constant 0 : index
    %88 = vector.load %arg5[%c0_107, %c0_108] : memref<256x128xf32, #tpu.memory_space<vmem>>, vector<256x128xf32>
    tpu.vector_store %arg5[%c0_107, %c0_108], %87 {strides = array<i32>} : memref<256x128xf32, #tpu.memory_space<vmem>>, vector<256x128xf32>,
    %c0_109 = arith.constant 0 : index
    %c0_110 = arith.constant 0 : index
    %89 = vector.load %arg6[%c0_109, %c0_110] : memref<256x128xf32, #tpu.memory_space<vmem>>, vector<256x128xf32>
    %90 = arith.addf %89, %85 : vector<256x128xf32>
    %c0_111 = arith.constant 0 : index
    %c0_112 = arith.constant 0 : index
    %91 = vector.load %arg6[%c0_111, %c0_112] : memref<256x128xf32, #tpu.memory_space<vmem>>, vector<256x128xf32>
    tpu.vector_store %arg6[%c0_111, %c0_112], %90 {strides = array<i32>} : memref<256x128xf32, #tpu.memory_space<vmem>>, vector<256x128xf32>,
    %92 = arith.truncf %85 : vector<256x128xf32> to vector<256x128xbf16>
    %c0_113 = arith.constant 0 : index
    %c0_114 = arith.constant 0 : index
    %93 = vector.load %arg12[%c0_113, %c0_114] : memref<256x256xbf16, #tpu.memory_space<vmem>>, vector<256x128xbf16>
    tpu.vector_store %arg12[%c0_113, %c0_114], %92 {strides = array<i32>} : memref<256x256xbf16, #tpu.memory_space<vmem>>, vector<256x128xbf16>,
    %c1_115 = arith.constant 1 : index
    %c0_116 = arith.constant 0 : index
    %c0_117 = arith.constant 0 : index
    %94 = vector.load %arg11[%c1_115, %c0_116, %c0_117] : memref<2x256x128xbf16, #tpu.memory_space<vmem>>, vector<1x256x128xbf16>
    %95 = vector.shape_cast %94 : vector<1x256x128xbf16> to vector<256x128xbf16>
    %c0_118 = arith.constant 0 : index
    %c128_119 = arith.constant 128 : index
    %96 = vector.load %arg12[%c0_118, %c128_119] : memref<256x256xbf16, #tpu.memory_space<vmem>>, vector<256x128xbf16>
    tpu.vector_store %arg12[%c0_118, %c128_119], %95 {strides = array<i32>} : memref<256x256xbf16, #tpu.memory_space<vmem>>, vector<256x128xbf16>,
    %c0_120 = arith.constant 0 : index
    %c0_121 = arith.constant 0 : index
    %97 = vector.load %arg8[%c0_120, %c0_121] : memref<256x256xbf16, #tpu.memory_space<vmem>>, vector<256x256xbf16>
    %c0_122 = arith.constant 0 : index
    %c0_123 = arith.constant 0 : index
    %98 = vector.load %arg12[%c0_122, %c0_123] : memref<256x256xbf16, #tpu.memory_space<vmem>>, vector<256x256xbf16>
    %cst_124 = arith.constant dense<0.000000e+00> : vector<256x256xf32>
    %99 = tpu.matmul %97, %98, %cst_124 {dimension_numbers = #tpu.dot_dimension_numbers<[1], [0], [0], [1], [0, 0, 1, 1], [], []>} : vector<256x256xbf16>, vector<256x256xbf16>, vector<256x256xf32> -> vector<256x256xf32>
    %100 = vector.extract_strided_slice %99 {offsets = [0, 0], sizes = [256, 128], strides = [1, 1]} : vector<256x256xf32> to vector<256x128xf32>
    %c0_125 = arith.constant 0 : index
    %c0_126 = arith.constant 0 : index
    %101 = vector.load %arg5[%c0_125, %c0_126] : memref<256x128xf32, #tpu.memory_space<vmem>>, vector<256x128xf32>
    %102 = arith.addf %101, %100 : vector<256x128xf32>
    %c0_127 = arith.constant 0 : index
    %c0_128 = arith.constant 0 : index
    %103 = vector.load %arg5[%c0_127, %c0_128] : memref<256x128xf32, #tpu.memory_space<vmem>>, vector<256x128xf32>
    tpu.vector_store %arg5[%c0_127, %c0_128], %102 {strides = array<i32>} : memref<256x128xf32, #tpu.memory_space<vmem>>, vector<256x128xf32>,
    %c0_129 = arith.constant 0 : index
    %c0_130 = arith.constant 0 : index
    %104 = vector.load %arg6[%c0_129, %c0_130] : memref<256x128xf32, #tpu.memory_space<vmem>>, vector<256x128xf32>
    %105 = vector.extract_strided_slice %99 {offsets = [0, 128], sizes = [256, 128], strides = [1, 1]} : vector<256x256xf32> to vector<256x128xf32>
    %106 = arith.addf %104, %105 : vector<256x128xf32>
    %c0_131 = arith.constant 0 : index
    %c0_132 = arith.constant 0 : index
    %107 = vector.load %arg6[%c0_131, %c0_132] : memref<256x128xf32, #tpu.memory_space<vmem>>, vector<256x128xf32>
    tpu.vector_store %arg6[%c0_131, %c0_132], %106 {strides = array<i32>} : memref<256x128xf32, #tpu.memory_space<vmem>>, vector<256x128xf32>,
    %c0_133 = arith.constant 0 : index
    %c0_134 = arith.constant 0 : index
    %108 = vector.load %arg5[%c0_133, %c0_134] : memref<256x128xf32, #tpu.memory_space<vmem>>, vector<256x128xf32>
    %cst_135 = arith.constant 2.500000e-01 : f32
    %109 = vector.broadcast %cst_135 : f32 to vector<256x128xf32>
    %110 = arith.mulf %108, %109 : vector<256x128xf32>
    %c0_136 = arith.constant 0 : index
    %c0_137 = arith.constant 0 : index
    %111 = vector.load %arg5[%c0_136, %c0_137] : memref<256x128xf32, #tpu.memory_space<vmem>>, vector<256x128xf32>
    tpu.vector_store %arg5[%c0_136, %c0_137], %110 {strides = array<i32>} : memref<256x128xf32, #tpu.memory_space<vmem>>, vector<256x128xf32>,
    %c0_138 = arith.constant 0 : index
    %c0_139 = arith.constant 0 : index
    %112 = vector.load %arg6[%c0_138, %c0_139] : memref<256x128xf32, #tpu.memory_space<vmem>>, vector<256x128xf32>
    %cst_140 = arith.constant 2.500000e-01 : f32
    %113 = vector.broadcast %cst_140 : f32 to vector<256x128xf32>
    %114 = arith.mulf %112, %113 : vector<256x128xf32>
    %c0_141 = arith.constant 0 : index
    %c0_142 = arith.constant 0 : index
    %115 = vector.load %arg6[%c0_141, %c0_142] : memref<256x128xf32, #tpu.memory_space<vmem>>, vector<256x128xf32>
    tpu.vector_store %arg6[%c0_141, %c0_142], %114 {strides = array<i32>} : memref<256x128xf32, #tpu.memory_space<vmem>>, vector<256x128xf32>,
    return
  }
}

</mosaic_0001>

<llo_original>
// kernel: graph_convolution_forward.1
$region0: #{graph_convolution_forward.1}
  #allocation0 [shape = 'u32[]', space=smem, size = 0x4, offset = 0x4, fixed_abs, tag = 'smem constant byte address 0x4 - core index']
  #allocation1 [shape = 'u32[72,128]{1,0:T(1,128)}', space=vmem, size = 0x9000, scoped, tag = 'internal scratch']
  #allocation2 [shape = 'bf16[256,256]{1,0:T(8,128)(2,1)}', space=vmem, size = 0x20000, scoped, tag = 'scratch operand']
  #allocation3 [shape = 'bf16[256,256]{1,0:T(8,128)(2,1)}', space=vmem, size = 0x20000, scoped, tag = 'scratch operand']
  #allocation4 [shape = 's32[2]{0}', space=sflag, size = 0x8, scoped, tag = 'scratch operand']
  #allocation5 [shape = 'bf16[256,128]{1,0:T(8,128)(2,1)}', space=vmem, size = 0x10000, scoped, tag = 'scratch operand']
  #allocation6 [shape = 'bf16[2,256,128]{2,1,0:T(8,128)(2,1)}', space=vmem, size = 0x20000, scoped, tag = 'scratch operand']
  #allocation7 [shape = 'bf16[256,256]{1,0:T(8,128)(2,1)}', space=vmem, size = 0x20000, scoped, tag = 'scratch operand']
  #allocation8 [shape = 's32[]', space=sflag, size = 0x4, offset = 0, fixed_abs, tag = 'sflag constant byte address 0x0 - dummy sync flag']
  #allocation9 [shape = 's32[]', space=sflag, size = 0x4, offset = 0, fixed_abs, tag = 'sflag constant byte address 0x0 - dummy sync flag']
  %s0 = inlined_call_operand.vmem [shape: bf16[256,256], index: 0, kind: input, shape index: {}]
  %s1 = inlined_call_operand.vmem [shape: bf16[256,256], index: 1, kind: input, shape index: {}]
  %s2 = inlined_call_operand.vmem [shape: bf16[256,128], index: 2, kind: input, shape index: {}]
  %s3 = inlined_call_operand.vmem [shape: bf16[256,128], index: 3, kind: input, shape index: {}]
  %s4 = inlined_call_operand.vmem [shape: f32[256,128], index: 4, kind: output, shape index: {0}]
  %s5 = inlined_call_operand.vmem [shape: f32[256,128], index: 5, kind: output, shape index: {1}]
  %s6 = inlined_call_operand.vmem [shape: f32[256,128], index: 6, kind: output, shape index: {2}]
  %7 = xla_tuple %s4, %s5, %s6
  %s8 = sld [smem:[#allocation0]]
  $region72: #{graph_convolution_forward.1} parent=0
    _
  %s10 = ssub.s32 1, %s8
  %s11 = scalar_select 0, %s10, %s8
  // Predicated region
  $region2: #{graph_convolution_forward.1} parent=0 // pred_check
    _
  $region3: #{graph_convolution_forward.1} parent=0 // pred_check_branch
    %13 = sbr.rel (0) target = $region5
  $region4: #{graph_convolution_forward.1} parent=0 // pred_region
    _
  $region5: #{graph_convolution_forward.1} parent=0 // pred_fallthru
    _
  // Predicated region
  $region6: #{graph_convolution_forward.1} parent=0 // pred_check
    _
  $region7: #{graph_convolution_forward.1} parent=0 // pred_check_branch
    %15 = sbr.rel (0) target = $region9
  $region8: #{graph_convolution_forward.1} parent=0 // pred_region
    _
  $region9: #{graph_convolution_forward.1} parent=0 // pred_fallthru
    _
  // Predicated region
  $region10: #{graph_convolution_forward.1} parent=0 // pred_check
    _
  $region11: #{graph_convolution_forward.1} parent=0 // pred_check_branch
    %17 = sbr.rel (0) target = $region13
  $region12: #{graph_convolution_forward.1} parent=0 // pred_region
    loop: start=0, step=1, limit=1
    $region14: #{graph_convolution_forward.1} parent=12 // loop_pre_header
      _
    $region15: #{graph_convolution_forward.1} parent=12 // loop_header
      %s19 = sphi 0, %s23
      %p20 = scmp.ge.s32.totalorder %s19, 1
      %s24 = sphi %s0, %s0
      %s25 = sphi [#allocation2], [#allocation2]
    $region16: #{graph_convolution_forward.1} parent=12 // loop_header_branch
      %22 = sbr.rel (%p20) target = $region20
    $region17: #{graph_convolution_forward.1} parent=12 // loop_body
      %v26 = vld [vmem:[%s24] sm:$0xff]
      %27 = vst [vmem:[%s25] sm:$0xff] %v26
      %v28 = vld [vmem:[%s24 + $0x8] sm:$0xff]
      %29 = vst [vmem:[%s25 + $0x8] sm:$0xff] %v28
      %v30 = vld [vmem:[%s24 + $0x10] sm:$0xff]
      %31 = vst [vmem:[%s25 + $0x10] sm:$0xff] %v30
      %v32 = vld [vmem:[%s24 + $0x18] sm:$0xff]
      %33 = vst [vmem:[%s25 + $0x18] sm:$0xff] %v32
      %v34 = vld [vmem:[%s24 + $0x20] sm:$0xff]
      %35 = vst [vmem:[%s25 + $0x20] sm:$0xff] %v34
      %v36 = vld [vmem:[%s24 + $0x28] sm:$0xff]
      %37 = vst [vmem:[%s25 + $0x28] sm:$0xff] %v36
      %v38 = vld [vmem:[%s24 + $0x30] sm:$0xff]
      %39 = vst [vmem:[%s25 + $0x30] sm:$0xff] %v38
      %v40 = vld [vmem:[%s24 + $0x38] sm:$0xff]
      %41 = vst [vmem:[%s25 + $0x38] sm:$0xff] %v40
      %v42 = vld [vmem:[%s24 + $0x40] sm:$0xff]
      %43 = vst [vmem:[%s25 + $0x40] sm:$0xff] %v42
      %v44 = vld [vmem:[%s24 + $0x48] sm:$0xff]
      %45 = vst [vmem:[%s25 + $0x48] sm:$0xff] %v44
      %v46 = vld [vmem:[%s24 + $0x50] sm:$0xff]
      %47 = vst [vmem:[%s25 + $0x50] sm:$0xff] %v46
      %v48 = vld [vmem:[%s24 + $0x58] sm:$0xff]
      %49 = vst [vmem:[%s25 + $0x58] sm:$0xff] %v48
      %v50 = vld [vmem:[%s24 + $0x60] sm:$0xff]
      %51 = vst [vmem:[%s25 + $0x60] sm:$0xff] %v50
      %v52 = vld [vmem:[%s24 + $0x68] sm:$0xff]
      %53 = vst [vmem:[%s25 + $0x68] sm:$0xff] %v52
      %v54 = vld [vmem:[%s24 + $0x70] sm:$0xff]
      %55 = vst [vmem:[%s25 + $0x70] sm:$0xff] %v54
      %v56 = vld [vmem:[%s24 + $0x78] sm:$0xff]
      %57 = vst [vmem:[%s25 + $0x78] sm:$0xff] %v56
      %v58 = vld [vmem:[%s24 + $0x80] sm:$0xff]
      %59 = vst [vmem:[%s25 + $0x80] sm:$0xff] %v58
      %v60 = vld [vmem:[%s24 + $0x88] sm:$0xff]
      %61 = vst [vmem:[%s25 + $0x88] sm:$0xff] %v60
      %v62 = vld [vmem:[%s24 + $0x90] sm:$0xff]
      %63 = vst [vmem:[%s25 + $0x90] sm:$0xff] %v62
      %v64 = vld [vmem:[%s24 + $0x98] sm:$0xff]
      %65 = vst [vmem:[%s25 + $0x98] sm:$0xff] %v64
      %v66 = vld [vmem:[%s24 + $0xa0] sm:$0xff]
      %67 = vst [vmem:[%s25 + $0xa0] sm:$0xff] %v66
      %v68 = vld [vmem:[%s24 + $0xa8] sm:$0xff]
      %69 = vst [vmem:[%s25 + $0xa8] sm:$0xff] %v68
      %v70 = vld [vmem:[%s24 + $0xb0] sm:$0xff]
      %71 = vst [vmem:[%s25 + $0xb0] sm:$0xff] %v70
      %v72 = vld [vmem:[%s24 + $0xb8] sm:$0xff]
      %73 = vst [vmem:[%s25 + $0xb8] sm:$0xff] %v72
      %v74 = vld [vmem:[%s24 + $0xc0] sm:$0xff]
      %75 = vst [vmem:[%s25 + $0xc0] sm:$0xff] %v74
      %v76 = vld [vmem:[%s24 + $0xc8] sm:$0xff]
      %77 = vst [vmem:[%s25 + $0xc8] sm:$0xff] %v76
      %v78 = vld [vmem:[%s24 + $0xd0] sm:$0xff]
      %79 = vst [vmem:[%s25 + $0xd0] sm:$0xff] %v78
      %v80 = vld [vmem:[%s24 + $0xd8] sm:$0xff]
      %81 = vst [vmem:[%s25 + $0xd8] sm:$0xff] %v80
      %v82 = vld [vmem:[%s24 + $0xe0] sm:$0xff]
      %83 = vst [vmem:[%s25 + $0xe0] sm:$0xff] %v82
      %v84 = vld [vmem:[%s24 + $0xe8] sm:$0xff]
      %85 = vst [vmem:[%s25 + $0xe8] sm:$0xff] %v84
      %v86 = vld [vmem:[%s24 + $0xf0] sm:$0xff]
      %87 = vst [vmem:[%s25 + $0xf0] sm:$0xff] %v86
      %v88 = vld [vmem:[%s24 + $0xf8] sm:$0xff]
      %89 = vst [vmem:[%s25 + $0xf8] sm:$0xff] %v88
    $region18: #{graph_convolution_forward.1} parent=12 // loop_footer
      %s23 = sadd.s32 1, %s19
    $region19: #{graph_convolution_forward.1} parent=12 // loop_footer_branch
      %18 = sbr.rel target = $region15
    $region20: #{graph_convolution_forward.1} parent=12 // loop_exit
      _
  $region13: #{graph_convolution_forward.1} parent=0 // pred_fallthru
    _
  // Predicated region
  $region21: #{graph_convolution_forward.1} parent=0 // pred_check
    _
  $region22: #{graph_convolution_forward.1} parent=0 // pred_check_branch
    %91 = sbr.rel target = $region24
  $region23: #{graph_convolution_forward.1} parent=0 // pred_region
    _
  $region24: #{graph_convolution_forward.1} parent=0 // pred_fallthru
    _
  // Predicated region
  $region25: #{graph_convolution_forward.1} parent=0 // pred_check
    _
  $region26: #{graph_convolution_forward.1} parent=0 // pred_check_branch
    %94 = sbr.rel (0) target = $region28
  $region27: #{graph_convolution_forward.1} parent=0 // pred_region
    %95 = vsyncadd [#allocation4], 4096
  $region28: #{graph_convolution_forward.1} parent=0 // pred_fallthru
    _
  %s96 = scalar_lea.sflag [#allocation4], 1
  // Predicated region
  $region29: #{graph_convolution_forward.1} parent=0 // pred_check
    _
  $region30: #{graph_convolution_forward.1} parent=0 // pred_check_branch
    %98 = sbr.rel (0) target = $region32
  $region31: #{graph_convolution_forward.1} parent=0 // pred_region
    loop: start=0, step=1, limit=1
    $region33: #{graph_convolution_forward.1} parent=31 // loop_pre_header
      _
    $region34: #{graph_convolution_forward.1} parent=31 // loop_header
      %s100 = sphi 0, %s104
      %p101 = scmp.ge.s32.totalorder %s100, 1
      %s105 = sphi %s1, %s1
      %s106 = sphi [#allocation3], [#allocation3]
    $region35: #{graph_convolution_forward.1} parent=31 // loop_header_branch
      %103 = sbr.rel (%p101) target = $region39
    $region36: #{graph_convolution_forward.1} parent=31 // loop_body
      %v107 = vld [vmem:[%s105] sm:$0xff]
      %108 = vst [vmem:[%s106] sm:$0xff] %v107
      %v109 = vld [vmem:[%s105 + $0x8] sm:$0xff]
      %110 = vst [vmem:[%s106 + $0x8] sm:$0xff] %v109
      %v111 = vld [vmem:[%s105 + $0x10] sm:$0xff]
      %112 = vst [vmem:[%s106 + $0x10] sm:$0xff] %v111
      %v113 = vld [vmem:[%s105 + $0x18] sm:$0xff]
      %114 = vst [vmem:[%s106 + $0x18] sm:$0xff] %v113
      %v115 = vld [vmem:[%s105 + $0x20] sm:$0xff]
      %116 = vst [vmem:[%s106 + $0x20] sm:$0xff] %v115
      %v117 = vld [vmem:[%s105 + $0x28] sm:$0xff]
      %118 = vst [vmem:[%s106 + $0x28] sm:$0xff] %v117
      %v119 = vld [vmem:[%s105 + $0x30] sm:$0xff]
      %120 = vst [vmem:[%s106 + $0x30] sm:$0xff] %v119
      %v121 = vld [vmem:[%s105 + $0x38] sm:$0xff]
      %122 = vst [vmem:[%s106 + $0x38] sm:$0xff] %v121
      %v123 = vld [vmem:[%s105 + $0x40] sm:$0xff]
      %124 = vst [vmem:[%s106 + $0x40] sm:$0xff] %v123
      %v125 = vld [vmem:[%s105 + $0x48] sm:$0xff]
      %126 = vst [vmem:[%s106 + $0x48] sm:$0xff] %v125
      %v127 = vld [vmem:[%s105 + $0x50] sm:$0xff]
      %128 = vst [vmem:[%s106 + $0x50] sm:$0xff] %v127
      %v129 = vld [vmem:[%s105 + $0x58] sm:$0xff]
      %130 = vst [vmem:[%s106 + $0x58] sm:$0xff] %v129
      %v131 = vld [vmem:[%s105 + $0x60] sm:$0xff]
      %132 = vst [vmem:[%s106 + $0x60] sm:$0xff] %v131
      %v133 = vld [vmem:[%s105 + $0x68] sm:$0xff]
      %134 = vst [vmem:[%s106 + $0x68] sm:$0xff] %v133
      %v135 = vld [vmem:[%s105 + $0x70] sm:$0xff]
      %136 = vst [vmem:[%s106 + $0x70] sm:$0xff] %v135
      %v137 = vld [vmem:[%s105 + $0x78] sm:$0xff]
      %138 = vst [vmem:[%s106 + $0x78] sm:$0xff] %v137
      %v139 = vld [vmem:[%s105 + $0x80] sm:$0xff]
      %140 = vst [vmem:[%s106 + $0x80] sm:$0xff] %v139
      %v141 = vld [vmem:[%s105 + $0x88] sm:$0xff]
      %142 = vst [vmem:[%s106 + $0x88] sm:$0xff] %v141
      %v143 = vld [vmem:[%s105 + $0x90] sm:$0xff]
      %144 = vst [vmem:[%s106 + $0x90] sm:$0xff] %v143
      %v145 = vld [vmem:[%s105 + $0x98] sm:$0xff]
      %146 = vst [vmem:[%s106 + $0x98] sm:$0xff] %v145
      %v147 = vld [vmem:[%s105 + $0xa0] sm:$0xff]
      %148 = vst [vmem:[%s106 + $0xa0] sm:$0xff] %v147
      %v149 = vld [vmem:[%s105 + $0xa8] sm:$0xff]
      %150 = vst [vmem:[%s106 + $0xa8] sm:$0xff] %v149
      %v151 = vld [vmem:[%s105 + $0xb0] sm:$0xff]
      %152 = vst [vmem:[%s106 + $0xb0] sm:$0xff] %v151
      %v153 = vld [vmem:[%s105 + $0xb8] sm:$0xff]
      %154 = vst [vmem:[%s106 + $0xb8] sm:$0xff] %v153
      %v155 = vld [vmem:[%s105 + $0xc0] sm:$0xff]
      %156 = vst [vmem:[%s106 + $0xc0] sm:$0xff] %v155
      %v157 = vld [vmem:[%s105 + $0xc8] sm:$0xff]
      %158 = vst [vmem:[%s106 + $0xc8] sm:$0xff] %v157
      %v159 = vld [vmem:[%s105 + $0xd0] sm:$0xff]
      %160 = vst [vmem:[%s106 + $0xd0] sm:$0xff] %v159
      %v161 = vld [vmem:[%s105 + $0xd8] sm:$0xff]
      %162 = vst [vmem:[%s106 + $0xd8] sm:$0xff] %v161
      %v163 = vld [vmem:[%s105 + $0xe0] sm:$0xff]
      %164 = vst [vmem:[%s106 + $0xe0] sm:$0xff] %v163
      %v165 = vld [vmem:[%s105 + $0xe8] sm:$0xff]
      %166 = vst [vmem:[%s106 + $0xe8] sm:$0xff] %v165
      %v167 = vld [vmem:[%s105 + $0xf0] sm:$0xff]
      %168 = vst [vmem:[%s106 + $0xf0] sm:$0xff] %v167
      %v169 = vld [vmem:[%s105 + $0xf8] sm:$0xff]
      %170 = vst [vmem:[%s106 + $0xf8] sm:$0xff] %v169
    $region37: #{graph_convolution_forward.1} parent=31 // loop_footer
      %s104 = sadd.s32 1, %s100
    $region38: #{graph_convolution_forward.1} parent=31 // loop_footer_branch
      %99 = sbr.rel target = $region34
    $region39: #{graph_convolution_forward.1} parent=31 // loop_exit
      _
  $region32: #{graph_convolution_forward.1} parent=0 // pred_fallthru
    _
  // Predicated region
  $region40: #{graph_convolution_forward.1} parent=0 // pred_check
    _
  $region41: #{graph_convolution_forward.1} parent=0 // pred_check_branch
    %172 = sbr.rel target = $region43
  $region42: #{graph_convolution_forward.1} parent=0 // pred_region
    _
  $region43: #{graph_convolution_forward.1} parent=0 // pred_fallthru
    _
  // Predicated region
  $region44: #{graph_convolution_forward.1} parent=0 // pred_check
    _
  $region45: #{graph_convolution_forward.1} parent=0 // pred_check_branch
    %175 = sbr.rel (0) target = $region47
  $region46: #{graph_convolution_forward.1} parent=0 // pred_region
    %176 = vsyncadd %s96, 4096
  $region47: #{graph_convolution_forward.1} parent=0 // pred_fallthru
    _
  %v177 = vld [vmem:[%s3] sm:$0xf]
  %v178 = vld [vmem:[%s3 + $0x4] sm:$0xf]
  %v179 = vld [vmem:[%s3 + $0x8] sm:$0xf]
  %v180 = vld [vmem:[%s3 + $0xc] sm:$0xf]
  %v181 = vld [vmem:[%s3 + $0x10] sm:$0xf]
  %v182 = vld [vmem:[%s3 + $0x14] sm:$0xf]
  %v183 = vld [vmem:[%s3 + $0x18] sm:$0xf]
  %v184 = vld [vmem:[%s3 + $0x1c] sm:$0xf]
  %v185 = vld [vmem:[%s3 + $0x20] sm:$0xf]
  %v186 = vld [vmem:[%s3 + $0x24] sm:$0xf]
  %v187 = vld [vmem:[%s3 + $0x28] sm:$0xf]
  %v188 = vld [vmem:[%s3 + $0x2c] sm:$0xf]
  %v189 = vld [vmem:[%s3 + $0x30] sm:$0xf]
  %v190 = vld [vmem:[%s3 + $0x34] sm:$0xf]
  %v191 = vld [vmem:[%s3 + $0x38] sm:$0xf]
  %v192 = vld [vmem:[%s3 + $0x3c] sm:$0xf]
  %v193 = vld [vmem:[%s3 + $0x40] sm:$0xf]
  %v194 = vld [vmem:[%s3 + $0x44] sm:$0xf]
  %v195 = vld [vmem:[%s3 + $0x48] sm:$0xf]
  %v196 = vld [vmem:[%s3 + $0x4c] sm:$0xf]
  %v197 = vld [vmem:[%s3 + $0x50] sm:$0xf]
  %v198 = vld [vmem:[%s3 + $0x54] sm:$0xf]
  %v199 = vld [vmem:[%s3 + $0x58] sm:$0xf]
  %v200 = vld [vmem:[%s3 + $0x5c] sm:$0xf]
  %v201 = vld [vmem:[%s3 + $0x60] sm:$0xf]
  %v202 = vld [vmem:[%s3 + $0x64] sm:$0xf]
  %v203 = vld [vmem:[%s3 + $0x68] sm:$0xf]
  %v204 = vld [vmem:[%s3 + $0x6c] sm:$0xf]
  %v205 = vld [vmem:[%s3 + $0x70] sm:$0xf]
  %v206 = vld [vmem:[%s3 + $0x74] sm:$0xf]
  %v207 = vld [vmem:[%s3 + $0x78] sm:$0xf]
  %v208 = vld [vmem:[%s3 + $0x7c] sm:$0xf]
  %209 = vst [vmem:[#allocation6] sm:$0xf] %v177
  %210 = vst [vmem:[#allocation6 + $0x4] sm:$0xf] %v178
  %211 = vst [vmem:[#allocation6 + $0x8] sm:$0xf] %v179
  %212 = vst [vmem:[#allocation6 + $0xc] sm:$0xf] %v180
  %213 = vst [vmem:[#allocation6 + $0x10] sm:$0xf] %v181
  %214 = vst [vmem:[#allocation6 + $0x14] sm:$0xf] %v182
  %215 = vst [vmem:[#allocation6 + $0x18] sm:$0xf] %v183
  %216 = vst [vmem:[#allocation6 + $0x1c] sm:$0xf] %v184
  %217 = vst [vmem:[#allocation6 + $0x20] sm:$0xf] %v185
  %218 = vst [vmem:[#allocation6 + $0x24] sm:$0xf] %v186
  %219 = vst [vmem:[#allocation6 + $0x28] sm:$0xf] %v187
  %220 = vst [vmem:[#allocation6 + $0x2c] sm:$0xf] %v188
  %221 = vst [vmem:[#allocation6 + $0x30] sm:$0xf] %v189
  %222 = vst [vmem:[#allocation6 + $0x34] sm:$0xf] %v190
  %223 = vst [vmem:[#allocation6 + $0x38] sm:$0xf] %v191
  %224 = vst [vmem:[#allocation6 + $0x3c] sm:$0xf] %v192
  %225 = vst [vmem:[#allocation6 + $0x40] sm:$0xf] %v193
  %226 = vst [vmem:[#allocation6 + $0x44] sm:$0xf] %v194
  %227 = vst [vmem:[#allocation6 + $0x48] sm:$0xf] %v195
  %228 = vst [vmem:[#allocation6 + $0x4c] sm:$0xf] %v196
  %229 = vst [vmem:[#allocation6 + $0x50] sm:$0xf] %v197
  %230 = vst [vmem:[#allocation6 + $0x54] sm:$0xf] %v198
  %231 = vst [vmem:[#allocation6 + $0x58] sm:$0xf] %v199
  %232 = vst [vmem:[#allocation6 + $0x5c] sm:$0xf] %v200
  %233 = vst [vmem:[#allocation6 + $0x60] sm:$0xf] %v201
  %234 = vst [vmem:[#allocation6 + $0x64] sm:$0xf] %v202
  %235 = vst [vmem:[#allocation6 + $0x68] sm:$0xf] %v203
  %236 = vst [vmem:[#allocation6 + $0x6c] sm:$0xf] %v204
  %237 = vst [vmem:[#allocation6 + $0x70] sm:$0xf] %v205
  %238 = vst [vmem:[#allocation6 + $0x74] sm:$0xf] %v206
  %239 = vst [vmem:[#allocation6 + $0x78] sm:$0xf] %v207
  %240 = vst [vmem:[#allocation6 + $0x7c] sm:$0xf] %v208
  %v241 = vld [vmem:[%s3] sm:$0xf]
  %v242 = vld [vmem:[%s3 + $0x4] sm:$0xf]
  %v243 = vld [vmem:[%s3 + $0x8] sm:$0xf]
  %v244 = vld [vmem:[%s3 + $0xc] sm:$0xf]
  %v245 = vld [vmem:[%s3 + $0x10] sm:$0xf]
  %v246 = vld [vmem:[%s3 + $0x14] sm:$0xf]
  %v247 = vld [vmem:[%s3 + $0x18] sm:$0xf]
  %v248 = vld [vmem:[%s3 + $0x1c] sm:$0xf]
  %v249 = vld [vmem:[%s3 + $0x20] sm:$0xf]
  %v250 = vld [vmem:[%s3 + $0x24] sm:$0xf]
  %v251 = vld [vmem:[%s3 + $0x28] sm:$0xf]
  %v252 = vld [vmem:[%s3 + $0x2c] sm:$0xf]
  %v253 = vld [vmem:[%s3 + $0x30] sm:$0xf]
  %v254 = vld [vmem:[%s3 + $0x34] sm:$0xf]
  %v255 = vld [vmem:[%s3 + $0x38] sm:$0xf]
  %v256 = vld [vmem:[%s3 + $0x3c] sm:$0xf]
  %v257 = vld [vmem:[%s3 + $0x40] sm:$0xf]
  %v258 = vld [vmem:[%s3 + $0x44] sm:$0xf]
  %v259 = vld [vmem:[%s3 + $0x48] sm:$0xf]
  %v260 = vld [vmem:[%s3 + $0x4c] sm:$0xf]
  %v261 = vld [vmem:[%s3 + $0x50] sm:$0xf]
  %v262 = vld [vmem:[%s3 + $0x54] sm:$0xf]
  %v263 = vld [vmem:[%s3 + $0x58] sm:$0xf]
  %v264 = vld [vmem:[%s3 + $0x5c] sm:$0xf]
  %v265 = vld [vmem:[%s3 + $0x60] sm:$0xf]
  %v266 = vld [vmem:[%s3 + $0x64] sm:$0xf]
  %v267 = vld [vmem:[%s3 + $0x68] sm:$0xf]
  %v268 = vld [vmem:[%s3 + $0x6c] sm:$0xf]
  %v269 = vld [vmem:[%s3 + $0x70] sm:$0xf]
  %v270 = vld [vmem:[%s3 + $0x74] sm:$0xf]
  %v271 = vld [vmem:[%s3 + $0x78] sm:$0xf]
  %v272 = vld [vmem:[%s3 + $0x7c] sm:$0xf]
  %s273 = scalar_lea.vmem [#allocation6], 128
  %274 = vst [vmem:[%s273] sm:$0xf] %v241
  %275 = vst [vmem:[%s273 + $0x4] sm:$0xf] %v242
  %276 = vst [vmem:[%s273 + $0x8] sm:$0xf] %v243
  %277 = vst [vmem:[%s273 + $0xc] sm:$0xf] %v244
  %278 = vst [vmem:[%s273 + $0x10] sm:$0xf] %v245
  %279 = vst [vmem:[%s273 + $0x14] sm:$0xf] %v246
  %280 = vst [vmem:[%s273 + $0x18] sm:$0xf] %v247
  %281 = vst [vmem:[%s273 + $0x1c] sm:$0xf] %v248
  %282 = vst [vmem:[%s273 + $0x20] sm:$0xf] %v249
  %283 = vst [vmem:[%s273 + $0x24] sm:$0xf] %v250
  %284 = vst [vmem:[%s273 + $0x28] sm:$0xf] %v251
  %285 = vst [vmem:[%s273 + $0x2c] sm:$0xf] %v252
  %286 = vst [vmem:[%s273 + $0x30] sm:$0xf] %v253
  %287 = vst [vmem:[%s273 + $0x34] sm:$0xf] %v254
  %288 = vst [vmem:[%s273 + $0x38] sm:$0xf] %v255
  %289 = vst [vmem:[%s273 + $0x3c] sm:$0xf] %v256
  %290 = vst [vmem:[%s273 + $0x40] sm:$0xf] %v257
  %291 = vst [vmem:[%s273 + $0x44] sm:$0xf] %v258
  %292 = vst [vmem:[%s273 + $0x48] sm:$0xf] %v259
  %293 = vst [vmem:[%s273 + $0x4c] sm:$0xf] %v260
  %294 = vst [vmem:[%s273 + $0x50] sm:$0xf] %v261
  %295 = vst [vmem:[%s273 + $0x54] sm:$0xf] %v262
  %296 = vst [vmem:[%s273 + $0x58] sm:$0xf] %v263
  %297 = vst [vmem:[%s273 + $0x5c] sm:$0xf] %v264
  %298 = vst [vmem:[%s273 + $0x60] sm:$0xf] %v265
  %299 = vst [vmem:[%s273 + $0x64] sm:$0xf] %v266
  %300 = vst [vmem:[%s273 + $0x68] sm:$0xf] %v267
  %301 = vst [vmem:[%s273 + $0x6c] sm:$0xf] %v268
  %302 = vst [vmem:[%s273 + $0x70] sm:$0xf] %v269
  %303 = vst [vmem:[%s273 + $0x74] sm:$0xf] %v270
  %304 = vst [vmem:[%s273 + $0x78] sm:$0xf] %v271
  %305 = vst [vmem:[%s273 + $0x7c] sm:$0xf] %v272
  %v306 = vld [vmem:[%s2] sm:$0xf]
  %v307 = vld [vmem:[%s2 + $0x4] sm:$0xf]
  %v308 = vld [vmem:[%s2 + $0x8] sm:$0xf]
  %v309 = vld [vmem:[%s2 + $0xc] sm:$0xf]
  %v310 = vld [vmem:[%s2 + $0x10] sm:$0xf]
  %v311 = vld [vmem:[%s2 + $0x14] sm:$0xf]
  %v312 = vld [vmem:[%s2 + $0x18] sm:$0xf]
  %v313 = vld [vmem:[%s2 + $0x1c] sm:$0xf]
  %v314 = vld [vmem:[%s2 + $0x20] sm:$0xf]
  %v315 = vld [vmem:[%s2 + $0x24] sm:$0xf]
  %v316 = vld [vmem:[%s2 + $0x28] sm:$0xf]
  %v317 = vld [vmem:[%s2 + $0x2c] sm:$0xf]
  %v318 = vld [vmem:[%s2 + $0x30] sm:$0xf]
  %v319 = vld [vmem:[%s2 + $0x34] sm:$0xf]
  %v320 = vld [vmem:[%s2 + $0x38] sm:$0xf]
  %v321 = vld [vmem:[%s2 + $0x3c] sm:$0xf]
  %v322 = vld [vmem:[%s2 + $0x40] sm:$0xf]
  %v323 = vld [vmem:[%s2 + $0x44] sm:$0xf]
  %v324 = vld [vmem:[%s2 + $0x48] sm:$0xf]
  %v325 = vld [vmem:[%s2 + $0x4c] sm:$0xf]
  %v326 = vld [vmem:[%s2 + $0x50] sm:$0xf]
  %v327 = vld [vmem:[%s2 + $0x54] sm:$0xf]
  %v328 = vld [vmem:[%s2 + $0x58] sm:$0xf]
  %v329 = vld [vmem:[%s2 + $0x5c] sm:$0xf]
  %v330 = vld [vmem:[%s2 + $0x60] sm:$0xf]
  %v331 = vld [vmem:[%s2 + $0x64] sm:$0xf]
  %v332 = vld [vmem:[%s2 + $0x68] sm:$0xf]
  %v333 = vld [vmem:[%s2 + $0x6c] sm:$0xf]
  %v334 = vld [vmem:[%s2 + $0x70] sm:$0xf]
  %v335 = vld [vmem:[%s2 + $0x74] sm:$0xf]
  %v336 = vld [vmem:[%s2 + $0x78] sm:$0xf]
  %v337 = vld [vmem:[%s2 + $0x7c] sm:$0xf]
  %338 = vst [vmem:[#allocation5] sm:$0xf] %v306
  %339 = vst [vmem:[#allocation5 + $0x4] sm:$0xf] %v307
  %340 = vst [vmem:[#allocation5 + $0x8] sm:$0xf] %v308
  %341 = vst [vmem:[#allocation5 + $0xc] sm:$0xf] %v309
  %342 = vst [vmem:[#allocation5 + $0x10] sm:$0xf] %v310
  %343 = vst [vmem:[#allocation5 + $0x14] sm:$0xf] %v311
  %344 = vst [vmem:[#allocation5 + $0x18] sm:$0xf] %v312
  %345 = vst [vmem:[#allocation5 + $0x1c] sm:$0xf] %v313
  %346 = vst [vmem:[#allocation5 + $0x20] sm:$0xf] %v314
  %347 = vst [vmem:[#allocation5 + $0x24] sm:$0xf] %v315
  %348 = vst [vmem:[#allocation5 + $0x28] sm:$0xf] %v316
  %349 = vst [vmem:[#allocation5 + $0x2c] sm:$0xf] %v317
  %350 = vst [vmem:[#allocation5 + $0x30] sm:$0xf] %v318
  %351 = vst [vmem:[#allocation5 + $0x34] sm:$0xf] %v319
  %352 = vst [vmem:[#allocation5 + $0x38] sm:$0xf] %v320
  %353 = vst [vmem:[#allocation5 + $0x3c] sm:$0xf] %v321
  %354 = vst [vmem:[#allocation5 + $0x40] sm:$0xf] %v322
  %355 = vst [vmem:[#allocation5 + $0x44] sm:$0xf] %v323
  %356 = vst [vmem:[#allocation5 + $0x48] sm:$0xf] %v324
  %357 = vst [vmem:[#allocation5 + $0x4c] sm:$0xf] %v325
  %358 = vst [vmem:[#allocation5 + $0x50] sm:$0xf] %v326
  %359 = vst [vmem:[#allocation5 + $0x54] sm:$0xf] %v327
  %360 = vst [vmem:[#allocation5 + $0x58] sm:$0xf] %v328
  %361 = vst [vmem:[#allocation5 + $0x5c] sm:$0xf] %v329
  %362 = vst [vmem:[#allocation5 + $0x60] sm:$0xf] %v330
  %363 = vst [vmem:[#allocation5 + $0x64] sm:$0xf] %v331
  %364 = vst [vmem:[#allocation5 + $0x68] sm:$0xf] %v332
  %365 = vst [vmem:[#allocation5 + $0x6c] sm:$0xf] %v333
  %366 = vst [vmem:[#allocation5 + $0x70] sm:$0xf] %v334
  %367 = vst [vmem:[#allocation5 + $0x74] sm:$0xf] %v335
  %368 = vst [vmem:[#allocation5 + $0x78] sm:$0xf] %v336
  %369 = vst [vmem:[#allocation5 + $0x7c] sm:$0xf] %v337
  %v370 = vld [vmem:[%s2] sm:$0xf]
  %v371 = vld [vmem:[%s2 + $0x4] sm:$0xf]
  %v372 = vld [vmem:[%s2 + $0x8] sm:$0xf]
  %v373 = vld [vmem:[%s2 + $0xc] sm:$0xf]
  %v374 = vld [vmem:[%s2 + $0x10] sm:$0xf]
  %v375 = vld [vmem:[%s2 + $0x14] sm:$0xf]
  %v376 = vld [vmem:[%s2 + $0x18] sm:$0xf]
  %v377 = vld [vmem:[%s2 + $0x1c] sm:$0xf]
  %v378 = vld [vmem:[%s2 + $0x20] sm:$0xf]
  %v379 = vld [vmem:[%s2 + $0x24] sm:$0xf]
  %v380 = vld [vmem:[%s2 + $0x28] sm:$0xf]
  %v381 = vld [vmem:[%s2 + $0x2c] sm:$0xf]
  %v382 = vld [vmem:[%s2 + $0x30] sm:$0xf]
  %v383 = vld [vmem:[%s2 + $0x34] sm:$0xf]
  %v384 = vld [vmem:[%s2 + $0x38] sm:$0xf]
  %v385 = vld [vmem:[%s2 + $0x3c] sm:$0xf]
  %v386 = vld [vmem:[%s2 + $0x40] sm:$0xf]
  %v387 = vld [vmem:[%s2 + $0x44] sm:$0xf]
  %v388 = vld [vmem:[%s2 + $0x48] sm:$0xf]
  %v389 = vld [vmem:[%s2 + $0x4c] sm:$0xf]
  %v390 = vld [vmem:[%s2 + $0x50] sm:$0xf]
  %v391 = vld [vmem:[%s2 + $0x54] sm:$0xf]
  %v392 = vld [vmem:[%s2 + $0x58] sm:$0xf]
  %v393 = vld [vmem:[%s2 + $0x5c] sm:$0xf]
  %v394 = vld [vmem:[%s2 + $0x60] sm:$0xf]
  %v395 = vld [vmem:[%s2 + $0x64] sm:$0xf]
  %v396 = vld [vmem:[%s2 + $0x68] sm:$0xf]
  %v397 = vld [vmem:[%s2 + $0x6c] sm:$0xf]
  %v398 = vld [vmem:[%s2 + $0x70] sm:$0xf]
  %v399 = vld [vmem:[%s2 + $0x74] sm:$0xf]
  %v400 = vld [vmem:[%s2 + $0x78] sm:$0xf]
  %v401 = vld [vmem:[%s2 + $0x7c] sm:$0xf]
  %v402 = vunpack.c.l.bf16 %v370
  %v403 = vunpack.c.l.bf16 %v371
  %v404 = vunpack.c.l.bf16 %v372
  %v405 = vunpack.c.l.bf16 %v373
  %v406 = vunpack.c.l.bf16 %v374
  %v407 = vunpack.c.l.bf16 %v375
  %v408 = vunpack.c.l.bf16 %v376
  %v409 = vunpack.c.l.bf16 %v377
  %v410 = vunpack.c.l.bf16 %v378
  %v411 = vunpack.c.l.bf16 %v379
  %v412 = vunpack.c.l.bf16 %v380
  %v413 = vunpack.c.l.bf16 %v381
  %v414 = vunpack.c.l.bf16 %v382
  %v415 = vunpack.c.l.bf16 %v383
  %v416 = vunpack.c.l.bf16 %v384
  %v417 = vunpack.c.l.bf16 %v385
  %v418 = vunpack.c.l.bf16 %v386
  %v419 = vunpack.c.l.bf16 %v387
  %v420 = vunpack.c.l.bf16 %v388
  %v421 = vunpack.c.l.bf16 %v389
  %v422 = vunpack.c.l.bf16 %v390
  %v423 = vunpack.c.l.bf16 %v391
  %v424 = vunpack.c.l.bf16 %v392
  %v425 = vunpack.c.l.bf16 %v393
  %v426 = vunpack.c.l.bf16 %v394
  %v427 = vunpack.c.l.bf16 %v395
  %v428 = vunpack.c.l.bf16 %v396
  %v429 = vunpack.c.l.bf16 %v397
  %v430 = vunpack.c.l.bf16 %v398
  %v431 = vunpack.c.l.bf16 %v399
  %v432 = vunpack.c.l.bf16 %v400
  %v433 = vunpack.c.l.bf16 %v401
  %434 = vst [vmem:[%s4] sm:$0xff] %v402
  %435 = vst [vmem:[%s4 + $0x8] sm:$0xff] %v403
  %436 = vst [vmem:[%s4 + $0x10] sm:$0xff] %v404
  %437 = vst [vmem:[%s4 + $0x18] sm:$0xff] %v405
  %438 = vst [vmem:[%s4 + $0x20] sm:$0xff] %v406
  %439 = vst [vmem:[%s4 + $0x28] sm:$0xff] %v407
  %440 = vst [vmem:[%s4 + $0x30] sm:$0xff] %v408
  %441 = vst [vmem:[%s4 + $0x38] sm:$0xff] %v409
  %442 = vst [vmem:[%s4 + $0x40] sm:$0xff] %v410
  %443 = vst [vmem:[%s4 + $0x48] sm:$0xff] %v411
  %444 = vst [vmem:[%s4 + $0x50] sm:$0xff] %v412
  %445 = vst [vmem:[%s4 + $0x58] sm:$0xff] %v413
  %446 = vst [vmem:[%s4 + $0x60] sm:$0xff] %v414
  %447 = vst [vmem:[%s4 + $0x68] sm:$0xff] %v415
  %448 = vst [vmem:[%s4 + $0x70] sm:$0xff] %v416
  %449 = vst [vmem:[%s4 + $0x78] sm:$0xff] %v417
  %450 = vst [vmem:[%s4 + $0x80] sm:$0xff] %v418
  %451 = vst [vmem:[%s4 + $0x88] sm:$0xff] %v419
  %452 = vst [vmem:[%s4 + $0x90] sm:$0xff] %v420
  %453 = vst [vmem:[%s4 + $0x98] sm:$0xff] %v421
  %454 = vst [vmem:[%s4 + $0xa0] sm:$0xff] %v422
  %455 = vst [vmem:[%s4 + $0xa8] sm:$0xff] %v423
  %456 = vst [vmem:[%s4 + $0xb0] sm:$0xff] %v424
  %457 = vst [vmem:[%s4 + $0xb8] sm:$0xff] %v425
  %458 = vst [vmem:[%s4 + $0xc0] sm:$0xff] %v426
  %459 = vst [vmem:[%s4 + $0xc8] sm:$0xff] %v427
  %460 = vst [vmem:[%s4 + $0xd0] sm:$0xff] %v428
  %461 = vst [vmem:[%s4 + $0xd8] sm:$0xff] %v429
  %462 = vst [vmem:[%s4 + $0xe0] sm:$0xff] %v430
  %463 = vst [vmem:[%s4 + $0xe8] sm:$0xff] %v431
  %464 = vst [vmem:[%s4 + $0xf0] sm:$0xff] %v432
  %465 = vst [vmem:[%s4 + $0xf8] sm:$0xff] %v433
  %s466 = smul.u32 4, 32
  %s467 = smul.u32 %s466, 2
  %s468 = sshll.u32 %s467, 4
  %469 = dma.done [#allocation4], %s468
  %v470 = vld [vmem:[#allocation5 + $0x40] sm:$0xf]
  %v471 = vld [vmem:[#allocation5 + $0x44] sm:$0xf]
  %v472 = vld [vmem:[#allocation5 + $0x48] sm:$0xf]
  %v473 = vld [vmem:[#allocation5 + $0x4c] sm:$0xf]
  %v474 = vld [vmem:[#allocation5 + $0x50] sm:$0xf]
  %v475 = vld [vmem:[#allocation5 + $0x54] sm:$0xf]
  %v476 = vld [vmem:[#allocation5 + $0x58] sm:$0xf]
  %v477 = vld [vmem:[#allocation5 + $0x5c] sm:$0xf]
  %v478 = vld [vmem:[#allocation5 + $0x60] sm:$0xf]
  %v479 = vld [vmem:[#allocation5 + $0x64] sm:$0xf]
  %v480 = vld [vmem:[#allocation5 + $0x68] sm:$0xf]
  %v481 = vld [vmem:[#allocation5 + $0x6c] sm:$0xf]
  %v482 = vld [vmem:[#allocation5 + $0x70] sm:$0xf]
  %v483 = vld [vmem:[#allocation5 + $0x74] sm:$0xf]
  %v484 = vld [vmem:[#allocation5 + $0x78] sm:$0xf]
  %v485 = vld [vmem:[#allocation5 + $0x7c] sm:$0xf]
  %486 = vst [vmem:[#allocation6 + $0x40] sm:$0xf] %v470
  %487 = vst [vmem:[#allocation6 + $0x44] sm:$0xf] %v471
  %488 = vst [vmem:[#allocation6 + $0x48] sm:$0xf] %v472
  %489 = vst [vmem:[#allocation6 + $0x4c] sm:$0xf] %v473
  %490 = vst [vmem:[#allocation6 + $0x50] sm:$0xf] %v474
  %491 = vst [vmem:[#allocation6 + $0x54] sm:$0xf] %v475
  %492 = vst [vmem:[#allocation6 + $0x58] sm:$0xf] %v476
  %493 = vst [vmem:[#allocation6 + $0x5c] sm:$0xf] %v477
  %494 = vst [vmem:[#allocation6 + $0x60] sm:$0xf] %v478
  %495 = vst [vmem:[#allocation6 + $0x64] sm:$0xf] %v479
  %496 = vst [vmem:[#allocation6 + $0x68] sm:$0xf] %v480
  %497 = vst [vmem:[#allocation6 + $0x6c] sm:$0xf] %v481
  %498 = vst [vmem:[#allocation6 + $0x70] sm:$0xf] %v482
  %499 = vst [vmem:[#allocation6 + $0x74] sm:$0xf] %v483
  %500 = vst [vmem:[#allocation6 + $0x78] sm:$0xf] %v484
  %501 = vst [vmem:[#allocation6 + $0x7c] sm:$0xf] %v485
  %v502 = vld [vmem:[#allocation2] sm:$0xff]
  %v503 = vld [vmem:[#allocation2 + $0x8] sm:$0xff]
  %v504 = vld [vmem:[#allocation2 + $0x10] sm:$0xff]
  %v505 = vld [vmem:[#allocation2 + $0x18] sm:$0xff]
  %v506 = vld [vmem:[#allocation2 + $0x20] sm:$0xff]
  %v507 = vld [vmem:[#allocation2 + $0x28] sm:$0xff]
  %v508 = vld [vmem:[#allocation2 + $0x30] sm:$0xff]
  %v509 = vld [vmem:[#allocation2 + $0x38] sm:$0xff]
  %v510 = vld [vmem:[#allocation2 + $0x40] sm:$0xff]
  %v511 = vld [vmem:[#allocation2 + $0x48] sm:$0xff]
  %v512 = vld [vmem:[#allocation2 + $0x50] sm:$0xff]
  %v513 = vld [vmem:[#allocation2 + $0x58] sm:$0xff]
  %v514 = vld [vmem:[#allocation2 + $0x60] sm:$0xff]
  %v515 = vld [vmem:[#allocation2 + $0x68] sm:$0xff]
  %v516 = vld [vmem:[#allocation2 + $0x70] sm:$0xff]
  %v517 = vld [vmem:[#allocation2 + $0x78] sm:$0xff]
  %v518 = vld [vmem:[#allocation2 + $0x80] sm:$0xff]
  %v519 = vld [vmem:[#allocation2 + $0x88] sm:$0xff]
  %v520 = vld [vmem:[#allocation2 + $0x90] sm:$0xff]
  %v521 = vld [vmem:[#allocation2 + $0x98] sm:$0xff]
  %v522 = vld [vmem:[#allocation2 + $0xa0] sm:$0xff]
  %v523 = vld [vmem:[#allocation2 + $0xa8] sm:$0xff]
  %v524 = vld [vmem:[#allocation2 + $0xb0] sm:$0xff]
  %v525 = vld [vmem:[#allocation2 + $0xb8] sm:$0xff]
  %v526 = vld [vmem:[#allocation2 + $0xc0] sm:$0xff]
  %v527 = vld [vmem:[#allocation2 + $0xc8] sm:$0xff]
  %v528 = vld [vmem:[#allocation2 + $0xd0] sm:$0xff]
  %v529 = vld [vmem:[#allocation2 + $0xd8] sm:$0xff]
  %v530 = vld [vmem:[#allocation2 + $0xe0] sm:$0xff]
  %v531 = vld [vmem:[#allocation2 + $0xe8] sm:$0xff]
  %v532 = vld [vmem:[#allocation2 + $0xf0] sm:$0xff]
  %v533 = vld [vmem:[#allocation2 + $0xf8] sm:$0xff]
  %v534 = vld [vmem:[#allocation5] sm:$0xf]
  %v535 = vld [vmem:[#allocation5 + $0x4] sm:$0xf]
  %v536 = vld [vmem:[#allocation5 + $0x8] sm:$0xf]
  %v537 = vld [vmem:[#allocation5 + $0xc] sm:$0xf]
  %v538 = vld [vmem:[#allocation5 + $0x10] sm:$0xf]
  %v539 = vld [vmem:[#allocation5 + $0x14] sm:$0xf]
  %v540 = vld [vmem:[#allocation5 + $0x18] sm:$0xf]
  %v541 = vld [vmem:[#allocation5 + $0x1c] sm:$0xf]
  %v542 = vld [vmem:[#allocation5 + $0x20] sm:$0xf]
  %v543 = vld [vmem:[#allocation5 + $0x24] sm:$0xf]
  %v544 = vld [vmem:[#allocation5 + $0x28] sm:$0xf]
  %v545 = vld [vmem:[#allocation5 + $0x2c] sm:$0xf]
  %v546 = vld [vmem:[#allocation5 + $0x30] sm:$0xf]
  %v547 = vld [vmem:[#allocation5 + $0x34] sm:$0xf]
  %v548 = vld [vmem:[#allocation5 + $0x38] sm:$0xf]
  %v549 = vld [vmem:[#allocation5 + $0x3c] sm:$0xf]
  %v550 = vld [vmem:[#allocation5 + $0x40] sm:$0xf]
  %v551 = vld [vmem:[#allocation5 + $0x44] sm:$0xf]
  %v552 = vld [vmem:[#allocation5 + $0x48] sm:$0xf]
  %v553 = vld [vmem:[#allocation5 + $0x4c] sm:$0xf]
  %v554 = vld [vmem:[#allocation5 + $0x50] sm:$0xf]
  %v555 = vld [vmem:[#allocation5 + $0x54] sm:$0xf]
  %v556 = vld [vmem:[#allocation5 + $0x58] sm:$0xf]
  %v557 = vld [vmem:[#allocation5 + $0x5c] sm:$0xf]
  %v558 = vld [vmem:[#allocation5 + $0x60] sm:$0xf]
  %v559 = vld [vmem:[#allocation5 + $0x64] sm:$0xf]
  %v560 = vld [vmem:[#allocation5 + $0x68] sm:$0xf]
  %v561 = vld [vmem:[#allocation5 + $0x6c] sm:$0xf]
  %v562 = vld [vmem:[#allocation5 + $0x70] sm:$0xf]
  %v563 = vld [vmem:[#allocation5 + $0x74] sm:$0xf]
  %v564 = vld [vmem:[#allocation5 + $0x78] sm:$0xf]
  %v565 = vld [vmem:[#allocation5 + $0x7c] sm:$0xf]
  %v598 = vunpack.c.l.b16 %v502
  %v599 = vunpack.c.h.b16 %v502
  %v600 = vunpack.c.l.b16 %v503
  %v601 = vunpack.c.h.b16 %v503
  %v602 = vunpack.c.l.b16 %v504
  %v603 = vunpack.c.h.b16 %v504
  %v604 = vunpack.c.l.b16 %v505
  %v605 = vunpack.c.h.b16 %v505
  %v606 = vunpack.c.l.b16 %v506
  %v607 = vunpack.c.h.b16 %v506
  %v608 = vunpack.c.l.b16 %v507
  %v609 = vunpack.c.h.b16 %v507
  %v610 = vunpack.c.l.b16 %v508
  %v611 = vunpack.c.h.b16 %v508
  %v612 = vunpack.c.l.b16 %v509
  %v613 = vunpack.c.h.b16 %v509
  %v614 = vunpack.c.l.b16 %v510
  %v615 = vunpack.c.h.b16 %v510
  %v616 = vunpack.c.l.b16 %v511
  %v617 = vunpack.c.h.b16 %v511
  %v618 = vunpack.c.l.b16 %v512
  %v619 = vunpack.c.h.b16 %v512
  %v620 = vunpack.c.l.b16 %v513
  %v621 = vunpack.c.h.b16 %v513
  %v622 = vunpack.c.l.b16 %v514
  %v623 = vunpack.c.h.b16 %v514
  %v624 = vunpack.c.l.b16 %v515
  %v625 = vunpack.c.h.b16 %v515
  %v626 = vunpack.c.l.b16 %v516
  %v627 = vunpack.c.h.b16 %v516
  %v628 = vunpack.c.l.b16 %v517
  %v629 = vunpack.c.h.b16 %v517
  %v630 = vunpack.c.l.b16 %v518
  %v631 = vunpack.c.h.b16 %v518
  %v632 = vunpack.c.l.b16 %v519
  %v633 = vunpack.c.h.b16 %v519
  %v634 = vunpack.c.l.b16 %v520
  %v635 = vunpack.c.h.b16 %v520
  %v636 = vunpack.c.l.b16 %v521
  %v637 = vunpack.c.h.b16 %v521
  %v638 = vunpack.c.l.b16 %v522
  %v639 = vunpack.c.h.b16 %v522
  %v640 = vunpack.c.l.b16 %v523
  %v641 = vunpack.c.h.b16 %v523
  %v642 = vunpack.c.l.b16 %v524
  %v643 = vunpack.c.h.b16 %v524
  %v644 = vunpack.c.l.b16 %v525
  %v645 = vunpack.c.h.b16 %v525
  %v646 = vunpack.c.l.b16 %v526
  %v647 = vunpack.c.h.b16 %v526
  %v648 = vunpack.c.l.b16 %v527
  %v649 = vunpack.c.h.b16 %v527
  %v650 = vunpack.c.l.b16 %v528
  %v651 = vunpack.c.h.b16 %v528
  %v652 = vunpack.c.l.b16 %v529
  %v653 = vunpack.c.h.b16 %v529
  %v654 = vunpack.c.l.b16 %v530
  %v655 = vunpack.c.h.b16 %v530
  %v656 = vunpack.c.l.b16 %v531
  %v657 = vunpack.c.h.b16 %v531
  %v658 = vunpack.c.l.b16 %v532
  %v659 = vunpack.c.h.b16 %v532
  %v660 = vunpack.c.l.b16 %v533
  %v661 = vunpack.c.h.b16 %v533
  %v662 = vpack.c.b16 %v600, %v598
  %v663 = vpack.c.b16 %v601, %v599
  %v664 = vpack.c.b16 %v604, %v602
  %v665 = vpack.c.b16 %v605, %v603
  %v666 = vpack.c.b16 %v608, %v606
  %v667 = vpack.c.b16 %v609, %v607
  %v668 = vpack.c.b16 %v612, %v610
  %v669 = vpack.c.b16 %v613, %v611
  %v670 = vpack.c.b16 %v616, %v614
  %v671 = vpack.c.b16 %v617, %v615
  %v672 = vpack.c.b16 %v620, %v618
  %v673 = vpack.c.b16 %v621, %v619
  %v674 = vpack.c.b16 %v624, %v622
  %v675 = vpack.c.b16 %v625, %v623
  %v676 = vpack.c.b16 %v628, %v626
  %v677 = vpack.c.b16 %v629, %v627
  %v678 = vpack.c.b16 %v632, %v630
  %v679 = vpack.c.b16 %v633, %v631
  %v680 = vpack.c.b16 %v636, %v634
  %v681 = vpack.c.b16 %v637, %v635
  %v682 = vpack.c.b16 %v640, %v638
  %v683 = vpack.c.b16 %v641, %v639
  %v684 = vpack.c.b16 %v644, %v642
  %v685 = vpack.c.b16 %v645, %v643
  %v686 = vpack.c.b16 %v648, %v646
  %v687 = vpack.c.b16 %v649, %v647
  %v688 = vpack.c.b16 %v652, %v650
  %v689 = vpack.c.b16 %v653, %v651
  %v690 = vpack.c.b16 %v656, %v654
  %v691 = vpack.c.b16 %v657, %v655
  %v692 = vpack.c.b16 %v660, %v658
  %v693 = vpack.c.b16 %v661, %v659
  %v758 = vunpack.c.l.b16 %v534
  %v759 = vunpack.c.l.b16 %v535
  %v760 = vunpack.c.l.b16 %v536
  %v761 = vunpack.c.l.b16 %v537
  %v762 = vunpack.c.l.b16 %v538
  %v763 = vunpack.c.l.b16 %v539
  %v764 = vunpack.c.l.b16 %v540
  %v765 = vunpack.c.l.b16 %v541
  %v766 = vunpack.c.l.b16 %v542
  %v767 = vunpack.c.l.b16 %v543
  %v768 = vunpack.c.l.b16 %v544
  %v769 = vunpack.c.l.b16 %v545
  %v770 = vunpack.c.l.b16 %v546
  %v771 = vunpack.c.l.b16 %v547
  %v772 = vunpack.c.l.b16 %v548
  %v773 = vunpack.c.l.b16 %v549
  %v774 = vunpack.c.l.b16 %v550
  %v775 = vunpack.c.l.b16 %v551
  %v776 = vunpack.c.l.b16 %v552
  %v777 = vunpack.c.l.b16 %v553
  %v778 = vunpack.c.l.b16 %v554
  %v779 = vunpack.c.l.b16 %v555
  %v780 = vunpack.c.l.b16 %v556
  %v781 = vunpack.c.l.b16 %v557
  %v782 = vunpack.c.l.b16 %v558
  %v783 = vunpack.c.l.b16 %v559
  %v784 = vunpack.c.l.b16 %v560
  %v785 = vunpack.c.l.b16 %v561
  %v786 = vunpack.c.l.b16 %v562
  %v787 = vunpack.c.l.b16 %v563
  %v788 = vunpack.c.l.b16 %v564
  %v789 = vunpack.c.l.b16 %v565
  %v790 = vpack.c.b16 %v759, %v758
  %v791 = vpack.c.b16 %v761, %v760
  %v792 = vpack.c.b16 %v763, %v762
  %v793 = vpack.c.b16 %v765, %v764
  %v794 = vpack.c.b16 %v767, %v766
  %v795 = vpack.c.b16 %v769, %v768
  %v796 = vpack.c.b16 %v771, %v770
  %v797 = vpack.c.b16 %v773, %v772
  %v798 = vpack.c.b16 %v775, %v774
  %v799 = vpack.c.b16 %v777, %v776
  %v800 = vpack.c.b16 %v779, %v778
  %v801 = vpack.c.b16 %v781, %v780
  %v802 = vpack.c.b16 %v783, %v782
  %v803 = vpack.c.b16 %v785, %v784
  %v804 = vpack.c.b16 %v787, %v786
  %v805 = vpack.c.b16 %v789, %v788
  %822 = vmatpush.bf16.msra.mxu0 %v797
  %823 = vmatpush.bf16.msra.mxu0 %v796
  %824 = vmatpush.bf16.msra.mxu0 %v795
  %825 = vmatpush.bf16.msra.mxu0 %v794
  %826 = vmatpush.bf16.msra.mxu0 %v793
  %827 = vmatpush.bf16.msra.mxu0 %v792
  %828 = vmatpush.bf16.msra.mxu0 %v791
  %829 = vmatpush.bf16.msra.mxu0 %v790
  %830 = vmatmul.bf16.gmra.mxu0 %v662
  %v831 = vpop.f32.mrf.mxu0
  %v832 = vadd.f32 0.0, %v831
  %v833 = vpop.f32.mrf.mxu0
  %v834 = vadd.f32 0.0, %v833
  %835 = vmatmul.bf16.gmra.mxu0 %v664
  %v836 = vpop.f32.mrf.mxu0
  %v837 = vadd.f32 0.0, %v836
  %v838 = vpop.f32.mrf.mxu0
  %v839 = vadd.f32 0.0, %v838
  %840 = vmatmul.bf16.gmra.mxu0 %v666
  %v841 = vpop.f32.mrf.mxu0
  %v842 = vadd.f32 0.0, %v841
  %v843 = vpop.f32.mrf.mxu0
  %v844 = vadd.f32 0.0, %v843
  %845 = vmatmul.bf16.gmra.mxu0 %v668
  %v846 = vpop.f32.mrf.mxu0
  %v847 = vadd.f32 0.0, %v846
  %v848 = vpop.f32.mrf.mxu0
  %v849 = vadd.f32 0.0, %v848
  %850 = vmatmul.bf16.gmra.mxu0 %v670
  %v851 = vpop.f32.mrf.mxu0
  %v852 = vadd.f32 0.0, %v851
  %v853 = vpop.f32.mrf.mxu0
  %v854 = vadd.f32 0.0, %v853
  %855 = vmatmul.bf16.gmra.mxu0 %v672
  %v856 = vpop.f32.mrf.mxu0
  %v857 = vadd.f32 0.0, %v856
  %v858 = vpop.f32.mrf.mxu0
  %v859 = vadd.f32 0.0, %v858
  %860 = vmatmul.bf16.gmra.mxu0 %v674
  %v861 = vpop.f32.mrf.mxu0
  %v862 = vadd.f32 0.0, %v861
  %v863 = vpop.f32.mrf.mxu0
  %v864 = vadd.f32 0.0, %v863
  %865 = vmatmul.bf16.gmra.mxu0 %v676
  %v866 = vpop.f32.mrf.mxu0
  %v867 = vadd.f32 0.0, %v866
  %v868 = vpop.f32.mrf.mxu0
  %v869 = vadd.f32 0.0, %v868
  %870 = vmatmul.bf16.gmra.mxu0 %v678
  %v871 = vpop.f32.mrf.mxu0
  %v872 = vadd.f32 0.0, %v871
  %v873 = vpop.f32.mrf.mxu0
  %v874 = vadd.f32 0.0, %v873
  %875 = vmatmul.bf16.gmra.mxu0 %v680
  %v876 = vpop.f32.mrf.mxu0
  %v877 = vadd.f32 0.0, %v876
  %v878 = vpop.f32.mrf.mxu0
  %v879 = vadd.f32 0.0, %v878
  %880 = vmatmul.bf16.gmra.mxu0 %v682
  %v881 = vpop.f32.mrf.mxu0
  %v882 = vadd.f32 0.0, %v881
  %v883 = vpop.f32.mrf.mxu0
  %v884 = vadd.f32 0.0, %v883
  %885 = vmatmul.bf16.gmra.mxu0 %v684
  %v886 = vpop.f32.mrf.mxu0
  %v887 = vadd.f32 0.0, %v886
  %v888 = vpop.f32.mrf.mxu0
  %v889 = vadd.f32 0.0, %v888
  %890 = vmatmul.bf16.gmra.mxu0 %v686
  %v891 = vpop.f32.mrf.mxu0
  %v892 = vadd.f32 0.0, %v891
  %v893 = vpop.f32.mrf.mxu0
  %v894 = vadd.f32 0.0, %v893
  %895 = vmatmul.bf16.gmra.mxu0 %v688
  %v896 = vpop.f32.mrf.mxu0
  %v897 = vadd.f32 0.0, %v896
  %v898 = vpop.f32.mrf.mxu0
  %v899 = vadd.f32 0.0, %v898
  %900 = vmatmul.bf16.gmra.mxu0 %v690
  %v901 = vpop.f32.mrf.mxu0
  %v902 = vadd.f32 0.0, %v901
  %v903 = vpop.f32.mrf.mxu0
  %v904 = vadd.f32 0.0, %v903
  %905 = vmatmul.bf16.gmra.mxu0 %v692
  %v906 = vpop.f32.mrf.mxu0
  %v907 = vadd.f32 0.0, %v906
  %v908 = vpop.f32.mrf.mxu0
  %v909 = vadd.f32 0.0, %v908
  %910 = vdwg.mxu0
  %911 = vmatpush.bf16.msra.mxu0 %v805
  %912 = vmatpush.bf16.msra.mxu0 %v804
  %913 = vmatpush.bf16.msra.mxu0 %v803
  %914 = vmatpush.bf16.msra.mxu0 %v802
  %915 = vmatpush.bf16.msra.mxu0 %v801
  %916 = vmatpush.bf16.msra.mxu0 %v800
  %917 = vmatpush.bf16.msra.mxu0 %v799
  %918 = vmatpush.bf16.msra.mxu0 %v798
  %919 = vmatmul.bf16.gmra.mxu0 %v663
  %v920 = vpop.f32.mrf.mxu0
  %v921 = vadd.f32 %v832, %v920
  %v922 = vpop.f32.mrf.mxu0
  %v923 = vadd.f32 %v834, %v922
  %924 = vmatmul.bf16.gmra.mxu0 %v665
  %v925 = vpop.f32.mrf.mxu0
  %v926 = vadd.f32 %v837, %v925
  %v927 = vpop.f32.mrf.mxu0
  %v928 = vadd.f32 %v839, %v927
  %929 = vmatmul.bf16.gmra.mxu0 %v667
  %v930 = vpop.f32.mrf.mxu0
  %v931 = vadd.f32 %v842, %v930
  %v932 = vpop.f32.mrf.mxu0
  %v933 = vadd.f32 %v844, %v932
  %934 = vmatmul.bf16.gmra.mxu0 %v669
  %v935 = vpop.f32.mrf.mxu0
  %v936 = vadd.f32 %v847, %v935
  %v937 = vpop.f32.mrf.mxu0
  %v938 = vadd.f32 %v849, %v937
  %939 = vmatmul.bf16.gmra.mxu0 %v671
  %v940 = vpop.f32.mrf.mxu0
  %v941 = vadd.f32 %v852, %v940
  %v942 = vpop.f32.mrf.mxu0
  %v943 = vadd.f32 %v854, %v942
  %944 = vmatmul.bf16.gmra.mxu0 %v673
  %v945 = vpop.f32.mrf.mxu0
  %v946 = vadd.f32 %v857, %v945
  %v947 = vpop.f32.mrf.mxu0
  %v948 = vadd.f32 %v859, %v947
  %949 = vmatmul.bf16.gmra.mxu0 %v675
  %v950 = vpop.f32.mrf.mxu0
  %v951 = vadd.f32 %v862, %v950
  %v952 = vpop.f32.mrf.mxu0
  %v953 = vadd.f32 %v864, %v952
  %954 = vmatmul.bf16.gmra.mxu0 %v677
  %v955 = vpop.f32.mrf.mxu0
  %v956 = vadd.f32 %v867, %v955
  %v957 = vpop.f32.mrf.mxu0
  %v958 = vadd.f32 %v869, %v957
  %959 = vmatmul.bf16.gmra.mxu0 %v679
  %v960 = vpop.f32.mrf.mxu0
  %v961 = vadd.f32 %v872, %v960
  %v962 = vpop.f32.mrf.mxu0
  %v963 = vadd.f32 %v874, %v962
  %964 = vmatmul.bf16.gmra.mxu0 %v681
  %v965 = vpop.f32.mrf.mxu0
  %v966 = vadd.f32 %v877, %v965
  %v967 = vpop.f32.mrf.mxu0
  %v968 = vadd.f32 %v879, %v967
  %969 = vmatmul.bf16.gmra.mxu0 %v683
  %v970 = vpop.f32.mrf.mxu0
  %v971 = vadd.f32 %v882, %v970
  %v972 = vpop.f32.mrf.mxu0
  %v973 = vadd.f32 %v884, %v972
  %974 = vmatmul.bf16.gmra.mxu0 %v685
  %v975 = vpop.f32.mrf.mxu0
  %v976 = vadd.f32 %v887, %v975
  %v977 = vpop.f32.mrf.mxu0
  %v978 = vadd.f32 %v889, %v977
  %979 = vmatmul.bf16.gmra.mxu0 %v687
  %v980 = vpop.f32.mrf.mxu0
  %v981 = vadd.f32 %v892, %v980
  %v982 = vpop.f32.mrf.mxu0
  %v983 = vadd.f32 %v894, %v982
  %984 = vmatmul.bf16.gmra.mxu0 %v689
  %v985 = vpop.f32.mrf.mxu0
  %v986 = vadd.f32 %v897, %v985
  %v987 = vpop.f32.mrf.mxu0
  %v988 = vadd.f32 %v899, %v987
  %989 = vmatmul.bf16.gmra.mxu0 %v691
  %v990 = vpop.f32.mrf.mxu0
  %v991 = vadd.f32 %v902, %v990
  %v992 = vpop.f32.mrf.mxu0
  %v993 = vadd.f32 %v904, %v992
  %994 = vmatmul.bf16.gmra.mxu0 %v693
  %v995 = vpop.f32.mrf.mxu0
  %v996 = vadd.f32 %v907, %v995
  %v997 = vpop.f32.mrf.mxu0
  %v998 = vadd.f32 %v909, %v997
  %999 = vdwg.mxu0
  %v1000 = vld [vmem:[%s4] sm:$0xff]
  %v1001 = vld [vmem:[%s4 + $0x8] sm:$0xff]
  %v1002 = vld [vmem:[%s4 + $0x10] sm:$0xff]
  %v1003 = vld [vmem:[%s4 + $0x18] sm:$0xff]
  %v1004 = vld [vmem:[%s4 + $0x20] sm:$0xff]
  %v1005 = vld [vmem:[%s4 + $0x28] sm:$0xff]
  %v1006 = vld [vmem:[%s4 + $0x30] sm:$0xff]
  %v1007 = vld [vmem:[%s4 + $0x38] sm:$0xff]
  %v1008 = vld [vmem:[%s4 + $0x40] sm:$0xff]
  %v1009 = vld [vmem:[%s4 + $0x48] sm:$0xff]
  %v1010 = vld [vmem:[%s4 + $0x50] sm:$0xff]
  %v1011 = vld [vmem:[%s4 + $0x58] sm:$0xff]
  %v1012 = vld [vmem:[%s4 + $0x60] sm:$0xff]
  %v1013 = vld [vmem:[%s4 + $0x68] sm:$0xff]
  %v1014 = vld [vmem:[%s4 + $0x70] sm:$0xff]
  %v1015 = vld [vmem:[%s4 + $0x78] sm:$0xff]
  %v1016 = vld [vmem:[%s4 + $0x80] sm:$0xff]
  %v1017 = vld [vmem:[%s4 + $0x88] sm:$0xff]
  %v1018 = vld [vmem:[%s4 + $0x90] sm:$0xff]
  %v1019 = vld [vmem:[%s4 + $0x98] sm:$0xff]
  %v1020 = vld [vmem:[%s4 + $0xa0] sm:$0xff]
  %v1021 = vld [vmem:[%s4 + $0xa8] sm:$0xff]
  %v1022 = vld [vmem:[%s4 + $0xb0] sm:$0xff]
  %v1023 = vld [vmem:[%s4 + $0xb8] sm:$0xff]
  %v1024 = vld [vmem:[%s4 + $0xc0] sm:$0xff]
  %v1025 = vld [vmem:[%s4 + $0xc8] sm:$0xff]
  %v1026 = vld [vmem:[%s4 + $0xd0] sm:$0xff]
  %v1027 = vld [vmem:[%s4 + $0xd8] sm:$0xff]
  %v1028 = vld [vmem:[%s4 + $0xe0] sm:$0xff]
  %v1029 = vld [vmem:[%s4 + $0xe8] sm:$0xff]
  %v1030 = vld [vmem:[%s4 + $0xf0] sm:$0xff]
  %v1031 = vld [vmem:[%s4 + $0xf8] sm:$0xff]
  %v1032 = vadd.f32 %v1000, %v921
  %v1033 = vadd.f32 %v1001, %v923
  %v1034 = vadd.f32 %v1002, %v926
  %v1035 = vadd.f32 %v1003, %v928
  %v1036 = vadd.f32 %v1004, %v931
  %v1037 = vadd.f32 %v1005, %v933
  %v1038 = vadd.f32 %v1006, %v936
  %v1039 = vadd.f32 %v1007, %v938
  %v1040 = vadd.f32 %v1008, %v941
  %v1041 = vadd.f32 %v1009, %v943
  %v1042 = vadd.f32 %v1010, %v946
  %v1043 = vadd.f32 %v1011, %v948
  %v1044 = vadd.f32 %v1012, %v951
  %v1045 = vadd.f32 %v1013, %v953
  %v1046 = vadd.f32 %v1014, %v956
  %v1047 = vadd.f32 %v1015, %v958
  %v1048 = vadd.f32 %v1016, %v961
  %v1049 = vadd.f32 %v1017, %v963
  %v1050 = vadd.f32 %v1018, %v966
  %v1051 = vadd.f32 %v1019, %v968
  %v1052 = vadd.f32 %v1020, %v971
  %v1053 = vadd.f32 %v1021, %v973
  %v1054 = vadd.f32 %v1022, %v976
  %v1055 = vadd.f32 %v1023, %v978
  %v1056 = vadd.f32 %v1024, %v981
  %v1057 = vadd.f32 %v1025, %v983
  %v1058 = vadd.f32 %v1026, %v986
  %v1059 = vadd.f32 %v1027, %v988
  %v1060 = vadd.f32 %v1028, %v991
  %v1061 = vadd.f32 %v1029, %v993
  %v1062 = vadd.f32 %v1030, %v996
  %v1063 = vadd.f32 %v1031, %v998
  %1064 = vst [vmem:[%s4] sm:$0xff] %v1032
  %1065 = vst [vmem:[%s4 + $0x8] sm:$0xff] %v1033
  %1066 = vst [vmem:[%s4 + $0x10] sm:$0xff] %v1034
  %1067 = vst [vmem:[%s4 + $0x18] sm:$0xff] %v1035
  %1068 = vst [vmem:[%s4 + $0x20] sm:$0xff] %v1036
  %1069 = vst [vmem:[%s4 + $0x28] sm:$0xff] %v1037
  %1070 = vst [vmem:[%s4 + $0x30] sm:$0xff] %v1038
  %1071 = vst [vmem:[%s4 + $0x38] sm:$0xff] %v1039
  %1072 = vst [vmem:[%s4 + $0x40] sm:$0xff] %v1040
  %1073 = vst [vmem:[%s4 + $0x48] sm:$0xff] %v1041
  %1074 = vst [vmem:[%s4 + $0x50] sm:$0xff] %v1042
  %1075 = vst [vmem:[%s4 + $0x58] sm:$0xff] %v1043
  %1076 = vst [vmem:[%s4 + $0x60] sm:$0xff] %v1044
  %1077 = vst [vmem:[%s4 + $0x68] sm:$0xff] %v1045
  %1078 = vst [vmem:[%s4 + $0x70] sm:$0xff] %v1046
  %1079 = vst [vmem:[%s4 + $0x78] sm:$0xff] %v1047
  %1080 = vst [vmem:[%s4 + $0x80] sm:$0xff] %v1048
  %1081 = vst [vmem:[%s4 + $0x88] sm:$0xff] %v1049
  %1082 = vst [vmem:[%s4 + $0x90] sm:$0xff] %v1050
  %1083 = vst [vmem:[%s4 + $0x98] sm:$0xff] %v1051
  %1084 = vst [vmem:[%s4 + $0xa0] sm:$0xff] %v1052
  %1085 = vst [vmem:[%s4 + $0xa8] sm:$0xff] %v1053
  %1086 = vst [vmem:[%s4 + $0xb0] sm:$0xff] %v1054
  %1087 = vst [vmem:[%s4 + $0xb8] sm:$0xff] %v1055
  %1088 = vst [vmem:[%s4 + $0xc0] sm:$0xff] %v1056
  %1089 = vst [vmem:[%s4 + $0xc8] sm:$0xff] %v1057
  %1090 = vst [vmem:[%s4 + $0xd0] sm:$0xff] %v1058
  %1091 = vst [vmem:[%s4 + $0xd8] sm:$0xff] %v1059
  %1092 = vst [vmem:[%s4 + $0xe0] sm:$0xff] %v1060
  %1093 = vst [vmem:[%s4 + $0xe8] sm:$0xff] %v1061
  %1094 = vst [vmem:[%s4 + $0xf0] sm:$0xff] %v1062
  %1095 = vst [vmem:[%s4 + $0xf8] sm:$0xff] %v1063
  %v1096 = vpack.c.bf16 %v921, %v921
  %v1097 = vpack.c.bf16 %v923, %v923
  %v1098 = vpack.c.bf16 %v926, %v926
  %v1099 = vpack.c.bf16 %v928, %v928
  %v1100 = vpack.c.bf16 %v931, %v931
  %v1101 = vpack.c.bf16 %v933, %v933
  %v1102 = vpack.c.bf16 %v936, %v936
  %v1103 = vpack.c.bf16 %v938, %v938
  %v1104 = vpack.c.bf16 %v941, %v941
  %v1105 = vpack.c.bf16 %v943, %v943
  %v1106 = vpack.c.bf16 %v946, %v946
  %v1107 = vpack.c.bf16 %v948, %v948
  %v1108 = vpack.c.bf16 %v951, %v951
  %v1109 = vpack.c.bf16 %v953, %v953
  %v1110 = vpack.c.bf16 %v956, %v956
  %v1111 = vpack.c.bf16 %v958, %v958
  %v1112 = vpack.c.bf16 %v961, %v961
  %v1113 = vpack.c.bf16 %v963, %v963
  %v1114 = vpack.c.bf16 %v966, %v966
  %v1115 = vpack.c.bf16 %v968, %v968
  %v1116 = vpack.c.bf16 %v971, %v971
  %v1117 = vpack.c.bf16 %v973, %v973
  %v1118 = vpack.c.bf16 %v976, %v976
  %v1119 = vpack.c.bf16 %v978, %v978
  %v1120 = vpack.c.bf16 %v981, %v981
  %v1121 = vpack.c.bf16 %v983, %v983
  %v1122 = vpack.c.bf16 %v986, %v986
  %v1123 = vpack.c.bf16 %v988, %v988
  %v1124 = vpack.c.bf16 %v991, %v991
  %v1125 = vpack.c.bf16 %v993, %v993
  %v1126 = vpack.c.bf16 %v996, %v996
  %v1127 = vpack.c.bf16 %v998, %v998
  %1128 = vst [vmem:[#allocation5] sm:$0xf] %v1096
  %1129 = vst [vmem:[#allocation5 + $0x4] sm:$0xf] %v1097
  %1130 = vst [vmem:[#allocation5 + $0x8] sm:$0xf] %v1098
  %1131 = vst [vmem:[#allocation5 + $0xc] sm:$0xf] %v1099
  %1132 = vst [vmem:[#allocation5 + $0x10] sm:$0xf] %v1100
  %1133 = vst [vmem:[#allocation5 + $0x14] sm:$0xf] %v1101
  %1134 = vst [vmem:[#allocation5 + $0x18] sm:$0xf] %v1102
  %1135 = vst [vmem:[#allocation5 + $0x1c] sm:$0xf] %v1103
  %1136 = vst [vmem:[#allocation5 + $0x20] sm:$0xf] %v1104
  %1137 = vst [vmem:[#allocation5 + $0x24] sm:$0xf] %v1105
  %1138 = vst [vmem:[#allocation5 + $0x28] sm:$0xf] %v1106
  %1139 = vst [vmem:[#allocation5 + $0x2c] sm:$0xf] %v1107
  %1140 = vst [vmem:[#allocation5 + $0x30] sm:$0xf] %v1108
  %1141 = vst [vmem:[#allocation5 + $0x34] sm:$0xf] %v1109
  %1142 = vst [vmem:[#allocation5 + $0x38] sm:$0xf] %v1110
  %1143 = vst [vmem:[#allocation5 + $0x3c] sm:$0xf] %v1111
  %1144 = vst [vmem:[#allocation5 + $0x40] sm:$0xf] %v1112
  %1145 = vst [vmem:[#allocation5 + $0x44] sm:$0xf] %v1113
  %1146 = vst [vmem:[#allocation5 + $0x48] sm:$0xf] %v1114
  %1147 = vst [vmem:[#allocation5 + $0x4c] sm:$0xf] %v1115
  %1148 = vst [vmem:[#allocation5 + $0x50] sm:$0xf] %v1116
  %1149 = vst [vmem:[#allocation5 + $0x54] sm:$0xf] %v1117
  %1150 = vst [vmem:[#allocation5 + $0x58] sm:$0xf] %v1118
  %1151 = vst [vmem:[#allocation5 + $0x5c] sm:$0xf] %v1119
  %1152 = vst [vmem:[#allocation5 + $0x60] sm:$0xf] %v1120
  %1153 = vst [vmem:[#allocation5 + $0x64] sm:$0xf] %v1121
  %1154 = vst [vmem:[#allocation5 + $0x68] sm:$0xf] %v1122
  %1155 = vst [vmem:[#allocation5 + $0x6c] sm:$0xf] %v1123
  %1156 = vst [vmem:[#allocation5 + $0x70] sm:$0xf] %v1124
  %1157 = vst [vmem:[#allocation5 + $0x74] sm:$0xf] %v1125
  %1158 = vst [vmem:[#allocation5 + $0x78] sm:$0xf] %v1126
  %1159 = vst [vmem:[#allocation5 + $0x7c] sm:$0xf] %v1127
  %v1160 = vld [vmem:[#allocation2] sm:$0xff]
  %v1161 = vld [vmem:[#allocation2 + $0x8] sm:$0xff]
  %v1162 = vld [vmem:[#allocation2 + $0x10] sm:$0xff]
  %v1163 = vld [vmem:[#allocation2 + $0x18] sm:$0xff]
  %v1164 = vld [vmem:[#allocation2 + $0x20] sm:$0xff]
  %v1165 = vld [vmem:[#allocation2 + $0x28] sm:$0xff]
  %v1166 = vld [vmem:[#allocation2 + $0x30] sm:$0xff]
  %v1167 = vld [vmem:[#allocation2 + $0x38] sm:$0xff]
  %v1168 = vld [vmem:[#allocation2 + $0x40] sm:$0xff]
  %v1169 = vld [vmem:[#allocation2 + $0x48] sm:$0xff]
  %v1170 = vld [vmem:[#allocation2 + $0x50] sm:$0xff]
  %v1171 = vld [vmem:[#allocation2 + $0x58] sm:$0xff]
  %v1172 = vld [vmem:[#allocation2 + $0x60] sm:$0xff]
  %v1173 = vld [vmem:[#allocation2 + $0x68] sm:$0xff]
  %v1174 = vld [vmem:[#allocation2 + $0x70] sm:$0xff]
  %v1175 = vld [vmem:[#allocation2 + $0x78] sm:$0xff]
  %v1176 = vld [vmem:[#allocation2 + $0x80] sm:$0xff]
  %v1177 = vld [vmem:[#allocation2 + $0x88] sm:$0xff]
  %v1178 = vld [vmem:[#allocation2 + $0x90] sm:$0xff]
  %v1179 = vld [vmem:[#allocation2 + $0x98] sm:$0xff]
  %v1180 = vld [vmem:[#allocation2 + $0xa0] sm:$0xff]
  %v1181 = vld [vmem:[#allocation2 + $0xa8] sm:$0xff]
  %v1182 = vld [vmem:[#allocation2 + $0xb0] sm:$0xff]
  %v1183 = vld [vmem:[#allocation2 + $0xb8] sm:$0xff]
  %v1184 = vld [vmem:[#allocation2 + $0xc0] sm:$0xff]
  %v1185 = vld [vmem:[#allocation2 + $0xc8] sm:$0xff]
  %v1186 = vld [vmem:[#allocation2 + $0xd0] sm:$0xff]
  %v1187 = vld [vmem:[#allocation2 + $0xd8] sm:$0xff]
  %v1188 = vld [vmem:[#allocation2 + $0xe0] sm:$0xff]
  %v1189 = vld [vmem:[#allocation2 + $0xe8] sm:$0xff]
  %v1190 = vld [vmem:[#allocation2 + $0xf0] sm:$0xff]
  %v1191 = vld [vmem:[#allocation2 + $0xf8] sm:$0xff]
  %v1192 = vld [vmem:[#allocation5] sm:$0xf]
  %v1193 = vld [vmem:[#allocation5 + $0x4] sm:$0xf]
  %v1194 = vld [vmem:[#allocation5 + $0x8] sm:$0xf]
  %v1195 = vld [vmem:[#allocation5 + $0xc] sm:$0xf]
  %v1196 = vld [vmem:[#allocation5 + $0x10] sm:$0xf]
  %v1197 = vld [vmem:[#allocation5 + $0x14] sm:$0xf]
  %v1198 = vld [vmem:[#allocation5 + $0x18] sm:$0xf]
  %v1199 = vld [vmem:[#allocation5 + $0x1c] sm:$0xf]
  %v1200 = vld [vmem:[#allocation5 + $0x20] sm:$0xf]
  %v1201 = vld [vmem:[#allocation5 + $0x24] sm:$0xf]
  %v1202 = vld [vmem:[#allocation5 + $0x28] sm:$0xf]
  %v1203 = vld [vmem:[#allocation5 + $0x2c] sm:$0xf]
  %v1204 = vld [vmem:[#allocation5 + $0x30] sm:$0xf]
  %v1205 = vld [vmem:[#allocation5 + $0x34] sm:$0xf]
  %v1206 = vld [vmem:[#allocation5 + $0x38] sm:$0xf]
  %v1207 = vld [vmem:[#allocation5 + $0x3c] sm:$0xf]
  %v1208 = vld [vmem:[#allocation5 + $0x40] sm:$0xf]
  %v1209 = vld [vmem:[#allocation5 + $0x44] sm:$0xf]
  %v1210 = vld [vmem:[#allocation5 + $0x48] sm:$0xf]
  %v1211 = vld [vmem:[#allocation5 + $0x4c] sm:$0xf]
  %v1212 = vld [vmem:[#allocation5 + $0x50] sm:$0xf]
  %v1213 = vld [vmem:[#allocation5 + $0x54] sm:$0xf]
  %v1214 = vld [vmem:[#allocation5 + $0x58] sm:$0xf]
  %v1215 = vld [vmem:[#allocation5 + $0x5c] sm:$0xf]
  %v1216 = vld [vmem:[#allocation5 + $0x60] sm:$0xf]
  %v1217 = vld [vmem:[#allocation5 + $0x64] sm:$0xf]
  %v1218 = vld [vmem:[#allocation5 + $0x68] sm:$0xf]
  %v1219 = vld [vmem:[#allocation5 + $0x6c] sm:$0xf]
  %v1220 = vld [vmem:[#allocation5 + $0x70] sm:$0xf]
  %v1221 = vld [vmem:[#allocation5 + $0x74] sm:$0xf]
  %v1222 = vld [vmem:[#allocation5 + $0x78] sm:$0xf]
  %v1223 = vld [vmem:[#allocation5 + $0x7c] sm:$0xf]
  %v1256 = vunpack.c.l.b16 %v1160
  %v1257 = vunpack.c.h.b16 %v1160
  %v1258 = vunpack.c.l.b16 %v1161
  %v1259 = vunpack.c.h.b16 %v1161
  %v1260 = vunpack.c.l.b16 %v1162
  %v1261 = vunpack.c.h.b16 %v1162
  %v1262 = vunpack.c.l.b16 %v1163
  %v1263 = vunpack.c.h.b16 %v1163
  %v1264 = vunpack.c.l.b16 %v1164
  %v1265 = vunpack.c.h.b16 %v1164
  %v1266 = vunpack.c.l.b16 %v1165
  %v1267 = vunpack.c.h.b16 %v1165
  %v1268 = vunpack.c.l.b16 %v1166
  %v1269 = vunpack.c.h.b16 %v1166
  %v1270 = vunpack.c.l.b16 %v1167
  %v1271 = vunpack.c.h.b16 %v1167
  %v1272 = vunpack.c.l.b16 %v1168
  %v1273 = vunpack.c.h.b16 %v1168
  %v1274 = vunpack.c.l.b16 %v1169
  %v1275 = vunpack.c.h.b16 %v1169
  %v1276 = vunpack.c.l.b16 %v1170
  %v1277 = vunpack.c.h.b16 %v1170
  %v1278 = vunpack.c.l.b16 %v1171
  %v1279 = vunpack.c.h.b16 %v1171
  %v1280 = vunpack.c.l.b16 %v1172
  %v1281 = vunpack.c.h.b16 %v1172
  %v1282 = vunpack.c.l.b16 %v1173
  %v1283 = vunpack.c.h.b16 %v1173
  %v1284 = vunpack.c.l.b16 %v1174
  %v1285 = vunpack.c.h.b16 %v1174
  %v1286 = vunpack.c.l.b16 %v1175
  %v1287 = vunpack.c.h.b16 %v1175
  %v1288 = vunpack.c.l.b16 %v1176
  %v1289 = vunpack.c.h.b16 %v1176
  %v1290 = vunpack.c.l.b16 %v1177
  %v1291 = vunpack.c.h.b16 %v1177
  %v1292 = vunpack.c.l.b16 %v1178
  %v1293 = vunpack.c.h.b16 %v1178
  %v1294 = vunpack.c.l.b16 %v1179
  %v1295 = vunpack.c.h.b16 %v1179
  %v1296 = vunpack.c.l.b16 %v1180
  %v1297 = vunpack.c.h.b16 %v1180
  %v1298 = vunpack.c.l.b16 %v1181
  %v1299 = vunpack.c.h.b16 %v1181
  %v1300 = vunpack.c.l.b16 %v1182
  %v1301 = vunpack.c.h.b16 %v1182
  %v1302 = vunpack.c.l.b16 %v1183
  %v1303 = vunpack.c.h.b16 %v1183
  %v1304 = vunpack.c.l.b16 %v1184
  %v1305 = vunpack.c.h.b16 %v1184
  %v1306 = vunpack.c.l.b16 %v1185
  %v1307 = vunpack.c.h.b16 %v1185
  %v1308 = vunpack.c.l.b16 %v1186
  %v1309 = vunpack.c.h.b16 %v1186
  %v1310 = vunpack.c.l.b16 %v1187
  %v1311 = vunpack.c.h.b16 %v1187
  %v1312 = vunpack.c.l.b16 %v1188
  %v1313 = vunpack.c.h.b16 %v1188
  %v1314 = vunpack.c.l.b16 %v1189
  %v1315 = vunpack.c.h.b16 %v1189
  %v1316 = vunpack.c.l.b16 %v1190
  %v1317 = vunpack.c.h.b16 %v1190
  %v1318 = vunpack.c.l.b16 %v1191
  %v1319 = vunpack.c.h.b16 %v1191
  %v1320 = vpack.c.b16 %v1258, %v1256
  %v1321 = vpack.c.b16 %v1259, %v1257
  %v1322 = vpack.c.b16 %v1262, %v1260
  %v1323 = vpack.c.b16 %v1263, %v1261
  %v1324 = vpack.c.b16 %v1266, %v1264
  %v1325 = vpack.c.b16 %v1267, %v1265
  %v1326 = vpack.c.b16 %v1270, %v1268
  %v1327 = vpack.c.b16 %v1271, %v1269
  %v1328 = vpack.c.b16 %v1274, %v1272
  %v1329 = vpack.c.b16 %v1275, %v1273
  %v1330 = vpack.c.b16 %v1278, %v1276
  %v1331 = vpack.c.b16 %v1279, %v1277
  %v1332 = vpack.c.b16 %v1282, %v1280
  %v1333 = vpack.c.b16 %v1283, %v1281
  %v1334 = vpack.c.b16 %v1286, %v1284
  %v1335 = vpack.c.b16 %v1287, %v1285
  %v1336 = vpack.c.b16 %v1290, %v1288
  %v1337 = vpack.c.b16 %v1291, %v1289
  %v1338 = vpack.c.b16 %v1294, %v1292
  %v1339 = vpack.c.b16 %v1295, %v1293
  %v1340 = vpack.c.b16 %v1298, %v1296
  %v1341 = vpack.c.b16 %v1299, %v1297
  %v1342 = vpack.c.b16 %v1302, %v1300
  %v1343 = vpack.c.b16 %v1303, %v1301
  %v1344 = vpack.c.b16 %v1306, %v1304
  %v1345 = vpack.c.b16 %v1307, %v1305
  %v1346 = vpack.c.b16 %v1310, %v1308
  %v1347 = vpack.c.b16 %v1311, %v1309
  %v1348 = vpack.c.b16 %v1314, %v1312
  %v1349 = vpack.c.b16 %v1315, %v1313
  %v1350 = vpack.c.b16 %v1318, %v1316
  %v1351 = vpack.c.b16 %v1319, %v1317
  %v1416 = vunpack.c.l.b16 %v1192
  %v1417 = vunpack.c.l.b16 %v1193
  %v1418 = vunpack.c.l.b16 %v1194
  %v1419 = vunpack.c.l.b16 %v1195
  %v1420 = vunpack.c.l.b16 %v1196
  %v1421 = vunpack.c.l.b16 %v1197
  %v1422 = vunpack.c.l.b16 %v1198
  %v1423 = vunpack.c.l.b16 %v1199
  %v1424 = vunpack.c.l.b16 %v1200
  %v1425 = vunpack.c.l.b16 %v1201
  %v1426 = vunpack.c.l.b16 %v1202
  %v1427 = vunpack.c.l.b16 %v1203
  %v1428 = vunpack.c.l.b16 %v1204
  %v1429 = vunpack.c.l.b16 %v1205
  %v1430 = vunpack.c.l.b16 %v1206
  %v1431 = vunpack.c.l.b16 %v1207
  %v1432 = vunpack.c.l.b16 %v1208
  %v1433 = vunpack.c.l.b16 %v1209
  %v1434 = vunpack.c.l.b16 %v1210
  %v1435 = vunpack.c.l.b16 %v1211
  %v1436 = vunpack.c.l.b16 %v1212
  %v1437 = vunpack.c.l.b16 %v1213
  %v1438 = vunpack.c.l.b16 %v1214
  %v1439 = vunpack.c.l.b16 %v1215
  %v1440 = vunpack.c.l.b16 %v1216
  %v1441 = vunpack.c.l.b16 %v1217
  %v1442 = vunpack.c.l.b16 %v1218
  %v1443 = vunpack.c.l.b16 %v1219
  %v1444 = vunpack.c.l.b16 %v1220
  %v1445 = vunpack.c.l.b16 %v1221
  %v1446 = vunpack.c.l.b16 %v1222
  %v1447 = vunpack.c.l.b16 %v1223
  %v1448 = vpack.c.b16 %v1417, %v1416
  %v1449 = vpack.c.b16 %v1419, %v1418
  %v1450 = vpack.c.b16 %v1421, %v1420
  %v1451 = vpack.c.b16 %v1423, %v1422
  %v1452 = vpack.c.b16 %v1425, %v1424
  %v1453 = vpack.c.b16 %v1427, %v1426
  %v1454 = vpack.c.b16 %v1429, %v1428
  %v1455 = vpack.c.b16 %v1431, %v1430
  %v1456 = vpack.c.b16 %v1433, %v1432
  %v1457 = vpack.c.b16 %v1435, %v1434
  %v1458 = vpack.c.b16 %v1437, %v1436
  %v1459 = vpack.c.b16 %v1439, %v1438
  %v1460 = vpack.c.b16 %v1441, %v1440
  %v1461 = vpack.c.b16 %v1443, %v1442
  %v1462 = vpack.c.b16 %v1445, %v1444
  %v1463 = vpack.c.b16 %v1447, %v1446
  %1480 = vmatpush.bf16.msra.mxu0 %v1455
  %1481 = vmatpush.bf16.msra.mxu0 %v1454
  %1482 = vmatpush.bf16.msra.mxu0 %v1453
  %1483 = vmatpush.bf16.msra.mxu0 %v1452
  %1484 = vmatpush.bf16.msra.mxu0 %v1451
  %1485 = vmatpush.bf16.msra.mxu0 %v1450
  %1486 = vmatpush.bf16.msra.mxu0 %v1449
  %1487 = vmatpush.bf16.msra.mxu0 %v1448
  %1488 = vmatmul.bf16.gmra.mxu0 %v1320
  %v1489 = vpop.f32.mrf.mxu0
  %v1490 = vadd.f32 0.0, %v1489
  %v1491 = vpop.f32.mrf.mxu0
  %v1492 = vadd.f32 0.0, %v1491
  %1493 = vmatmul.bf16.gmra.mxu0 %v1322
  %v1494 = vpop.f32.mrf.mxu0
  %v1495 = vadd.f32 0.0, %v1494
  %v1496 = vpop.f32.mrf.mxu0
  %v1497 = vadd.f32 0.0, %v1496
  %1498 = vmatmul.bf16.gmra.mxu0 %v1324
  %v1499 = vpop.f32.mrf.mxu0
  %v1500 = vadd.f32 0.0, %v1499
  %v1501 = vpop.f32.mrf.mxu0
  %v1502 = vadd.f32 0.0, %v1501
  %1503 = vmatmul.bf16.gmra.mxu0 %v1326
  %v1504 = vpop.f32.mrf.mxu0
  %v1505 = vadd.f32 0.0, %v1504
  %v1506 = vpop.f32.mrf.mxu0
  %v1507 = vadd.f32 0.0, %v1506
  %1508 = vmatmul.bf16.gmra.mxu0 %v1328
  %v1509 = vpop.f32.mrf.mxu0
  %v1510 = vadd.f32 0.0, %v1509
  %v1511 = vpop.f32.mrf.mxu0
  %v1512 = vadd.f32 0.0, %v1511
  %1513 = vmatmul.bf16.gmra.mxu0 %v1330
  %v1514 = vpop.f32.mrf.mxu0
  %v1515 = vadd.f32 0.0, %v1514
  %v1516 = vpop.f32.mrf.mxu0
  %v1517 = vadd.f32 0.0, %v1516
  %1518 = vmatmul.bf16.gmra.mxu0 %v1332
  %v1519 = vpop.f32.mrf.mxu0
  %v1520 = vadd.f32 0.0, %v1519
  %v1521 = vpop.f32.mrf.mxu0
  %v1522 = vadd.f32 0.0, %v1521
  %1523 = vmatmul.bf16.gmra.mxu0 %v1334
  %v1524 = vpop.f32.mrf.mxu0
  %v1525 = vadd.f32 0.0, %v1524
  %v1526 = vpop.f32.mrf.mxu0
  %v1527 = vadd.f32 0.0, %v1526
  %1528 = vmatmul.bf16.gmra.mxu0 %v1336
  %v1529 = vpop.f32.mrf.mxu0
  %v1530 = vadd.f32 0.0, %v1529
  %v1531 = vpop.f32.mrf.mxu0
  %v1532 = vadd.f32 0.0, %v1531
  %1533 = vmatmul.bf16.gmra.mxu0 %v1338
  %v1534 = vpop.f32.mrf.mxu0
  %v1535 = vadd.f32 0.0, %v1534
  %v1536 = vpop.f32.mrf.mxu0
  %v1537 = vadd.f32 0.0, %v1536
  %1538 = vmatmul.bf16.gmra.mxu0 %v1340
  %v1539 = vpop.f32.mrf.mxu0
  %v1540 = vadd.f32 0.0, %v1539
  %v1541 = vpop.f32.mrf.mxu0
  %v1542 = vadd.f32 0.0, %v1541
  %1543 = vmatmul.bf16.gmra.mxu0 %v1342
  %v1544 = vpop.f32.mrf.mxu0
  %v1545 = vadd.f32 0.0, %v1544
  %v1546 = vpop.f32.mrf.mxu0
  %v1547 = vadd.f32 0.0, %v1546
  %1548 = vmatmul.bf16.gmra.mxu0 %v1344
  %v1549 = vpop.f32.mrf.mxu0
  %v1550 = vadd.f32 0.0, %v1549
  %v1551 = vpop.f32.mrf.mxu0
  %v1552 = vadd.f32 0.0, %v1551
  %1553 = vmatmul.bf16.gmra.mxu0 %v1346
  %v1554 = vpop.f32.mrf.mxu0
  %v1555 = vadd.f32 0.0, %v1554
  %v1556 = vpop.f32.mrf.mxu0
  %v1557 = vadd.f32 0.0, %v1556
  %1558 = vmatmul.bf16.gmra.mxu0 %v1348
  %v1559 = vpop.f32.mrf.mxu0
  %v1560 = vadd.f32 0.0, %v1559
  %v1561 = vpop.f32.mrf.mxu0
  %v1562 = vadd.f32 0.0, %v1561
  %1563 = vmatmul.bf16.gmra.mxu0 %v1350
  %v1564 = vpop.f32.mrf.mxu0
  %v1565 = vadd.f32 0.0, %v1564
  %v1566 = vpop.f32.mrf.mxu0
  %v1567 = vadd.f32 0.0, %v1566
  %1568 = vdwg.mxu0
  %1569 = vmatpush.bf16.msra.mxu0 %v1463
  %1570 = vmatpush.bf16.msra.mxu0 %v1462
  %1571 = vmatpush.bf16.msra.mxu0 %v1461
  %1572 = vmatpush.bf16.msra.mxu0 %v1460
  %1573 = vmatpush.bf16.msra.mxu0 %v1459
  %1574 = vmatpush.bf16.msra.mxu0 %v1458
  %1575 = vmatpush.bf16.msra.mxu0 %v1457
  %1576 = vmatpush.bf16.msra.mxu0 %v1456
  %1577 = vmatmul.bf16.gmra.mxu0 %v1321
  %v1578 = vpop.f32.mrf.mxu0
  %v1579 = vadd.f32 %v1490, %v1578
  %v1580 = vpop.f32.mrf.mxu0
  %v1581 = vadd.f32 %v1492, %v1580
  %1582 = vmatmul.bf16.gmra.mxu0 %v1323
  %v1583 = vpop.f32.mrf.mxu0
  %v1584 = vadd.f32 %v1495, %v1583
  %v1585 = vpop.f32.mrf.mxu0
  %v1586 = vadd.f32 %v1497, %v1585
  %1587 = vmatmul.bf16.gmra.mxu0 %v1325
  %v1588 = vpop.f32.mrf.mxu0
  %v1589 = vadd.f32 %v1500, %v1588
  %v1590 = vpop.f32.mrf.mxu0
  %v1591 = vadd.f32 %v1502, %v1590
  %1592 = vmatmul.bf16.gmra.mxu0 %v1327
  %v1593 = vpop.f32.mrf.mxu0
  %v1594 = vadd.f32 %v1505, %v1593
  %v1595 = vpop.f32.mrf.mxu0
  %v1596 = vadd.f32 %v1507, %v1595
  %1597 = vmatmul.bf16.gmra.mxu0 %v1329
  %v1598 = vpop.f32.mrf.mxu0
  %v1599 = vadd.f32 %v1510, %v1598
  %v1600 = vpop.f32.mrf.mxu0
  %v1601 = vadd.f32 %v1512, %v1600
  %1602 = vmatmul.bf16.gmra.mxu0 %v1331
  %v1603 = vpop.f32.mrf.mxu0
  %v1604 = vadd.f32 %v1515, %v1603
  %v1605 = vpop.f32.mrf.mxu0
  %v1606 = vadd.f32 %v1517, %v1605
  %1607 = vmatmul.bf16.gmra.mxu0 %v1333
  %v1608 = vpop.f32.mrf.mxu0
  %v1609 = vadd.f32 %v1520, %v1608
  %v1610 = vpop.f32.mrf.mxu0
  %v1611 = vadd.f32 %v1522, %v1610
  %1612 = vmatmul.bf16.gmra.mxu0 %v1335
  %v1613 = vpop.f32.mrf.mxu0
  %v1614 = vadd.f32 %v1525, %v1613
  %v1615 = vpop.f32.mrf.mxu0
  %v1616 = vadd.f32 %v1527, %v1615
  %1617 = vmatmul.bf16.gmra.mxu0 %v1337
  %v1618 = vpop.f32.mrf.mxu0
  %v1619 = vadd.f32 %v1530, %v1618
  %v1620 = vpop.f32.mrf.mxu0
  %v1621 = vadd.f32 %v1532, %v1620
  %1622 = vmatmul.bf16.gmra.mxu0 %v1339
  %v1623 = vpop.f32.mrf.mxu0
  %v1624 = vadd.f32 %v1535, %v1623
  %v1625 = vpop.f32.mrf.mxu0
  %v1626 = vadd.f32 %v1537, %v1625
  %1627 = vmatmul.bf16.gmra.mxu0 %v1341
  %v1628 = vpop.f32.mrf.mxu0
  %v1629 = vadd.f32 %v1540, %v1628
  %v1630 = vpop.f32.mrf.mxu0
  %v1631 = vadd.f32 %v1542, %v1630
  %1632 = vmatmul.bf16.gmra.mxu0 %v1343
  %v1633 = vpop.f32.mrf.mxu0
  %v1634 = vadd.f32 %v1545, %v1633
  %v1635 = vpop.f32.mrf.mxu0
  %v1636 = vadd.f32 %v1547, %v1635
  %1637 = vmatmul.bf16.gmra.mxu0 %v1345
  %v1638 = vpop.f32.mrf.mxu0
  %v1639 = vadd.f32 %v1550, %v1638
  %v1640 = vpop.f32.mrf.mxu0
  %v1641 = vadd.f32 %v1552, %v1640
  %1642 = vmatmul.bf16.gmra.mxu0 %v1347
  %v1643 = vpop.f32.mrf.mxu0
  %v1644 = vadd.f32 %v1555, %v1643
  %v1645 = vpop.f32.mrf.mxu0
  %v1646 = vadd.f32 %v1557, %v1645
  %1647 = vmatmul.bf16.gmra.mxu0 %v1349
  %v1648 = vpop.f32.mrf.mxu0
  %v1649 = vadd.f32 %v1560, %v1648
  %v1650 = vpop.f32.mrf.mxu0
  %v1651 = vadd.f32 %v1562, %v1650
  %1652 = vmatmul.bf16.gmra.mxu0 %v1351
  %v1653 = vpop.f32.mrf.mxu0
  %v1654 = vadd.f32 %v1565, %v1653
  %v1655 = vpop.f32.mrf.mxu0
  %v1656 = vadd.f32 %v1567, %v1655
  %1657 = vdwg.mxu0
  %v1658 = vld [vmem:[%s4] sm:$0xff]
  %v1659 = vld [vmem:[%s4 + $0x8] sm:$0xff]
  %v1660 = vld [vmem:[%s4 + $0x10] sm:$0xff]
  %v1661 = vld [vmem:[%s4 + $0x18] sm:$0xff]
  %v1662 = vld [vmem:[%s4 + $0x20] sm:$0xff]
  %v1663 = vld [vmem:[%s4 + $0x28] sm:$0xff]
  %v1664 = vld [vmem:[%s4 + $0x30] sm:$0xff]
  %v1665 = vld [vmem:[%s4 + $0x38] sm:$0xff]
  %v1666 = vld [vmem:[%s4 + $0x40] sm:$0xff]
  %v1667 = vld [vmem:[%s4 + $0x48] sm:$0xff]
  %v1668 = vld [vmem:[%s4 + $0x50] sm:$0xff]
  %v1669 = vld [vmem:[%s4 + $0x58] sm:$0xff]
  %v1670 = vld [vmem:[%s4 + $0x60] sm:$0xff]
  %v1671 = vld [vmem:[%s4 + $0x68] sm:$0xff]
  %v1672 = vld [vmem:[%s4 + $0x70] sm:$0xff]
  %v1673 = vld [vmem:[%s4 + $0x78] sm:$0xff]
  %v1674 = vld [vmem:[%s4 + $0x80] sm:$0xff]
  %v1675 = vld [vmem:[%s4 + $0x88] sm:$0xff]
  %v1676 = vld [vmem:[%s4 + $0x90] sm:$0xff]
  %v1677 = vld [vmem:[%s4 + $0x98] sm:$0xff]
  %v1678 = vld [vmem:[%s4 + $0xa0] sm:$0xff]
  %v1679 = vld [vmem:[%s4 + $0xa8] sm:$0xff]
  %v1680 = vld [vmem:[%s4 + $0xb0] sm:$0xff]
  %v1681 = vld [vmem:[%s4 + $0xb8] sm:$0xff]
  %v1682 = vld [vmem:[%s4 + $0xc0] sm:$0xff]
  %v1683 = vld [vmem:[%s4 + $0xc8] sm:$0xff]
  %v1684 = vld [vmem:[%s4 + $0xd0] sm:$0xff]
  %v1685 = vld [vmem:[%s4 + $0xd8] sm:$0xff]
  %v1686 = vld [vmem:[%s4 + $0xe0] sm:$0xff]
  %v1687 = vld [vmem:[%s4 + $0xe8] sm:$0xff]
  %v1688 = vld [vmem:[%s4 + $0xf0] sm:$0xff]
  %v1689 = vld [vmem:[%s4 + $0xf8] sm:$0xff]
  %v1690 = vadd.f32 %v1658, %v1579
  %v1691 = vadd.f32 %v1659, %v1581
  %v1692 = vadd.f32 %v1660, %v1584
  %v1693 = vadd.f32 %v1661, %v1586
  %v1694 = vadd.f32 %v1662, %v1589
  %v1695 = vadd.f32 %v1663, %v1591
  %v1696 = vadd.f32 %v1664, %v1594
  %v1697 = vadd.f32 %v1665, %v1596
  %v1698 = vadd.f32 %v1666, %v1599
  %v1699 = vadd.f32 %v1667, %v1601
  %v1700 = vadd.f32 %v1668, %v1604
  %v1701 = vadd.f32 %v1669, %v1606
  %v1702 = vadd.f32 %v1670, %v1609
  %v1703 = vadd.f32 %v1671, %v1611
  %v1704 = vadd.f32 %v1672, %v1614
  %v1705 = vadd.f32 %v1673, %v1616
  %v1706 = vadd.f32 %v1674, %v1619
  %v1707 = vadd.f32 %v1675, %v1621
  %v1708 = vadd.f32 %v1676, %v1624
  %v1709 = vadd.f32 %v1677, %v1626
  %v1710 = vadd.f32 %v1678, %v1629
  %v1711 = vadd.f32 %v1679, %v1631
  %v1712 = vadd.f32 %v1680, %v1634
  %v1713 = vadd.f32 %v1681, %v1636
  %v1714 = vadd.f32 %v1682, %v1639
  %v1715 = vadd.f32 %v1683, %v1641
  %v1716 = vadd.f32 %v1684, %v1644
  %v1717 = vadd.f32 %v1685, %v1646
  %v1718 = vadd.f32 %v1686, %v1649
  %v1719 = vadd.f32 %v1687, %v1651
  %v1720 = vadd.f32 %v1688, %v1654
  %v1721 = vadd.f32 %v1689, %v1656
  %1722 = vst [vmem:[%s4] sm:$0xff] %v1690
  %1723 = vst [vmem:[%s4 + $0x8] sm:$0xff] %v1691
  %1724 = vst [vmem:[%s4 + $0x10] sm:$0xff] %v1692
  %1725 = vst [vmem:[%s4 + $0x18] sm:$0xff] %v1693
  %1726 = vst [vmem:[%s4 + $0x20] sm:$0xff] %v1694
  %1727 = vst [vmem:[%s4 + $0x28] sm:$0xff] %v1695
  %1728 = vst [vmem:[%s4 + $0x30] sm:$0xff] %v1696
  %1729 = vst [vmem:[%s4 + $0x38] sm:$0xff] %v1697
  %1730 = vst [vmem:[%s4 + $0x40] sm:$0xff] %v1698
  %1731 = vst [vmem:[%s4 + $0x48] sm:$0xff] %v1699
  %1732 = vst [vmem:[%s4 + $0x50] sm:$0xff] %v1700
  %1733 = vst [vmem:[%s4 + $0x58] sm:$0xff] %v1701
  %1734 = vst [vmem:[%s4 + $0x60] sm:$0xff] %v1702
  %1735 = vst [vmem:[%s4 + $0x68] sm:$0xff] %v1703
  %1736 = vst [vmem:[%s4 + $0x70] sm:$0xff] %v1704
  %1737 = vst [vmem:[%s4 + $0x78] sm:$0xff] %v1705
  %1738 = vst [vmem:[%s4 + $0x80] sm:$0xff] %v1706
  %1739 = vst [vmem:[%s4 + $0x88] sm:$0xff] %v1707
  %1740 = vst [vmem:[%s4 + $0x90] sm:$0xff] %v1708
  %1741 = vst [vmem:[%s4 + $0x98] sm:$0xff] %v1709
  %1742 = vst [vmem:[%s4 + $0xa0] sm:$0xff] %v1710
  %1743 = vst [vmem:[%s4 + $0xa8] sm:$0xff] %v1711
  %1744 = vst [vmem:[%s4 + $0xb0] sm:$0xff] %v1712
  %1745 = vst [vmem:[%s4 + $0xb8] sm:$0xff] %v1713
  %1746 = vst [vmem:[%s4 + $0xc0] sm:$0xff] %v1714
  %1747 = vst [vmem:[%s4 + $0xc8] sm:$0xff] %v1715
  %1748 = vst [vmem:[%s4 + $0xd0] sm:$0xff] %v1716
  %1749 = vst [vmem:[%s4 + $0xd8] sm:$0xff] %v1717
  %1750 = vst [vmem:[%s4 + $0xe0] sm:$0xff] %v1718
  %1751 = vst [vmem:[%s4 + $0xe8] sm:$0xff] %v1719
  %1752 = vst [vmem:[%s4 + $0xf0] sm:$0xff] %v1720
  %1753 = vst [vmem:[%s4 + $0xf8] sm:$0xff] %v1721
  %v1754 = vpack.c.bf16 %v1579, %v1579
  %v1755 = vpack.c.bf16 %v1581, %v1581
  %v1756 = vpack.c.bf16 %v1584, %v1584
  %v1757 = vpack.c.bf16 %v1586, %v1586
  %v1758 = vpack.c.bf16 %v1589, %v1589
  %v1759 = vpack.c.bf16 %v1591, %v1591
  %v1760 = vpack.c.bf16 %v1594, %v1594
  %v1761 = vpack.c.bf16 %v1596, %v1596
  %v1762 = vpack.c.bf16 %v1599, %v1599
  %v1763 = vpack.c.bf16 %v1601, %v1601
  %v1764 = vpack.c.bf16 %v1604, %v1604
  %v1765 = vpack.c.bf16 %v1606, %v1606
  %v1766 = vpack.c.bf16 %v1609, %v1609
  %v1767 = vpack.c.bf16 %v1611, %v1611
  %v1768 = vpack.c.bf16 %v1614, %v1614
  %v1769 = vpack.c.bf16 %v1616, %v1616
  %v1770 = vpack.c.bf16 %v1619, %v1619
  %v1771 = vpack.c.bf16 %v1621, %v1621
  %v1772 = vpack.c.bf16 %v1624, %v1624
  %v1773 = vpack.c.bf16 %v1626, %v1626
  %v1774 = vpack.c.bf16 %v1629, %v1629
  %v1775 = vpack.c.bf16 %v1631, %v1631
  %v1776 = vpack.c.bf16 %v1634, %v1634
  %v1777 = vpack.c.bf16 %v1636, %v1636
  %v1778 = vpack.c.bf16 %v1639, %v1639
  %v1779 = vpack.c.bf16 %v1641, %v1641
  %v1780 = vpack.c.bf16 %v1644, %v1644
  %v1781 = vpack.c.bf16 %v1646, %v1646
  %v1782 = vpack.c.bf16 %v1649, %v1649
  %v1783 = vpack.c.bf16 %v1651, %v1651
  %v1784 = vpack.c.bf16 %v1654, %v1654
  %v1785 = vpack.c.bf16 %v1656, %v1656
  %1786 = vst [vmem:[#allocation5] sm:$0xf] %v1754
  %1787 = vst [vmem:[#allocation5 + $0x4] sm:$0xf] %v1755
  %1788 = vst [vmem:[#allocation5 + $0x8] sm:$0xf] %v1756
  %1789 = vst [vmem:[#allocation5 + $0xc] sm:$0xf] %v1757
  %1790 = vst [vmem:[#allocation5 + $0x10] sm:$0xf] %v1758
  %1791 = vst [vmem:[#allocation5 + $0x14] sm:$0xf] %v1759
  %1792 = vst [vmem:[#allocation5 + $0x18] sm:$0xf] %v1760
  %1793 = vst [vmem:[#allocation5 + $0x1c] sm:$0xf] %v1761
  %1794 = vst [vmem:[#allocation5 + $0x20] sm:$0xf] %v1762
  %1795 = vst [vmem:[#allocation5 + $0x24] sm:$0xf] %v1763
  %1796 = vst [vmem:[#allocation5 + $0x28] sm:$0xf] %v1764
  %1797 = vst [vmem:[#allocation5 + $0x2c] sm:$0xf] %v1765
  %1798 = vst [vmem:[#allocation5 + $0x30] sm:$0xf] %v1766
  %1799 = vst [vmem:[#allocation5 + $0x34] sm:$0xf] %v1767
  %1800 = vst [vmem:[#allocation5 + $0x38] sm:$0xf] %v1768
  %1801 = vst [vmem:[#allocation5 + $0x3c] sm:$0xf] %v1769
  %1802 = vst [vmem:[#allocation5 + $0x40] sm:$0xf] %v1770
  %1803 = vst [vmem:[#allocation5 + $0x44] sm:$0xf] %v1771
  %1804 = vst [vmem:[#allocation5 + $0x48] sm:$0xf] %v1772
  %1805 = vst [vmem:[#allocation5 + $0x4c] sm:$0xf] %v1773
  %1806 = vst [vmem:[#allocation5 + $0x50] sm:$0xf] %v1774
  %1807 = vst [vmem:[#allocation5 + $0x54] sm:$0xf] %v1775
  %1808 = vst [vmem:[#allocation5 + $0x58] sm:$0xf] %v1776
  %1809 = vst [vmem:[#allocation5 + $0x5c] sm:$0xf] %v1777
  %1810 = vst [vmem:[#allocation5 + $0x60] sm:$0xf] %v1778
  %1811 = vst [vmem:[#allocation5 + $0x64] sm:$0xf] %v1779
  %1812 = vst [vmem:[#allocation5 + $0x68] sm:$0xf] %v1780
  %1813 = vst [vmem:[#allocation5 + $0x6c] sm:$0xf] %v1781
  %1814 = vst [vmem:[#allocation5 + $0x70] sm:$0xf] %v1782
  %1815 = vst [vmem:[#allocation5 + $0x74] sm:$0xf] %v1783
  %1816 = vst [vmem:[#allocation5 + $0x78] sm:$0xf] %v1784
  %1817 = vst [vmem:[#allocation5 + $0x7c] sm:$0xf] %v1785
  %v1818 = vld [vmem:[#allocation5 + $0x40] sm:$0xf]
  %v1819 = vld [vmem:[#allocation5 + $0x44] sm:$0xf]
  %v1820 = vld [vmem:[#allocation5 + $0x48] sm:$0xf]
  %v1821 = vld [vmem:[#allocation5 + $0x4c] sm:$0xf]
  %v1822 = vld [vmem:[#allocation5 + $0x50] sm:$0xf]
  %v1823 = vld [vmem:[#allocation5 + $0x54] sm:$0xf]
  %v1824 = vld [vmem:[#allocation5 + $0x58] sm:$0xf]
  %v1825 = vld [vmem:[#allocation5 + $0x5c] sm:$0xf]
  %v1826 = vld [vmem:[#allocation5 + $0x60] sm:$0xf]
  %v1827 = vld [vmem:[#allocation5 + $0x64] sm:$0xf]
  %v1828 = vld [vmem:[#allocation5 + $0x68] sm:$0xf]
  %v1829 = vld [vmem:[#allocation5 + $0x6c] sm:$0xf]
  %v1830 = vld [vmem:[#allocation5 + $0x70] sm:$0xf]
  %v1831 = vld [vmem:[#allocation5 + $0x74] sm:$0xf]
  %v1832 = vld [vmem:[#allocation5 + $0x78] sm:$0xf]
  %v1833 = vld [vmem:[#allocation5 + $0x7c] sm:$0xf]
  %1834 = vst [vmem:[%s273 + $0x40] sm:$0xf] %v1818
  %1835 = vst [vmem:[%s273 + $0x44] sm:$0xf] %v1819
  %1836 = vst [vmem:[%s273 + $0x48] sm:$0xf] %v1820
  %1837 = vst [vmem:[%s273 + $0x4c] sm:$0xf] %v1821
  %1838 = vst [vmem:[%s273 + $0x50] sm:$0xf] %v1822
  %1839 = vst [vmem:[%s273 + $0x54] sm:$0xf] %v1823
  %1840 = vst [vmem:[%s273 + $0x58] sm:$0xf] %v1824
  %1841 = vst [vmem:[%s273 + $0x5c] sm:$0xf] %v1825
  %1842 = vst [vmem:[%s273 + $0x60] sm:$0xf] %v1826
  %1843 = vst [vmem:[%s273 + $0x64] sm:$0xf] %v1827
  %1844 = vst [vmem:[%s273 + $0x68] sm:$0xf] %v1828
  %1845 = vst [vmem:[%s273 + $0x6c] sm:$0xf] %v1829
  %1846 = vst [vmem:[%s273 + $0x70] sm:$0xf] %v1830
  %1847 = vst [vmem:[%s273 + $0x74] sm:$0xf] %v1831
  %1848 = vst [vmem:[%s273 + $0x78] sm:$0xf] %v1832
  %1849 = vst [vmem:[%s273 + $0x7c] sm:$0xf] %v1833
  %v1850 = vld [vmem:[#allocation2] sm:$0xff]
  %v1851 = vld [vmem:[#allocation2 + $0x8] sm:$0xff]
  %v1852 = vld [vmem:[#allocation2 + $0x10] sm:$0xff]
  %v1853 = vld [vmem:[#allocation2 + $0x18] sm:$0xff]
  %v1854 = vld [vmem:[#allocation2 + $0x20] sm:$0xff]
  %v1855 = vld [vmem:[#allocation2 + $0x28] sm:$0xff]
  %v1856 = vld [vmem:[#allocation2 + $0x30] sm:$0xff]
  %v1857 = vld [vmem:[#allocation2 + $0x38] sm:$0xff]
  %v1858 = vld [vmem:[#allocation2 + $0x40] sm:$0xff]
  %v1859 = vld [vmem:[#allocation2 + $0x48] sm:$0xff]
  %v1860 = vld [vmem:[#allocation2 + $0x50] sm:$0xff]
  %v1861 = vld [vmem:[#allocation2 + $0x58] sm:$0xff]
  %v1862 = vld [vmem:[#allocation2 + $0x60] sm:$0xff]
  %v1863 = vld [vmem:[#allocation2 + $0x68] sm:$0xff]
  %v1864 = vld [vmem:[#allocation2 + $0x70] sm:$0xff]
  %v1865 = vld [vmem:[#allocation2 + $0x78] sm:$0xff]
  %v1866 = vld [vmem:[#allocation2 + $0x80] sm:$0xff]
  %v1867 = vld [vmem:[#allocation2 + $0x88] sm:$0xff]
  %v1868 = vld [vmem:[#allocation2 + $0x90] sm:$0xff]
  %v1869 = vld [vmem:[#allocation2 + $0x98] sm:$0xff]
  %v1870 = vld [vmem:[#allocation2 + $0xa0] sm:$0xff]
  %v1871 = vld [vmem:[#allocation2 + $0xa8] sm:$0xff]
  %v1872 = vld [vmem:[#allocation2 + $0xb0] sm:$0xff]
  %v1873 = vld [vmem:[#allocation2 + $0xb8] sm:$0xff]
  %v1874 = vld [vmem:[#allocation2 + $0xc0] sm:$0xff]
  %v1875 = vld [vmem:[#allocation2 + $0xc8] sm:$0xff]
  %v1876 = vld [vmem:[#allocation2 + $0xd0] sm:$0xff]
  %v1877 = vld [vmem:[#allocation2 + $0xd8] sm:$0xff]
  %v1878 = vld [vmem:[#allocation2 + $0xe0] sm:$0xff]
  %v1879 = vld [vmem:[#allocation2 + $0xe8] sm:$0xff]
  %v1880 = vld [vmem:[#allocation2 + $0xf0] sm:$0xff]
  %v1881 = vld [vmem:[#allocation2 + $0xf8] sm:$0xff]
  %v1882 = vld [vmem:[#allocation5] sm:$0xf]
  %v1883 = vld [vmem:[#allocation5 + $0x4] sm:$0xf]
  %v1884 = vld [vmem:[#allocation5 + $0x8] sm:$0xf]
  %v1885 = vld [vmem:[#allocation5 + $0xc] sm:$0xf]
  %v1886 = vld [vmem:[#allocation5 + $0x10] sm:$0xf]
  %v1887 = vld [vmem:[#allocation5 + $0x14] sm:$0xf]
  %v1888 = vld [vmem:[#allocation5 + $0x18] sm:$0xf]
  %v1889 = vld [vmem:[#allocation5 + $0x1c] sm:$0xf]
  %v1890 = vld [vmem:[#allocation5 + $0x20] sm:$0xf]
  %v1891 = vld [vmem:[#allocation5 + $0x24] sm:$0xf]
  %v1892 = vld [vmem:[#allocation5 + $0x28] sm:$0xf]
  %v1893 = vld [vmem:[#allocation5 + $0x2c] sm:$0xf]
  %v1894 = vld [vmem:[#allocation5 + $0x30] sm:$0xf]
  %v1895 = vld [vmem:[#allocation5 + $0x34] sm:$0xf]
  %v1896 = vld [vmem:[#allocation5 + $0x38] sm:$0xf]
  %v1897 = vld [vmem:[#allocation5 + $0x3c] sm:$0xf]
  %v1898 = vld [vmem:[#allocation5 + $0x40] sm:$0xf]
  %v1899 = vld [vmem:[#allocation5 + $0x44] sm:$0xf]
  %v1900 = vld [vmem:[#allocation5 + $0x48] sm:$0xf]
  %v1901 = vld [vmem:[#allocation5 + $0x4c] sm:$0xf]
  %v1902 = vld [vmem:[#allocation5 + $0x50] sm:$0xf]
  %v1903 = vld [vmem:[#allocation5 + $0x54] sm:$0xf]
  %v1904 = vld [vmem:[#allocation5 + $0x58] sm:$0xf]
  %v1905 = vld [vmem:[#allocation5 + $0x5c] sm:$0xf]
  %v1906 = vld [vmem:[#allocation5 + $0x60] sm:$0xf]
  %v1907 = vld [vmem:[#allocation5 + $0x64] sm:$0xf]
  %v1908 = vld [vmem:[#allocation5 + $0x68] sm:$0xf]
  %v1909 = vld [vmem:[#allocation5 + $0x6c] sm:$0xf]
  %v1910 = vld [vmem:[#allocation5 + $0x70] sm:$0xf]
  %v1911 = vld [vmem:[#allocation5 + $0x74] sm:$0xf]
  %v1912 = vld [vmem:[#allocation5 + $0x78] sm:$0xf]
  %v1913 = vld [vmem:[#allocation5 + $0x7c] sm:$0xf]
  %v1946 = vunpack.c.l.b16 %v1850
  %v1947 = vunpack.c.h.b16 %v1850
  %v1948 = vunpack.c.l.b16 %v1851
  %v1949 = vunpack.c.h.b16 %v1851
  %v1950 = vunpack.c.l.b16 %v1852
  %v1951 = vunpack.c.h.b16 %v1852
  %v1952 = vunpack.c.l.b16 %v1853
  %v1953 = vunpack.c.h.b16 %v1853
  %v1954 = vunpack.c.l.b16 %v1854
  %v1955 = vunpack.c.h.b16 %v1854
  %v1956 = vunpack.c.l.b16 %v1855
  %v1957 = vunpack.c.h.b16 %v1855
  %v1958 = vunpack.c.l.b16 %v1856
  %v1959 = vunpack.c.h.b16 %v1856
  %v1960 = vunpack.c.l.b16 %v1857
  %v1961 = vunpack.c.h.b16 %v1857
  %v1962 = vunpack.c.l.b16 %v1858
  %v1963 = vunpack.c.h.b16 %v1858
  %v1964 = vunpack.c.l.b16 %v1859
  %v1965 = vunpack.c.h.b16 %v1859
  %v1966 = vunpack.c.l.b16 %v1860
  %v1967 = vunpack.c.h.b16 %v1860
  %v1968 = vunpack.c.l.b16 %v1861
  %v1969 = vunpack.c.h.b16 %v1861
  %v1970 = vunpack.c.l.b16 %v1862
  %v1971 = vunpack.c.h.b16 %v1862
  %v1972 = vunpack.c.l.b16 %v1863
  %v1973 = vunpack.c.h.b16 %v1863
  %v1974 = vunpack.c.l.b16 %v1864
  %v1975 = vunpack.c.h.b16 %v1864
  %v1976 = vunpack.c.l.b16 %v1865
  %v1977 = vunpack.c.h.b16 %v1865
  %v1978 = vunpack.c.l.b16 %v1866
  %v1979 = vunpack.c.h.b16 %v1866
  %v1980 = vunpack.c.l.b16 %v1867
  %v1981 = vunpack.c.h.b16 %v1867
  %v1982 = vunpack.c.l.b16 %v1868
  %v1983 = vunpack.c.h.b16 %v1868
  %v1984 = vunpack.c.l.b16 %v1869
  %v1985 = vunpack.c.h.b16 %v1869
  %v1986 = vunpack.c.l.b16 %v1870
  %v1987 = vunpack.c.h.b16 %v1870
  %v1988 = vunpack.c.l.b16 %v1871
  %v1989 = vunpack.c.h.b16 %v1871
  %v1990 = vunpack.c.l.b16 %v1872
  %v1991 = vunpack.c.h.b16 %v1872
  %v1992 = vunpack.c.l.b16 %v1873
  %v1993 = vunpack.c.h.b16 %v1873
  %v1994 = vunpack.c.l.b16 %v1874
  %v1995 = vunpack.c.h.b16 %v1874
  %v1996 = vunpack.c.l.b16 %v1875
  %v1997 = vunpack.c.h.b16 %v1875
  %v1998 = vunpack.c.l.b16 %v1876
  %v1999 = vunpack.c.h.b16 %v1876
  %v2000 = vunpack.c.l.b16 %v1877
  %v2001 = vunpack.c.h.b16 %v1877
  %v2002 = vunpack.c.l.b16 %v1878
  %v2003 = vunpack.c.h.b16 %v1878
  %v2004 = vunpack.c.l.b16 %v1879
  %v2005 = vunpack.c.h.b16 %v1879
  %v2006 = vunpack.c.l.b16 %v1880
  %v2007 = vunpack.c.h.b16 %v1880
  %v2008 = vunpack.c.l.b16 %v1881
  %v2009 = vunpack.c.h.b16 %v1881
  %v2010 = vpack.c.b16 %v1948, %v1946
  %v2011 = vpack.c.b16 %v1949, %v1947
  %v2012 = vpack.c.b16 %v1952, %v1950
  %v2013 = vpack.c.b16 %v1953, %v1951
  %v2014 = vpack.c.b16 %v1956, %v1954
  %v2015 = vpack.c.b16 %v1957, %v1955
  %v2016 = vpack.c.b16 %v1960, %v1958
  %v2017 = vpack.c.b16 %v1961, %v1959
  %v2018 = vpack.c.b16 %v1964, %v1962
  %v2019 = vpack.c.b16 %v1965, %v1963
  %v2020 = vpack.c.b16 %v1968, %v1966
  %v2021 = vpack.c.b16 %v1969, %v1967
  %v2022 = vpack.c.b16 %v1972, %v1970
  %v2023 = vpack.c.b16 %v1973, %v1971
  %v2024 = vpack.c.b16 %v1976, %v1974
  %v2025 = vpack.c.b16 %v1977, %v1975
  %v2026 = vpack.c.b16 %v1980, %v1978
  %v2027 = vpack.c.b16 %v1981, %v1979
  %v2028 = vpack.c.b16 %v1984, %v1982
  %v2029 = vpack.c.b16 %v1985, %v1983
  %v2030 = vpack.c.b16 %v1988, %v1986
  %v2031 = vpack.c.b16 %v1989, %v1987
  %v2032 = vpack.c.b16 %v1992, %v1990
  %v2033 = vpack.c.b16 %v1993, %v1991
  %v2034 = vpack.c.b16 %v1996, %v1994
  %v2035 = vpack.c.b16 %v1997, %v1995
  %v2036 = vpack.c.b16 %v2000, %v1998
  %v2037 = vpack.c.b16 %v2001, %v1999
  %v2038 = vpack.c.b16 %v2004, %v2002
  %v2039 = vpack.c.b16 %v2005, %v2003
  %v2040 = vpack.c.b16 %v2008, %v2006
  %v2041 = vpack.c.b16 %v2009, %v2007
  %v2106 = vunpack.c.l.b16 %v1882
  %v2107 = vunpack.c.l.b16 %v1883
  %v2108 = vunpack.c.l.b16 %v1884
  %v2109 = vunpack.c.l.b16 %v1885
  %v2110 = vunpack.c.l.b16 %v1886
  %v2111 = vunpack.c.l.b16 %v1887
  %v2112 = vunpack.c.l.b16 %v1888
  %v2113 = vunpack.c.l.b16 %v1889
  %v2114 = vunpack.c.l.b16 %v1890
  %v2115 = vunpack.c.l.b16 %v1891
  %v2116 = vunpack.c.l.b16 %v1892
  %v2117 = vunpack.c.l.b16 %v1893
  %v2118 = vunpack.c.l.b16 %v1894
  %v2119 = vunpack.c.l.b16 %v1895
  %v2120 = vunpack.c.l.b16 %v1896
  %v2121 = vunpack.c.l.b16 %v1897
  %v2122 = vunpack.c.l.b16 %v1898
  %v2123 = vunpack.c.l.b16 %v1899
  %v2124 = vunpack.c.l.b16 %v1900
  %v2125 = vunpack.c.l.b16 %v1901
  %v2126 = vunpack.c.l.b16 %v1902
  %v2127 = vunpack.c.l.b16 %v1903
  %v2128 = vunpack.c.l.b16 %v1904
  %v2129 = vunpack.c.l.b16 %v1905
  %v2130 = vunpack.c.l.b16 %v1906
  %v2131 = vunpack.c.l.b16 %v1907
  %v2132 = vunpack.c.l.b16 %v1908
  %v2133 = vunpack.c.l.b16 %v1909
  %v2134 = vunpack.c.l.b16 %v1910
  %v2135 = vunpack.c.l.b16 %v1911
  %v2136 = vunpack.c.l.b16 %v1912
  %v2137 = vunpack.c.l.b16 %v1913
  %v2138 = vpack.c.b16 %v2107, %v2106
  %v2139 = vpack.c.b16 %v2109, %v2108
  %v2140 = vpack.c.b16 %v2111, %v2110
  %v2141 = vpack.c.b16 %v2113, %v2112
  %v2142 = vpack.c.b16 %v2115, %v2114
  %v2143 = vpack.c.b16 %v2117, %v2116
  %v2144 = vpack.c.b16 %v2119, %v2118
  %v2145 = vpack.c.b16 %v2121, %v2120
  %v2146 = vpack.c.b16 %v2123, %v2122
  %v2147 = vpack.c.b16 %v2125, %v2124
  %v2148 = vpack.c.b16 %v2127, %v2126
  %v2149 = vpack.c.b16 %v2129, %v2128
  %v2150 = vpack.c.b16 %v2131, %v2130
  %v2151 = vpack.c.b16 %v2133, %v2132
  %v2152 = vpack.c.b16 %v2135, %v2134
  %v2153 = vpack.c.b16 %v2137, %v2136
  %2170 = vmatpush.bf16.msra.mxu0 %v2145
  %2171 = vmatpush.bf16.msra.mxu0 %v2144
  %2172 = vmatpush.bf16.msra.mxu0 %v2143
  %2173 = vmatpush.bf16.msra.mxu0 %v2142
  %2174 = vmatpush.bf16.msra.mxu0 %v2141
  %2175 = vmatpush.bf16.msra.mxu0 %v2140
  %2176 = vmatpush.bf16.msra.mxu0 %v2139
  %2177 = vmatpush.bf16.msra.mxu0 %v2138
  %2178 = vmatmul.bf16.gmra.mxu0 %v2010
  %v2179 = vpop.f32.mrf.mxu0
  %v2180 = vadd.f32 0.0, %v2179
  %v2181 = vpop.f32.mrf.mxu0
  %v2182 = vadd.f32 0.0, %v2181
  %2183 = vmatmul.bf16.gmra.mxu0 %v2012
  %v2184 = vpop.f32.mrf.mxu0
  %v2185 = vadd.f32 0.0, %v2184
  %v2186 = vpop.f32.mrf.mxu0
  %v2187 = vadd.f32 0.0, %v2186
  %2188 = vmatmul.bf16.gmra.mxu0 %v2014
  %v2189 = vpop.f32.mrf.mxu0
  %v2190 = vadd.f32 0.0, %v2189
  %v2191 = vpop.f32.mrf.mxu0
  %v2192 = vadd.f32 0.0, %v2191
  %2193 = vmatmul.bf16.gmra.mxu0 %v2016
  %v2194 = vpop.f32.mrf.mxu0
  %v2195 = vadd.f32 0.0, %v2194
  %v2196 = vpop.f32.mrf.mxu0
  %v2197 = vadd.f32 0.0, %v2196
  %2198 = vmatmul.bf16.gmra.mxu0 %v2018
  %v2199 = vpop.f32.mrf.mxu0
  %v2200 = vadd.f32 0.0, %v2199
  %v2201 = vpop.f32.mrf.mxu0
  %v2202 = vadd.f32 0.0, %v2201
  %2203 = vmatmul.bf16.gmra.mxu0 %v2020
  %v2204 = vpop.f32.mrf.mxu0
  %v2205 = vadd.f32 0.0, %v2204
  %v2206 = vpop.f32.mrf.mxu0
  %v2207 = vadd.f32 0.0, %v2206
  %2208 = vmatmul.bf16.gmra.mxu0 %v2022
  %v2209 = vpop.f32.mrf.mxu0
  %v2210 = vadd.f32 0.0, %v2209
  %v2211 = vpop.f32.mrf.mxu0
  %v2212 = vadd.f32 0.0, %v2211
  %2213 = vmatmul.bf16.gmra.mxu0 %v2024
  %v2214 = vpop.f32.mrf.mxu0
  %v2215 = vadd.f32 0.0, %v2214
  %v2216 = vpop.f32.mrf.mxu0
  %v2217 = vadd.f32 0.0, %v2216
  %2218 = vmatmul.bf16.gmra.mxu0 %v2026
  %v2219 = vpop.f32.mrf.mxu0
  %v2220 = vadd.f32 0.0, %v2219
  %v2221 = vpop.f32.mrf.mxu0
  %v2222 = vadd.f32 0.0, %v2221
  %2223 = vmatmul.bf16.gmra.mxu0 %v2028
  %v2224 = vpop.f32.mrf.mxu0
  %v2225 = vadd.f32 0.0, %v2224
  %v2226 = vpop.f32.mrf.mxu0
  %v2227 = vadd.f32 0.0, %v2226
  %2228 = vmatmul.bf16.gmra.mxu0 %v2030
  %v2229 = vpop.f32.mrf.mxu0
  %v2230 = vadd.f32 0.0, %v2229
  %v2231 = vpop.f32.mrf.mxu0
  %v2232 = vadd.f32 0.0, %v2231
  %2233 = vmatmul.bf16.gmra.mxu0 %v2032
  %v2234 = vpop.f32.mrf.mxu0
  %v2235 = vadd.f32 0.0, %v2234
  %v2236 = vpop.f32.mrf.mxu0
  %v2237 = vadd.f32 0.0, %v2236
  %2238 = vmatmul.bf16.gmra.mxu0 %v2034
  %v2239 = vpop.f32.mrf.mxu0
  %v2240 = vadd.f32 0.0, %v2239
  %v2241 = vpop.f32.mrf.mxu0
  %v2242 = vadd.f32 0.0, %v2241
  %2243 = vmatmul.bf16.gmra.mxu0 %v2036
  %v2244 = vpop.f32.mrf.mxu0
  %v2245 = vadd.f32 0.0, %v2244
  %v2246 = vpop.f32.mrf.mxu0
  %v2247 = vadd.f32 0.0, %v2246
  %2248 = vmatmul.bf16.gmra.mxu0 %v2038
  %v2249 = vpop.f32.mrf.mxu0
  %v2250 = vadd.f32 0.0, %v2249
  %v2251 = vpop.f32.mrf.mxu0
  %v2252 = vadd.f32 0.0, %v2251
  %2253 = vmatmul.bf16.gmra.mxu0 %v2040
  %v2254 = vpop.f32.mrf.mxu0
  %v2255 = vadd.f32 0.0, %v2254
  %v2256 = vpop.f32.mrf.mxu0
  %v2257 = vadd.f32 0.0, %v2256
  %2258 = vdwg.mxu0
  %2259 = vmatpush.bf16.msra.mxu0 %v2153
  %2260 = vmatpush.bf16.msra.mxu0 %v2152
  %2261 = vmatpush.bf16.msra.mxu0 %v2151
  %2262 = vmatpush.bf16.msra.mxu0 %v2150
  %2263 = vmatpush.bf16.msra.mxu0 %v2149
  %2264 = vmatpush.bf16.msra.mxu0 %v2148
  %2265 = vmatpush.bf16.msra.mxu0 %v2147
  %2266 = vmatpush.bf16.msra.mxu0 %v2146
  %2267 = vmatmul.bf16.gmra.mxu0 %v2011
  %v2268 = vpop.f32.mrf.mxu0
  %v2269 = vadd.f32 %v2180, %v2268
  %v2270 = vpop.f32.mrf.mxu0
  %v2271 = vadd.f32 %v2182, %v2270
  %2272 = vmatmul.bf16.gmra.mxu0 %v2013
  %v2273 = vpop.f32.mrf.mxu0
  %v2274 = vadd.f32 %v2185, %v2273
  %v2275 = vpop.f32.mrf.mxu0
  %v2276 = vadd.f32 %v2187, %v2275
  %2277 = vmatmul.bf16.gmra.mxu0 %v2015
  %v2278 = vpop.f32.mrf.mxu0
  %v2279 = vadd.f32 %v2190, %v2278
  %v2280 = vpop.f32.mrf.mxu0
  %v2281 = vadd.f32 %v2192, %v2280
  %2282 = vmatmul.bf16.gmra.mxu0 %v2017
  %v2283 = vpop.f32.mrf.mxu0
  %v2284 = vadd.f32 %v2195, %v2283
  %v2285 = vpop.f32.mrf.mxu0
  %v2286 = vadd.f32 %v2197, %v2285
  %2287 = vmatmul.bf16.gmra.mxu0 %v2019
  %v2288 = vpop.f32.mrf.mxu0
  %v2289 = vadd.f32 %v2200, %v2288
  %v2290 = vpop.f32.mrf.mxu0
  %v2291 = vadd.f32 %v2202, %v2290
  %2292 = vmatmul.bf16.gmra.mxu0 %v2021
  %v2293 = vpop.f32.mrf.mxu0
  %v2294 = vadd.f32 %v2205, %v2293
  %v2295 = vpop.f32.mrf.mxu0
  %v2296 = vadd.f32 %v2207, %v2295
  %2297 = vmatmul.bf16.gmra.mxu0 %v2023
  %v2298 = vpop.f32.mrf.mxu0
  %v2299 = vadd.f32 %v2210, %v2298
  %v2300 = vpop.f32.mrf.mxu0
  %v2301 = vadd.f32 %v2212, %v2300
  %2302 = vmatmul.bf16.gmra.mxu0 %v2025
  %v2303 = vpop.f32.mrf.mxu0
  %v2304 = vadd.f32 %v2215, %v2303
  %v2305 = vpop.f32.mrf.mxu0
  %v2306 = vadd.f32 %v2217, %v2305
  %2307 = vmatmul.bf16.gmra.mxu0 %v2027
  %v2308 = vpop.f32.mrf.mxu0
  %v2309 = vadd.f32 %v2220, %v2308
  %v2310 = vpop.f32.mrf.mxu0
  %v2311 = vadd.f32 %v2222, %v2310
  %2312 = vmatmul.bf16.gmra.mxu0 %v2029
  %v2313 = vpop.f32.mrf.mxu0
  %v2314 = vadd.f32 %v2225, %v2313
  %v2315 = vpop.f32.mrf.mxu0
  %v2316 = vadd.f32 %v2227, %v2315
  %2317 = vmatmul.bf16.gmra.mxu0 %v2031
  %v2318 = vpop.f32.mrf.mxu0
  %v2319 = vadd.f32 %v2230, %v2318
  %v2320 = vpop.f32.mrf.mxu0
  %v2321 = vadd.f32 %v2232, %v2320
  %2322 = vmatmul.bf16.gmra.mxu0 %v2033
  %v2323 = vpop.f32.mrf.mxu0
  %v2324 = vadd.f32 %v2235, %v2323
  %v2325 = vpop.f32.mrf.mxu0
  %v2326 = vadd.f32 %v2237, %v2325
  %2327 = vmatmul.bf16.gmra.mxu0 %v2035
  %v2328 = vpop.f32.mrf.mxu0
  %v2329 = vadd.f32 %v2240, %v2328
  %v2330 = vpop.f32.mrf.mxu0
  %v2331 = vadd.f32 %v2242, %v2330
  %2332 = vmatmul.bf16.gmra.mxu0 %v2037
  %v2333 = vpop.f32.mrf.mxu0
  %v2334 = vadd.f32 %v2245, %v2333
  %v2335 = vpop.f32.mrf.mxu0
  %v2336 = vadd.f32 %v2247, %v2335
  %2337 = vmatmul.bf16.gmra.mxu0 %v2039
  %v2338 = vpop.f32.mrf.mxu0
  %v2339 = vadd.f32 %v2250, %v2338
  %v2340 = vpop.f32.mrf.mxu0
  %v2341 = vadd.f32 %v2252, %v2340
  %2342 = vmatmul.bf16.gmra.mxu0 %v2041
  %v2343 = vpop.f32.mrf.mxu0
  %v2344 = vadd.f32 %v2255, %v2343
  %v2345 = vpop.f32.mrf.mxu0
  %v2346 = vadd.f32 %v2257, %v2345
  %2347 = vdwg.mxu0
  %v2348 = vld [vmem:[%s4] sm:$0xff]
  %v2349 = vld [vmem:[%s4 + $0x8] sm:$0xff]
  %v2350 = vld [vmem:[%s4 + $0x10] sm:$0xff]
  %v2351 = vld [vmem:[%s4 + $0x18] sm:$0xff]
  %v2352 = vld [vmem:[%s4 + $0x20] sm:$0xff]
  %v2353 = vld [vmem:[%s4 + $0x28] sm:$0xff]
  %v2354 = vld [vmem:[%s4 + $0x30] sm:$0xff]
  %v2355 = vld [vmem:[%s4 + $0x38] sm:$0xff]
  %v2356 = vld [vmem:[%s4 + $0x40] sm:$0xff]
  %v2357 = vld [vmem:[%s4 + $0x48] sm:$0xff]
  %v2358 = vld [vmem:[%s4 + $0x50] sm:$0xff]
  %v2359 = vld [vmem:[%s4 + $0x58] sm:$0xff]
  %v2360 = vld [vmem:[%s4 + $0x60] sm:$0xff]
  %v2361 = vld [vmem:[%s4 + $0x68] sm:$0xff]
  %v2362 = vld [vmem:[%s4 + $0x70] sm:$0xff]
  %v2363 = vld [vmem:[%s4 + $0x78] sm:$0xff]
  %v2364 = vld [vmem:[%s4 + $0x80] sm:$0xff]
  %v2365 = vld [vmem:[%s4 + $0x88] sm:$0xff]
  %v2366 = vld [vmem:[%s4 + $0x90] sm:$0xff]
  %v2367 = vld [vmem:[%s4 + $0x98] sm:$0xff]
  %v2368 = vld [vmem:[%s4 + $0xa0] sm:$0xff]
  %v2369 = vld [vmem:[%s4 + $0xa8] sm:$0xff]
  %v2370 = vld [vmem:[%s4 + $0xb0] sm:$0xff]
  %v2371 = vld [vmem:[%s4 + $0xb8] sm:$0xff]
  %v2372 = vld [vmem:[%s4 + $0xc0] sm:$0xff]
  %v2373 = vld [vmem:[%s4 + $0xc8] sm:$0xff]
  %v2374 = vld [vmem:[%s4 + $0xd0] sm:$0xff]
  %v2375 = vld [vmem:[%s4 + $0xd8] sm:$0xff]
  %v2376 = vld [vmem:[%s4 + $0xe0] sm:$0xff]
  %v2377 = vld [vmem:[%s4 + $0xe8] sm:$0xff]
  %v2378 = vld [vmem:[%s4 + $0xf0] sm:$0xff]
  %v2379 = vld [vmem:[%s4 + $0xf8] sm:$0xff]
  %v2380 = vadd.f32 %v2348, %v2269
  %v2381 = vadd.f32 %v2349, %v2271
  %v2382 = vadd.f32 %v2350, %v2274
  %v2383 = vadd.f32 %v2351, %v2276
  %v2384 = vadd.f32 %v2352, %v2279
  %v2385 = vadd.f32 %v2353, %v2281
  %v2386 = vadd.f32 %v2354, %v2284
  %v2387 = vadd.f32 %v2355, %v2286
  %v2388 = vadd.f32 %v2356, %v2289
  %v2389 = vadd.f32 %v2357, %v2291
  %v2390 = vadd.f32 %v2358, %v2294
  %v2391 = vadd.f32 %v2359, %v2296
  %v2392 = vadd.f32 %v2360, %v2299
  %v2393 = vadd.f32 %v2361, %v2301
  %v2394 = vadd.f32 %v2362, %v2304
  %v2395 = vadd.f32 %v2363, %v2306
  %v2396 = vadd.f32 %v2364, %v2309
  %v2397 = vadd.f32 %v2365, %v2311
  %v2398 = vadd.f32 %v2366, %v2314
  %v2399 = vadd.f32 %v2367, %v2316
  %v2400 = vadd.f32 %v2368, %v2319
  %v2401 = vadd.f32 %v2369, %v2321
  %v2402 = vadd.f32 %v2370, %v2324
  %v2403 = vadd.f32 %v2371, %v2326
  %v2404 = vadd.f32 %v2372, %v2329
  %v2405 = vadd.f32 %v2373, %v2331
  %v2406 = vadd.f32 %v2374, %v2334
  %v2407 = vadd.f32 %v2375, %v2336
  %v2408 = vadd.f32 %v2376, %v2339
  %v2409 = vadd.f32 %v2377, %v2341
  %v2410 = vadd.f32 %v2378, %v2344
  %v2411 = vadd.f32 %v2379, %v2346
  %2412 = vst [vmem:[%s4] sm:$0xff] %v2380
  %2413 = vst [vmem:[%s4 + $0x8] sm:$0xff] %v2381
  %2414 = vst [vmem:[%s4 + $0x10] sm:$0xff] %v2382
  %2415 = vst [vmem:[%s4 + $0x18] sm:$0xff] %v2383
  %2416 = vst [vmem:[%s4 + $0x20] sm:$0xff] %v2384
  %2417 = vst [vmem:[%s4 + $0x28] sm:$0xff] %v2385
  %2418 = vst [vmem:[%s4 + $0x30] sm:$0xff] %v2386
  %2419 = vst [vmem:[%s4 + $0x38] sm:$0xff] %v2387
  %2420 = vst [vmem:[%s4 + $0x40] sm:$0xff] %v2388
  %2421 = vst [vmem:[%s4 + $0x48] sm:$0xff] %v2389
  %2422 = vst [vmem:[%s4 + $0x50] sm:$0xff] %v2390
  %2423 = vst [vmem:[%s4 + $0x58] sm:$0xff] %v2391
  %2424 = vst [vmem:[%s4 + $0x60] sm:$0xff] %v2392
  %2425 = vst [vmem:[%s4 + $0x68] sm:$0xff] %v2393
  %2426 = vst [vmem:[%s4 + $0x70] sm:$0xff] %v2394
  %2427 = vst [vmem:[%s4 + $0x78] sm:$0xff] %v2395
  %2428 = vst [vmem:[%s4 + $0x80] sm:$0xff] %v2396
  %2429 = vst [vmem:[%s4 + $0x88] sm:$0xff] %v2397
  %2430 = vst [vmem:[%s4 + $0x90] sm:$0xff] %v2398
  %2431 = vst [vmem:[%s4 + $0x98] sm:$0xff] %v2399
  %2432 = vst [vmem:[%s4 + $0xa0] sm:$0xff] %v2400
  %2433 = vst [vmem:[%s4 + $0xa8] sm:$0xff] %v2401
  %2434 = vst [vmem:[%s4 + $0xb0] sm:$0xff] %v2402
  %2435 = vst [vmem:[%s4 + $0xb8] sm:$0xff] %v2403
  %2436 = vst [vmem:[%s4 + $0xc0] sm:$0xff] %v2404
  %2437 = vst [vmem:[%s4 + $0xc8] sm:$0xff] %v2405
  %2438 = vst [vmem:[%s4 + $0xd0] sm:$0xff] %v2406
  %2439 = vst [vmem:[%s4 + $0xd8] sm:$0xff] %v2407
  %2440 = vst [vmem:[%s4 + $0xe0] sm:$0xff] %v2408
  %2441 = vst [vmem:[%s4 + $0xe8] sm:$0xff] %v2409
  %2442 = vst [vmem:[%s4 + $0xf0] sm:$0xff] %v2410
  %2443 = vst [vmem:[%s4 + $0xf8] sm:$0xff] %v2411
  %v2444 = vpack.c.bf16 %v2269, %v2269
  %v2445 = vpack.c.bf16 %v2271, %v2271
  %v2446 = vpack.c.bf16 %v2274, %v2274
  %v2447 = vpack.c.bf16 %v2276, %v2276
  %v2448 = vpack.c.bf16 %v2279, %v2279
  %v2449 = vpack.c.bf16 %v2281, %v2281
  %v2450 = vpack.c.bf16 %v2284, %v2284
  %v2451 = vpack.c.bf16 %v2286, %v2286
  %v2452 = vpack.c.bf16 %v2289, %v2289
  %v2453 = vpack.c.bf16 %v2291, %v2291
  %v2454 = vpack.c.bf16 %v2294, %v2294
  %v2455 = vpack.c.bf16 %v2296, %v2296
  %v2456 = vpack.c.bf16 %v2299, %v2299
  %v2457 = vpack.c.bf16 %v2301, %v2301
  %v2458 = vpack.c.bf16 %v2304, %v2304
  %v2459 = vpack.c.bf16 %v2306, %v2306
  %v2460 = vpack.c.bf16 %v2309, %v2309
  %v2461 = vpack.c.bf16 %v2311, %v2311
  %v2462 = vpack.c.bf16 %v2314, %v2314
  %v2463 = vpack.c.bf16 %v2316, %v2316
  %v2464 = vpack.c.bf16 %v2319, %v2319
  %v2465 = vpack.c.bf16 %v2321, %v2321
  %v2466 = vpack.c.bf16 %v2324, %v2324
  %v2467 = vpack.c.bf16 %v2326, %v2326
  %v2468 = vpack.c.bf16 %v2329, %v2329
  %v2469 = vpack.c.bf16 %v2331, %v2331
  %v2470 = vpack.c.bf16 %v2334, %v2334
  %v2471 = vpack.c.bf16 %v2336, %v2336
  %v2472 = vpack.c.bf16 %v2339, %v2339
  %v2473 = vpack.c.bf16 %v2341, %v2341
  %v2474 = vpack.c.bf16 %v2344, %v2344
  %v2475 = vpack.c.bf16 %v2346, %v2346
  %2476 = vst [vmem:[#allocation5] sm:$0xf] %v2444
  %2477 = vst [vmem:[#allocation5 + $0x4] sm:$0xf] %v2445
  %2478 = vst [vmem:[#allocation5 + $0x8] sm:$0xf] %v2446
  %2479 = vst [vmem:[#allocation5 + $0xc] sm:$0xf] %v2447
  %2480 = vst [vmem:[#allocation5 + $0x10] sm:$0xf] %v2448
  %2481 = vst [vmem:[#allocation5 + $0x14] sm:$0xf] %v2449
  %2482 = vst [vmem:[#allocation5 + $0x18] sm:$0xf] %v2450
  %2483 = vst [vmem:[#allocation5 + $0x1c] sm:$0xf] %v2451
  %2484 = vst [vmem:[#allocation5 + $0x20] sm:$0xf] %v2452
  %2485 = vst [vmem:[#allocation5 + $0x24] sm:$0xf] %v2453
  %2486 = vst [vmem:[#allocation5 + $0x28] sm:$0xf] %v2454
  %2487 = vst [vmem:[#allocation5 + $0x2c] sm:$0xf] %v2455
  %2488 = vst [vmem:[#allocation5 + $0x30] sm:$0xf] %v2456
  %2489 = vst [vmem:[#allocation5 + $0x34] sm:$0xf] %v2457
  %2490 = vst [vmem:[#allocation5 + $0x38] sm:$0xf] %v2458
  %2491 = vst [vmem:[#allocation5 + $0x3c] sm:$0xf] %v2459
  %2492 = vst [vmem:[#allocation5 + $0x40] sm:$0xf] %v2460
  %2493 = vst [vmem:[#allocation5 + $0x44] sm:$0xf] %v2461
  %2494 = vst [vmem:[#allocation5 + $0x48] sm:$0xf] %v2462
  %2495 = vst [vmem:[#allocation5 + $0x4c] sm:$0xf] %v2463
  %2496 = vst [vmem:[#allocation5 + $0x50] sm:$0xf] %v2464
  %2497 = vst [vmem:[#allocation5 + $0x54] sm:$0xf] %v2465
  %2498 = vst [vmem:[#allocation5 + $0x58] sm:$0xf] %v2466
  %2499 = vst [vmem:[#allocation5 + $0x5c] sm:$0xf] %v2467
  %2500 = vst [vmem:[#allocation5 + $0x60] sm:$0xf] %v2468
  %2501 = vst [vmem:[#allocation5 + $0x64] sm:$0xf] %v2469
  %2502 = vst [vmem:[#allocation5 + $0x68] sm:$0xf] %v2470
  %2503 = vst [vmem:[#allocation5 + $0x6c] sm:$0xf] %v2471
  %2504 = vst [vmem:[#allocation5 + $0x70] sm:$0xf] %v2472
  %2505 = vst [vmem:[#allocation5 + $0x74] sm:$0xf] %v2473
  %2506 = vst [vmem:[#allocation5 + $0x78] sm:$0xf] %v2474
  %2507 = vst [vmem:[#allocation5 + $0x7c] sm:$0xf] %v2475
  %v2508 = vld [vmem:[%s4] sm:$0xff]
  %v2509 = vld [vmem:[%s4 + $0x8] sm:$0xff]
  %v2510 = vld [vmem:[%s4 + $0x10] sm:$0xff]
  %v2511 = vld [vmem:[%s4 + $0x18] sm:$0xff]
  %v2512 = vld [vmem:[%s4 + $0x20] sm:$0xff]
  %v2513 = vld [vmem:[%s4 + $0x28] sm:$0xff]
  %v2514 = vld [vmem:[%s4 + $0x30] sm:$0xff]
  %v2515 = vld [vmem:[%s4 + $0x38] sm:$0xff]
  %v2516 = vld [vmem:[%s4 + $0x40] sm:$0xff]
  %v2517 = vld [vmem:[%s4 + $0x48] sm:$0xff]
  %v2518 = vld [vmem:[%s4 + $0x50] sm:$0xff]
  %v2519 = vld [vmem:[%s4 + $0x58] sm:$0xff]
  %v2520 = vld [vmem:[%s4 + $0x60] sm:$0xff]
  %v2521 = vld [vmem:[%s4 + $0x68] sm:$0xff]
  %v2522 = vld [vmem:[%s4 + $0x70] sm:$0xff]
  %v2523 = vld [vmem:[%s4 + $0x78] sm:$0xff]
  %v2524 = vld [vmem:[%s4 + $0x80] sm:$0xff]
  %v2525 = vld [vmem:[%s4 + $0x88] sm:$0xff]
  %v2526 = vld [vmem:[%s4 + $0x90] sm:$0xff]
  %v2527 = vld [vmem:[%s4 + $0x98] sm:$0xff]
  %v2528 = vld [vmem:[%s4 + $0xa0] sm:$0xff]
  %v2529 = vld [vmem:[%s4 + $0xa8] sm:$0xff]
  %v2530 = vld [vmem:[%s4 + $0xb0] sm:$0xff]
  %v2531 = vld [vmem:[%s4 + $0xb8] sm:$0xff]
  %v2532 = vld [vmem:[%s4 + $0xc0] sm:$0xff]
  %v2533 = vld [vmem:[%s4 + $0xc8] sm:$0xff]
  %v2534 = vld [vmem:[%s4 + $0xd0] sm:$0xff]
  %v2535 = vld [vmem:[%s4 + $0xd8] sm:$0xff]
  %v2536 = vld [vmem:[%s4 + $0xe0] sm:$0xff]
  %v2537 = vld [vmem:[%s4 + $0xe8] sm:$0xff]
  %v2538 = vld [vmem:[%s4 + $0xf0] sm:$0xff]
  %v2539 = vld [vmem:[%s4 + $0xf8] sm:$0xff]
  %v2540 = vmul.f32 %v2508, 0.25
  %v2541 = vmul.f32 %v2509, 0.25
  %v2542 = vmul.f32 %v2510, 0.25
  %v2543 = vmul.f32 %v2511, 0.25
  %v2544 = vmul.f32 %v2512, 0.25
  %v2545 = vmul.f32 %v2513, 0.25
  %v2546 = vmul.f32 %v2514, 0.25
  %v2547 = vmul.f32 %v2515, 0.25
  %v2548 = vmul.f32 %v2516, 0.25
  %v2549 = vmul.f32 %v2517, 0.25
  %v2550 = vmul.f32 %v2518, 0.25
  %v2551 = vmul.f32 %v2519, 0.25
  %v2552 = vmul.f32 %v2520, 0.25
  %v2553 = vmul.f32 %v2521, 0.25
  %v2554 = vmul.f32 %v2522, 0.25
  %v2555 = vmul.f32 %v2523, 0.25
  %v2556 = vmul.f32 %v2524, 0.25
  %v2557 = vmul.f32 %v2525, 0.25
  %v2558 = vmul.f32 %v2526, 0.25
  %v2559 = vmul.f32 %v2527, 0.25
  %v2560 = vmul.f32 %v2528, 0.25
  %v2561 = vmul.f32 %v2529, 0.25
  %v2562 = vmul.f32 %v2530, 0.25
  %v2563 = vmul.f32 %v2531, 0.25
  %v2564 = vmul.f32 %v2532, 0.25
  %v2565 = vmul.f32 %v2533, 0.25
  %v2566 = vmul.f32 %v2534, 0.25
  %v2567 = vmul.f32 %v2535, 0.25
  %v2568 = vmul.f32 %v2536, 0.25
  %v2569 = vmul.f32 %v2537, 0.25
  %v2570 = vmul.f32 %v2538, 0.25
  %v2571 = vmul.f32 %v2539, 0.25
  %2572 = vst [vmem:[%s4] sm:$0xff] %v2540
  %2573 = vst [vmem:[%s4 + $0x8] sm:$0xff] %v2541
  %2574 = vst [vmem:[%s4 + $0x10] sm:$0xff] %v2542
  %2575 = vst [vmem:[%s4 + $0x18] sm:$0xff] %v2543
  %2576 = vst [vmem:[%s4 + $0x20] sm:$0xff] %v2544
  %2577 = vst [vmem:[%s4 + $0x28] sm:$0xff] %v2545
  %2578 = vst [vmem:[%s4 + $0x30] sm:$0xff] %v2546
  %2579 = vst [vmem:[%s4 + $0x38] sm:$0xff] %v2547
  %2580 = vst [vmem:[%s4 + $0x40] sm:$0xff] %v2548
  %2581 = vst [vmem:[%s4 + $0x48] sm:$0xff] %v2549
  %2582 = vst [vmem:[%s4 + $0x50] sm:$0xff] %v2550
  %2583 = vst [vmem:[%s4 + $0x58] sm:$0xff] %v2551
  %2584 = vst [vmem:[%s4 + $0x60] sm:$0xff] %v2552
  %2585 = vst [vmem:[%s4 + $0x68] sm:$0xff] %v2553
  %2586 = vst [vmem:[%s4 + $0x70] sm:$0xff] %v2554
  %2587 = vst [vmem:[%s4 + $0x78] sm:$0xff] %v2555
  %2588 = vst [vmem:[%s4 + $0x80] sm:$0xff] %v2556
  %2589 = vst [vmem:[%s4 + $0x88] sm:$0xff] %v2557
  %2590 = vst [vmem:[%s4 + $0x90] sm:$0xff] %v2558
  %2591 = vst [vmem:[%s4 + $0x98] sm:$0xff] %v2559
  %2592 = vst [vmem:[%s4 + $0xa0] sm:$0xff] %v2560
  %2593 = vst [vmem:[%s4 + $0xa8] sm:$0xff] %v2561
  %2594 = vst [vmem:[%s4 + $0xb0] sm:$0xff] %v2562
  %2595 = vst [vmem:[%s4 + $0xb8] sm:$0xff] %v2563
  %2596 = vst [vmem:[%s4 + $0xc0] sm:$0xff] %v2564
  %2597 = vst [vmem:[%s4 + $0xc8] sm:$0xff] %v2565
  %2598 = vst [vmem:[%s4 + $0xd0] sm:$0xff] %v2566
  %2599 = vst [vmem:[%s4 + $0xd8] sm:$0xff] %v2567
  %2600 = vst [vmem:[%s4 + $0xe0] sm:$0xff] %v2568
  %2601 = vst [vmem:[%s4 + $0xe8] sm:$0xff] %v2569
  %2602 = vst [vmem:[%s4 + $0xf0] sm:$0xff] %v2570
  %2603 = vst [vmem:[%s4 + $0xf8] sm:$0xff] %v2571
  %v2604 = vld [vmem:[%s3] sm:$0xf]
  %v2605 = vld [vmem:[%s3 + $0x4] sm:$0xf]
  %v2606 = vld [vmem:[%s3 + $0x8] sm:$0xf]
  %v2607 = vld [vmem:[%s3 + $0xc] sm:$0xf]
  %v2608 = vld [vmem:[%s3 + $0x10] sm:$0xf]
  %v2609 = vld [vmem:[%s3 + $0x14] sm:$0xf]
  %v2610 = vld [vmem:[%s3 + $0x18] sm:$0xf]
  %v2611 = vld [vmem:[%s3 + $0x1c] sm:$0xf]
  %v2612 = vld [vmem:[%s3 + $0x20] sm:$0xf]
  %v2613 = vld [vmem:[%s3 + $0x24] sm:$0xf]
  %v2614 = vld [vmem:[%s3 + $0x28] sm:$0xf]
  %v2615 = vld [vmem:[%s3 + $0x2c] sm:$0xf]
  %v2616 = vld [vmem:[%s3 + $0x30] sm:$0xf]
  %v2617 = vld [vmem:[%s3 + $0x34] sm:$0xf]
  %v2618 = vld [vmem:[%s3 + $0x38] sm:$0xf]
  %v2619 = vld [vmem:[%s3 + $0x3c] sm:$0xf]
  %v2620 = vld [vmem:[%s3 + $0x40] sm:$0xf]
  %v2621 = vld [vmem:[%s3 + $0x44] sm:$0xf]
  %v2622 = vld [vmem:[%s3 + $0x48] sm:$0xf]
  %v2623 = vld [vmem:[%s3 + $0x4c] sm:$0xf]
  %v2624 = vld [vmem:[%s3 + $0x50] sm:$0xf]
  %v2625 = vld [vmem:[%s3 + $0x54] sm:$0xf]
  %v2626 = vld [vmem:[%s3 + $0x58] sm:$0xf]
  %v2627 = vld [vmem:[%s3 + $0x5c] sm:$0xf]
  %v2628 = vld [vmem:[%s3 + $0x60] sm:$0xf]
  %v2629 = vld [vmem:[%s3 + $0x64] sm:$0xf]
  %v2630 = vld [vmem:[%s3 + $0x68] sm:$0xf]
  %v2631 = vld [vmem:[%s3 + $0x6c] sm:$0xf]
  %v2632 = vld [vmem:[%s3 + $0x70] sm:$0xf]
  %v2633 = vld [vmem:[%s3 + $0x74] sm:$0xf]
  %v2634 = vld [vmem:[%s3 + $0x78] sm:$0xf]
  %v2635 = vld [vmem:[%s3 + $0x7c] sm:$0xf]
  %v2636 = vunpack.c.l.bf16 %v2604
  %v2637 = vunpack.c.l.bf16 %v2605
  %v2638 = vunpack.c.l.bf16 %v2606
  %v2639 = vunpack.c.l.bf16 %v2607
  %v2640 = vunpack.c.l.bf16 %v2608
  %v2641 = vunpack.c.l.bf16 %v2609
  %v2642 = vunpack.c.l.bf16 %v2610
  %v2643 = vunpack.c.l.bf16 %v2611
  %v2644 = vunpack.c.l.bf16 %v2612
  %v2645 = vunpack.c.l.bf16 %v2613
  %v2646 = vunpack.c.l.bf16 %v2614
  %v2647 = vunpack.c.l.bf16 %v2615
  %v2648 = vunpack.c.l.bf16 %v2616
  %v2649 = vunpack.c.l.bf16 %v2617
  %v2650 = vunpack.c.l.bf16 %v2618
  %v2651 = vunpack.c.l.bf16 %v2619
  %v2652 = vunpack.c.l.bf16 %v2620
  %v2653 = vunpack.c.l.bf16 %v2621
  %v2654 = vunpack.c.l.bf16 %v2622
  %v2655 = vunpack.c.l.bf16 %v2623
  %v2656 = vunpack.c.l.bf16 %v2624
  %v2657 = vunpack.c.l.bf16 %v2625
  %v2658 = vunpack.c.l.bf16 %v2626
  %v2659 = vunpack.c.l.bf16 %v2627
  %v2660 = vunpack.c.l.bf16 %v2628
  %v2661 = vunpack.c.l.bf16 %v2629
  %v2662 = vunpack.c.l.bf16 %v2630
  %v2663 = vunpack.c.l.bf16 %v2631
  %v2664 = vunpack.c.l.bf16 %v2632
  %v2665 = vunpack.c.l.bf16 %v2633
  %v2666 = vunpack.c.l.bf16 %v2634
  %v2667 = vunpack.c.l.bf16 %v2635
  %2668 = vst [vmem:[%s5] sm:$0xff] %v2636
  %2669 = vst [vmem:[%s5 + $0x8] sm:$0xff] %v2637
  %2670 = vst [vmem:[%s5 + $0x10] sm:$0xff] %v2638
  %2671 = vst [vmem:[%s5 + $0x18] sm:$0xff] %v2639
  %2672 = vst [vmem:[%s5 + $0x20] sm:$0xff] %v2640
  %2673 = vst [vmem:[%s5 + $0x28] sm:$0xff] %v2641
  %2674 = vst [vmem:[%s5 + $0x30] sm:$0xff] %v2642
  %2675 = vst [vmem:[%s5 + $0x38] sm:$0xff] %v2643
  %2676 = vst [vmem:[%s5 + $0x40] sm:$0xff] %v2644
  %2677 = vst [vmem:[%s5 + $0x48] sm:$0xff] %v2645
  %2678 = vst [vmem:[%s5 + $0x50] sm:$0xff] %v2646
  %2679 = vst [vmem:[%s5 + $0x58] sm:$0xff] %v2647
  %2680 = vst [vmem:[%s5 + $0x60] sm:$0xff] %v2648
  %2681 = vst [vmem:[%s5 + $0x68] sm:$0xff] %v2649
  %2682 = vst [vmem:[%s5 + $0x70] sm:$0xff] %v2650
  %2683 = vst [vmem:[%s5 + $0x78] sm:$0xff] %v2651
  %2684 = vst [vmem:[%s5 + $0x80] sm:$0xff] %v2652
  %2685 = vst [vmem:[%s5 + $0x88] sm:$0xff] %v2653
  %2686 = vst [vmem:[%s5 + $0x90] sm:$0xff] %v2654
  %2687 = vst [vmem:[%s5 + $0x98] sm:$0xff] %v2655
  %2688 = vst [vmem:[%s5 + $0xa0] sm:$0xff] %v2656
  %2689 = vst [vmem:[%s5 + $0xa8] sm:$0xff] %v2657
  %2690 = vst [vmem:[%s5 + $0xb0] sm:$0xff] %v2658
  %2691 = vst [vmem:[%s5 + $0xb8] sm:$0xff] %v2659
  %2692 = vst [vmem:[%s5 + $0xc0] sm:$0xff] %v2660
  %2693 = vst [vmem:[%s5 + $0xc8] sm:$0xff] %v2661
  %2694 = vst [vmem:[%s5 + $0xd0] sm:$0xff] %v2662
  %2695 = vst [vmem:[%s5 + $0xd8] sm:$0xff] %v2663
  %2696 = vst [vmem:[%s5 + $0xe0] sm:$0xff] %v2664
  %2697 = vst [vmem:[%s5 + $0xe8] sm:$0xff] %v2665
  %2698 = vst [vmem:[%s5 + $0xf0] sm:$0xff] %v2666
  %2699 = vst [vmem:[%s5 + $0xf8] sm:$0xff] %v2667
  %v2700 = vld [vmem:[%s4 + $0x80] sm:$0xff]
  %v2701 = vld [vmem:[%s4 + $0x88] sm:$0xff]
  %v2702 = vld [vmem:[%s4 + $0x90] sm:$0xff]
  %v2703 = vld [vmem:[%s4 + $0x98] sm:$0xff]
  %v2704 = vld [vmem:[%s4 + $0xa0] sm:$0xff]
  %v2705 = vld [vmem:[%s4 + $0xa8] sm:$0xff]
  %v2706 = vld [vmem:[%s4 + $0xb0] sm:$0xff]
  %v2707 = vld [vmem:[%s4 + $0xb8] sm:$0xff]
  %v2708 = vld [vmem:[%s4 + $0xc0] sm:$0xff]
  %v2709 = vld [vmem:[%s4 + $0xc8] sm:$0xff]
  %v2710 = vld [vmem:[%s4 + $0xd0] sm:$0xff]
  %v2711 = vld [vmem:[%s4 + $0xd8] sm:$0xff]
  %v2712 = vld [vmem:[%s4 + $0xe0] sm:$0xff]
  %v2713 = vld [vmem:[%s4 + $0xe8] sm:$0xff]
  %v2714 = vld [vmem:[%s4 + $0xf0] sm:$0xff]
  %v2715 = vld [vmem:[%s4 + $0xf8] sm:$0xff]
  %2716 = vst [vmem:[%s5 + $0x80] sm:$0xff] %v2700
  %2717 = vst [vmem:[%s5 + $0x88] sm:$0xff] %v2701
  %2718 = vst [vmem:[%s5 + $0x90] sm:$0xff] %v2702
  %2719 = vst [vmem:[%s5 + $0x98] sm:$0xff] %v2703
  %2720 = vst [vmem:[%s5 + $0xa0] sm:$0xff] %v2704
  %2721 = vst [vmem:[%s5 + $0xa8] sm:$0xff] %v2705
  %2722 = vst [vmem:[%s5 + $0xb0] sm:$0xff] %v2706
  %2723 = vst [vmem:[%s5 + $0xb8] sm:$0xff] %v2707
  %2724 = vst [vmem:[%s5 + $0xc0] sm:$0xff] %v2708
  %2725 = vst [vmem:[%s5 + $0xc8] sm:$0xff] %v2709
  %2726 = vst [vmem:[%s5 + $0xd0] sm:$0xff] %v2710
  %2727 = vst [vmem:[%s5 + $0xd8] sm:$0xff] %v2711
  %2728 = vst [vmem:[%s5 + $0xe0] sm:$0xff] %v2712
  %2729 = vst [vmem:[%s5 + $0xe8] sm:$0xff] %v2713
  %2730 = vst [vmem:[%s5 + $0xf0] sm:$0xff] %v2714
  %2731 = vst [vmem:[%s5 + $0xf8] sm:$0xff] %v2715
  %v2732 = vld [vmem:[%s5] sm:$0xff]
  %v2733 = vld [vmem:[%s5 + $0x8] sm:$0xff]
  %v2734 = vld [vmem:[%s5 + $0x10] sm:$0xff]
  %v2735 = vld [vmem:[%s5 + $0x18] sm:$0xff]
  %v2736 = vld [vmem:[%s5 + $0x20] sm:$0xff]
  %v2737 = vld [vmem:[%s5 + $0x28] sm:$0xff]
  %v2738 = vld [vmem:[%s5 + $0x30] sm:$0xff]
  %v2739 = vld [vmem:[%s5 + $0x38] sm:$0xff]
  %v2740 = vld [vmem:[%s5 + $0x40] sm:$0xff]
  %v2741 = vld [vmem:[%s5 + $0x48] sm:$0xff]
  %v2742 = vld [vmem:[%s5 + $0x50] sm:$0xff]
  %v2743 = vld [vmem:[%s5 + $0x58] sm:$0xff]
  %v2744 = vld [vmem:[%s5 + $0x60] sm:$0xff]
  %v2745 = vld [vmem:[%s5 + $0x68] sm:$0xff]
  %v2746 = vld [vmem:[%s5 + $0x70] sm:$0xff]
  %v2747 = vld [vmem:[%s5 + $0x78] sm:$0xff]
  %v2748 = vld [vmem:[%s5 + $0x80] sm:$0xff]
  %v2749 = vld [vmem:[%s5 + $0x88] sm:$0xff]
  %v2750 = vld [vmem:[%s5 + $0x90] sm:$0xff]
  %v2751 = vld [vmem:[%s5 + $0x98] sm:$0xff]
  %v2752 = vld [vmem:[%s5 + $0xa0] sm:$0xff]
  %v2753 = vld [vmem:[%s5 + $0xa8] sm:$0xff]
  %v2754 = vld [vmem:[%s5 + $0xb0] sm:$0xff]
  %v2755 = vld [vmem:[%s5 + $0xb8] sm:$0xff]
  %v2756 = vld [vmem:[%s5 + $0xc0] sm:$0xff]
  %v2757 = vld [vmem:[%s5 + $0xc8] sm:$0xff]
  %v2758 = vld [vmem:[%s5 + $0xd0] sm:$0xff]
  %v2759 = vld [vmem:[%s5 + $0xd8] sm:$0xff]
  %v2760 = vld [vmem:[%s5 + $0xe0] sm:$0xff]
  %v2761 = vld [vmem:[%s5 + $0xe8] sm:$0xff]
  %v2762 = vld [vmem:[%s5 + $0xf0] sm:$0xff]
  %v2763 = vld [vmem:[%s5 + $0xf8] sm:$0xff]
  %2764 = vst [vmem:[%s6] sm:$0xff] %v2732
  %2765 = vst [vmem:[%s6 + $0x8] sm:$0xff] %v2733
  %2766 = vst [vmem:[%s6 + $0x10] sm:$0xff] %v2734
  %2767 = vst [vmem:[%s6 + $0x18] sm:$0xff] %v2735
  %2768 = vst [vmem:[%s6 + $0x20] sm:$0xff] %v2736
  %2769 = vst [vmem:[%s6 + $0x28] sm:$0xff] %v2737
  %2770 = vst [vmem:[%s6 + $0x30] sm:$0xff] %v2738
  %2771 = vst [vmem:[%s6 + $0x38] sm:$0xff] %v2739
  %2772 = vst [vmem:[%s6 + $0x40] sm:$0xff] %v2740
  %2773 = vst [vmem:[%s6 + $0x48] sm:$0xff] %v2741
  %2774 = vst [vmem:[%s6 + $0x50] sm:$0xff] %v2742
  %2775 = vst [vmem:[%s6 + $0x58] sm:$0xff] %v2743
  %2776 = vst [vmem:[%s6 + $0x60] sm:$0xff] %v2744
  %2777 = vst [vmem:[%s6 + $0x68] sm:$0xff] %v2745
  %2778 = vst [vmem:[%s6 + $0x70] sm:$0xff] %v2746
  %2779 = vst [vmem:[%s6 + $0x78] sm:$0xff] %v2747
  %2780 = vst [vmem:[%s6 + $0x80] sm:$0xff] %v2748
  %2781 = vst [vmem:[%s6 + $0x88] sm:$0xff] %v2749
  %2782 = vst [vmem:[%s6 + $0x90] sm:$0xff] %v2750
  %2783 = vst [vmem:[%s6 + $0x98] sm:$0xff] %v2751
  %2784 = vst [vmem:[%s6 + $0xa0] sm:$0xff] %v2752
  %2785 = vst [vmem:[%s6 + $0xa8] sm:$0xff] %v2753
  %2786 = vst [vmem:[%s6 + $0xb0] sm:$0xff] %v2754
  %2787 = vst [vmem:[%s6 + $0xb8] sm:$0xff] %v2755
  %2788 = vst [vmem:[%s6 + $0xc0] sm:$0xff] %v2756
  %2789 = vst [vmem:[%s6 + $0xc8] sm:$0xff] %v2757
  %2790 = vst [vmem:[%s6 + $0xd0] sm:$0xff] %v2758
  %2791 = vst [vmem:[%s6 + $0xd8] sm:$0xff] %v2759
  %2792 = vst [vmem:[%s6 + $0xe0] sm:$0xff] %v2760
  %2793 = vst [vmem:[%s6 + $0xe8] sm:$0xff] %v2761
  %2794 = vst [vmem:[%s6 + $0xf0] sm:$0xff] %v2762
  %2795 = vst [vmem:[%s6 + $0xf8] sm:$0xff] %v2763
  %v2796 = vld [vmem:[%s5] sm:$0xff]
  %v2797 = vld [vmem:[%s5 + $0x8] sm:$0xff]
  %v2798 = vld [vmem:[%s5 + $0x10] sm:$0xff]
  %v2799 = vld [vmem:[%s5 + $0x18] sm:$0xff]
  %v2800 = vld [vmem:[%s5 + $0x20] sm:$0xff]
  %v2801 = vld [vmem:[%s5 + $0x28] sm:$0xff]
  %v2802 = vld [vmem:[%s5 + $0x30] sm:$0xff]
  %v2803 = vld [vmem:[%s5 + $0x38] sm:$0xff]
  %v2804 = vld [vmem:[%s5 + $0x40] sm:$0xff]
  %v2805 = vld [vmem:[%s5 + $0x48] sm:$0xff]
  %v2806 = vld [vmem:[%s5 + $0x50] sm:$0xff]
  %v2807 = vld [vmem:[%s5 + $0x58] sm:$0xff]
  %v2808 = vld [vmem:[%s5 + $0x60] sm:$0xff]
  %v2809 = vld [vmem:[%s5 + $0x68] sm:$0xff]
  %v2810 = vld [vmem:[%s5 + $0x70] sm:$0xff]
  %v2811 = vld [vmem:[%s5 + $0x78] sm:$0xff]
  %v2812 = vld [vmem:[%s5 + $0x80] sm:$0xff]
  %v2813 = vld [vmem:[%s5 + $0x88] sm:$0xff]
  %v2814 = vld [vmem:[%s5 + $0x90] sm:$0xff]
  %v2815 = vld [vmem:[%s5 + $0x98] sm:$0xff]
  %v2816 = vld [vmem:[%s5 + $0xa0] sm:$0xff]
  %v2817 = vld [vmem:[%s5 + $0xa8] sm:$0xff]
  %v2818 = vld [vmem:[%s5 + $0xb0] sm:$0xff]
  %v2819 = vld [vmem:[%s5 + $0xb8] sm:$0xff]
  %v2820 = vld [vmem:[%s5 + $0xc0] sm:$0xff]
  %v2821 = vld [vmem:[%s5 + $0xc8] sm:$0xff]
  %v2822 = vld [vmem:[%s5 + $0xd0] sm:$0xff]
  %v2823 = vld [vmem:[%s5 + $0xd8] sm:$0xff]
  %v2824 = vld [vmem:[%s5 + $0xe0] sm:$0xff]
  %v2825 = vld [vmem:[%s5 + $0xe8] sm:$0xff]
  %v2826 = vld [vmem:[%s5 + $0xf0] sm:$0xff]
  %v2827 = vld [vmem:[%s5 + $0xf8] sm:$0xff]
  %v2828 = vpack.c.bf16 %v2796, %v2796
  %v2829 = vpack.c.bf16 %v2797, %v2797
  %v2830 = vpack.c.bf16 %v2798, %v2798
  %v2831 = vpack.c.bf16 %v2799, %v2799
  %v2832 = vpack.c.bf16 %v2800, %v2800
  %v2833 = vpack.c.bf16 %v2801, %v2801
  %v2834 = vpack.c.bf16 %v2802, %v2802
  %v2835 = vpack.c.bf16 %v2803, %v2803
  %v2836 = vpack.c.bf16 %v2804, %v2804
  %v2837 = vpack.c.bf16 %v2805, %v2805
  %v2838 = vpack.c.bf16 %v2806, %v2806
  %v2839 = vpack.c.bf16 %v2807, %v2807
  %v2840 = vpack.c.bf16 %v2808, %v2808
  %v2841 = vpack.c.bf16 %v2809, %v2809
  %v2842 = vpack.c.bf16 %v2810, %v2810
  %v2843 = vpack.c.bf16 %v2811, %v2811
  %v2844 = vpack.c.bf16 %v2812, %v2812
  %v2845 = vpack.c.bf16 %v2813, %v2813
  %v2846 = vpack.c.bf16 %v2814, %v2814
  %v2847 = vpack.c.bf16 %v2815, %v2815
  %v2848 = vpack.c.bf16 %v2816, %v2816
  %v2849 = vpack.c.bf16 %v2817, %v2817
  %v2850 = vpack.c.bf16 %v2818, %v2818
  %v2851 = vpack.c.bf16 %v2819, %v2819
  %v2852 = vpack.c.bf16 %v2820, %v2820
  %v2853 = vpack.c.bf16 %v2821, %v2821
  %v2854 = vpack.c.bf16 %v2822, %v2822
  %v2855 = vpack.c.bf16 %v2823, %v2823
  %v2856 = vpack.c.bf16 %v2824, %v2824
  %v2857 = vpack.c.bf16 %v2825, %v2825
  %v2858 = vpack.c.bf16 %v2826, %v2826
  %v2859 = vpack.c.bf16 %v2827, %v2827
  %2860 = vst [vmem:[#allocation7] sm:$0xf] %v2828
  %2861 = vst [vmem:[#allocation7 + $0x8] sm:$0xf] %v2829
  %2862 = vst [vmem:[#allocation7 + $0x10] sm:$0xf] %v2830
  %2863 = vst [vmem:[#allocation7 + $0x18] sm:$0xf] %v2831
  %2864 = vst [vmem:[#allocation7 + $0x20] sm:$0xf] %v2832
  %2865 = vst [vmem:[#allocation7 + $0x28] sm:$0xf] %v2833
  %2866 = vst [vmem:[#allocation7 + $0x30] sm:$0xf] %v2834
  %2867 = vst [vmem:[#allocation7 + $0x38] sm:$0xf] %v2835
  %2868 = vst [vmem:[#allocation7 + $0x40] sm:$0xf] %v2836
  %2869 = vst [vmem:[#allocation7 + $0x48] sm:$0xf] %v2837
  %2870 = vst [vmem:[#allocation7 + $0x50] sm:$0xf] %v2838
  %2871 = vst [vmem:[#allocation7 + $0x58] sm:$0xf] %v2839
  %2872 = vst [vmem:[#allocation7 + $0x60] sm:$0xf] %v2840
  %2873 = vst [vmem:[#allocation7 + $0x68] sm:$0xf] %v2841
  %2874 = vst [vmem:[#allocation7 + $0x70] sm:$0xf] %v2842
  %2875 = vst [vmem:[#allocation7 + $0x78] sm:$0xf] %v2843
  %2876 = vst [vmem:[#allocation7 + $0x80] sm:$0xf] %v2844
  %2877 = vst [vmem:[#allocation7 + $0x88] sm:$0xf] %v2845
  %2878 = vst [vmem:[#allocation7 + $0x90] sm:$0xf] %v2846
  %2879 = vst [vmem:[#allocation7 + $0x98] sm:$0xf] %v2847
  %2880 = vst [vmem:[#allocation7 + $0xa0] sm:$0xf] %v2848
  %2881 = vst [vmem:[#allocation7 + $0xa8] sm:$0xf] %v2849
  %2882 = vst [vmem:[#allocation7 + $0xb0] sm:$0xf] %v2850
  %2883 = vst [vmem:[#allocation7 + $0xb8] sm:$0xf] %v2851
  %2884 = vst [vmem:[#allocation7 + $0xc0] sm:$0xf] %v2852
  %2885 = vst [vmem:[#allocation7 + $0xc8] sm:$0xf] %v2853
  %2886 = vst [vmem:[#allocation7 + $0xd0] sm:$0xf] %v2854
  %2887 = vst [vmem:[#allocation7 + $0xd8] sm:$0xf] %v2855
  %2888 = vst [vmem:[#allocation7 + $0xe0] sm:$0xf] %v2856
  %2889 = vst [vmem:[#allocation7 + $0xe8] sm:$0xf] %v2857
  %2890 = vst [vmem:[#allocation7 + $0xf0] sm:$0xf] %v2858
  %2891 = vst [vmem:[#allocation7 + $0xf8] sm:$0xf] %v2859
  %s2892 = sshll.u32 %s467, 4
  %2893 = dma.done %s96, %s2892
  %v2894 = vld [vmem:[#allocation6] sm:$0xf]
  %v2895 = vld [vmem:[#allocation6 + $0x4] sm:$0xf]
  %v2896 = vld [vmem:[#allocation6 + $0x8] sm:$0xf]
  %v2897 = vld [vmem:[#allocation6 + $0xc] sm:$0xf]
  %v2898 = vld [vmem:[#allocation6 + $0x10] sm:$0xf]
  %v2899 = vld [vmem:[#allocation6 + $0x14] sm:$0xf]
  %v2900 = vld [vmem:[#allocation6 + $0x18] sm:$0xf]
  %v2901 = vld [vmem:[#allocation6 + $0x1c] sm:$0xf]
  %v2902 = vld [vmem:[#allocation6 + $0x20] sm:$0xf]
  %v2903 = vld [vmem:[#allocation6 + $0x24] sm:$0xf]
  %v2904 = vld [vmem:[#allocation6 + $0x28] sm:$0xf]
  %v2905 = vld [vmem:[#allocation6 + $0x2c] sm:$0xf]
  %v2906 = vld [vmem:[#allocation6 + $0x30] sm:$0xf]
  %v2907 = vld [vmem:[#allocation6 + $0x34] sm:$0xf]
  %v2908 = vld [vmem:[#allocation6 + $0x38] sm:$0xf]
  %v2909 = vld [vmem:[#allocation6 + $0x3c] sm:$0xf]
  %v2910 = vld [vmem:[#allocation6 + $0x40] sm:$0xf]
  %v2911 = vld [vmem:[#allocation6 + $0x44] sm:$0xf]
  %v2912 = vld [vmem:[#allocation6 + $0x48] sm:$0xf]
  %v2913 = vld [vmem:[#allocation6 + $0x4c] sm:$0xf]
  %v2914 = vld [vmem:[#allocation6 + $0x50] sm:$0xf]
  %v2915 = vld [vmem:[#allocation6 + $0x54] sm:$0xf]
  %v2916 = vld [vmem:[#allocation6 + $0x58] sm:$0xf]
  %v2917 = vld [vmem:[#allocation6 + $0x5c] sm:$0xf]
  %v2918 = vld [vmem:[#allocation6 + $0x60] sm:$0xf]
  %v2919 = vld [vmem:[#allocation6 + $0x64] sm:$0xf]
  %v2920 = vld [vmem:[#allocation6 + $0x68] sm:$0xf]
  %v2921 = vld [vmem:[#allocation6 + $0x6c] sm:$0xf]
  %v2922 = vld [vmem:[#allocation6 + $0x70] sm:$0xf]
  %v2923 = vld [vmem:[#allocation6 + $0x74] sm:$0xf]
  %v2924 = vld [vmem:[#allocation6 + $0x78] sm:$0xf]
  %v2925 = vld [vmem:[#allocation6 + $0x7c] sm:$0xf]
  %2926 = vst [vmem:[#allocation7 + $0x4] sm:$0xf] %v2894
  %2927 = vst [vmem:[#allocation7 + $0xc] sm:$0xf] %v2895
  %2928 = vst [vmem:[#allocation7 + $0x14] sm:$0xf] %v2896
  %2929 = vst [vmem:[#allocation7 + $0x1c] sm:$0xf] %v2897
  %2930 = vst [vmem:[#allocation7 + $0x24] sm:$0xf] %v2898
  %2931 = vst [vmem:[#allocation7 + $0x2c] sm:$0xf] %v2899
  %2932 = vst [vmem:[#allocation7 + $0x34] sm:$0xf] %v2900
  %2933 = vst [vmem:[#allocation7 + $0x3c] sm:$0xf] %v2901
  %2934 = vst [vmem:[#allocation7 + $0x44] sm:$0xf] %v2902
  %2935 = vst [vmem:[#allocation7 + $0x4c] sm:$0xf] %v2903
  %2936 = vst [vmem:[#allocation7 + $0x54] sm:$0xf] %v2904
  %2937 = vst [vmem:[#allocation7 + $0x5c] sm:$0xf] %v2905
  %2938 = vst [vmem:[#allocation7 + $0x64] sm:$0xf] %v2906
  %2939 = vst [vmem:[#allocation7 + $0x6c] sm:$0xf] %v2907
  %2940 = vst [vmem:[#allocation7 + $0x74] sm:$0xf] %v2908
  %2941 = vst [vmem:[#allocation7 + $0x7c] sm:$0xf] %v2909
  %2942 = vst [vmem:[#allocation7 + $0x84] sm:$0xf] %v2910
  %2943 = vst [vmem:[#allocation7 + $0x8c] sm:$0xf] %v2911
  %2944 = vst [vmem:[#allocation7 + $0x94] sm:$0xf] %v2912
  %2945 = vst [vmem:[#allocation7 + $0x9c] sm:$0xf] %v2913
  %2946 = vst [vmem:[#allocation7 + $0xa4] sm:$0xf] %v2914
  %2947 = vst [vmem:[#allocation7 + $0xac] sm:$0xf] %v2915
  %2948 = vst [vmem:[#allocation7 + $0xb4] sm:$0xf] %v2916
  %2949 = vst [vmem:[#allocation7 + $0xbc] sm:$0xf] %v2917
  %2950 = vst [vmem:[#allocation7 + $0xc4] sm:$0xf] %v2918
  %2951 = vst [vmem:[#allocation7 + $0xcc] sm:$0xf] %v2919
  %2952 = vst [vmem:[#allocation7 + $0xd4] sm:$0xf] %v2920
  %2953 = vst [vmem:[#allocation7 + $0xdc] sm:$0xf] %v2921
  %2954 = vst [vmem:[#allocation7 + $0xe4] sm:$0xf] %v2922
  %2955 = vst [vmem:[#allocation7 + $0xec] sm:$0xf] %v2923
  %2956 = vst [vmem:[#allocation7 + $0xf4] sm:$0xf] %v2924
  %2957 = vst [vmem:[#allocation7 + $0xfc] sm:$0xf] %v2925
  %v2958 = vld [vmem:[#allocation3] sm:$0xff]
  %v2959 = vld [vmem:[#allocation3 + $0x8] sm:$0xff]
  %v2960 = vld [vmem:[#allocation3 + $0x10] sm:$0xff]
  %v2961 = vld [vmem:[#allocation3 + $0x18] sm:$0xff]
  %v2962 = vld [vmem:[#allocation3 + $0x20] sm:$0xff]
  %v2963 = vld [vmem:[#allocation3 + $0x28] sm:$0xff]
  %v2964 = vld [vmem:[#allocation3 + $0x30] sm:$0xff]
  %v2965 = vld [vmem:[#allocation3 + $0x38] sm:$0xff]
  %v2966 = vld [vmem:[#allocation3 + $0x40] sm:$0xff]
  %v2967 = vld [vmem:[#allocation3 + $0x48] sm:$0xff]
  %v2968 = vld [vmem:[#allocation3 + $0x50] sm:$0xff]
  %v2969 = vld [vmem:[#allocation3 + $0x58] sm:$0xff]
  %v2970 = vld [vmem:[#allocation3 + $0x60] sm:$0xff]
  %v2971 = vld [vmem:[#allocation3 + $0x68] sm:$0xff]
  %v2972 = vld [vmem:[#allocation3 + $0x70] sm:$0xff]
  %v2973 = vld [vmem:[#allocation3 + $0x78] sm:$0xff]
  %v2974 = vld [vmem:[#allocation3 + $0x80] sm:$0xff]
  %v2975 = vld [vmem:[#allocation3 + $0x88] sm:$0xff]
  %v2976 = vld [vmem:[#allocation3 + $0x90] sm:$0xff]
  %v2977 = vld [vmem:[#allocation3 + $0x98] sm:$0xff]
  %v2978 = vld [vmem:[#allocation3 + $0xa0] sm:$0xff]
  %v2979 = vld [vmem:[#allocation3 + $0xa8] sm:$0xff]
  %v2980 = vld [vmem:[#allocation3 + $0xb0] sm:$0xff]
  %v2981 = vld [vmem:[#allocation3 + $0xb8] sm:$0xff]
  %v2982 = vld [vmem:[#allocation3 + $0xc0] sm:$0xff]
  %v2983 = vld [vmem:[#allocation3 + $0xc8] sm:$0xff]
  %v2984 = vld [vmem:[#allocation3 + $0xd0] sm:$0xff]
  %v2985 = vld [vmem:[#allocation3 + $0xd8] sm:$0xff]
  %v2986 = vld [vmem:[#allocation3 + $0xe0] sm:$0xff]
  %v2987 = vld [vmem:[#allocation3 + $0xe8] sm:$0xff]
  %v2988 = vld [vmem:[#allocation3 + $0xf0] sm:$0xff]
  %v2989 = vld [vmem:[#allocation3 + $0xf8] sm:$0xff]
  %v2990 = vld [vmem:[#allocation7] sm:$0xff]
  %v2991 = vld [vmem:[#allocation7 + $0x8] sm:$0xff]
  %v2992 = vld [vmem:[#allocation7 + $0x10] sm:$0xff]
  %v2993 = vld [vmem:[#allocation7 + $0x18] sm:$0xff]
  %v2994 = vld [vmem:[#allocation7 + $0x20] sm:$0xff]
  %v2995 = vld [vmem:[#allocation7 + $0x28] sm:$0xff]
  %v2996 = vld [vmem:[#allocation7 + $0x30] sm:$0xff]
  %v2997 = vld [vmem:[#allocation7 + $0x38] sm:$0xff]
  %v2998 = vld [vmem:[#allocation7 + $0x40] sm:$0xff]
  %v2999 = vld [vmem:[#allocation7 + $0x48] sm:$0xff]
  %v3000 = vld [vmem:[#allocation7 + $0x50] sm:$0xff]
  %v3001 = vld [vmem:[#allocation7 + $0x58] sm:$0xff]
  %v3002 = vld [vmem:[#allocation7 + $0x60] sm:$0xff]
  %v3003 = vld [vmem:[#allocation7 + $0x68] sm:$0xff]
  %v3004 = vld [vmem:[#allocation7 + $0x70] sm:$0xff]
  %v3005 = vld [vmem:[#allocation7 + $0x78] sm:$0xff]
  %v3006 = vld [vmem:[#allocation7 + $0x80] sm:$0xff]
  %v3007 = vld [vmem:[#allocation7 + $0x88] sm:$0xff]
  %v3008 = vld [vmem:[#allocation7 + $0x90] sm:$0xff]
  %v3009 = vld [vmem:[#allocation7 + $0x98] sm:$0xff]
  %v3010 = vld [vmem:[#allocation7 + $0xa0] sm:$0xff]
  %v3011 = vld [vmem:[#allocation7 + $0xa8] sm:$0xff]
  %v3012 = vld [vmem:[#allocation7 + $0xb0] sm:$0xff]
  %v3013 = vld [vmem:[#allocation7 + $0xb8] sm:$0xff]
  %v3014 = vld [vmem:[#allocation7 + $0xc0] sm:$0xff]
  %v3015 = vld [vmem:[#allocation7 + $0xc8] sm:$0xff]
  %v3016 = vld [vmem:[#allocation7 + $0xd0] sm:$0xff]
  %v3017 = vld [vmem:[#allocation7 + $0xd8] sm:$0xff]
  %v3018 = vld [vmem:[#allocation7 + $0xe0] sm:$0xff]
  %v3019 = vld [vmem:[#allocation7 + $0xe8] sm:$0xff]
  %v3020 = vld [vmem:[#allocation7 + $0xf0] sm:$0xff]
  %v3021 = vld [vmem:[#allocation7 + $0xf8] sm:$0xff]
  %v3054 = vunpack.c.l.b16 %v2958
  %v3055 = vunpack.c.h.b16 %v2958
  %v3056 = vunpack.c.l.b16 %v2959
  %v3057 = vunpack.c.h.b16 %v2959
  %v3058 = vunpack.c.l.b16 %v2960
  %v3059 = vunpack.c.h.b16 %v2960
  %v3060 = vunpack.c.l.b16 %v2961
  %v3061 = vunpack.c.h.b16 %v2961
  %v3062 = vunpack.c.l.b16 %v2962
  %v3063 = vunpack.c.h.b16 %v2962
  %v3064 = vunpack.c.l.b16 %v2963
  %v3065 = vunpack.c.h.b16 %v2963
  %v3066 = vunpack.c.l.b16 %v2964
  %v3067 = vunpack.c.h.b16 %v2964
  %v3068 = vunpack.c.l.b16 %v2965
  %v3069 = vunpack.c.h.b16 %v2965
  %v3070 = vunpack.c.l.b16 %v2966
  %v3071 = vunpack.c.h.b16 %v2966
  %v3072 = vunpack.c.l.b16 %v2967
  %v3073 = vunpack.c.h.b16 %v2967
  %v3074 = vunpack.c.l.b16 %v2968
  %v3075 = vunpack.c.h.b16 %v2968
  %v3076 = vunpack.c.l.b16 %v2969
  %v3077 = vunpack.c.h.b16 %v2969
  %v3078 = vunpack.c.l.b16 %v2970
  %v3079 = vunpack.c.h.b16 %v2970
  %v3080 = vunpack.c.l.b16 %v2971
  %v3081 = vunpack.c.h.b16 %v2971
  %v3082 = vunpack.c.l.b16 %v2972
  %v3083 = vunpack.c.h.b16 %v2972
  %v3084 = vunpack.c.l.b16 %v2973
  %v3085 = vunpack.c.h.b16 %v2973
  %v3086 = vunpack.c.l.b16 %v2974
  %v3087 = vunpack.c.h.b16 %v2974
  %v3088 = vunpack.c.l.b16 %v2975
  %v3089 = vunpack.c.h.b16 %v2975
  %v3090 = vunpack.c.l.b16 %v2976
  %v3091 = vunpack.c.h.b16 %v2976
  %v3092 = vunpack.c.l.b16 %v2977
  %v3093 = vunpack.c.h.b16 %v2977
  %v3094 = vunpack.c.l.b16 %v2978
  %v3095 = vunpack.c.h.b16 %v2978
  %v3096 = vunpack.c.l.b16 %v2979
  %v3097 = vunpack.c.h.b16 %v2979
  %v3098 = vunpack.c.l.b16 %v2980
  %v3099 = vunpack.c.h.b16 %v2980
  %v3100 = vunpack.c.l.b16 %v2981
  %v3101 = vunpack.c.h.b16 %v2981
  %v3102 = vunpack.c.l.b16 %v2982
  %v3103 = vunpack.c.h.b16 %v2982
  %v3104 = vunpack.c.l.b16 %v2983
  %v3105 = vunpack.c.h.b16 %v2983
  %v3106 = vunpack.c.l.b16 %v2984
  %v3107 = vunpack.c.h.b16 %v2984
  %v3108 = vunpack.c.l.b16 %v2985
  %v3109 = vunpack.c.h.b16 %v2985
  %v3110 = vunpack.c.l.b16 %v2986
  %v3111 = vunpack.c.h.b16 %v2986
  %v3112 = vunpack.c.l.b16 %v2987
  %v3113 = vunpack.c.h.b16 %v2987
  %v3114 = vunpack.c.l.b16 %v2988
  %v3115 = vunpack.c.h.b16 %v2988
  %v3116 = vunpack.c.l.b16 %v2989
  %v3117 = vunpack.c.h.b16 %v2989
  %v3118 = vpack.c.b16 %v3056, %v3054
  %v3119 = vpack.c.b16 %v3057, %v3055
  %v3120 = vpack.c.b16 %v3060, %v3058
  %v3121 = vpack.c.b16 %v3061, %v3059
  %v3122 = vpack.c.b16 %v3064, %v3062
  %v3123 = vpack.c.b16 %v3065, %v3063
  %v3124 = vpack.c.b16 %v3068, %v3066
  %v3125 = vpack.c.b16 %v3069, %v3067
  %v3126 = vpack.c.b16 %v3072, %v3070
  %v3127 = vpack.c.b16 %v3073, %v3071
  %v3128 = vpack.c.b16 %v3076, %v3074
  %v3129 = vpack.c.b16 %v3077, %v3075
  %v3130 = vpack.c.b16 %v3080, %v3078
  %v3131 = vpack.c.b16 %v3081, %v3079
  %v3132 = vpack.c.b16 %v3084, %v3082
  %v3133 = vpack.c.b16 %v3085, %v3083
  %v3134 = vpack.c.b16 %v3088, %v3086
  %v3135 = vpack.c.b16 %v3089, %v3087
  %v3136 = vpack.c.b16 %v3092, %v3090
  %v3137 = vpack.c.b16 %v3093, %v3091
  %v3138 = vpack.c.b16 %v3096, %v3094
  %v3139 = vpack.c.b16 %v3097, %v3095
  %v3140 = vpack.c.b16 %v3100, %v3098
  %v3141 = vpack.c.b16 %v3101, %v3099
  %v3142 = vpack.c.b16 %v3104, %v3102
  %v3143 = vpack.c.b16 %v3105, %v3103
  %v3144 = vpack.c.b16 %v3108, %v3106
  %v3145 = vpack.c.b16 %v3109, %v3107
  %v3146 = vpack.c.b16 %v3112, %v3110
  %v3147 = vpack.c.b16 %v3113, %v3111
  %v3148 = vpack.c.b16 %v3116, %v3114
  %v3149 = vpack.c.b16 %v3117, %v3115
  %v3214 = vunpack.c.l.b16 %v2990
  %v3215 = vunpack.c.h.b16 %v2990
  %v3216 = vunpack.c.l.b16 %v2991
  %v3217 = vunpack.c.h.b16 %v2991
  %v3218 = vunpack.c.l.b16 %v2992
  %v3219 = vunpack.c.h.b16 %v2992
  %v3220 = vunpack.c.l.b16 %v2993
  %v3221 = vunpack.c.h.b16 %v2993
  %v3222 = vunpack.c.l.b16 %v2994
  %v3223 = vunpack.c.h.b16 %v2994
  %v3224 = vunpack.c.l.b16 %v2995
  %v3225 = vunpack.c.h.b16 %v2995
  %v3226 = vunpack.c.l.b16 %v2996
  %v3227 = vunpack.c.h.b16 %v2996
  %v3228 = vunpack.c.l.b16 %v2997
  %v3229 = vunpack.c.h.b16 %v2997
  %v3230 = vunpack.c.l.b16 %v2998
  %v3231 = vunpack.c.h.b16 %v2998
  %v3232 = vunpack.c.l.b16 %v2999
  %v3233 = vunpack.c.h.b16 %v2999
  %v3234 = vunpack.c.l.b16 %v3000
  %v3235 = vunpack.c.h.b16 %v3000
  %v3236 = vunpack.c.l.b16 %v3001
  %v3237 = vunpack.c.h.b16 %v3001
  %v3238 = vunpack.c.l.b16 %v3002
  %v3239 = vunpack.c.h.b16 %v3002
  %v3240 = vunpack.c.l.b16 %v3003
  %v3241 = vunpack.c.h.b16 %v3003
  %v3242 = vunpack.c.l.b16 %v3004
  %v3243 = vunpack.c.h.b16 %v3004
  %v3244 = vunpack.c.l.b16 %v3005
  %v3245 = vunpack.c.h.b16 %v3005
  %v3246 = vunpack.c.l.b16 %v3006
  %v3247 = vunpack.c.h.b16 %v3006
  %v3248 = vunpack.c.l.b16 %v3007
  %v3249 = vunpack.c.h.b16 %v3007
  %v3250 = vunpack.c.l.b16 %v3008
  %v3251 = vunpack.c.h.b16 %v3008
  %v3252 = vunpack.c.l.b16 %v3009
  %v3253 = vunpack.c.h.b16 %v3009
  %v3254 = vunpack.c.l.b16 %v3010
  %v3255 = vunpack.c.h.b16 %v3010
  %v3256 = vunpack.c.l.b16 %v3011
  %v3257 = vunpack.c.h.b16 %v3011
  %v3258 = vunpack.c.l.b16 %v3012
  %v3259 = vunpack.c.h.b16 %v3012
  %v3260 = vunpack.c.l.b16 %v3013
  %v3261 = vunpack.c.h.b16 %v3013
  %v3262 = vunpack.c.l.b16 %v3014
  %v3263 = vunpack.c.h.b16 %v3014
  %v3264 = vunpack.c.l.b16 %v3015
  %v3265 = vunpack.c.h.b16 %v3015
  %v3266 = vunpack.c.l.b16 %v3016
  %v3267 = vunpack.c.h.b16 %v3016
  %v3268 = vunpack.c.l.b16 %v3017
  %v3269 = vunpack.c.h.b16 %v3017
  %v3270 = vunpack.c.l.b16 %v3018
  %v3271 = vunpack.c.h.b16 %v3018
  %v3272 = vunpack.c.l.b16 %v3019
  %v3273 = vunpack.c.h.b16 %v3019
  %v3274 = vunpack.c.l.b16 %v3020
  %v3275 = vunpack.c.h.b16 %v3020
  %v3276 = vunpack.c.l.b16 %v3021
  %v3277 = vunpack.c.h.b16 %v3021
  %v3278 = vpack.c.b16 %v3216, %v3214
  %v3279 = vpack.c.b16 %v3217, %v3215
  %v3280 = vpack.c.b16 %v3220, %v3218
  %v3281 = vpack.c.b16 %v3221, %v3219
  %v3282 = vpack.c.b16 %v3224, %v3222
  %v3283 = vpack.c.b16 %v3225, %v3223
  %v3284 = vpack.c.b16 %v3228, %v3226
  %v3285 = vpack.c.b16 %v3229, %v3227
  %v3286 = vpack.c.b16 %v3232, %v3230
  %v3287 = vpack.c.b16 %v3233, %v3231
  %v3288 = vpack.c.b16 %v3236, %v3234
  %v3289 = vpack.c.b16 %v3237, %v3235
  %v3290 = vpack.c.b16 %v3240, %v3238
  %v3291 = vpack.c.b16 %v3241, %v3239
  %v3292 = vpack.c.b16 %v3244, %v3242
  %v3293 = vpack.c.b16 %v3245, %v3243
  %v3294 = vpack.c.b16 %v3248, %v3246
  %v3295 = vpack.c.b16 %v3249, %v3247
  %v3296 = vpack.c.b16 %v3252, %v3250
  %v3297 = vpack.c.b16 %v3253, %v3251
  %v3298 = vpack.c.b16 %v3256, %v3254
  %v3299 = vpack.c.b16 %v3257, %v3255
  %v3300 = vpack.c.b16 %v3260, %v3258
  %v3301 = vpack.c.b16 %v3261, %v3259
  %v3302 = vpack.c.b16 %v3264, %v3262
  %v3303 = vpack.c.b16 %v3265, %v3263
  %v3304 = vpack.c.b16 %v3268, %v3266
  %v3305 = vpack.c.b16 %v3269, %v3267
  %v3306 = vpack.c.b16 %v3272, %v3270
  %v3307 = vpack.c.b16 %v3273, %v3271
  %v3308 = vpack.c.b16 %v3276, %v3274
  %v3309 = vpack.c.b16 %v3277, %v3275
  %3342 = vmatpush.bf16.msra.mxu0 %v3292
  %3343 = vmatpush.bf16.msra.mxu0 %v3290
  %3344 = vmatpush.bf16.msra.mxu0 %v3288
  %3345 = vmatpush.bf16.msra.mxu0 %v3286
  %3346 = vmatpush.bf16.msra.mxu0 %v3284
  %3347 = vmatpush.bf16.msra.mxu0 %v3282
  %3348 = vmatpush.bf16.msra.mxu0 %v3280
  %3349 = vmatpush.bf16.msra.mxu0 %v3278
  %3350 = vmatmul.bf16.gmra.mxu0 %v3118
  %v3351 = vpop.f32.mrf.mxu0
  %v3352 = vadd.f32 0.0, %v3351
  %v3353 = vpop.f32.mrf.mxu0
  %v3354 = vadd.f32 0.0, %v3353
  %3355 = vmatmul.bf16.gmra.mxu0 %v3120
  %v3356 = vpop.f32.mrf.mxu0
  %v3357 = vadd.f32 0.0, %v3356
  %v3358 = vpop.f32.mrf.mxu0
  %v3359 = vadd.f32 0.0, %v3358
  %3360 = vmatmul.bf16.gmra.mxu0 %v3122
  %v3361 = vpop.f32.mrf.mxu0
  %v3362 = vadd.f32 0.0, %v3361
  %v3363 = vpop.f32.mrf.mxu0
  %v3364 = vadd.f32 0.0, %v3363
  %3365 = vmatmul.bf16.gmra.mxu0 %v3124
  %v3366 = vpop.f32.mrf.mxu0
  %v3367 = vadd.f32 0.0, %v3366
  %v3368 = vpop.f32.mrf.mxu0
  %v3369 = vadd.f32 0.0, %v3368
  %3370 = vmatmul.bf16.gmra.mxu0 %v3126
  %v3371 = vpop.f32.mrf.mxu0
  %v3372 = vadd.f32 0.0, %v3371
  %v3373 = vpop.f32.mrf.mxu0
  %v3374 = vadd.f32 0.0, %v3373
  %3375 = vmatmul.bf16.gmra.mxu0 %v3128
  %v3376 = vpop.f32.mrf.mxu0
  %v3377 = vadd.f32 0.0, %v3376
  %v3378 = vpop.f32.mrf.mxu0
  %v3379 = vadd.f32 0.0, %v3378
  %3380 = vmatmul.bf16.gmra.mxu0 %v3130
  %v3381 = vpop.f32.mrf.mxu0
  %v3382 = vadd.f32 0.0, %v3381
  %v3383 = vpop.f32.mrf.mxu0
  %v3384 = vadd.f32 0.0, %v3383
  %3385 = vmatmul.bf16.gmra.mxu0 %v3132
  %v3386 = vpop.f32.mrf.mxu0
  %v3387 = vadd.f32 0.0, %v3386
  %v3388 = vpop.f32.mrf.mxu0
  %v3389 = vadd.f32 0.0, %v3388
  %3390 = vmatmul.bf16.gmra.mxu0 %v3134
  %v3391 = vpop.f32.mrf.mxu0
  %v3392 = vadd.f32 0.0, %v3391
  %v3393 = vpop.f32.mrf.mxu0
  %v3394 = vadd.f32 0.0, %v3393
  %3395 = vmatmul.bf16.gmra.mxu0 %v3136
  %v3396 = vpop.f32.mrf.mxu0
  %v3397 = vadd.f32 0.0, %v3396
  %v3398 = vpop.f32.mrf.mxu0
  %v3399 = vadd.f32 0.0, %v3398
  %3400 = vmatmul.bf16.gmra.mxu0 %v3138
  %v3401 = vpop.f32.mrf.mxu0
  %v3402 = vadd.f32 0.0, %v3401
  %v3403 = vpop.f32.mrf.mxu0
  %v3404 = vadd.f32 0.0, %v3403
  %3405 = vmatmul.bf16.gmra.mxu0 %v3140
  %v3406 = vpop.f32.mrf.mxu0
  %v3407 = vadd.f32 0.0, %v3406
  %v3408 = vpop.f32.mrf.mxu0
  %v3409 = vadd.f32 0.0, %v3408
  %3410 = vmatmul.bf16.gmra.mxu0 %v3142
  %v3411 = vpop.f32.mrf.mxu0
  %v3412 = vadd.f32 0.0, %v3411
  %v3413 = vpop.f32.mrf.mxu0
  %v3414 = vadd.f32 0.0, %v3413
  %3415 = vmatmul.bf16.gmra.mxu0 %v3144
  %v3416 = vpop.f32.mrf.mxu0
  %v3417 = vadd.f32 0.0, %v3416
  %v3418 = vpop.f32.mrf.mxu0
  %v3419 = vadd.f32 0.0, %v3418
  %3420 = vmatmul.bf16.gmra.mxu0 %v3146
  %v3421 = vpop.f32.mrf.mxu0
  %v3422 = vadd.f32 0.0, %v3421
  %v3423 = vpop.f32.mrf.mxu0
  %v3424 = vadd.f32 0.0, %v3423
  %3425 = vmatmul.bf16.gmra.mxu0 %v3148
  %v3426 = vpop.f32.mrf.mxu0
  %v3427 = vadd.f32 0.0, %v3426
  %v3428 = vpop.f32.mrf.mxu0
  %v3429 = vadd.f32 0.0, %v3428
  %3430 = vdwg.mxu0
  %3431 = vmatpush.bf16.msra.mxu0 %v3308
  %3432 = vmatpush.bf16.msra.mxu0 %v3306
  %3433 = vmatpush.bf16.msra.mxu0 %v3304
  %3434 = vmatpush.bf16.msra.mxu0 %v3302
  %3435 = vmatpush.bf16.msra.mxu0 %v3300
  %3436 = vmatpush.bf16.msra.mxu0 %v3298
  %3437 = vmatpush.bf16.msra.mxu0 %v3296
  %3438 = vmatpush.bf16.msra.mxu0 %v3294
  %3439 = vmatmul.bf16.gmra.mxu0 %v3119
  %v3440 = vpop.f32.mrf.mxu0
  %v3441 = vadd.f32 %v3352, %v3440
  %v3442 = vpop.f32.mrf.mxu0
  %v3443 = vadd.f32 %v3354, %v3442
  %3444 = vmatmul.bf16.gmra.mxu0 %v3121
  %v3445 = vpop.f32.mrf.mxu0
  %v3446 = vadd.f32 %v3357, %v3445
  %v3447 = vpop.f32.mrf.mxu0
  %v3448 = vadd.f32 %v3359, %v3447
  %3449 = vmatmul.bf16.gmra.mxu0 %v3123
  %v3450 = vpop.f32.mrf.mxu0
  %v3451 = vadd.f32 %v3362, %v3450
  %v3452 = vpop.f32.mrf.mxu0
  %v3453 = vadd.f32 %v3364, %v3452
  %3454 = vmatmul.bf16.gmra.mxu0 %v3125
  %v3455 = vpop.f32.mrf.mxu0
  %v3456 = vadd.f32 %v3367, %v3455
  %v3457 = vpop.f32.mrf.mxu0
  %v3458 = vadd.f32 %v3369, %v3457
  %3459 = vmatmul.bf16.gmra.mxu0 %v3127
  %v3460 = vpop.f32.mrf.mxu0
  %v3461 = vadd.f32 %v3372, %v3460
  %v3462 = vpop.f32.mrf.mxu0
  %v3463 = vadd.f32 %v3374, %v3462
  %3464 = vmatmul.bf16.gmra.mxu0 %v3129
  %v3465 = vpop.f32.mrf.mxu0
  %v3466 = vadd.f32 %v3377, %v3465
  %v3467 = vpop.f32.mrf.mxu0
  %v3468 = vadd.f32 %v3379, %v3467
  %3469 = vmatmul.bf16.gmra.mxu0 %v3131
  %v3470 = vpop.f32.mrf.mxu0
  %v3471 = vadd.f32 %v3382, %v3470
  %v3472 = vpop.f32.mrf.mxu0
  %v3473 = vadd.f32 %v3384, %v3472
  %3474 = vmatmul.bf16.gmra.mxu0 %v3133
  %v3475 = vpop.f32.mrf.mxu0
  %v3476 = vadd.f32 %v3387, %v3475
  %v3477 = vpop.f32.mrf.mxu0
  %v3478 = vadd.f32 %v3389, %v3477
  %3479 = vmatmul.bf16.gmra.mxu0 %v3135
  %v3480 = vpop.f32.mrf.mxu0
  %v3481 = vadd.f32 %v3392, %v3480
  %v3482 = vpop.f32.mrf.mxu0
  %v3483 = vadd.f32 %v3394, %v3482
  %3484 = vmatmul.bf16.gmra.mxu0 %v3137
  %v3485 = vpop.f32.mrf.mxu0
  %v3486 = vadd.f32 %v3397, %v3485
  %v3487 = vpop.f32.mrf.mxu0
  %v3488 = vadd.f32 %v3399, %v3487
  %3489 = vmatmul.bf16.gmra.mxu0 %v3139
  %v3490 = vpop.f32.mrf.mxu0
  %v3491 = vadd.f32 %v3402, %v3490
  %v3492 = vpop.f32.mrf.mxu0
  %v3493 = vadd.f32 %v3404, %v3492
  %3494 = vmatmul.bf16.gmra.mxu0 %v3141
  %v3495 = vpop.f32.mrf.mxu0
  %v3496 = vadd.f32 %v3407, %v3495
  %v3497 = vpop.f32.mrf.mxu0
  %v3498 = vadd.f32 %v3409, %v3497
  %3499 = vmatmul.bf16.gmra.mxu0 %v3143
  %v3500 = vpop.f32.mrf.mxu0
  %v3501 = vadd.f32 %v3412, %v3500
  %v3502 = vpop.f32.mrf.mxu0
  %v3503 = vadd.f32 %v3414, %v3502
  %3504 = vmatmul.bf16.gmra.mxu0 %v3145
  %v3505 = vpop.f32.mrf.mxu0
  %v3506 = vadd.f32 %v3417, %v3505
  %v3507 = vpop.f32.mrf.mxu0
  %v3508 = vadd.f32 %v3419, %v3507
  %3509 = vmatmul.bf16.gmra.mxu0 %v3147
  %v3510 = vpop.f32.mrf.mxu0
  %v3511 = vadd.f32 %v3422, %v3510
  %v3512 = vpop.f32.mrf.mxu0
  %v3513 = vadd.f32 %v3424, %v3512
  %3514 = vmatmul.bf16.gmra.mxu0 %v3149
  %v3515 = vpop.f32.mrf.mxu0
  %v3516 = vadd.f32 %v3427, %v3515
  %v3517 = vpop.f32.mrf.mxu0
  %v3518 = vadd.f32 %v3429, %v3517
  %3519 = vdwg.mxu0
  %3520 = vmatpush.bf16.msra.mxu0 %v3293
  %3521 = vmatpush.bf16.msra.mxu0 %v3291
  %3522 = vmatpush.bf16.msra.mxu0 %v3289
  %3523 = vmatpush.bf16.msra.mxu0 %v3287
  %3524 = vmatpush.bf16.msra.mxu0 %v3285
  %3525 = vmatpush.bf16.msra.mxu0 %v3283
  %3526 = vmatpush.bf16.msra.mxu0 %v3281
  %3527 = vmatpush.bf16.msra.mxu0 %v3279
  %3528 = vmatmul.bf16.gmra.mxu0 %v3118
  %v3529 = vpop.f32.mrf.mxu0
  %v3530 = vadd.f32 0.0, %v3529
  %v3531 = vpop.f32.mrf.mxu0
  %v3532 = vadd.f32 0.0, %v3531
  %3533 = vmatmul.bf16.gmra.mxu0 %v3120
  %v3534 = vpop.f32.mrf.mxu0
  %v3535 = vadd.f32 0.0, %v3534
  %v3536 = vpop.f32.mrf.mxu0
  %v3537 = vadd.f32 0.0, %v3536
  %3538 = vmatmul.bf16.gmra.mxu0 %v3122
  %v3539 = vpop.f32.mrf.mxu0
  %v3540 = vadd.f32 0.0, %v3539
  %v3541 = vpop.f32.mrf.mxu0
  %v3542 = vadd.f32 0.0, %v3541
  %3543 = vmatmul.bf16.gmra.mxu0 %v3124
  %v3544 = vpop.f32.mrf.mxu0
  %v3545 = vadd.f32 0.0, %v3544
  %v3546 = vpop.f32.mrf.mxu0
  %v3547 = vadd.f32 0.0, %v3546
  %3548 = vmatmul.bf16.gmra.mxu0 %v3126
  %v3549 = vpop.f32.mrf.mxu0
  %v3550 = vadd.f32 0.0, %v3549
  %v3551 = vpop.f32.mrf.mxu0
  %v3552 = vadd.f32 0.0, %v3551
  %3553 = vmatmul.bf16.gmra.mxu0 %v3128
  %v3554 = vpop.f32.mrf.mxu0
  %v3555 = vadd.f32 0.0, %v3554
  %v3556 = vpop.f32.mrf.mxu0
  %v3557 = vadd.f32 0.0, %v3556
  %3558 = vmatmul.bf16.gmra.mxu0 %v3130
  %v3559 = vpop.f32.mrf.mxu0
  %v3560 = vadd.f32 0.0, %v3559
  %v3561 = vpop.f32.mrf.mxu0
  %v3562 = vadd.f32 0.0, %v3561
  %3563 = vmatmul.bf16.gmra.mxu0 %v3132
  %v3564 = vpop.f32.mrf.mxu0
  %v3565 = vadd.f32 0.0, %v3564
  %v3566 = vpop.f32.mrf.mxu0
  %v3567 = vadd.f32 0.0, %v3566
  %3568 = vmatmul.bf16.gmra.mxu0 %v3134
  %v3569 = vpop.f32.mrf.mxu0
  %v3570 = vadd.f32 0.0, %v3569
  %v3571 = vpop.f32.mrf.mxu0
  %v3572 = vadd.f32 0.0, %v3571
  %3573 = vmatmul.bf16.gmra.mxu0 %v3136
  %v3574 = vpop.f32.mrf.mxu0
  %v3575 = vadd.f32 0.0, %v3574
  %v3576 = vpop.f32.mrf.mxu0
  %v3577 = vadd.f32 0.0, %v3576
  %3578 = vmatmul.bf16.gmra.mxu0 %v3138
  %v3579 = vpop.f32.mrf.mxu0
  %v3580 = vadd.f32 0.0, %v3579
  %v3581 = vpop.f32.mrf.mxu0
  %v3582 = vadd.f32 0.0, %v3581
  %3583 = vmatmul.bf16.gmra.mxu0 %v3140
  %v3584 = vpop.f32.mrf.mxu0
  %v3585 = vadd.f32 0.0, %v3584
  %v3586 = vpop.f32.mrf.mxu0
  %v3587 = vadd.f32 0.0, %v3586
  %3588 = vmatmul.bf16.gmra.mxu0 %v3142
  %v3589 = vpop.f32.mrf.mxu0
  %v3590 = vadd.f32 0.0, %v3589
  %v3591 = vpop.f32.mrf.mxu0
  %v3592 = vadd.f32 0.0, %v3591
  %3593 = vmatmul.bf16.gmra.mxu0 %v3144
  %v3594 = vpop.f32.mrf.mxu0
  %v3595 = vadd.f32 0.0, %v3594
  %v3596 = vpop.f32.mrf.mxu0
  %v3597 = vadd.f32 0.0, %v3596
  %3598 = vmatmul.bf16.gmra.mxu0 %v3146
  %v3599 = vpop.f32.mrf.mxu0
  %v3600 = vadd.f32 0.0, %v3599
  %v3601 = vpop.f32.mrf.mxu0
  %v3602 = vadd.f32 0.0, %v3601
  %3603 = vmatmul.bf16.gmra.mxu0 %v3148
  %v3604 = vpop.f32.mrf.mxu0
  %v3605 = vadd.f32 0.0, %v3604
  %v3606 = vpop.f32.mrf.mxu0
  %v3607 = vadd.f32 0.0, %v3606
  %3608 = vdwg.mxu0
  %3609 = vmatpush.bf16.msra.mxu0 %v3309
  %3610 = vmatpush.bf16.msra.mxu0 %v3307
  %3611 = vmatpush.bf16.msra.mxu0 %v3305
  %3612 = vmatpush.bf16.msra.mxu0 %v3303
  %3613 = vmatpush.bf16.msra.mxu0 %v3301
  %3614 = vmatpush.bf16.msra.mxu0 %v3299
  %3615 = vmatpush.bf16.msra.mxu0 %v3297
  %3616 = vmatpush.bf16.msra.mxu0 %v3295
  %3617 = vmatmul.bf16.gmra.mxu0 %v3119
  %v3618 = vpop.f32.mrf.mxu0
  %v3619 = vadd.f32 %v3530, %v3618
  %v3620 = vpop.f32.mrf.mxu0
  %v3621 = vadd.f32 %v3532, %v3620
  %3622 = vmatmul.bf16.gmra.mxu0 %v3121
  %v3623 = vpop.f32.mrf.mxu0
  %v3624 = vadd.f32 %v3535, %v3623
  %v3625 = vpop.f32.mrf.mxu0
  %v3626 = vadd.f32 %v3537, %v3625
  %3627 = vmatmul.bf16.gmra.mxu0 %v3123
  %v3628 = vpop.f32.mrf.mxu0
  %v3629 = vadd.f32 %v3540, %v3628
  %v3630 = vpop.f32.mrf.mxu0
  %v3631 = vadd.f32 %v3542, %v3630
  %3632 = vmatmul.bf16.gmra.mxu0 %v3125
  %v3633 = vpop.f32.mrf.mxu0
  %v3634 = vadd.f32 %v3545, %v3633
  %v3635 = vpop.f32.mrf.mxu0
  %v3636 = vadd.f32 %v3547, %v3635
  %3637 = vmatmul.bf16.gmra.mxu0 %v3127
  %v3638 = vpop.f32.mrf.mxu0
  %v3639 = vadd.f32 %v3550, %v3638
  %v3640 = vpop.f32.mrf.mxu0
  %v3641 = vadd.f32 %v3552, %v3640
  %3642 = vmatmul.bf16.gmra.mxu0 %v3129
  %v3643 = vpop.f32.mrf.mxu0
  %v3644 = vadd.f32 %v3555, %v3643
  %v3645 = vpop.f32.mrf.mxu0
  %v3646 = vadd.f32 %v3557, %v3645
  %3647 = vmatmul.bf16.gmra.mxu0 %v3131
  %v3648 = vpop.f32.mrf.mxu0
  %v3649 = vadd.f32 %v3560, %v3648
  %v3650 = vpop.f32.mrf.mxu0
  %v3651 = vadd.f32 %v3562, %v3650
  %3652 = vmatmul.bf16.gmra.mxu0 %v3133
  %v3653 = vpop.f32.mrf.mxu0
  %v3654 = vadd.f32 %v3565, %v3653
  %v3655 = vpop.f32.mrf.mxu0
  %v3656 = vadd.f32 %v3567, %v3655
  %3657 = vmatmul.bf16.gmra.mxu0 %v3135
  %v3658 = vpop.f32.mrf.mxu0
  %v3659 = vadd.f32 %v3570, %v3658
  %v3660 = vpop.f32.mrf.mxu0
  %v3661 = vadd.f32 %v3572, %v3660
  %3662 = vmatmul.bf16.gmra.mxu0 %v3137
  %v3663 = vpop.f32.mrf.mxu0
  %v3664 = vadd.f32 %v3575, %v3663
  %v3665 = vpop.f32.mrf.mxu0
  %v3666 = vadd.f32 %v3577, %v3665
  %3667 = vmatmul.bf16.gmra.mxu0 %v3139
  %v3668 = vpop.f32.mrf.mxu0
  %v3669 = vadd.f32 %v3580, %v3668
  %v3670 = vpop.f32.mrf.mxu0
  %v3671 = vadd.f32 %v3582, %v3670
  %3672 = vmatmul.bf16.gmra.mxu0 %v3141
  %v3673 = vpop.f32.mrf.mxu0
  %v3674 = vadd.f32 %v3585, %v3673
  %v3675 = vpop.f32.mrf.mxu0
  %v3676 = vadd.f32 %v3587, %v3675
  %3677 = vmatmul.bf16.gmra.mxu0 %v3143
  %v3678 = vpop.f32.mrf.mxu0
  %v3679 = vadd.f32 %v3590, %v3678
  %v3680 = vpop.f32.mrf.mxu0
  %v3681 = vadd.f32 %v3592, %v3680
  %3682 = vmatmul.bf16.gmra.mxu0 %v3145
  %v3683 = vpop.f32.mrf.mxu0
  %v3684 = vadd.f32 %v3595, %v3683
  %v3685 = vpop.f32.mrf.mxu0
  %v3686 = vadd.f32 %v3597, %v3685
  %3687 = vmatmul.bf16.gmra.mxu0 %v3147
  %v3688 = vpop.f32.mrf.mxu0
  %v3689 = vadd.f32 %v3600, %v3688
  %v3690 = vpop.f32.mrf.mxu0
  %v3691 = vadd.f32 %v3602, %v3690
  %3692 = vmatmul.bf16.gmra.mxu0 %v3149
  %v3693 = vpop.f32.mrf.mxu0
  %v3694 = vadd.f32 %v3605, %v3693
  %v3695 = vpop.f32.mrf.mxu0
  %v3696 = vadd.f32 %v3607, %v3695
  %3697 = vdwg.mxu0
  %v3698 = vld [vmem:[%s5] sm:$0xff]
  %v3699 = vld [vmem:[%s5 + $0x8] sm:$0xff]
  %v3700 = vld [vmem:[%s5 + $0x10] sm:$0xff]
  %v3701 = vld [vmem:[%s5 + $0x18] sm:$0xff]
  %v3702 = vld [vmem:[%s5 + $0x20] sm:$0xff]
  %v3703 = vld [vmem:[%s5 + $0x28] sm:$0xff]
  %v3704 = vld [vmem:[%s5 + $0x30] sm:$0xff]
  %v3705 = vld [vmem:[%s5 + $0x38] sm:$0xff]
  %v3706 = vld [vmem:[%s5 + $0x40] sm:$0xff]
  %v3707 = vld [vmem:[%s5 + $0x48] sm:$0xff]
  %v3708 = vld [vmem:[%s5 + $0x50] sm:$0xff]
  %v3709 = vld [vmem:[%s5 + $0x58] sm:$0xff]
  %v3710 = vld [vmem:[%s5 + $0x60] sm:$0xff]
  %v3711 = vld [vmem:[%s5 + $0x68] sm:$0xff]
  %v3712 = vld [vmem:[%s5 + $0x70] sm:$0xff]
  %v3713 = vld [vmem:[%s5 + $0x78] sm:$0xff]
  %v3714 = vld [vmem:[%s5 + $0x80] sm:$0xff]
  %v3715 = vld [vmem:[%s5 + $0x88] sm:$0xff]
  %v3716 = vld [vmem:[%s5 + $0x90] sm:$0xff]
  %v3717 = vld [vmem:[%s5 + $0x98] sm:$0xff]
  %v3718 = vld [vmem:[%s5 + $0xa0] sm:$0xff]
  %v3719 = vld [vmem:[%s5 + $0xa8] sm:$0xff]
  %v3720 = vld [vmem:[%s5 + $0xb0] sm:$0xff]
  %v3721 = vld [vmem:[%s5 + $0xb8] sm:$0xff]
  %v3722 = vld [vmem:[%s5 + $0xc0] sm:$0xff]
  %v3723 = vld [vmem:[%s5 + $0xc8] sm:$0xff]
  %v3724 = vld [vmem:[%s5 + $0xd0] sm:$0xff]
  %v3725 = vld [vmem:[%s5 + $0xd8] sm:$0xff]
  %v3726 = vld [vmem:[%s5 + $0xe0] sm:$0xff]
  %v3727 = vld [vmem:[%s5 + $0xe8] sm:$0xff]
  %v3728 = vld [vmem:[%s5 + $0xf0] sm:$0xff]
  %v3729 = vld [vmem:[%s5 + $0xf8] sm:$0xff]
  %v3730 = vadd.f32 %v3698, %v3441
  %v3731 = vadd.f32 %v3699, %v3443
  %v3732 = vadd.f32 %v3700, %v3446
  %v3733 = vadd.f32 %v3701, %v3448
  %v3734 = vadd.f32 %v3702, %v3451
  %v3735 = vadd.f32 %v3703, %v3453
  %v3736 = vadd.f32 %v3704, %v3456
  %v3737 = vadd.f32 %v3705, %v3458
  %v3738 = vadd.f32 %v3706, %v3461
  %v3739 = vadd.f32 %v3707, %v3463
  %v3740 = vadd.f32 %v3708, %v3466
  %v3741 = vadd.f32 %v3709, %v3468
  %v3742 = vadd.f32 %v3710, %v3471
  %v3743 = vadd.f32 %v3711, %v3473
  %v3744 = vadd.f32 %v3712, %v3476
  %v3745 = vadd.f32 %v3713, %v3478
  %v3746 = vadd.f32 %v3714, %v3481
  %v3747 = vadd.f32 %v3715, %v3483
  %v3748 = vadd.f32 %v3716, %v3486
  %v3749 = vadd.f32 %v3717, %v3488
  %v3750 = vadd.f32 %v3718, %v3491
  %v3751 = vadd.f32 %v3719, %v3493
  %v3752 = vadd.f32 %v3720, %v3496
  %v3753 = vadd.f32 %v3721, %v3498
  %v3754 = vadd.f32 %v3722, %v3501
  %v3755 = vadd.f32 %v3723, %v3503
  %v3756 = vadd.f32 %v3724, %v3506
  %v3757 = vadd.f32 %v3725, %v3508
  %v3758 = vadd.f32 %v3726, %v3511
  %v3759 = vadd.f32 %v3727, %v3513
  %v3760 = vadd.f32 %v3728, %v3516
  %v3761 = vadd.f32 %v3729, %v3518
  %3762 = vst [vmem:[%s5] sm:$0xff] %v3730
  %3763 = vst [vmem:[%s5 + $0x8] sm:$0xff] %v3731
  %3764 = vst [vmem:[%s5 + $0x10] sm:$0xff] %v3732
  %3765 = vst [vmem:[%s5 + $0x18] sm:$0xff] %v3733
  %3766 = vst [vmem:[%s5 + $0x20] sm:$0xff] %v3734
  %3767 = vst [vmem:[%s5 + $0x28] sm:$0xff] %v3735
  %3768 = vst [vmem:[%s5 + $0x30] sm:$0xff] %v3736
  %3769 = vst [vmem:[%s5 + $0x38] sm:$0xff] %v3737
  %3770 = vst [vmem:[%s5 + $0x40] sm:$0xff] %v3738
  %3771 = vst [vmem:[%s5 + $0x48] sm:$0xff] %v3739
  %3772 = vst [vmem:[%s5 + $0x50] sm:$0xff] %v3740
  %3773 = vst [vmem:[%s5 + $0x58] sm:$0xff] %v3741
  %3774 = vst [vmem:[%s5 + $0x60] sm:$0xff] %v3742
  %3775 = vst [vmem:[%s5 + $0x68] sm:$0xff] %v3743
  %3776 = vst [vmem:[%s5 + $0x70] sm:$0xff] %v3744
  %3777 = vst [vmem:[%s5 + $0x78] sm:$0xff] %v3745
  %3778 = vst [vmem:[%s5 + $0x80] sm:$0xff] %v3746
  %3779 = vst [vmem:[%s5 + $0x88] sm:$0xff] %v3747
  %3780 = vst [vmem:[%s5 + $0x90] sm:$0xff] %v3748
  %3781 = vst [vmem:[%s5 + $0x98] sm:$0xff] %v3749
  %3782 = vst [vmem:[%s5 + $0xa0] sm:$0xff] %v3750
  %3783 = vst [vmem:[%s5 + $0xa8] sm:$0xff] %v3751
  %3784 = vst [vmem:[%s5 + $0xb0] sm:$0xff] %v3752
  %3785 = vst [vmem:[%s5 + $0xb8] sm:$0xff] %v3753
  %3786 = vst [vmem:[%s5 + $0xc0] sm:$0xff] %v3754
  %3787 = vst [vmem:[%s5 + $0xc8] sm:$0xff] %v3755
  %3788 = vst [vmem:[%s5 + $0xd0] sm:$0xff] %v3756
  %3789 = vst [vmem:[%s5 + $0xd8] sm:$0xff] %v3757
  %3790 = vst [vmem:[%s5 + $0xe0] sm:$0xff] %v3758
  %3791 = vst [vmem:[%s5 + $0xe8] sm:$0xff] %v3759
  %3792 = vst [vmem:[%s5 + $0xf0] sm:$0xff] %v3760
  %3793 = vst [vmem:[%s5 + $0xf8] sm:$0xff] %v3761
  %v3794 = vld [vmem:[%s6] sm:$0xff]
  %v3795 = vld [vmem:[%s6 + $0x8] sm:$0xff]
  %v3796 = vld [vmem:[%s6 + $0x10] sm:$0xff]
  %v3797 = vld [vmem:[%s6 + $0x18] sm:$0xff]
  %v3798 = vld [vmem:[%s6 + $0x20] sm:$0xff]
  %v3799 = vld [vmem:[%s6 + $0x28] sm:$0xff]
  %v3800 = vld [vmem:[%s6 + $0x30] sm:$0xff]
  %v3801 = vld [vmem:[%s6 + $0x38] sm:$0xff]
  %v3802 = vld [vmem:[%s6 + $0x40] sm:$0xff]
  %v3803 = vld [vmem:[%s6 + $0x48] sm:$0xff]
  %v3804 = vld [vmem:[%s6 + $0x50] sm:$0xff]
  %v3805 = vld [vmem:[%s6 + $0x58] sm:$0xff]
  %v3806 = vld [vmem:[%s6 + $0x60] sm:$0xff]
  %v3807 = vld [vmem:[%s6 + $0x68] sm:$0xff]
  %v3808 = vld [vmem:[%s6 + $0x70] sm:$0xff]
  %v3809 = vld [vmem:[%s6 + $0x78] sm:$0xff]
  %v3810 = vld [vmem:[%s6 + $0x80] sm:$0xff]
  %v3811 = vld [vmem:[%s6 + $0x88] sm:$0xff]
  %v3812 = vld [vmem:[%s6 + $0x90] sm:$0xff]
  %v3813 = vld [vmem:[%s6 + $0x98] sm:$0xff]
  %v3814 = vld [vmem:[%s6 + $0xa0] sm:$0xff]
  %v3815 = vld [vmem:[%s6 + $0xa8] sm:$0xff]
  %v3816 = vld [vmem:[%s6 + $0xb0] sm:$0xff]
  %v3817 = vld [vmem:[%s6 + $0xb8] sm:$0xff]
  %v3818 = vld [vmem:[%s6 + $0xc0] sm:$0xff]
  %v3819 = vld [vmem:[%s6 + $0xc8] sm:$0xff]
  %v3820 = vld [vmem:[%s6 + $0xd0] sm:$0xff]
  %v3821 = vld [vmem:[%s6 + $0xd8] sm:$0xff]
  %v3822 = vld [vmem:[%s6 + $0xe0] sm:$0xff]
  %v3823 = vld [vmem:[%s6 + $0xe8] sm:$0xff]
  %v3824 = vld [vmem:[%s6 + $0xf0] sm:$0xff]
  %v3825 = vld [vmem:[%s6 + $0xf8] sm:$0xff]
  %v3826 = vadd.f32 %v3794, %v3619
  %v3827 = vadd.f32 %v3795, %v3621
  %v3828 = vadd.f32 %v3796, %v3624
  %v3829 = vadd.f32 %v3797, %v3626
  %v3830 = vadd.f32 %v3798, %v3629
  %v3831 = vadd.f32 %v3799, %v3631
  %v3832 = vadd.f32 %v3800, %v3634
  %v3833 = vadd.f32 %v3801, %v3636
  %v3834 = vadd.f32 %v3802, %v3639
  %v3835 = vadd.f32 %v3803, %v3641
  %v3836 = vadd.f32 %v3804, %v3644
  %v3837 = vadd.f32 %v3805, %v3646
  %v3838 = vadd.f32 %v3806, %v3649
  %v3839 = vadd.f32 %v3807, %v3651
  %v3840 = vadd.f32 %v3808, %v3654
  %v3841 = vadd.f32 %v3809, %v3656
  %v3842 = vadd.f32 %v3810, %v3659
  %v3843 = vadd.f32 %v3811, %v3661
  %v3844 = vadd.f32 %v3812, %v3664
  %v3845 = vadd.f32 %v3813, %v3666
  %v3846 = vadd.f32 %v3814, %v3669
  %v3847 = vadd.f32 %v3815, %v3671
  %v3848 = vadd.f32 %v3816, %v3674
  %v3849 = vadd.f32 %v3817, %v3676
  %v3850 = vadd.f32 %v3818, %v3679
  %v3851 = vadd.f32 %v3819, %v3681
  %v3852 = vadd.f32 %v3820, %v3684
  %v3853 = vadd.f32 %v3821, %v3686
  %v3854 = vadd.f32 %v3822, %v3689
  %v3855 = vadd.f32 %v3823, %v3691
  %v3856 = vadd.f32 %v3824, %v3694
  %v3857 = vadd.f32 %v3825, %v3696
  %3858 = vst [vmem:[%s6] sm:$0xff] %v3826
  %3859 = vst [vmem:[%s6 + $0x8] sm:$0xff] %v3827
  %3860 = vst [vmem:[%s6 + $0x10] sm:$0xff] %v3828
  %3861 = vst [vmem:[%s6 + $0x18] sm:$0xff] %v3829
  %3862 = vst [vmem:[%s6 + $0x20] sm:$0xff] %v3830
  %3863 = vst [vmem:[%s6 + $0x28] sm:$0xff] %v3831
  %3864 = vst [vmem:[%s6 + $0x30] sm:$0xff] %v3832
  %3865 = vst [vmem:[%s6 + $0x38] sm:$0xff] %v3833
  %3866 = vst [vmem:[%s6 + $0x40] sm:$0xff] %v3834
  %3867 = vst [vmem:[%s6 + $0x48] sm:$0xff] %v3835
  %3868 = vst [vmem:[%s6 + $0x50] sm:$0xff] %v3836
  %3869 = vst [vmem:[%s6 + $0x58] sm:$0xff] %v3837
  %3870 = vst [vmem:[%s6 + $0x60] sm:$0xff] %v3838
  %3871 = vst [vmem:[%s6 + $0x68] sm:$0xff] %v3839
  %3872 = vst [vmem:[%s6 + $0x70] sm:$0xff] %v3840
  %3873 = vst [vmem:[%s6 + $0x78] sm:$0xff] %v3841
  %3874 = vst [vmem:[%s6 + $0x80] sm:$0xff] %v3842
  %3875 = vst [vmem:[%s6 + $0x88] sm:$0xff] %v3843
  %3876 = vst [vmem:[%s6 + $0x90] sm:$0xff] %v3844
  %3877 = vst [vmem:[%s6 + $0x98] sm:$0xff] %v3845
  %3878 = vst [vmem:[%s6 + $0xa0] sm:$0xff] %v3846
  %3879 = vst [vmem:[%s6 + $0xa8] sm:$0xff] %v3847
  %3880 = vst [vmem:[%s6 + $0xb0] sm:$0xff] %v3848
  %3881 = vst [vmem:[%s6 + $0xb8] sm:$0xff] %v3849
  %3882 = vst [vmem:[%s6 + $0xc0] sm:$0xff] %v3850
  %3883 = vst [vmem:[%s6 + $0xc8] sm:$0xff] %v3851
  %3884 = vst [vmem:[%s6 + $0xd0] sm:$0xff] %v3852
  %3885 = vst [vmem:[%s6 + $0xd8] sm:$0xff] %v3853
  %3886 = vst [vmem:[%s6 + $0xe0] sm:$0xff] %v3854
  %3887 = vst [vmem:[%s6 + $0xe8] sm:$0xff] %v3855
  %3888 = vst [vmem:[%s6 + $0xf0] sm:$0xff] %v3856
  %3889 = vst [vmem:[%s6 + $0xf8] sm:$0xff] %v3857
  %v3890 = vpack.c.bf16 %v3441, %v3441
  %v3891 = vpack.c.bf16 %v3443, %v3443
  %v3892 = vpack.c.bf16 %v3446, %v3446
  %v3893 = vpack.c.bf16 %v3448, %v3448
  %v3894 = vpack.c.bf16 %v3451, %v3451
  %v3895 = vpack.c.bf16 %v3453, %v3453
  %v3896 = vpack.c.bf16 %v3456, %v3456
  %v3897 = vpack.c.bf16 %v3458, %v3458
  %v3898 = vpack.c.bf16 %v3461, %v3461
  %v3899 = vpack.c.bf16 %v3463, %v3463
  %v3900 = vpack.c.bf16 %v3466, %v3466
  %v3901 = vpack.c.bf16 %v3468, %v3468
  %v3902 = vpack.c.bf16 %v3471, %v3471
  %v3903 = vpack.c.bf16 %v3473, %v3473
  %v3904 = vpack.c.bf16 %v3476, %v3476
  %v3905 = vpack.c.bf16 %v3478, %v3478
  %v3906 = vpack.c.bf16 %v3481, %v3481
  %v3907 = vpack.c.bf16 %v3483, %v3483
  %v3908 = vpack.c.bf16 %v3486, %v3486
  %v3909 = vpack.c.bf16 %v3488, %v3488
  %v3910 = vpack.c.bf16 %v3491, %v3491
  %v3911 = vpack.c.bf16 %v3493, %v3493
  %v3912 = vpack.c.bf16 %v3496, %v3496
  %v3913 = vpack.c.bf16 %v3498, %v3498
  %v3914 = vpack.c.bf16 %v3501, %v3501
  %v3915 = vpack.c.bf16 %v3503, %v3503
  %v3916 = vpack.c.bf16 %v3506, %v3506
  %v3917 = vpack.c.bf16 %v3508, %v3508
  %v3918 = vpack.c.bf16 %v3511, %v3511
  %v3919 = vpack.c.bf16 %v3513, %v3513
  %v3920 = vpack.c.bf16 %v3516, %v3516
  %v3921 = vpack.c.bf16 %v3518, %v3518
  %3922 = vst [vmem:[#allocation7] sm:$0xf] %v3890
  %3923 = vst [vmem:[#allocation7 + $0x8] sm:$0xf] %v3891
  %3924 = vst [vmem:[#allocation7 + $0x10] sm:$0xf] %v3892
  %3925 = vst [vmem:[#allocation7 + $0x18] sm:$0xf] %v3893
  %3926 = vst [vmem:[#allocation7 + $0x20] sm:$0xf] %v3894
  %3927 = vst [vmem:[#allocation7 + $0x28] sm:$0xf] %v3895
  %3928 = vst [vmem:[#allocation7 + $0x30] sm:$0xf] %v3896
  %3929 = vst [vmem:[#allocation7 + $0x38] sm:$0xf] %v3897
  %3930 = vst [vmem:[#allocation7 + $0x40] sm:$0xf] %v3898
  %3931 = vst [vmem:[#allocation7 + $0x48] sm:$0xf] %v3899
  %3932 = vst [vmem:[#allocation7 + $0x50] sm:$0xf] %v3900
  %3933 = vst [vmem:[#allocation7 + $0x58] sm:$0xf] %v3901
  %3934 = vst [vmem:[#allocation7 + $0x60] sm:$0xf] %v3902
  %3935 = vst [vmem:[#allocation7 + $0x68] sm:$0xf] %v3903
  %3936 = vst [vmem:[#allocation7 + $0x70] sm:$0xf] %v3904
  %3937 = vst [vmem:[#allocation7 + $0x78] sm:$0xf] %v3905
  %3938 = vst [vmem:[#allocation7 + $0x80] sm:$0xf] %v3906
  %3939 = vst [vmem:[#allocation7 + $0x88] sm:$0xf] %v3907
  %3940 = vst [vmem:[#allocation7 + $0x90] sm:$0xf] %v3908
  %3941 = vst [vmem:[#allocation7 + $0x98] sm:$0xf] %v3909
  %3942 = vst [vmem:[#allocation7 + $0xa0] sm:$0xf] %v3910
  %3943 = vst [vmem:[#allocation7 + $0xa8] sm:$0xf] %v3911
  %3944 = vst [vmem:[#allocation7 + $0xb0] sm:$0xf] %v3912
  %3945 = vst [vmem:[#allocation7 + $0xb8] sm:$0xf] %v3913
  %3946 = vst [vmem:[#allocation7 + $0xc0] sm:$0xf] %v3914
  %3947 = vst [vmem:[#allocation7 + $0xc8] sm:$0xf] %v3915
  %3948 = vst [vmem:[#allocation7 + $0xd0] sm:$0xf] %v3916
  %3949 = vst [vmem:[#allocation7 + $0xd8] sm:$0xf] %v3917
  %3950 = vst [vmem:[#allocation7 + $0xe0] sm:$0xf] %v3918
  %3951 = vst [vmem:[#allocation7 + $0xe8] sm:$0xf] %v3919
  %3952 = vst [vmem:[#allocation7 + $0xf0] sm:$0xf] %v3920
  %3953 = vst [vmem:[#allocation7 + $0xf8] sm:$0xf] %v3921
  %v3954 = vld [vmem:[#allocation3] sm:$0xff]
  %v3955 = vld [vmem:[#allocation3 + $0x8] sm:$0xff]
  %v3956 = vld [vmem:[#allocation3 + $0x10] sm:$0xff]
  %v3957 = vld [vmem:[#allocation3 + $0x18] sm:$0xff]
  %v3958 = vld [vmem:[#allocation3 + $0x20] sm:$0xff]
  %v3959 = vld [vmem:[#allocation3 + $0x28] sm:$0xff]
  %v3960 = vld [vmem:[#allocation3 + $0x30] sm:$0xff]
  %v3961 = vld [vmem:[#allocation3 + $0x38] sm:$0xff]
  %v3962 = vld [vmem:[#allocation3 + $0x40] sm:$0xff]
  %v3963 = vld [vmem:[#allocation3 + $0x48] sm:$0xff]
  %v3964 = vld [vmem:[#allocation3 + $0x50] sm:$0xff]
  %v3965 = vld [vmem:[#allocation3 + $0x58] sm:$0xff]
  %v3966 = vld [vmem:[#allocation3 + $0x60] sm:$0xff]
  %v3967 = vld [vmem:[#allocation3 + $0x68] sm:$0xff]
  %v3968 = vld [vmem:[#allocation3 + $0x70] sm:$0xff]
  %v3969 = vld [vmem:[#allocation3 + $0x78] sm:$0xff]
  %v3970 = vld [vmem:[#allocation3 + $0x80] sm:$0xff]
  %v3971 = vld [vmem:[#allocation3 + $0x88] sm:$0xff]
  %v3972 = vld [vmem:[#allocation3 + $0x90] sm:$0xff]
  %v3973 = vld [vmem:[#allocation3 + $0x98] sm:$0xff]
  %v3974 = vld [vmem:[#allocation3 + $0xa0] sm:$0xff]
  %v3975 = vld [vmem:[#allocation3 + $0xa8] sm:$0xff]
  %v3976 = vld [vmem:[#allocation3 + $0xb0] sm:$0xff]
  %v3977 = vld [vmem:[#allocation3 + $0xb8] sm:$0xff]
  %v3978 = vld [vmem:[#allocation3 + $0xc0] sm:$0xff]
  %v3979 = vld [vmem:[#allocation3 + $0xc8] sm:$0xff]
  %v3980 = vld [vmem:[#allocation3 + $0xd0] sm:$0xff]
  %v3981 = vld [vmem:[#allocation3 + $0xd8] sm:$0xff]
  %v3982 = vld [vmem:[#allocation3 + $0xe0] sm:$0xff]
  %v3983 = vld [vmem:[#allocation3 + $0xe8] sm:$0xff]
  %v3984 = vld [vmem:[#allocation3 + $0xf0] sm:$0xff]
  %v3985 = vld [vmem:[#allocation3 + $0xf8] sm:$0xff]
  %v3986 = vld [vmem:[#allocation7] sm:$0xf]
  %v3987 = vld [vmem:[#allocation7 + $0x8] sm:$0xf]
  %v3988 = vld [vmem:[#allocation7 + $0x10] sm:$0xf]
  %v3989 = vld [vmem:[#allocation7 + $0x18] sm:$0xf]
  %v3990 = vld [vmem:[#allocation7 + $0x20] sm:$0xf]
  %v3991 = vld [vmem:[#allocation7 + $0x28] sm:$0xf]
  %v3992 = vld [vmem:[#allocation7 + $0x30] sm:$0xf]
  %v3993 = vld [vmem:[#allocation7 + $0x38] sm:$0xf]
  %v3994 = vld [vmem:[#allocation7 + $0x40] sm:$0xf]
  %v3995 = vld [vmem:[#allocation7 + $0x48] sm:$0xf]
  %v3996 = vld [vmem:[#allocation7 + $0x50] sm:$0xf]
  %v3997 = vld [vmem:[#allocation7 + $0x58] sm:$0xf]
  %v3998 = vld [vmem:[#allocation7 + $0x60] sm:$0xf]
  %v3999 = vld [vmem:[#allocation7 + $0x68] sm:$0xf]
  %v4000 = vld [vmem:[#allocation7 + $0x70] sm:$0xf]
  %v4001 = vld [vmem:[#allocation7 + $0x78] sm:$0xf]
  %v4002 = vld [vmem:[#allocation7 + $0x80] sm:$0xf]
  %v4003 = vld [vmem:[#allocation7 + $0x88] sm:$0xf]
  %v4004 = vld [vmem:[#allocation7 + $0x90] sm:$0xf]
  %v4005 = vld [vmem:[#allocation7 + $0x98] sm:$0xf]
  %v4006 = vld [vmem:[#allocation7 + $0xa0] sm:$0xf]
  %v4007 = vld [vmem:[#allocation7 + $0xa8] sm:$0xf]
  %v4008 = vld [vmem:[#allocation7 + $0xb0] sm:$0xf]
  %v4009 = vld [vmem:[#allocation7 + $0xb8] sm:$0xf]
  %v4010 = vld [vmem:[#allocation7 + $0xc0] sm:$0xf]
  %v4011 = vld [vmem:[#allocation7 + $0xc8] sm:$0xf]
  %v4012 = vld [vmem:[#allocation7 + $0xd0] sm:$0xf]
  %v4013 = vld [vmem:[#allocation7 + $0xd8] sm:$0xf]
  %v4014 = vld [vmem:[#allocation7 + $0xe0] sm:$0xf]
  %v4015 = vld [vmem:[#allocation7 + $0xe8] sm:$0xf]
  %v4016 = vld [vmem:[#allocation7 + $0xf0] sm:$0xf]
  %v4017 = vld [vmem:[#allocation7 + $0xf8] sm:$0xf]
  %v4050 = vunpack.c.l.b16 %v3954
  %v4051 = vunpack.c.h.b16 %v3954
  %v4052 = vunpack.c.l.b16 %v3955
  %v4053 = vunpack.c.h.b16 %v3955
  %v4054 = vunpack.c.l.b16 %v3956
  %v4055 = vunpack.c.h.b16 %v3956
  %v4056 = vunpack.c.l.b16 %v3957
  %v4057 = vunpack.c.h.b16 %v3957
  %v4058 = vunpack.c.l.b16 %v3958
  %v4059 = vunpack.c.h.b16 %v3958
  %v4060 = vunpack.c.l.b16 %v3959
  %v4061 = vunpack.c.h.b16 %v3959
  %v4062 = vunpack.c.l.b16 %v3960
  %v4063 = vunpack.c.h.b16 %v3960
  %v4064 = vunpack.c.l.b16 %v3961
  %v4065 = vunpack.c.h.b16 %v3961
  %v4066 = vunpack.c.l.b16 %v3962
  %v4067 = vunpack.c.h.b16 %v3962
  %v4068 = vunpack.c.l.b16 %v3963
  %v4069 = vunpack.c.h.b16 %v3963
  %v4070 = vunpack.c.l.b16 %v3964
  %v4071 = vunpack.c.h.b16 %v3964
  %v4072 = vunpack.c.l.b16 %v3965
  %v4073 = vunpack.c.h.b16 %v3965
  %v4074 = vunpack.c.l.b16 %v3966
  %v4075 = vunpack.c.h.b16 %v3966
  %v4076 = vunpack.c.l.b16 %v3967
  %v4077 = vunpack.c.h.b16 %v3967
  %v4078 = vunpack.c.l.b16 %v3968
  %v4079 = vunpack.c.h.b16 %v3968
  %v4080 = vunpack.c.l.b16 %v3969
  %v4081 = vunpack.c.h.b16 %v3969
  %v4082 = vunpack.c.l.b16 %v3970
  %v4083 = vunpack.c.h.b16 %v3970
  %v4084 = vunpack.c.l.b16 %v3971
  %v4085 = vunpack.c.h.b16 %v3971
  %v4086 = vunpack.c.l.b16 %v3972
  %v4087 = vunpack.c.h.b16 %v3972
  %v4088 = vunpack.c.l.b16 %v3973
  %v4089 = vunpack.c.h.b16 %v3973
  %v4090 = vunpack.c.l.b16 %v3974
  %v4091 = vunpack.c.h.b16 %v3974
  %v4092 = vunpack.c.l.b16 %v3975
  %v4093 = vunpack.c.h.b16 %v3975
  %v4094 = vunpack.c.l.b16 %v3976
  %v4095 = vunpack.c.h.b16 %v3976
  %v4096 = vunpack.c.l.b16 %v3977
  %v4097 = vunpack.c.h.b16 %v3977
  %v4098 = vunpack.c.l.b16 %v3978
  %v4099 = vunpack.c.h.b16 %v3978
  %v4100 = vunpack.c.l.b16 %v3979
  %v4101 = vunpack.c.h.b16 %v3979
  %v4102 = vunpack.c.l.b16 %v3980
  %v4103 = vunpack.c.h.b16 %v3980
  %v4104 = vunpack.c.l.b16 %v3981
  %v4105 = vunpack.c.h.b16 %v3981
  %v4106 = vunpack.c.l.b16 %v3982
  %v4107 = vunpack.c.h.b16 %v3982
  %v4108 = vunpack.c.l.b16 %v3983
  %v4109 = vunpack.c.h.b16 %v3983
  %v4110 = vunpack.c.l.b16 %v3984
  %v4111 = vunpack.c.h.b16 %v3984
  %v4112 = vunpack.c.l.b16 %v3985
  %v4113 = vunpack.c.h.b16 %v3985
  %v4114 = vpack.c.b16 %v4052, %v4050
  %v4115 = vpack.c.b16 %v4053, %v4051
  %v4116 = vpack.c.b16 %v4056, %v4054
  %v4117 = vpack.c.b16 %v4057, %v4055
  %v4118 = vpack.c.b16 %v4060, %v4058
  %v4119 = vpack.c.b16 %v4061, %v4059
  %v4120 = vpack.c.b16 %v4064, %v4062
  %v4121 = vpack.c.b16 %v4065, %v4063
  %v4122 = vpack.c.b16 %v4068, %v4066
  %v4123 = vpack.c.b16 %v4069, %v4067
  %v4124 = vpack.c.b16 %v4072, %v4070
  %v4125 = vpack.c.b16 %v4073, %v4071
  %v4126 = vpack.c.b16 %v4076, %v4074
  %v4127 = vpack.c.b16 %v4077, %v4075
  %v4128 = vpack.c.b16 %v4080, %v4078
  %v4129 = vpack.c.b16 %v4081, %v4079
  %v4130 = vpack.c.b16 %v4084, %v4082
  %v4131 = vpack.c.b16 %v4085, %v4083
  %v4132 = vpack.c.b16 %v4088, %v4086
  %v4133 = vpack.c.b16 %v4089, %v4087
  %v4134 = vpack.c.b16 %v4092, %v4090
  %v4135 = vpack.c.b16 %v4093, %v4091
  %v4136 = vpack.c.b16 %v4096, %v4094
  %v4137 = vpack.c.b16 %v4097, %v4095
  %v4138 = vpack.c.b16 %v4100, %v4098
  %v4139 = vpack.c.b16 %v4101, %v4099
  %v4140 = vpack.c.b16 %v4104, %v4102
  %v4141 = vpack.c.b16 %v4105, %v4103
  %v4142 = vpack.c.b16 %v4108, %v4106
  %v4143 = vpack.c.b16 %v4109, %v4107
  %v4144 = vpack.c.b16 %v4112, %v4110
  %v4145 = vpack.c.b16 %v4113, %v4111
  %v4210 = vunpack.c.l.b16 %v3986
  %v4211 = vunpack.c.l.b16 %v3987
  %v4212 = vunpack.c.l.b16 %v3988
  %v4213 = vunpack.c.l.b16 %v3989
  %v4214 = vunpack.c.l.b16 %v3990
  %v4215 = vunpack.c.l.b16 %v3991
  %v4216 = vunpack.c.l.b16 %v3992
  %v4217 = vunpack.c.l.b16 %v3993
  %v4218 = vunpack.c.l.b16 %v3994
  %v4219 = vunpack.c.l.b16 %v3995
  %v4220 = vunpack.c.l.b16 %v3996
  %v4221 = vunpack.c.l.b16 %v3997
  %v4222 = vunpack.c.l.b16 %v3998
  %v4223 = vunpack.c.l.b16 %v3999
  %v4224 = vunpack.c.l.b16 %v4000
  %v4225 = vunpack.c.l.b16 %v4001
  %v4226 = vunpack.c.l.b16 %v4002
  %v4227 = vunpack.c.l.b16 %v4003
  %v4228 = vunpack.c.l.b16 %v4004
  %v4229 = vunpack.c.l.b16 %v4005
  %v4230 = vunpack.c.l.b16 %v4006
  %v4231 = vunpack.c.l.b16 %v4007
  %v4232 = vunpack.c.l.b16 %v4008
  %v4233 = vunpack.c.l.b16 %v4009
  %v4234 = vunpack.c.l.b16 %v4010
  %v4235 = vunpack.c.l.b16 %v4011
  %v4236 = vunpack.c.l.b16 %v4012
  %v4237 = vunpack.c.l.b16 %v4013
  %v4238 = vunpack.c.l.b16 %v4014
  %v4239 = vunpack.c.l.b16 %v4015
  %v4240 = vunpack.c.l.b16 %v4016
  %v4241 = vunpack.c.l.b16 %v4017
  %v4242 = vpack.c.b16 %v4211, %v4210
  %v4243 = vpack.c.b16 %v4213, %v4212
  %v4244 = vpack.c.b16 %v4215, %v4214
  %v4245 = vpack.c.b16 %v4217, %v4216
  %v4246 = vpack.c.b16 %v4219, %v4218
  %v4247 = vpack.c.b16 %v4221, %v4220
  %v4248 = vpack.c.b16 %v4223, %v4222
  %v4249 = vpack.c.b16 %v4225, %v4224
  %v4250 = vpack.c.b16 %v4227, %v4226
  %v4251 = vpack.c.b16 %v4229, %v4228
  %v4252 = vpack.c.b16 %v4231, %v4230
  %v4253 = vpack.c.b16 %v4233, %v4232
  %v4254 = vpack.c.b16 %v4235, %v4234
  %v4255 = vpack.c.b16 %v4237, %v4236
  %v4256 = vpack.c.b16 %v4239, %v4238
  %v4257 = vpack.c.b16 %v4241, %v4240
  %4274 = vmatpush.bf16.msra.mxu0 %v4249
  %4275 = vmatpush.bf16.msra.mxu0 %v4248
  %4276 = vmatpush.bf16.msra.mxu0 %v4247
  %4277 = vmatpush.bf16.msra.mxu0 %v4246
  %4278 = vmatpush.bf16.msra.mxu0 %v4245
  %4279 = vmatpush.bf16.msra.mxu0 %v4244
  %4280 = vmatpush.bf16.msra.mxu0 %v4243
  %4281 = vmatpush.bf16.msra.mxu0 %v4242
  %4282 = vmatmul.bf16.gmra.mxu0 %v4114
  %v4283 = vpop.f32.mrf.mxu0
  %v4284 = vadd.f32 0.0, %v4283
  %v4285 = vpop.f32.mrf.mxu0
  %v4286 = vadd.f32 0.0, %v4285
  %4287 = vmatmul.bf16.gmra.mxu0 %v4116
  %v4288 = vpop.f32.mrf.mxu0
  %v4289 = vadd.f32 0.0, %v4288
  %v4290 = vpop.f32.mrf.mxu0
  %v4291 = vadd.f32 0.0, %v4290
  %4292 = vmatmul.bf16.gmra.mxu0 %v4118
  %v4293 = vpop.f32.mrf.mxu0
  %v4294 = vadd.f32 0.0, %v4293
  %v4295 = vpop.f32.mrf.mxu0
  %v4296 = vadd.f32 0.0, %v4295
  %4297 = vmatmul.bf16.gmra.mxu0 %v4120
  %v4298 = vpop.f32.mrf.mxu0
  %v4299 = vadd.f32 0.0, %v4298
  %v4300 = vpop.f32.mrf.mxu0
  %v4301 = vadd.f32 0.0, %v4300
  %4302 = vmatmul.bf16.gmra.mxu0 %v4122
  %v4303 = vpop.f32.mrf.mxu0
  %v4304 = vadd.f32 0.0, %v4303
  %v4305 = vpop.f32.mrf.mxu0
  %v4306 = vadd.f32 0.0, %v4305
  %4307 = vmatmul.bf16.gmra.mxu0 %v4124
  %v4308 = vpop.f32.mrf.mxu0
  %v4309 = vadd.f32 0.0, %v4308
  %v4310 = vpop.f32.mrf.mxu0
  %v4311 = vadd.f32 0.0, %v4310
  %4312 = vmatmul.bf16.gmra.mxu0 %v4126
  %v4313 = vpop.f32.mrf.mxu0
  %v4314 = vadd.f32 0.0, %v4313
  %v4315 = vpop.f32.mrf.mxu0
  %v4316 = vadd.f32 0.0, %v4315
  %4317 = vmatmul.bf16.gmra.mxu0 %v4128
  %v4318 = vpop.f32.mrf.mxu0
  %v4319 = vadd.f32 0.0, %v4318
  %v4320 = vpop.f32.mrf.mxu0
  %v4321 = vadd.f32 0.0, %v4320
  %4322 = vmatmul.bf16.gmra.mxu0 %v4130
  %v4323 = vpop.f32.mrf.mxu0
  %v4324 = vadd.f32 0.0, %v4323
  %v4325 = vpop.f32.mrf.mxu0
  %v4326 = vadd.f32 0.0, %v4325
  %4327 = vmatmul.bf16.gmra.mxu0 %v4132
  %v4328 = vpop.f32.mrf.mxu0
  %v4329 = vadd.f32 0.0, %v4328
  %v4330 = vpop.f32.mrf.mxu0
  %v4331 = vadd.f32 0.0, %v4330
  %4332 = vmatmul.bf16.gmra.mxu0 %v4134
  %v4333 = vpop.f32.mrf.mxu0
  %v4334 = vadd.f32 0.0, %v4333
  %v4335 = vpop.f32.mrf.mxu0
  %v4336 = vadd.f32 0.0, %v4335
  %4337 = vmatmul.bf16.gmra.mxu0 %v4136
  %v4338 = vpop.f32.mrf.mxu0
  %v4339 = vadd.f32 0.0, %v4338
  %v4340 = vpop.f32.mrf.mxu0
  %v4341 = vadd.f32 0.0, %v4340
  %4342 = vmatmul.bf16.gmra.mxu0 %v4138
  %v4343 = vpop.f32.mrf.mxu0
  %v4344 = vadd.f32 0.0, %v4343
  %v4345 = vpop.f32.mrf.mxu0
  %v4346 = vadd.f32 0.0, %v4345
  %4347 = vmatmul.bf16.gmra.mxu0 %v4140
  %v4348 = vpop.f32.mrf.mxu0
  %v4349 = vadd.f32 0.0, %v4348
  %v4350 = vpop.f32.mrf.mxu0
  %v4351 = vadd.f32 0.0, %v4350
  %4352 = vmatmul.bf16.gmra.mxu0 %v4142
  %v4353 = vpop.f32.mrf.mxu0
  %v4354 = vadd.f32 0.0, %v4353
  %v4355 = vpop.f32.mrf.mxu0
  %v4356 = vadd.f32 0.0, %v4355
  %4357 = vmatmul.bf16.gmra.mxu0 %v4144
  %v4358 = vpop.f32.mrf.mxu0
  %v4359 = vadd.f32 0.0, %v4358
  %v4360 = vpop.f32.mrf.mxu0
  %v4361 = vadd.f32 0.0, %v4360
  %4362 = vdwg.mxu0
  %4363 = vmatpush.bf16.msra.mxu0 %v4257
  %4364 = vmatpush.bf16.msra.mxu0 %v4256
  %4365 = vmatpush.bf16.msra.mxu0 %v4255
  %4366 = vmatpush.bf16.msra.mxu0 %v4254
  %4367 = vmatpush.bf16.msra.mxu0 %v4253
  %4368 = vmatpush.bf16.msra.mxu0 %v4252
  %4369 = vmatpush.bf16.msra.mxu0 %v4251
  %4370 = vmatpush.bf16.msra.mxu0 %v4250
  %4371 = vmatmul.bf16.gmra.mxu0 %v4115
  %v4372 = vpop.f32.mrf.mxu0
  %v4373 = vadd.f32 %v4284, %v4372
  %v4374 = vpop.f32.mrf.mxu0
  %v4375 = vadd.f32 %v4286, %v4374
  %4376 = vmatmul.bf16.gmra.mxu0 %v4117
  %v4377 = vpop.f32.mrf.mxu0
  %v4378 = vadd.f32 %v4289, %v4377
  %v4379 = vpop.f32.mrf.mxu0
  %v4380 = vadd.f32 %v4291, %v4379
  %4381 = vmatmul.bf16.gmra.mxu0 %v4119
  %v4382 = vpop.f32.mrf.mxu0
  %v4383 = vadd.f32 %v4294, %v4382
  %v4384 = vpop.f32.mrf.mxu0
  %v4385 = vadd.f32 %v4296, %v4384
  %4386 = vmatmul.bf16.gmra.mxu0 %v4121
  %v4387 = vpop.f32.mrf.mxu0
  %v4388 = vadd.f32 %v4299, %v4387
  %v4389 = vpop.f32.mrf.mxu0
  %v4390 = vadd.f32 %v4301, %v4389
  %4391 = vmatmul.bf16.gmra.mxu0 %v4123
  %v4392 = vpop.f32.mrf.mxu0
  %v4393 = vadd.f32 %v4304, %v4392
  %v4394 = vpop.f32.mrf.mxu0
  %v4395 = vadd.f32 %v4306, %v4394
  %4396 = vmatmul.bf16.gmra.mxu0 %v4125
  %v4397 = vpop.f32.mrf.mxu0
  %v4398 = vadd.f32 %v4309, %v4397
  %v4399 = vpop.f32.mrf.mxu0
  %v4400 = vadd.f32 %v4311, %v4399
  %4401 = vmatmul.bf16.gmra.mxu0 %v4127
  %v4402 = vpop.f32.mrf.mxu0
  %v4403 = vadd.f32 %v4314, %v4402
  %v4404 = vpop.f32.mrf.mxu0
  %v4405 = vadd.f32 %v4316, %v4404
  %4406 = vmatmul.bf16.gmra.mxu0 %v4129
  %v4407 = vpop.f32.mrf.mxu0
  %v4408 = vadd.f32 %v4319, %v4407
  %v4409 = vpop.f32.mrf.mxu0
  %v4410 = vadd.f32 %v4321, %v4409
  %4411 = vmatmul.bf16.gmra.mxu0 %v4131
  %v4412 = vpop.f32.mrf.mxu0
  %v4413 = vadd.f32 %v4324, %v4412
  %v4414 = vpop.f32.mrf.mxu0
  %v4415 = vadd.f32 %v4326, %v4414
  %4416 = vmatmul.bf16.gmra.mxu0 %v4133
  %v4417 = vpop.f32.mrf.mxu0
  %v4418 = vadd.f32 %v4329, %v4417
  %v4419 = vpop.f32.mrf.mxu0
  %v4420 = vadd.f32 %v4331, %v4419
  %4421 = vmatmul.bf16.gmra.mxu0 %v4135
  %v4422 = vpop.f32.mrf.mxu0
  %v4423 = vadd.f32 %v4334, %v4422
  %v4424 = vpop.f32.mrf.mxu0
  %v4425 = vadd.f32 %v4336, %v4424
  %4426 = vmatmul.bf16.gmra.mxu0 %v4137
  %v4427 = vpop.f32.mrf.mxu0
  %v4428 = vadd.f32 %v4339, %v4427
  %v4429 = vpop.f32.mrf.mxu0
  %v4430 = vadd.f32 %v4341, %v4429
  %4431 = vmatmul.bf16.gmra.mxu0 %v4139
  %v4432 = vpop.f32.mrf.mxu0
  %v4433 = vadd.f32 %v4344, %v4432
  %v4434 = vpop.f32.mrf.mxu0
  %v4435 = vadd.f32 %v4346, %v4434
  %4436 = vmatmul.bf16.gmra.mxu0 %v4141
  %v4437 = vpop.f32.mrf.mxu0
  %v4438 = vadd.f32 %v4349, %v4437
  %v4439 = vpop.f32.mrf.mxu0
  %v4440 = vadd.f32 %v4351, %v4439
  %4441 = vmatmul.bf16.gmra.mxu0 %v4143
  %v4442 = vpop.f32.mrf.mxu0
  %v4443 = vadd.f32 %v4354, %v4442
  %v4444 = vpop.f32.mrf.mxu0
  %v4445 = vadd.f32 %v4356, %v4444
  %4446 = vmatmul.bf16.gmra.mxu0 %v4145
  %v4447 = vpop.f32.mrf.mxu0
  %v4448 = vadd.f32 %v4359, %v4447
  %v4449 = vpop.f32.mrf.mxu0
  %v4450 = vadd.f32 %v4361, %v4449
  %4451 = vdwg.mxu0
  %v4452 = vld [vmem:[%s5] sm:$0xff]
  %v4453 = vld [vmem:[%s5 + $0x8] sm:$0xff]
  %v4454 = vld [vmem:[%s5 + $0x10] sm:$0xff]
  %v4455 = vld [vmem:[%s5 + $0x18] sm:$0xff]
  %v4456 = vld [vmem:[%s5 + $0x20] sm:$0xff]
  %v4457 = vld [vmem:[%s5 + $0x28] sm:$0xff]
  %v4458 = vld [vmem:[%s5 + $0x30] sm:$0xff]
  %v4459 = vld [vmem:[%s5 + $0x38] sm:$0xff]
  %v4460 = vld [vmem:[%s5 + $0x40] sm:$0xff]
  %v4461 = vld [vmem:[%s5 + $0x48] sm:$0xff]
  %v4462 = vld [vmem:[%s5 + $0x50] sm:$0xff]
  %v4463 = vld [vmem:[%s5 + $0x58] sm:$0xff]
  %v4464 = vld [vmem:[%s5 + $0x60] sm:$0xff]
  %v4465 = vld [vmem:[%s5 + $0x68] sm:$0xff]
  %v4466 = vld [vmem:[%s5 + $0x70] sm:$0xff]
  %v4467 = vld [vmem:[%s5 + $0x78] sm:$0xff]
  %v4468 = vld [vmem:[%s5 + $0x80] sm:$0xff]
  %v4469 = vld [vmem:[%s5 + $0x88] sm:$0xff]
  %v4470 = vld [vmem:[%s5 + $0x90] sm:$0xff]
  %v4471 = vld [vmem:[%s5 + $0x98] sm:$0xff]
  %v4472 = vld [vmem:[%s5 + $0xa0] sm:$0xff]
  %v4473 = vld [vmem:[%s5 + $0xa8] sm:$0xff]
  %v4474 = vld [vmem:[%s5 + $0xb0] sm:$0xff]
  %v4475 = vld [vmem:[%s5 + $0xb8] sm:$0xff]
  %v4476 = vld [vmem:[%s5 + $0xc0] sm:$0xff]
  %v4477 = vld [vmem:[%s5 + $0xc8] sm:$0xff]
  %v4478 = vld [vmem:[%s5 + $0xd0] sm:$0xff]
  %v4479 = vld [vmem:[%s5 + $0xd8] sm:$0xff]
  %v4480 = vld [vmem:[%s5 + $0xe0] sm:$0xff]
  %v4481 = vld [vmem:[%s5 + $0xe8] sm:$0xff]
  %v4482 = vld [vmem:[%s5 + $0xf0] sm:$0xff]
  %v4483 = vld [vmem:[%s5 + $0xf8] sm:$0xff]
  %v4484 = vadd.f32 %v4452, %v4373
  %v4485 = vadd.f32 %v4453, %v4375
  %v4486 = vadd.f32 %v4454, %v4378
  %v4487 = vadd.f32 %v4455, %v4380
  %v4488 = vadd.f32 %v4456, %v4383
  %v4489 = vadd.f32 %v4457, %v4385
  %v4490 = vadd.f32 %v4458, %v4388
  %v4491 = vadd.f32 %v4459, %v4390
  %v4492 = vadd.f32 %v4460, %v4393
  %v4493 = vadd.f32 %v4461, %v4395
  %v4494 = vadd.f32 %v4462, %v4398
  %v4495 = vadd.f32 %v4463, %v4400
  %v4496 = vadd.f32 %v4464, %v4403
  %v4497 = vadd.f32 %v4465, %v4405
  %v4498 = vadd.f32 %v4466, %v4408
  %v4499 = vadd.f32 %v4467, %v4410
  %v4500 = vadd.f32 %v4468, %v4413
  %v4501 = vadd.f32 %v4469, %v4415
  %v4502 = vadd.f32 %v4470, %v4418
  %v4503 = vadd.f32 %v4471, %v4420
  %v4504 = vadd.f32 %v4472, %v4423
  %v4505 = vadd.f32 %v4473, %v4425
  %v4506 = vadd.f32 %v4474, %v4428
  %v4507 = vadd.f32 %v4475, %v4430
  %v4508 = vadd.f32 %v4476, %v4433
  %v4509 = vadd.f32 %v4477, %v4435
  %v4510 = vadd.f32 %v4478, %v4438
  %v4511 = vadd.f32 %v4479, %v4440
  %v4512 = vadd.f32 %v4480, %v4443
  %v4513 = vadd.f32 %v4481, %v4445
  %v4514 = vadd.f32 %v4482, %v4448
  %v4515 = vadd.f32 %v4483, %v4450
  %4516 = vst [vmem:[%s5] sm:$0xff] %v4484
  %4517 = vst [vmem:[%s5 + $0x8] sm:$0xff] %v4485
  %4518 = vst [vmem:[%s5 + $0x10] sm:$0xff] %v4486
  %4519 = vst [vmem:[%s5 + $0x18] sm:$0xff] %v4487
  %4520 = vst [vmem:[%s5 + $0x20] sm:$0xff] %v4488
  %4521 = vst [vmem:[%s5 + $0x28] sm:$0xff] %v4489
  %4522 = vst [vmem:[%s5 + $0x30] sm:$0xff] %v4490
  %4523 = vst [vmem:[%s5 + $0x38] sm:$0xff] %v4491
  %4524 = vst [vmem:[%s5 + $0x40] sm:$0xff] %v4492
  %4525 = vst [vmem:[%s5 + $0x48] sm:$0xff] %v4493
  %4526 = vst [vmem:[%s5 + $0x50] sm:$0xff] %v4494
  %4527 = vst [vmem:[%s5 + $0x58] sm:$0xff] %v4495
  %4528 = vst [vmem:[%s5 + $0x60] sm:$0xff] %v4496
  %4529 = vst [vmem:[%s5 + $0x68] sm:$0xff] %v4497
  %4530 = vst [vmem:[%s5 + $0x70] sm:$0xff] %v4498
  %4531 = vst [vmem:[%s5 + $0x78] sm:$0xff] %v4499
  %4532 = vst [vmem:[%s5 + $0x80] sm:$0xff] %v4500
  %4533 = vst [vmem:[%s5 + $0x88] sm:$0xff] %v4501
  %4534 = vst [vmem:[%s5 + $0x90] sm:$0xff] %v4502
  %4535 = vst [vmem:[%s5 + $0x98] sm:$0xff] %v4503
  %4536 = vst [vmem:[%s5 + $0xa0] sm:$0xff] %v4504
  %4537 = vst [vmem:[%s5 + $0xa8] sm:$0xff] %v4505
  %4538 = vst [vmem:[%s5 + $0xb0] sm:$0xff] %v4506
  %4539 = vst [vmem:[%s5 + $0xb8] sm:$0xff] %v4507
  %4540 = vst [vmem:[%s5 + $0xc0] sm:$0xff] %v4508
  %4541 = vst [vmem:[%s5 + $0xc8] sm:$0xff] %v4509
  %4542 = vst [vmem:[%s5 + $0xd0] sm:$0xff] %v4510
  %4543 = vst [vmem:[%s5 + $0xd8] sm:$0xff] %v4511
  %4544 = vst [vmem:[%s5 + $0xe0] sm:$0xff] %v4512
  %4545 = vst [vmem:[%s5 + $0xe8] sm:$0xff] %v4513
  %4546 = vst [vmem:[%s5 + $0xf0] sm:$0xff] %v4514
  %4547 = vst [vmem:[%s5 + $0xf8] sm:$0xff] %v4515
  %v4548 = vld [vmem:[%s6] sm:$0xff]
  %v4549 = vld [vmem:[%s6 + $0x8] sm:$0xff]
  %v4550 = vld [vmem:[%s6 + $0x10] sm:$0xff]
  %v4551 = vld [vmem:[%s6 + $0x18] sm:$0xff]
  %v4552 = vld [vmem:[%s6 + $0x20] sm:$0xff]
  %v4553 = vld [vmem:[%s6 + $0x28] sm:$0xff]
  %v4554 = vld [vmem:[%s6 + $0x30] sm:$0xff]
  %v4555 = vld [vmem:[%s6 + $0x38] sm:$0xff]
  %v4556 = vld [vmem:[%s6 + $0x40] sm:$0xff]
  %v4557 = vld [vmem:[%s6 + $0x48] sm:$0xff]
  %v4558 = vld [vmem:[%s6 + $0x50] sm:$0xff]
  %v4559 = vld [vmem:[%s6 + $0x58] sm:$0xff]
  %v4560 = vld [vmem:[%s6 + $0x60] sm:$0xff]
  %v4561 = vld [vmem:[%s6 + $0x68] sm:$0xff]
  %v4562 = vld [vmem:[%s6 + $0x70] sm:$0xff]
  %v4563 = vld [vmem:[%s6 + $0x78] sm:$0xff]
  %v4564 = vld [vmem:[%s6 + $0x80] sm:$0xff]
  %v4565 = vld [vmem:[%s6 + $0x88] sm:$0xff]
  %v4566 = vld [vmem:[%s6 + $0x90] sm:$0xff]
  %v4567 = vld [vmem:[%s6 + $0x98] sm:$0xff]
  %v4568 = vld [vmem:[%s6 + $0xa0] sm:$0xff]
  %v4569 = vld [vmem:[%s6 + $0xa8] sm:$0xff]
  %v4570 = vld [vmem:[%s6 + $0xb0] sm:$0xff]
  %v4571 = vld [vmem:[%s6 + $0xb8] sm:$0xff]
  %v4572 = vld [vmem:[%s6 + $0xc0] sm:$0xff]
  %v4573 = vld [vmem:[%s6 + $0xc8] sm:$0xff]
  %v4574 = vld [vmem:[%s6 + $0xd0] sm:$0xff]
  %v4575 = vld [vmem:[%s6 + $0xd8] sm:$0xff]
  %v4576 = vld [vmem:[%s6 + $0xe0] sm:$0xff]
  %v4577 = vld [vmem:[%s6 + $0xe8] sm:$0xff]
  %v4578 = vld [vmem:[%s6 + $0xf0] sm:$0xff]
  %v4579 = vld [vmem:[%s6 + $0xf8] sm:$0xff]
  %v4580 = vadd.f32 %v4548, %v4373
  %v4581 = vadd.f32 %v4549, %v4375
  %v4582 = vadd.f32 %v4550, %v4378
  %v4583 = vadd.f32 %v4551, %v4380
  %v4584 = vadd.f32 %v4552, %v4383
  %v4585 = vadd.f32 %v4553, %v4385
  %v4586 = vadd.f32 %v4554, %v4388
  %v4587 = vadd.f32 %v4555, %v4390
  %v4588 = vadd.f32 %v4556, %v4393
  %v4589 = vadd.f32 %v4557, %v4395
  %v4590 = vadd.f32 %v4558, %v4398
  %v4591 = vadd.f32 %v4559, %v4400
  %v4592 = vadd.f32 %v4560, %v4403
  %v4593 = vadd.f32 %v4561, %v4405
  %v4594 = vadd.f32 %v4562, %v4408
  %v4595 = vadd.f32 %v4563, %v4410
  %v4596 = vadd.f32 %v4564, %v4413
  %v4597 = vadd.f32 %v4565, %v4415
  %v4598 = vadd.f32 %v4566, %v4418
  %v4599 = vadd.f32 %v4567, %v4420
  %v4600 = vadd.f32 %v4568, %v4423
  %v4601 = vadd.f32 %v4569, %v4425
  %v4602 = vadd.f32 %v4570, %v4428
  %v4603 = vadd.f32 %v4571, %v4430
  %v4604 = vadd.f32 %v4572, %v4433
  %v4605 = vadd.f32 %v4573, %v4435
  %v4606 = vadd.f32 %v4574, %v4438
  %v4607 = vadd.f32 %v4575, %v4440
  %v4608 = vadd.f32 %v4576, %v4443
  %v4609 = vadd.f32 %v4577, %v4445
  %v4610 = vadd.f32 %v4578, %v4448
  %v4611 = vadd.f32 %v4579, %v4450
  %4612 = vst [vmem:[%s6] sm:$0xff] %v4580
  %4613 = vst [vmem:[%s6 + $0x8] sm:$0xff] %v4581
  %4614 = vst [vmem:[%s6 + $0x10] sm:$0xff] %v4582
  %4615 = vst [vmem:[%s6 + $0x18] sm:$0xff] %v4583
  %4616 = vst [vmem:[%s6 + $0x20] sm:$0xff] %v4584
  %4617 = vst [vmem:[%s6 + $0x28] sm:$0xff] %v4585
  %4618 = vst [vmem:[%s6 + $0x30] sm:$0xff] %v4586
  %4619 = vst [vmem:[%s6 + $0x38] sm:$0xff] %v4587
  %4620 = vst [vmem:[%s6 + $0x40] sm:$0xff] %v4588
  %4621 = vst [vmem:[%s6 + $0x48] sm:$0xff] %v4589
  %4622 = vst [vmem:[%s6 + $0x50] sm:$0xff] %v4590
  %4623 = vst [vmem:[%s6 + $0x58] sm:$0xff] %v4591
  %4624 = vst [vmem:[%s6 + $0x60] sm:$0xff] %v4592
  %4625 = vst [vmem:[%s6 + $0x68] sm:$0xff] %v4593
  %4626 = vst [vmem:[%s6 + $0x70] sm:$0xff] %v4594
  %4627 = vst [vmem:[%s6 + $0x78] sm:$0xff] %v4595
  %4628 = vst [vmem:[%s6 + $0x80] sm:$0xff] %v4596
  %4629 = vst [vmem:[%s6 + $0x88] sm:$0xff] %v4597
  %4630 = vst [vmem:[%s6 + $0x90] sm:$0xff] %v4598
  %4631 = vst [vmem:[%s6 + $0x98] sm:$0xff] %v4599
  %4632 = vst [vmem:[%s6 + $0xa0] sm:$0xff] %v4600
  %4633 = vst [vmem:[%s6 + $0xa8] sm:$0xff] %v4601
  %4634 = vst [vmem:[%s6 + $0xb0] sm:$0xff] %v4602
  %4635 = vst [vmem:[%s6 + $0xb8] sm:$0xff] %v4603
  %4636 = vst [vmem:[%s6 + $0xc0] sm:$0xff] %v4604
  %4637 = vst [vmem:[%s6 + $0xc8] sm:$0xff] %v4605
  %4638 = vst [vmem:[%s6 + $0xd0] sm:$0xff] %v4606
  %4639 = vst [vmem:[%s6 + $0xd8] sm:$0xff] %v4607
  %4640 = vst [vmem:[%s6 + $0xe0] sm:$0xff] %v4608
  %4641 = vst [vmem:[%s6 + $0xe8] sm:$0xff] %v4609
  %4642 = vst [vmem:[%s6 + $0xf0] sm:$0xff] %v4610
  %4643 = vst [vmem:[%s6 + $0xf8] sm:$0xff] %v4611
  %v4644 = vpack.c.bf16 %v4373, %v4373
  %v4645 = vpack.c.bf16 %v4375, %v4375
  %v4646 = vpack.c.bf16 %v4378, %v4378
  %v4647 = vpack.c.bf16 %v4380, %v4380
  %v4648 = vpack.c.bf16 %v4383, %v4383
  %v4649 = vpack.c.bf16 %v4385, %v4385
  %v4650 = vpack.c.bf16 %v4388, %v4388
  %v4651 = vpack.c.bf16 %v4390, %v4390
  %v4652 = vpack.c.bf16 %v4393, %v4393
  %v4653 = vpack.c.bf16 %v4395, %v4395
  %v4654 = vpack.c.bf16 %v4398, %v4398
  %v4655 = vpack.c.bf16 %v4400, %v4400
  %v4656 = vpack.c.bf16 %v4403, %v4403
  %v4657 = vpack.c.bf16 %v4405, %v4405
  %v4658 = vpack.c.bf16 %v4408, %v4408
  %v4659 = vpack.c.bf16 %v4410, %v4410
  %v4660 = vpack.c.bf16 %v4413, %v4413
  %v4661 = vpack.c.bf16 %v4415, %v4415
  %v4662 = vpack.c.bf16 %v4418, %v4418
  %v4663 = vpack.c.bf16 %v4420, %v4420
  %v4664 = vpack.c.bf16 %v4423, %v4423
  %v4665 = vpack.c.bf16 %v4425, %v4425
  %v4666 = vpack.c.bf16 %v4428, %v4428
  %v4667 = vpack.c.bf16 %v4430, %v4430
  %v4668 = vpack.c.bf16 %v4433, %v4433
  %v4669 = vpack.c.bf16 %v4435, %v4435
  %v4670 = vpack.c.bf16 %v4438, %v4438
  %v4671 = vpack.c.bf16 %v4440, %v4440
  %v4672 = vpack.c.bf16 %v4443, %v4443
  %v4673 = vpack.c.bf16 %v4445, %v4445
  %v4674 = vpack.c.bf16 %v4448, %v4448
  %v4675 = vpack.c.bf16 %v4450, %v4450
  %4676 = vst [vmem:[#allocation7] sm:$0xf] %v4644
  %4677 = vst [vmem:[#allocation7 + $0x8] sm:$0xf] %v4645
  %4678 = vst [vmem:[#allocation7 + $0x10] sm:$0xf] %v4646
  %4679 = vst [vmem:[#allocation7 + $0x18] sm:$0xf] %v4647
  %4680 = vst [vmem:[#allocation7 + $0x20] sm:$0xf] %v4648
  %4681 = vst [vmem:[#allocation7 + $0x28] sm:$0xf] %v4649
  %4682 = vst [vmem:[#allocation7 + $0x30] sm:$0xf] %v4650
  %4683 = vst [vmem:[#allocation7 + $0x38] sm:$0xf] %v4651
  %4684 = vst [vmem:[#allocation7 + $0x40] sm:$0xf] %v4652
  %4685 = vst [vmem:[#allocation7 + $0x48] sm:$0xf] %v4653
  %4686 = vst [vmem:[#allocation7 + $0x50] sm:$0xf] %v4654
  %4687 = vst [vmem:[#allocation7 + $0x58] sm:$0xf] %v4655
  %4688 = vst [vmem:[#allocation7 + $0x60] sm:$0xf] %v4656
  %4689 = vst [vmem:[#allocation7 + $0x68] sm:$0xf] %v4657
  %4690 = vst [vmem:[#allocation7 + $0x70] sm:$0xf] %v4658
  %4691 = vst [vmem:[#allocation7 + $0x78] sm:$0xf] %v4659
  %4692 = vst [vmem:[#allocation7 + $0x80] sm:$0xf] %v4660
  %4693 = vst [vmem:[#allocation7 + $0x88] sm:$0xf] %v4661
  %4694 = vst [vmem:[#allocation7 + $0x90] sm:$0xf] %v4662
  %4695 = vst [vmem:[#allocation7 + $0x98] sm:$0xf] %v4663
  %4696 = vst [vmem:[#allocation7 + $0xa0] sm:$0xf] %v4664
  %4697 = vst [vmem:[#allocation7 + $0xa8] sm:$0xf] %v4665
  %4698 = vst [vmem:[#allocation7 + $0xb0] sm:$0xf] %v4666
  %4699 = vst [vmem:[#allocation7 + $0xb8] sm:$0xf] %v4667
  %4700 = vst [vmem:[#allocation7 + $0xc0] sm:$0xf] %v4668
  %4701 = vst [vmem:[#allocation7 + $0xc8] sm:$0xf] %v4669
  %4702 = vst [vmem:[#allocation7 + $0xd0] sm:$0xf] %v4670
  %4703 = vst [vmem:[#allocation7 + $0xd8] sm:$0xf] %v4671
  %4704 = vst [vmem:[#allocation7 + $0xe0] sm:$0xf] %v4672
  %4705 = vst [vmem:[#allocation7 + $0xe8] sm:$0xf] %v4673
  %4706 = vst [vmem:[#allocation7 + $0xf0] sm:$0xf] %v4674
  %4707 = vst [vmem:[#allocation7 + $0xf8] sm:$0xf] %v4675
  %v4708 = vld [vmem:[%s273] sm:$0xf]
  %v4709 = vld [vmem:[%s273 + $0x4] sm:$0xf]
  %v4710 = vld [vmem:[%s273 + $0x8] sm:$0xf]
  %v4711 = vld [vmem:[%s273 + $0xc] sm:$0xf]
  %v4712 = vld [vmem:[%s273 + $0x10] sm:$0xf]
  %v4713 = vld [vmem:[%s273 + $0x14] sm:$0xf]
  %v4714 = vld [vmem:[%s273 + $0x18] sm:$0xf]
  %v4715 = vld [vmem:[%s273 + $0x1c] sm:$0xf]
  %v4716 = vld [vmem:[%s273 + $0x20] sm:$0xf]
  %v4717 = vld [vmem:[%s273 + $0x24] sm:$0xf]
  %v4718 = vld [vmem:[%s273 + $0x28] sm:$0xf]
  %v4719 = vld [vmem:[%s273 + $0x2c] sm:$0xf]
  %v4720 = vld [vmem:[%s273 + $0x30] sm:$0xf]
  %v4721 = vld [vmem:[%s273 + $0x34] sm:$0xf]
  %v4722 = vld [vmem:[%s273 + $0x38] sm:$0xf]
  %v4723 = vld [vmem:[%s273 + $0x3c] sm:$0xf]
  %v4724 = vld [vmem:[%s273 + $0x40] sm:$0xf]
  %v4725 = vld [vmem:[%s273 + $0x44] sm:$0xf]
  %v4726 = vld [vmem:[%s273 + $0x48] sm:$0xf]
  %v4727 = vld [vmem:[%s273 + $0x4c] sm:$0xf]
  %v4728 = vld [vmem:[%s273 + $0x50] sm:$0xf]
  %v4729 = vld [vmem:[%s273 + $0x54] sm:$0xf]
  %v4730 = vld [vmem:[%s273 + $0x58] sm:$0xf]
  %v4731 = vld [vmem:[%s273 + $0x5c] sm:$0xf]
  %v4732 = vld [vmem:[%s273 + $0x60] sm:$0xf]
  %v4733 = vld [vmem:[%s273 + $0x64] sm:$0xf]
  %v4734 = vld [vmem:[%s273 + $0x68] sm:$0xf]
  %v4735 = vld [vmem:[%s273 + $0x6c] sm:$0xf]
  %v4736 = vld [vmem:[%s273 + $0x70] sm:$0xf]
  %v4737 = vld [vmem:[%s273 + $0x74] sm:$0xf]
  %v4738 = vld [vmem:[%s273 + $0x78] sm:$0xf]
  %v4739 = vld [vmem:[%s273 + $0x7c] sm:$0xf]
  %4740 = vst [vmem:[#allocation7 + $0x4] sm:$0xf] %v4708
  %4741 = vst [vmem:[#allocation7 + $0xc] sm:$0xf] %v4709
  %4742 = vst [vmem:[#allocation7 + $0x14] sm:$0xf] %v4710
  %4743 = vst [vmem:[#allocation7 + $0x1c] sm:$0xf] %v4711
  %4744 = vst [vmem:[#allocation7 + $0x24] sm:$0xf] %v4712
  %4745 = vst [vmem:[#allocation7 + $0x2c] sm:$0xf] %v4713
  %4746 = vst [vmem:[#allocation7 + $0x34] sm:$0xf] %v4714
  %4747 = vst [vmem:[#allocation7 + $0x3c] sm:$0xf] %v4715
  %4748 = vst [vmem:[#allocation7 + $0x44] sm:$0xf] %v4716
  %4749 = vst [vmem:[#allocation7 + $0x4c] sm:$0xf] %v4717
  %4750 = vst [vmem:[#allocation7 + $0x54] sm:$0xf] %v4718
  %4751 = vst [vmem:[#allocation7 + $0x5c] sm:$0xf] %v4719
  %4752 = vst [vmem:[#allocation7 + $0x64] sm:$0xf] %v4720
  %4753 = vst [vmem:[#allocation7 + $0x6c] sm:$0xf] %v4721
  %4754 = vst [vmem:[#allocation7 + $0x74] sm:$0xf] %v4722
  %4755 = vst [vmem:[#allocation7 + $0x7c] sm:$0xf] %v4723
  %4756 = vst [vmem:[#allocation7 + $0x84] sm:$0xf] %v4724
  %4757 = vst [vmem:[#allocation7 + $0x8c] sm:$0xf] %v4725
  %4758 = vst [vmem:[#allocation7 + $0x94] sm:$0xf] %v4726
  %4759 = vst [vmem:[#allocation7 + $0x9c] sm:$0xf] %v4727
  %4760 = vst [vmem:[#allocation7 + $0xa4] sm:$0xf] %v4728
  %4761 = vst [vmem:[#allocation7 + $0xac] sm:$0xf] %v4729
  %4762 = vst [vmem:[#allocation7 + $0xb4] sm:$0xf] %v4730
  %4763 = vst [vmem:[#allocation7 + $0xbc] sm:$0xf] %v4731
  %4764 = vst [vmem:[#allocation7 + $0xc4] sm:$0xf] %v4732
  %4765 = vst [vmem:[#allocation7 + $0xcc] sm:$0xf] %v4733
  %4766 = vst [vmem:[#allocation7 + $0xd4] sm:$0xf] %v4734
  %4767 = vst [vmem:[#allocation7 + $0xdc] sm:$0xf] %v4735
  %4768 = vst [vmem:[#allocation7 + $0xe4] sm:$0xf] %v4736
  %4769 = vst [vmem:[#allocation7 + $0xec] sm:$0xf] %v4737
  %4770 = vst [vmem:[#allocation7 + $0xf4] sm:$0xf] %v4738
  %4771 = vst [vmem:[#allocation7 + $0xfc] sm:$0xf] %v4739
  %v4772 = vld [vmem:[#allocation3] sm:$0xff]
  %v4773 = vld [vmem:[#allocation3 + $0x8] sm:$0xff]
  %v4774 = vld [vmem:[#allocation3 + $0x10] sm:$0xff]
  %v4775 = vld [vmem:[#allocation3 + $0x18] sm:$0xff]
  %v4776 = vld [vmem:[#allocation3 + $0x20] sm:$0xff]
  %v4777 = vld [vmem:[#allocation3 + $0x28] sm:$0xff]
  %v4778 = vld [vmem:[#allocation3 + $0x30] sm:$0xff]
  %v4779 = vld [vmem:[#allocation3 + $0x38] sm:$0xff]
  %v4780 = vld [vmem:[#allocation3 + $0x40] sm:$0xff]
  %v4781 = vld [vmem:[#allocation3 + $0x48] sm:$0xff]
  %v4782 = vld [vmem:[#allocation3 + $0x50] sm:$0xff]
  %v4783 = vld [vmem:[#allocation3 + $0x58] sm:$0xff]
  %v4784 = vld [vmem:[#allocation3 + $0x60] sm:$0xff]
  %v4785 = vld [vmem:[#allocation3 + $0x68] sm:$0xff]
  %v4786 = vld [vmem:[#allocation3 + $0x70] sm:$0xff]
  %v4787 = vld [vmem:[#allocation3 + $0x78] sm:$0xff]
  %v4788 = vld [vmem:[#allocation3 + $0x80] sm:$0xff]
  %v4789 = vld [vmem:[#allocation3 + $0x88] sm:$0xff]
  %v4790 = vld [vmem:[#allocation3 + $0x90] sm:$0xff]
  %v4791 = vld [vmem:[#allocation3 + $0x98] sm:$0xff]
  %v4792 = vld [vmem:[#allocation3 + $0xa0] sm:$0xff]
  %v4793 = vld [vmem:[#allocation3 + $0xa8] sm:$0xff]
  %v4794 = vld [vmem:[#allocation3 + $0xb0] sm:$0xff]
  %v4795 = vld [vmem:[#allocation3 + $0xb8] sm:$0xff]
  %v4796 = vld [vmem:[#allocation3 + $0xc0] sm:$0xff]
  %v4797 = vld [vmem:[#allocation3 + $0xc8] sm:$0xff]
  %v4798 = vld [vmem:[#allocation3 + $0xd0] sm:$0xff]
  %v4799 = vld [vmem:[#allocation3 + $0xd8] sm:$0xff]
  %v4800 = vld [vmem:[#allocation3 + $0xe0] sm:$0xff]
  %v4801 = vld [vmem:[#allocation3 + $0xe8] sm:$0xff]
  %v4802 = vld [vmem:[#allocation3 + $0xf0] sm:$0xff]
  %v4803 = vld [vmem:[#allocation3 + $0xf8] sm:$0xff]
  %v4804 = vld [vmem:[#allocation7] sm:$0xff]
  %v4805 = vld [vmem:[#allocation7 + $0x8] sm:$0xff]
  %v4806 = vld [vmem:[#allocation7 + $0x10] sm:$0xff]
  %v4807 = vld [vmem:[#allocation7 + $0x18] sm:$0xff]
  %v4808 = vld [vmem:[#allocation7 + $0x20] sm:$0xff]
  %v4809 = vld [vmem:[#allocation7 + $0x28] sm:$0xff]
  %v4810 = vld [vmem:[#allocation7 + $0x30] sm:$0xff]
  %v4811 = vld [vmem:[#allocation7 + $0x38] sm:$0xff]
  %v4812 = vld [vmem:[#allocation7 + $0x40] sm:$0xff]
  %v4813 = vld [vmem:[#allocation7 + $0x48] sm:$0xff]
  %v4814 = vld [vmem:[#allocation7 + $0x50] sm:$0xff]
  %v4815 = vld [vmem:[#allocation7 + $0x58] sm:$0xff]
  %v4816 = vld [vmem:[#allocation7 + $0x60] sm:$0xff]
  %v4817 = vld [vmem:[#allocation7 + $0x68] sm:$0xff]
  %v4818 = vld [vmem:[#allocation7 + $0x70] sm:$0xff]
  %v4819 = vld [vmem:[#allocation7 + $0x78] sm:$0xff]
  %v4820 = vld [vmem:[#allocation7 + $0x80] sm:$0xff]
  %v4821 = vld [vmem:[#allocation7 + $0x88] sm:$0xff]
  %v4822 = vld [vmem:[#allocation7 + $0x90] sm:$0xff]
  %v4823 = vld [vmem:[#allocation7 + $0x98] sm:$0xff]
  %v4824 = vld [vmem:[#allocation7 + $0xa0] sm:$0xff]
  %v4825 = vld [vmem:[#allocation7 + $0xa8] sm:$0xff]
  %v4826 = vld [vmem:[#allocation7 + $0xb0] sm:$0xff]
  %v4827 = vld [vmem:[#allocation7 + $0xb8] sm:$0xff]
  %v4828 = vld [vmem:[#allocation7 + $0xc0] sm:$0xff]
  %v4829 = vld [vmem:[#allocation7 + $0xc8] sm:$0xff]
  %v4830 = vld [vmem:[#allocation7 + $0xd0] sm:$0xff]
  %v4831 = vld [vmem:[#allocation7 + $0xd8] sm:$0xff]
  %v4832 = vld [vmem:[#allocation7 + $0xe0] sm:$0xff]
  %v4833 = vld [vmem:[#allocation7 + $0xe8] sm:$0xff]
  %v4834 = vld [vmem:[#allocation7 + $0xf0] sm:$0xff]
  %v4835 = vld [vmem:[#allocation7 + $0xf8] sm:$0xff]
  %v4868 = vunpack.c.l.b16 %v4772
  %v4869 = vunpack.c.h.b16 %v4772
  %v4870 = vunpack.c.l.b16 %v4773
  %v4871 = vunpack.c.h.b16 %v4773
  %v4872 = vunpack.c.l.b16 %v4774
  %v4873 = vunpack.c.h.b16 %v4774
  %v4874 = vunpack.c.l.b16 %v4775
  %v4875 = vunpack.c.h.b16 %v4775
  %v4876 = vunpack.c.l.b16 %v4776
  %v4877 = vunpack.c.h.b16 %v4776
  %v4878 = vunpack.c.l.b16 %v4777
  %v4879 = vunpack.c.h.b16 %v4777
  %v4880 = vunpack.c.l.b16 %v4778
  %v4881 = vunpack.c.h.b16 %v4778
  %v4882 = vunpack.c.l.b16 %v4779
  %v4883 = vunpack.c.h.b16 %v4779
  %v4884 = vunpack.c.l.b16 %v4780
  %v4885 = vunpack.c.h.b16 %v4780
  %v4886 = vunpack.c.l.b16 %v4781
  %v4887 = vunpack.c.h.b16 %v4781
  %v4888 = vunpack.c.l.b16 %v4782
  %v4889 = vunpack.c.h.b16 %v4782
  %v4890 = vunpack.c.l.b16 %v4783
  %v4891 = vunpack.c.h.b16 %v4783
  %v4892 = vunpack.c.l.b16 %v4784
  %v4893 = vunpack.c.h.b16 %v4784
  %v4894 = vunpack.c.l.b16 %v4785
  %v4895 = vunpack.c.h.b16 %v4785
  %v4896 = vunpack.c.l.b16 %v4786
  %v4897 = vunpack.c.h.b16 %v4786
  %v4898 = vunpack.c.l.b16 %v4787
  %v4899 = vunpack.c.h.b16 %v4787
  %v4900 = vunpack.c.l.b16 %v4788
  %v4901 = vunpack.c.h.b16 %v4788
  %v4902 = vunpack.c.l.b16 %v4789
  %v4903 = vunpack.c.h.b16 %v4789
  %v4904 = vunpack.c.l.b16 %v4790
  %v4905 = vunpack.c.h.b16 %v4790
  %v4906 = vunpack.c.l.b16 %v4791
  %v4907 = vunpack.c.h.b16 %v4791
  %v4908 = vunpack.c.l.b16 %v4792
  %v4909 = vunpack.c.h.b16 %v4792
  %v4910 = vunpack.c.l.b16 %v4793
  %v4911 = vunpack.c.h.b16 %v4793
  %v4912 = vunpack.c.l.b16 %v4794
  %v4913 = vunpack.c.h.b16 %v4794
  %v4914 = vunpack.c.l.b16 %v4795
  %v4915 = vunpack.c.h.b16 %v4795
  %v4916 = vunpack.c.l.b16 %v4796
  %v4917 = vunpack.c.h.b16 %v4796
  %v4918 = vunpack.c.l.b16 %v4797
  %v4919 = vunpack.c.h.b16 %v4797
  %v4920 = vunpack.c.l.b16 %v4798
  %v4921 = vunpack.c.h.b16 %v4798
  %v4922 = vunpack.c.l.b16 %v4799
  %v4923 = vunpack.c.h.b16 %v4799
  %v4924 = vunpack.c.l.b16 %v4800
  %v4925 = vunpack.c.h.b16 %v4800
  %v4926 = vunpack.c.l.b16 %v4801
  %v4927 = vunpack.c.h.b16 %v4801
  %v4928 = vunpack.c.l.b16 %v4802
  %v4929 = vunpack.c.h.b16 %v4802
  %v4930 = vunpack.c.l.b16 %v4803
  %v4931 = vunpack.c.h.b16 %v4803
  %v4932 = vpack.c.b16 %v4870, %v4868
  %v4933 = vpack.c.b16 %v4871, %v4869
  %v4934 = vpack.c.b16 %v4874, %v4872
  %v4935 = vpack.c.b16 %v4875, %v4873
  %v4936 = vpack.c.b16 %v4878, %v4876
  %v4937 = vpack.c.b16 %v4879, %v4877
  %v4938 = vpack.c.b16 %v4882, %v4880
  %v4939 = vpack.c.b16 %v4883, %v4881
  %v4940 = vpack.c.b16 %v4886, %v4884
  %v4941 = vpack.c.b16 %v4887, %v4885
  %v4942 = vpack.c.b16 %v4890, %v4888
  %v4943 = vpack.c.b16 %v4891, %v4889
  %v4944 = vpack.c.b16 %v4894, %v4892
  %v4945 = vpack.c.b16 %v4895, %v4893
  %v4946 = vpack.c.b16 %v4898, %v4896
  %v4947 = vpack.c.b16 %v4899, %v4897
  %v4948 = vpack.c.b16 %v4902, %v4900
  %v4949 = vpack.c.b16 %v4903, %v4901
  %v4950 = vpack.c.b16 %v4906, %v4904
  %v4951 = vpack.c.b16 %v4907, %v4905
  %v4952 = vpack.c.b16 %v4910, %v4908
  %v4953 = vpack.c.b16 %v4911, %v4909
  %v4954 = vpack.c.b16 %v4914, %v4912
  %v4955 = vpack.c.b16 %v4915, %v4913
  %v4956 = vpack.c.b16 %v4918, %v4916
  %v4957 = vpack.c.b16 %v4919, %v4917
  %v4958 = vpack.c.b16 %v4922, %v4920
  %v4959 = vpack.c.b16 %v4923, %v4921
  %v4960 = vpack.c.b16 %v4926, %v4924
  %v4961 = vpack.c.b16 %v4927, %v4925
  %v4962 = vpack.c.b16 %v4930, %v4928
  %v4963 = vpack.c.b16 %v4931, %v4929
  %v5028 = vunpack.c.l.b16 %v4804
  %v5029 = vunpack.c.h.b16 %v4804
  %v5030 = vunpack.c.l.b16 %v4805
  %v5031 = vunpack.c.h.b16 %v4805
  %v5032 = vunpack.c.l.b16 %v4806
  %v5033 = vunpack.c.h.b16 %v4806
  %v5034 = vunpack.c.l.b16 %v4807
  %v5035 = vunpack.c.h.b16 %v4807
  %v5036 = vunpack.c.l.b16 %v4808
  %v5037 = vunpack.c.h.b16 %v4808
  %v5038 = vunpack.c.l.b16 %v4809
  %v5039 = vunpack.c.h.b16 %v4809
  %v5040 = vunpack.c.l.b16 %v4810
  %v5041 = vunpack.c.h.b16 %v4810
  %v5042 = vunpack.c.l.b16 %v4811
  %v5043 = vunpack.c.h.b16 %v4811
  %v5044 = vunpack.c.l.b16 %v4812
  %v5045 = vunpack.c.h.b16 %v4812
  %v5046 = vunpack.c.l.b16 %v4813
  %v5047 = vunpack.c.h.b16 %v4813
  %v5048 = vunpack.c.l.b16 %v4814
  %v5049 = vunpack.c.h.b16 %v4814
  %v5050 = vunpack.c.l.b16 %v4815
  %v5051 = vunpack.c.h.b16 %v4815
  %v5052 = vunpack.c.l.b16 %v4816
  %v5053 = vunpack.c.h.b16 %v4816
  %v5054 = vunpack.c.l.b16 %v4817
  %v5055 = vunpack.c.h.b16 %v4817
  %v5056 = vunpack.c.l.b16 %v4818
  %v5057 = vunpack.c.h.b16 %v4818
  %v5058 = vunpack.c.l.b16 %v4819
  %v5059 = vunpack.c.h.b16 %v4819
  %v5060 = vunpack.c.l.b16 %v4820
  %v5061 = vunpack.c.h.b16 %v4820
  %v5062 = vunpack.c.l.b16 %v4821
  %v5063 = vunpack.c.h.b16 %v4821
  %v5064 = vunpack.c.l.b16 %v4822
  %v5065 = vunpack.c.h.b16 %v4822
  %v5066 = vunpack.c.l.b16 %v4823
  %v5067 = vunpack.c.h.b16 %v4823
  %v5068 = vunpack.c.l.b16 %v4824
  %v5069 = vunpack.c.h.b16 %v4824
  %v5070 = vunpack.c.l.b16 %v4825
  %v5071 = vunpack.c.h.b16 %v4825
  %v5072 = vunpack.c.l.b16 %v4826
  %v5073 = vunpack.c.h.b16 %v4826
  %v5074 = vunpack.c.l.b16 %v4827
  %v5075 = vunpack.c.h.b16 %v4827
  %v5076 = vunpack.c.l.b16 %v4828
  %v5077 = vunpack.c.h.b16 %v4828
  %v5078 = vunpack.c.l.b16 %v4829
  %v5079 = vunpack.c.h.b16 %v4829
  %v5080 = vunpack.c.l.b16 %v4830
  %v5081 = vunpack.c.h.b16 %v4830
  %v5082 = vunpack.c.l.b16 %v4831
  %v5083 = vunpack.c.h.b16 %v4831
  %v5084 = vunpack.c.l.b16 %v4832
  %v5085 = vunpack.c.h.b16 %v4832
  %v5086 = vunpack.c.l.b16 %v4833
  %v5087 = vunpack.c.h.b16 %v4833
  %v5088 = vunpack.c.l.b16 %v4834
  %v5089 = vunpack.c.h.b16 %v4834
  %v5090 = vunpack.c.l.b16 %v4835
  %v5091 = vunpack.c.h.b16 %v4835
  %v5092 = vpack.c.b16 %v5030, %v5028
  %v5093 = vpack.c.b16 %v5031, %v5029
  %v5094 = vpack.c.b16 %v5034, %v5032
  %v5095 = vpack.c.b16 %v5035, %v5033
  %v5096 = vpack.c.b16 %v5038, %v5036
  %v5097 = vpack.c.b16 %v5039, %v5037
  %v5098 = vpack.c.b16 %v5042, %v5040
  %v5099 = vpack.c.b16 %v5043, %v5041
  %v5100 = vpack.c.b16 %v5046, %v5044
  %v5101 = vpack.c.b16 %v5047, %v5045
  %v5102 = vpack.c.b16 %v5050, %v5048
  %v5103 = vpack.c.b16 %v5051, %v5049
  %v5104 = vpack.c.b16 %v5054, %v5052
  %v5105 = vpack.c.b16 %v5055, %v5053
  %v5106 = vpack.c.b16 %v5058, %v5056
  %v5107 = vpack.c.b16 %v5059, %v5057
  %v5108 = vpack.c.b16 %v5062, %v5060
  %v5109 = vpack.c.b16 %v5063, %v5061
  %v5110 = vpack.c.b16 %v5066, %v5064
  %v5111 = vpack.c.b16 %v5067, %v5065
  %v5112 = vpack.c.b16 %v5070, %v5068
  %v5113 = vpack.c.b16 %v5071, %v5069
  %v5114 = vpack.c.b16 %v5074, %v5072
  %v5115 = vpack.c.b16 %v5075, %v5073
  %v5116 = vpack.c.b16 %v5078, %v5076
  %v5117 = vpack.c.b16 %v5079, %v5077
  %v5118 = vpack.c.b16 %v5082, %v5080
  %v5119 = vpack.c.b16 %v5083, %v5081
  %v5120 = vpack.c.b16 %v5086, %v5084
  %v5121 = vpack.c.b16 %v5087, %v5085
  %v5122 = vpack.c.b16 %v5090, %v5088
  %v5123 = vpack.c.b16 %v5091, %v5089
  %5156 = vmatpush.bf16.msra.mxu0 %v5106
  %5157 = vmatpush.bf16.msra.mxu0 %v5104
  %5158 = vmatpush.bf16.msra.mxu0 %v5102
  %5159 = vmatpush.bf16.msra.mxu0 %v5100
  %5160 = vmatpush.bf16.msra.mxu0 %v5098
  %5161 = vmatpush.bf16.msra.mxu0 %v5096
  %5162 = vmatpush.bf16.msra.mxu0 %v5094
  %5163 = vmatpush.bf16.msra.mxu0 %v5092
  %5164 = vmatmul.bf16.gmra.mxu0 %v4932
  %v5165 = vpop.f32.mrf.mxu0
  %v5166 = vadd.f32 0.0, %v5165
  %v5167 = vpop.f32.mrf.mxu0
  %v5168 = vadd.f32 0.0, %v5167
  %5169 = vmatmul.bf16.gmra.mxu0 %v4934
  %v5170 = vpop.f32.mrf.mxu0
  %v5171 = vadd.f32 0.0, %v5170
  %v5172 = vpop.f32.mrf.mxu0
  %v5173 = vadd.f32 0.0, %v5172
  %5174 = vmatmul.bf16.gmra.mxu0 %v4936
  %v5175 = vpop.f32.mrf.mxu0
  %v5176 = vadd.f32 0.0, %v5175
  %v5177 = vpop.f32.mrf.mxu0
  %v5178 = vadd.f32 0.0, %v5177
  %5179 = vmatmul.bf16.gmra.mxu0 %v4938
  %v5180 = vpop.f32.mrf.mxu0
  %v5181 = vadd.f32 0.0, %v5180
  %v5182 = vpop.f32.mrf.mxu0
  %v5183 = vadd.f32 0.0, %v5182
  %5184 = vmatmul.bf16.gmra.mxu0 %v4940
  %v5185 = vpop.f32.mrf.mxu0
  %v5186 = vadd.f32 0.0, %v5185
  %v5187 = vpop.f32.mrf.mxu0
  %v5188 = vadd.f32 0.0, %v5187
  %5189 = vmatmul.bf16.gmra.mxu0 %v4942
  %v5190 = vpop.f32.mrf.mxu0
  %v5191 = vadd.f32 0.0, %v5190
  %v5192 = vpop.f32.mrf.mxu0
  %v5193 = vadd.f32 0.0, %v5192
  %5194 = vmatmul.bf16.gmra.mxu0 %v4944
  %v5195 = vpop.f32.mrf.mxu0
  %v5196 = vadd.f32 0.0, %v5195
  %v5197 = vpop.f32.mrf.mxu0
  %v5198 = vadd.f32 0.0, %v5197
  %5199 = vmatmul.bf16.gmra.mxu0 %v4946
  %v5200 = vpop.f32.mrf.mxu0
  %v5201 = vadd.f32 0.0, %v5200
  %v5202 = vpop.f32.mrf.mxu0
  %v5203 = vadd.f32 0.0, %v5202
  %5204 = vmatmul.bf16.gmra.mxu0 %v4948
  %v5205 = vpop.f32.mrf.mxu0
  %v5206 = vadd.f32 0.0, %v5205
  %v5207 = vpop.f32.mrf.mxu0
  %v5208 = vadd.f32 0.0, %v5207
  %5209 = vmatmul.bf16.gmra.mxu0 %v4950
  %v5210 = vpop.f32.mrf.mxu0
  %v5211 = vadd.f32 0.0, %v5210
  %v5212 = vpop.f32.mrf.mxu0
  %v5213 = vadd.f32 0.0, %v5212
  %5214 = vmatmul.bf16.gmra.mxu0 %v4952
  %v5215 = vpop.f32.mrf.mxu0
  %v5216 = vadd.f32 0.0, %v5215
  %v5217 = vpop.f32.mrf.mxu0
  %v5218 = vadd.f32 0.0, %v5217
  %5219 = vmatmul.bf16.gmra.mxu0 %v4954
  %v5220 = vpop.f32.mrf.mxu0
  %v5221 = vadd.f32 0.0, %v5220
  %v5222 = vpop.f32.mrf.mxu0
  %v5223 = vadd.f32 0.0, %v5222
  %5224 = vmatmul.bf16.gmra.mxu0 %v4956
  %v5225 = vpop.f32.mrf.mxu0
  %v5226 = vadd.f32 0.0, %v5225
  %v5227 = vpop.f32.mrf.mxu0
  %v5228 = vadd.f32 0.0, %v5227
  %5229 = vmatmul.bf16.gmra.mxu0 %v4958
  %v5230 = vpop.f32.mrf.mxu0
  %v5231 = vadd.f32 0.0, %v5230
  %v5232 = vpop.f32.mrf.mxu0
  %v5233 = vadd.f32 0.0, %v5232
  %5234 = vmatmul.bf16.gmra.mxu0 %v4960
  %v5235 = vpop.f32.mrf.mxu0
  %v5236 = vadd.f32 0.0, %v5235
  %v5237 = vpop.f32.mrf.mxu0
  %v5238 = vadd.f32 0.0, %v5237
  %5239 = vmatmul.bf16.gmra.mxu0 %v4962
  %v5240 = vpop.f32.mrf.mxu0
  %v5241 = vadd.f32 0.0, %v5240
  %v5242 = vpop.f32.mrf.mxu0
  %v5243 = vadd.f32 0.0, %v5242
  %5244 = vdwg.mxu0
  %5245 = vmatpush.bf16.msra.mxu0 %v5122
  %5246 = vmatpush.bf16.msra.mxu0 %v5120
  %5247 = vmatpush.bf16.msra.mxu0 %v5118
  %5248 = vmatpush.bf16.msra.mxu0 %v5116
  %5249 = vmatpush.bf16.msra.mxu0 %v5114
  %5250 = vmatpush.bf16.msra.mxu0 %v5112
  %5251 = vmatpush.bf16.msra.mxu0 %v5110
  %5252 = vmatpush.bf16.msra.mxu0 %v5108
  %5253 = vmatmul.bf16.gmra.mxu0 %v4933
  %v5254 = vpop.f32.mrf.mxu0
  %v5255 = vadd.f32 %v5166, %v5254
  %v5256 = vpop.f32.mrf.mxu0
  %v5257 = vadd.f32 %v5168, %v5256
  %5258 = vmatmul.bf16.gmra.mxu0 %v4935
  %v5259 = vpop.f32.mrf.mxu0
  %v5260 = vadd.f32 %v5171, %v5259
  %v5261 = vpop.f32.mrf.mxu0
  %v5262 = vadd.f32 %v5173, %v5261
  %5263 = vmatmul.bf16.gmra.mxu0 %v4937
  %v5264 = vpop.f32.mrf.mxu0
  %v5265 = vadd.f32 %v5176, %v5264
  %v5266 = vpop.f32.mrf.mxu0
  %v5267 = vadd.f32 %v5178, %v5266
  %5268 = vmatmul.bf16.gmra.mxu0 %v4939
  %v5269 = vpop.f32.mrf.mxu0
  %v5270 = vadd.f32 %v5181, %v5269
  %v5271 = vpop.f32.mrf.mxu0
  %v5272 = vadd.f32 %v5183, %v5271
  %5273 = vmatmul.bf16.gmra.mxu0 %v4941
  %v5274 = vpop.f32.mrf.mxu0
  %v5275 = vadd.f32 %v5186, %v5274
  %v5276 = vpop.f32.mrf.mxu0
  %v5277 = vadd.f32 %v5188, %v5276
  %5278 = vmatmul.bf16.gmra.mxu0 %v4943
  %v5279 = vpop.f32.mrf.mxu0
  %v5280 = vadd.f32 %v5191, %v5279
  %v5281 = vpop.f32.mrf.mxu0
  %v5282 = vadd.f32 %v5193, %v5281
  %5283 = vmatmul.bf16.gmra.mxu0 %v4945
  %v5284 = vpop.f32.mrf.mxu0
  %v5285 = vadd.f32 %v5196, %v5284
  %v5286 = vpop.f32.mrf.mxu0
  %v5287 = vadd.f32 %v5198, %v5286
  %5288 = vmatmul.bf16.gmra.mxu0 %v4947
  %v5289 = vpop.f32.mrf.mxu0
  %v5290 = vadd.f32 %v5201, %v5289
  %v5291 = vpop.f32.mrf.mxu0
  %v5292 = vadd.f32 %v5203, %v5291
  %5293 = vmatmul.bf16.gmra.mxu0 %v4949
  %v5294 = vpop.f32.mrf.mxu0
  %v5295 = vadd.f32 %v5206, %v5294
  %v5296 = vpop.f32.mrf.mxu0
  %v5297 = vadd.f32 %v5208, %v5296
  %5298 = vmatmul.bf16.gmra.mxu0 %v4951
  %v5299 = vpop.f32.mrf.mxu0
  %v5300 = vadd.f32 %v5211, %v5299
  %v5301 = vpop.f32.mrf.mxu0
  %v5302 = vadd.f32 %v5213, %v5301
  %5303 = vmatmul.bf16.gmra.mxu0 %v4953
  %v5304 = vpop.f32.mrf.mxu0
  %v5305 = vadd.f32 %v5216, %v5304
  %v5306 = vpop.f32.mrf.mxu0
  %v5307 = vadd.f32 %v5218, %v5306
  %5308 = vmatmul.bf16.gmra.mxu0 %v4955
  %v5309 = vpop.f32.mrf.mxu0
  %v5310 = vadd.f32 %v5221, %v5309
  %v5311 = vpop.f32.mrf.mxu0
  %v5312 = vadd.f32 %v5223, %v5311
  %5313 = vmatmul.bf16.gmra.mxu0 %v4957
  %v5314 = vpop.f32.mrf.mxu0
  %v5315 = vadd.f32 %v5226, %v5314
  %v5316 = vpop.f32.mrf.mxu0
  %v5317 = vadd.f32 %v5228, %v5316
  %5318 = vmatmul.bf16.gmra.mxu0 %v4959
  %v5319 = vpop.f32.mrf.mxu0
  %v5320 = vadd.f32 %v5231, %v5319
  %v5321 = vpop.f32.mrf.mxu0
  %v5322 = vadd.f32 %v5233, %v5321
  %5323 = vmatmul.bf16.gmra.mxu0 %v4961
  %v5324 = vpop.f32.mrf.mxu0
  %v5325 = vadd.f32 %v5236, %v5324
  %v5326 = vpop.f32.mrf.mxu0
  %v5327 = vadd.f32 %v5238, %v5326
  %5328 = vmatmul.bf16.gmra.mxu0 %v4963
  %v5329 = vpop.f32.mrf.mxu0
  %v5330 = vadd.f32 %v5241, %v5329
  %v5331 = vpop.f32.mrf.mxu0
  %v5332 = vadd.f32 %v5243, %v5331
  %5333 = vdwg.mxu0
  %5334 = vmatpush.bf16.msra.mxu0 %v5107
  %5335 = vmatpush.bf16.msra.mxu0 %v5105
  %5336 = vmatpush.bf16.msra.mxu0 %v5103
  %5337 = vmatpush.bf16.msra.mxu0 %v5101
  %5338 = vmatpush.bf16.msra.mxu0 %v5099
  %5339 = vmatpush.bf16.msra.mxu0 %v5097
  %5340 = vmatpush.bf16.msra.mxu0 %v5095
  %5341 = vmatpush.bf16.msra.mxu0 %v5093
  %5342 = vmatmul.bf16.gmra.mxu0 %v4932
  %v5343 = vpop.f32.mrf.mxu0
  %v5344 = vadd.f32 0.0, %v5343
  %v5345 = vpop.f32.mrf.mxu0
  %v5346 = vadd.f32 0.0, %v5345
  %5347 = vmatmul.bf16.gmra.mxu0 %v4934
  %v5348 = vpop.f32.mrf.mxu0
  %v5349 = vadd.f32 0.0, %v5348
  %v5350 = vpop.f32.mrf.mxu0
  %v5351 = vadd.f32 0.0, %v5350
  %5352 = vmatmul.bf16.gmra.mxu0 %v4936
  %v5353 = vpop.f32.mrf.mxu0
  %v5354 = vadd.f32 0.0, %v5353
  %v5355 = vpop.f32.mrf.mxu0
  %v5356 = vadd.f32 0.0, %v5355
  %5357 = vmatmul.bf16.gmra.mxu0 %v4938
  %v5358 = vpop.f32.mrf.mxu0
  %v5359 = vadd.f32 0.0, %v5358
  %v5360 = vpop.f32.mrf.mxu0
  %v5361 = vadd.f32 0.0, %v5360
  %5362 = vmatmul.bf16.gmra.mxu0 %v4940
  %v5363 = vpop.f32.mrf.mxu0
  %v5364 = vadd.f32 0.0, %v5363
  %v5365 = vpop.f32.mrf.mxu0
  %v5366 = vadd.f32 0.0, %v5365
  %5367 = vmatmul.bf16.gmra.mxu0 %v4942
  %v5368 = vpop.f32.mrf.mxu0
  %v5369 = vadd.f32 0.0, %v5368
  %v5370 = vpop.f32.mrf.mxu0
  %v5371 = vadd.f32 0.0, %v5370
  %5372 = vmatmul.bf16.gmra.mxu0 %v4944
  %v5373 = vpop.f32.mrf.mxu0
  %v5374 = vadd.f32 0.0, %v5373
  %v5375 = vpop.f32.mrf.mxu0
  %v5376 = vadd.f32 0.0, %v5375
  %5377 = vmatmul.bf16.gmra.mxu0 %v4946
  %v5378 = vpop.f32.mrf.mxu0
  %v5379 = vadd.f32 0.0, %v5378
  %v5380 = vpop.f32.mrf.mxu0
  %v5381 = vadd.f32 0.0, %v5380
  %5382 = vmatmul.bf16.gmra.mxu0 %v4948
  %v5383 = vpop.f32.mrf.mxu0
  %v5384 = vadd.f32 0.0, %v5383
  %v5385 = vpop.f32.mrf.mxu0
  %v5386 = vadd.f32 0.0, %v5385
  %5387 = vmatmul.bf16.gmra.mxu0 %v4950
  %v5388 = vpop.f32.mrf.mxu0
  %v5389 = vadd.f32 0.0, %v5388
  %v5390 = vpop.f32.mrf.mxu0
  %v5391 = vadd.f32 0.0, %v5390
  %5392 = vmatmul.bf16.gmra.mxu0 %v4952
  %v5393 = vpop.f32.mrf.mxu0
  %v5394 = vadd.f32 0.0, %v5393
  %v5395 = vpop.f32.mrf.mxu0
  %v5396 = vadd.f32 0.0, %v5395
  %5397 = vmatmul.bf16.gmra.mxu0 %v4954
  %v5398 = vpop.f32.mrf.mxu0
  %v5399 = vadd.f32 0.0, %v5398
  %v5400 = vpop.f32.mrf.mxu0
  %v5401 = vadd.f32 0.0, %v5400
  %5402 = vmatmul.bf16.gmra.mxu0 %v4956
  %v5403 = vpop.f32.mrf.mxu0
  %v5404 = vadd.f32 0.0, %v5403
  %v5405 = vpop.f32.mrf.mxu0
  %v5406 = vadd.f32 0.0, %v5405
  %5407 = vmatmul.bf16.gmra.mxu0 %v4958
  %v5408 = vpop.f32.mrf.mxu0
  %v5409 = vadd.f32 0.0, %v5408
  %v5410 = vpop.f32.mrf.mxu0
  %v5411 = vadd.f32 0.0, %v5410
  %5412 = vmatmul.bf16.gmra.mxu0 %v4960
  %v5413 = vpop.f32.mrf.mxu0
  %v5414 = vadd.f32 0.0, %v5413
  %v5415 = vpop.f32.mrf.mxu0
  %v5416 = vadd.f32 0.0, %v5415
  %5417 = vmatmul.bf16.gmra.mxu0 %v4962
  %v5418 = vpop.f32.mrf.mxu0
  %v5419 = vadd.f32 0.0, %v5418
  %v5420 = vpop.f32.mrf.mxu0
  %v5421 = vadd.f32 0.0, %v5420
  %5422 = vdwg.mxu0
  %5423 = vmatpush.bf16.msra.mxu0 %v5123
  %5424 = vmatpush.bf16.msra.mxu0 %v5121
  %5425 = vmatpush.bf16.msra.mxu0 %v5119
  %5426 = vmatpush.bf16.msra.mxu0 %v5117
  %5427 = vmatpush.bf16.msra.mxu0 %v5115
  %5428 = vmatpush.bf16.msra.mxu0 %v5113
  %5429 = vmatpush.bf16.msra.mxu0 %v5111
  %5430 = vmatpush.bf16.msra.mxu0 %v5109
  %5431 = vmatmul.bf16.gmra.mxu0 %v4933
  %v5432 = vpop.f32.mrf.mxu0
  %v5433 = vadd.f32 %v5344, %v5432
  %v5434 = vpop.f32.mrf.mxu0
  %v5435 = vadd.f32 %v5346, %v5434
  %5436 = vmatmul.bf16.gmra.mxu0 %v4935
  %v5437 = vpop.f32.mrf.mxu0
  %v5438 = vadd.f32 %v5349, %v5437
  %v5439 = vpop.f32.mrf.mxu0
  %v5440 = vadd.f32 %v5351, %v5439
  %5441 = vmatmul.bf16.gmra.mxu0 %v4937
  %v5442 = vpop.f32.mrf.mxu0
  %v5443 = vadd.f32 %v5354, %v5442
  %v5444 = vpop.f32.mrf.mxu0
  %v5445 = vadd.f32 %v5356, %v5444
  %5446 = vmatmul.bf16.gmra.mxu0 %v4939
  %v5447 = vpop.f32.mrf.mxu0
  %v5448 = vadd.f32 %v5359, %v5447
  %v5449 = vpop.f32.mrf.mxu0
  %v5450 = vadd.f32 %v5361, %v5449
  %5451 = vmatmul.bf16.gmra.mxu0 %v4941
  %v5452 = vpop.f32.mrf.mxu0
  %v5453 = vadd.f32 %v5364, %v5452
  %v5454 = vpop.f32.mrf.mxu0
  %v5455 = vadd.f32 %v5366, %v5454
  %5456 = vmatmul.bf16.gmra.mxu0 %v4943
  %v5457 = vpop.f32.mrf.mxu0
  %v5458 = vadd.f32 %v5369, %v5457
  %v5459 = vpop.f32.mrf.mxu0
  %v5460 = vadd.f32 %v5371, %v5459
  %5461 = vmatmul.bf16.gmra.mxu0 %v4945
  %v5462 = vpop.f32.mrf.mxu0
  %v5463 = vadd.f32 %v5374, %v5462
  %v5464 = vpop.f32.mrf.mxu0
  %v5465 = vadd.f32 %v5376, %v5464
  %5466 = vmatmul.bf16.gmra.mxu0 %v4947
  %v5467 = vpop.f32.mrf.mxu0
  %v5468 = vadd.f32 %v5379, %v5467
  %v5469 = vpop.f32.mrf.mxu0
  %v5470 = vadd.f32 %v5381, %v5469
  %5471 = vmatmul.bf16.gmra.mxu0 %v4949
  %v5472 = vpop.f32.mrf.mxu0
  %v5473 = vadd.f32 %v5384, %v5472
  %v5474 = vpop.f32.mrf.mxu0
  %v5475 = vadd.f32 %v5386, %v5474
  %5476 = vmatmul.bf16.gmra.mxu0 %v4951
  %v5477 = vpop.f32.mrf.mxu0
  %v5478 = vadd.f32 %v5389, %v5477
  %v5479 = vpop.f32.mrf.mxu0
  %v5480 = vadd.f32 %v5391, %v5479
  %5481 = vmatmul.bf16.gmra.mxu0 %v4953
  %v5482 = vpop.f32.mrf.mxu0
  %v5483 = vadd.f32 %v5394, %v5482
  %v5484 = vpop.f32.mrf.mxu0
  %v5485 = vadd.f32 %v5396, %v5484
  %5486 = vmatmul.bf16.gmra.mxu0 %v4955
  %v5487 = vpop.f32.mrf.mxu0
  %v5488 = vadd.f32 %v5399, %v5487
  %v5489 = vpop.f32.mrf.mxu0
  %v5490 = vadd.f32 %v5401, %v5489
  %5491 = vmatmul.bf16.gmra.mxu0 %v4957
  %v5492 = vpop.f32.mrf.mxu0
  %v5493 = vadd.f32 %v5404, %v5492
  %v5494 = vpop.f32.mrf.mxu0
  %v5495 = vadd.f32 %v5406, %v5494
  %5496 = vmatmul.bf16.gmra.mxu0 %v4959
  %v5497 = vpop.f32.mrf.mxu0
  %v5498 = vadd.f32 %v5409, %v5497
  %v5499 = vpop.f32.mrf.mxu0
  %v5500 = vadd.f32 %v5411, %v5499
  %5501 = vmatmul.bf16.gmra.mxu0 %v4961
  %v5502 = vpop.f32.mrf.mxu0
  %v5503 = vadd.f32 %v5414, %v5502
  %v5504 = vpop.f32.mrf.mxu0
  %v5505 = vadd.f32 %v5416, %v5504
  %5506 = vmatmul.bf16.gmra.mxu0 %v4963
  %v5507 = vpop.f32.mrf.mxu0
  %v5508 = vadd.f32 %v5419, %v5507
  %v5509 = vpop.f32.mrf.mxu0
  %v5510 = vadd.f32 %v5421, %v5509
  %5511 = vdwg.mxu0
  %v5512 = vld [vmem:[%s5] sm:$0xff]
  %v5513 = vld [vmem:[%s5 + $0x8] sm:$0xff]
  %v5514 = vld [vmem:[%s5 + $0x10] sm:$0xff]
  %v5515 = vld [vmem:[%s5 + $0x18] sm:$0xff]
  %v5516 = vld [vmem:[%s5 + $0x20] sm:$0xff]
  %v5517 = vld [vmem:[%s5 + $0x28] sm:$0xff]
  %v5518 = vld [vmem:[%s5 + $0x30] sm:$0xff]
  %v5519 = vld [vmem:[%s5 + $0x38] sm:$0xff]
  %v5520 = vld [vmem:[%s5 + $0x40] sm:$0xff]
  %v5521 = vld [vmem:[%s5 + $0x48] sm:$0xff]
  %v5522 = vld [vmem:[%s5 + $0x50] sm:$0xff]
  %v5523 = vld [vmem:[%s5 + $0x58] sm:$0xff]
  %v5524 = vld [vmem:[%s5 + $0x60] sm:$0xff]
  %v5525 = vld [vmem:[%s5 + $0x68] sm:$0xff]
  %v5526 = vld [vmem:[%s5 + $0x70] sm:$0xff]
  %v5527 = vld [vmem:[%s5 + $0x78] sm:$0xff]
  %v5528 = vld [vmem:[%s5 + $0x80] sm:$0xff]
  %v5529 = vld [vmem:[%s5 + $0x88] sm:$0xff]
  %v5530 = vld [vmem:[%s5 + $0x90] sm:$0xff]
  %v5531 = vld [vmem:[%s5 + $0x98] sm:$0xff]
  %v5532 = vld [vmem:[%s5 + $0xa0] sm:$0xff]
  %v5533 = vld [vmem:[%s5 + $0xa8] sm:$0xff]
  %v5534 = vld [vmem:[%s5 + $0xb0] sm:$0xff]
  %v5535 = vld [vmem:[%s5 + $0xb8] sm:$0xff]
  %v5536 = vld [vmem:[%s5 + $0xc0] sm:$0xff]
  %v5537 = vld [vmem:[%s5 + $0xc8] sm:$0xff]
  %v5538 = vld [vmem:[%s5 + $0xd0] sm:$0xff]
  %v5539 = vld [vmem:[%s5 + $0xd8] sm:$0xff]
  %v5540 = vld [vmem:[%s5 + $0xe0] sm:$0xff]
  %v5541 = vld [vmem:[%s5 + $0xe8] sm:$0xff]
  %v5542 = vld [vmem:[%s5 + $0xf0] sm:$0xff]
  %v5543 = vld [vmem:[%s5 + $0xf8] sm:$0xff]
  %v5544 = vadd.f32 %v5512, %v5255
  %v5545 = vadd.f32 %v5513, %v5257
  %v5546 = vadd.f32 %v5514, %v5260
  %v5547 = vadd.f32 %v5515, %v5262
  %v5548 = vadd.f32 %v5516, %v5265
  %v5549 = vadd.f32 %v5517, %v5267
  %v5550 = vadd.f32 %v5518, %v5270
  %v5551 = vadd.f32 %v5519, %v5272
  %v5552 = vadd.f32 %v5520, %v5275
  %v5553 = vadd.f32 %v5521, %v5277
  %v5554 = vadd.f32 %v5522, %v5280
  %v5555 = vadd.f32 %v5523, %v5282
  %v5556 = vadd.f32 %v5524, %v5285
  %v5557 = vadd.f32 %v5525, %v5287
  %v5558 = vadd.f32 %v5526, %v5290
  %v5559 = vadd.f32 %v5527, %v5292
  %v5560 = vadd.f32 %v5528, %v5295
  %v5561 = vadd.f32 %v5529, %v5297
  %v5562 = vadd.f32 %v5530, %v5300
  %v5563 = vadd.f32 %v5531, %v5302
  %v5564 = vadd.f32 %v5532, %v5305
  %v5565 = vadd.f32 %v5533, %v5307
  %v5566 = vadd.f32 %v5534, %v5310
  %v5567 = vadd.f32 %v5535, %v5312
  %v5568 = vadd.f32 %v5536, %v5315
  %v5569 = vadd.f32 %v5537, %v5317
  %v5570 = vadd.f32 %v5538, %v5320
  %v5571 = vadd.f32 %v5539, %v5322
  %v5572 = vadd.f32 %v5540, %v5325
  %v5573 = vadd.f32 %v5541, %v5327
  %v5574 = vadd.f32 %v5542, %v5330
  %v5575 = vadd.f32 %v5543, %v5332
  %5576 = vst [vmem:[%s5] sm:$0xff] %v5544
  %5577 = vst [vmem:[%s5 + $0x8] sm:$0xff] %v5545
  %5578 = vst [vmem:[%s5 + $0x10] sm:$0xff] %v5546
  %5579 = vst [vmem:[%s5 + $0x18] sm:$0xff] %v5547
  %5580 = vst [vmem:[%s5 + $0x20] sm:$0xff] %v5548
  %5581 = vst [vmem:[%s5 + $0x28] sm:$0xff] %v5549
  %5582 = vst [vmem:[%s5 + $0x30] sm:$0xff] %v5550
  %5583 = vst [vmem:[%s5 + $0x38] sm:$0xff] %v5551
  %5584 = vst [vmem:[%s5 + $0x40] sm:$0xff] %v5552
  %5585 = vst [vmem:[%s5 + $0x48] sm:$0xff] %v5553
  %5586 = vst [vmem:[%s5 + $0x50] sm:$0xff] %v5554
  %5587 = vst [vmem:[%s5 + $0x58] sm:$0xff] %v5555
  %5588 = vst [vmem:[%s5 + $0x60] sm:$0xff] %v5556
  %5589 = vst [vmem:[%s5 + $0x68] sm:$0xff] %v5557
  %5590 = vst [vmem:[%s5 + $0x70] sm:$0xff] %v5558
  %5591 = vst [vmem:[%s5 + $0x78] sm:$0xff] %v5559
  %5592 = vst [vmem:[%s5 + $0x80] sm:$0xff] %v5560
  %5593 = vst [vmem:[%s5 + $0x88] sm:$0xff] %v5561
  %5594 = vst [vmem:[%s5 + $0x90] sm:$0xff] %v5562
  %5595 = vst [vmem:[%s5 + $0x98] sm:$0xff] %v5563
  %5596 = vst [vmem:[%s5 + $0xa0] sm:$0xff] %v5564
  %5597 = vst [vmem:[%s5 + $0xa8] sm:$0xff] %v5565
  %5598 = vst [vmem:[%s5 + $0xb0] sm:$0xff] %v5566
  %5599 = vst [vmem:[%s5 + $0xb8] sm:$0xff] %v5567
  %5600 = vst [vmem:[%s5 + $0xc0] sm:$0xff] %v5568
  %5601 = vst [vmem:[%s5 + $0xc8] sm:$0xff] %v5569
  %5602 = vst [vmem:[%s5 + $0xd0] sm:$0xff] %v5570
  %5603 = vst [vmem:[%s5 + $0xd8] sm:$0xff] %v5571
  %5604 = vst [vmem:[%s5 + $0xe0] sm:$0xff] %v5572
  %5605 = vst [vmem:[%s5 + $0xe8] sm:$0xff] %v5573
  %5606 = vst [vmem:[%s5 + $0xf0] sm:$0xff] %v5574
  %5607 = vst [vmem:[%s5 + $0xf8] sm:$0xff] %v5575
  %v5608 = vld [vmem:[%s6] sm:$0xff]
  %v5609 = vld [vmem:[%s6 + $0x8] sm:$0xff]
  %v5610 = vld [vmem:[%s6 + $0x10] sm:$0xff]
  %v5611 = vld [vmem:[%s6 + $0x18] sm:$0xff]
  %v5612 = vld [vmem:[%s6 + $0x20] sm:$0xff]
  %v5613 = vld [vmem:[%s6 + $0x28] sm:$0xff]
  %v5614 = vld [vmem:[%s6 + $0x30] sm:$0xff]
  %v5615 = vld [vmem:[%s6 + $0x38] sm:$0xff]
  %v5616 = vld [vmem:[%s6 + $0x40] sm:$0xff]
  %v5617 = vld [vmem:[%s6 + $0x48] sm:$0xff]
  %v5618 = vld [vmem:[%s6 + $0x50] sm:$0xff]
  %v5619 = vld [vmem:[%s6 + $0x58] sm:$0xff]
  %v5620 = vld [vmem:[%s6 + $0x60] sm:$0xff]
  %v5621 = vld [vmem:[%s6 + $0x68] sm:$0xff]
  %v5622 = vld [vmem:[%s6 + $0x70] sm:$0xff]
  %v5623 = vld [vmem:[%s6 + $0x78] sm:$0xff]
  %v5624 = vld [vmem:[%s6 + $0x80] sm:$0xff]
  %v5625 = vld [vmem:[%s6 + $0x88] sm:$0xff]
  %v5626 = vld [vmem:[%s6 + $0x90] sm:$0xff]
  %v5627 = vld [vmem:[%s6 + $0x98] sm:$0xff]
  %v5628 = vld [vmem:[%s6 + $0xa0] sm:$0xff]
  %v5629 = vld [vmem:[%s6 + $0xa8] sm:$0xff]
  %v5630 = vld [vmem:[%s6 + $0xb0] sm:$0xff]
  %v5631 = vld [vmem:[%s6 + $0xb8] sm:$0xff]
  %v5632 = vld [vmem:[%s6 + $0xc0] sm:$0xff]
  %v5633 = vld [vmem:[%s6 + $0xc8] sm:$0xff]
  %v5634 = vld [vmem:[%s6 + $0xd0] sm:$0xff]
  %v5635 = vld [vmem:[%s6 + $0xd8] sm:$0xff]
  %v5636 = vld [vmem:[%s6 + $0xe0] sm:$0xff]
  %v5637 = vld [vmem:[%s6 + $0xe8] sm:$0xff]
  %v5638 = vld [vmem:[%s6 + $0xf0] sm:$0xff]
  %v5639 = vld [vmem:[%s6 + $0xf8] sm:$0xff]
  %v5640 = vadd.f32 %v5608, %v5433
  %v5641 = vadd.f32 %v5609, %v5435
  %v5642 = vadd.f32 %v5610, %v5438
  %v5643 = vadd.f32 %v5611, %v5440
  %v5644 = vadd.f32 %v5612, %v5443
  %v5645 = vadd.f32 %v5613, %v5445
  %v5646 = vadd.f32 %v5614, %v5448
  %v5647 = vadd.f32 %v5615, %v5450
  %v5648 = vadd.f32 %v5616, %v5453
  %v5649 = vadd.f32 %v5617, %v5455
  %v5650 = vadd.f32 %v5618, %v5458
  %v5651 = vadd.f32 %v5619, %v5460
  %v5652 = vadd.f32 %v5620, %v5463
  %v5653 = vadd.f32 %v5621, %v5465
  %v5654 = vadd.f32 %v5622, %v5468
  %v5655 = vadd.f32 %v5623, %v5470
  %v5656 = vadd.f32 %v5624, %v5473
  %v5657 = vadd.f32 %v5625, %v5475
  %v5658 = vadd.f32 %v5626, %v5478
  %v5659 = vadd.f32 %v5627, %v5480
  %v5660 = vadd.f32 %v5628, %v5483
  %v5661 = vadd.f32 %v5629, %v5485
  %v5662 = vadd.f32 %v5630, %v5488
  %v5663 = vadd.f32 %v5631, %v5490
  %v5664 = vadd.f32 %v5632, %v5493
  %v5665 = vadd.f32 %v5633, %v5495
  %v5666 = vadd.f32 %v5634, %v5498
  %v5667 = vadd.f32 %v5635, %v5500
  %v5668 = vadd.f32 %v5636, %v5503
  %v5669 = vadd.f32 %v5637, %v5505
  %v5670 = vadd.f32 %v5638, %v5508
  %v5671 = vadd.f32 %v5639, %v5510
  %5672 = vst [vmem:[%s6] sm:$0xff] %v5640
  %5673 = vst [vmem:[%s6 + $0x8] sm:$0xff] %v5641
  %5674 = vst [vmem:[%s6 + $0x10] sm:$0xff] %v5642
  %5675 = vst [vmem:[%s6 + $0x18] sm:$0xff] %v5643
  %5676 = vst [vmem:[%s6 + $0x20] sm:$0xff] %v5644
  %5677 = vst [vmem:[%s6 + $0x28] sm:$0xff] %v5645
  %5678 = vst [vmem:[%s6 + $0x30] sm:$0xff] %v5646
  %5679 = vst [vmem:[%s6 + $0x38] sm:$0xff] %v5647
  %5680 = vst [vmem:[%s6 + $0x40] sm:$0xff] %v5648
  %5681 = vst [vmem:[%s6 + $0x48] sm:$0xff] %v5649
  %5682 = vst [vmem:[%s6 + $0x50] sm:$0xff] %v5650
  %5683 = vst [vmem:[%s6 + $0x58] sm:$0xff] %v5651
  %5684 = vst [vmem:[%s6 + $0x60] sm:$0xff] %v5652
  %5685 = vst [vmem:[%s6 + $0x68] sm:$0xff] %v5653
  %5686 = vst [vmem:[%s6 + $0x70] sm:$0xff] %v5654
  %5687 = vst [vmem:[%s6 + $0x78] sm:$0xff] %v5655
  %5688 = vst [vmem:[%s6 + $0x80] sm:$0xff] %v5656
  %5689 = vst [vmem:[%s6 + $0x88] sm:$0xff] %v5657
  %5690 = vst [vmem:[%s6 + $0x90] sm:$0xff] %v5658
  %5691 = vst [vmem:[%s6 + $0x98] sm:$0xff] %v5659
  %5692 = vst [vmem:[%s6 + $0xa0] sm:$0xff] %v5660
  %5693 = vst [vmem:[%s6 + $0xa8] sm:$0xff] %v5661
  %5694 = vst [vmem:[%s6 + $0xb0] sm:$0xff] %v5662
  %5695 = vst [vmem:[%s6 + $0xb8] sm:$0xff] %v5663
  %5696 = vst [vmem:[%s6 + $0xc0] sm:$0xff] %v5664
  %5697 = vst [vmem:[%s6 + $0xc8] sm:$0xff] %v5665
  %5698 = vst [vmem:[%s6 + $0xd0] sm:$0xff] %v5666
  %5699 = vst [vmem:[%s6 + $0xd8] sm:$0xff] %v5667
  %5700 = vst [vmem:[%s6 + $0xe0] sm:$0xff] %v5668
  %5701 = vst [vmem:[%s6 + $0xe8] sm:$0xff] %v5669
  %5702 = vst [vmem:[%s6 + $0xf0] sm:$0xff] %v5670
  %5703 = vst [vmem:[%s6 + $0xf8] sm:$0xff] %v5671
  %v5704 = vld [vmem:[%s5] sm:$0xff]
  %v5705 = vld [vmem:[%s5 + $0x8] sm:$0xff]
  %v5706 = vld [vmem:[%s5 + $0x10] sm:$0xff]
  %v5707 = vld [vmem:[%s5 + $0x18] sm:$0xff]
  %v5708 = vld [vmem:[%s5 + $0x20] sm:$0xff]
  %v5709 = vld [vmem:[%s5 + $0x28] sm:$0xff]
  %v5710 = vld [vmem:[%s5 + $0x30] sm:$0xff]
  %v5711 = vld [vmem:[%s5 + $0x38] sm:$0xff]
  %v5712 = vld [vmem:[%s5 + $0x40] sm:$0xff]
  %v5713 = vld [vmem:[%s5 + $0x48] sm:$0xff]
  %v5714 = vld [vmem:[%s5 + $0x50] sm:$0xff]
  %v5715 = vld [vmem:[%s5 + $0x58] sm:$0xff]
  %v5716 = vld [vmem:[%s5 + $0x60] sm:$0xff]
  %v5717 = vld [vmem:[%s5 + $0x68] sm:$0xff]
  %v5718 = vld [vmem:[%s5 + $0x70] sm:$0xff]
  %v5719 = vld [vmem:[%s5 + $0x78] sm:$0xff]
  %v5720 = vld [vmem:[%s5 + $0x80] sm:$0xff]
  %v5721 = vld [vmem:[%s5 + $0x88] sm:$0xff]
  %v5722 = vld [vmem:[%s5 + $0x90] sm:$0xff]
  %v5723 = vld [vmem:[%s5 + $0x98] sm:$0xff]
  %v5724 = vld [vmem:[%s5 + $0xa0] sm:$0xff]
  %v5725 = vld [vmem:[%s5 + $0xa8] sm:$0xff]
  %v5726 = vld [vmem:[%s5 + $0xb0] sm:$0xff]
  %v5727 = vld [vmem:[%s5 + $0xb8] sm:$0xff]
  %v5728 = vld [vmem:[%s5 + $0xc0] sm:$0xff]
  %v5729 = vld [vmem:[%s5 + $0xc8] sm:$0xff]
  %v5730 = vld [vmem:[%s5 + $0xd0] sm:$0xff]
  %v5731 = vld [vmem:[%s5 + $0xd8] sm:$0xff]
  %v5732 = vld [vmem:[%s5 + $0xe0] sm:$0xff]
  %v5733 = vld [vmem:[%s5 + $0xe8] sm:$0xff]
  %v5734 = vld [vmem:[%s5 + $0xf0] sm:$0xff]
  %v5735 = vld [vmem:[%s5 + $0xf8] sm:$0xff]
  %v5736 = vmul.f32 %v5704, 0.25
  %v5737 = vmul.f32 %v5705, 0.25
  %v5738 = vmul.f32 %v5706, 0.25
  %v5739 = vmul.f32 %v5707, 0.25
  %v5740 = vmul.f32 %v5708, 0.25
  %v5741 = vmul.f32 %v5709, 0.25
  %v5742 = vmul.f32 %v5710, 0.25
  %v5743 = vmul.f32 %v5711, 0.25
  %v5744 = vmul.f32 %v5712, 0.25
  %v5745 = vmul.f32 %v5713, 0.25
  %v5746 = vmul.f32 %v5714, 0.25
  %v5747 = vmul.f32 %v5715, 0.25
  %v5748 = vmul.f32 %v5716, 0.25
  %v5749 = vmul.f32 %v5717, 0.25
  %v5750 = vmul.f32 %v5718, 0.25
  %v5751 = vmul.f32 %v5719, 0.25
  %v5752 = vmul.f32 %v5720, 0.25
  %v5753 = vmul.f32 %v5721, 0.25
  %v5754 = vmul.f32 %v5722, 0.25
  %v5755 = vmul.f32 %v5723, 0.25
  %v5756 = vmul.f32 %v5724, 0.25
  %v5757 = vmul.f32 %v5725, 0.25
  %v5758 = vmul.f32 %v5726, 0.25
  %v5759 = vmul.f32 %v5727, 0.25
  %v5760 = vmul.f32 %v5728, 0.25
  %v5761 = vmul.f32 %v5729, 0.25
  %v5762 = vmul.f32 %v5730, 0.25
  %v5763 = vmul.f32 %v5731, 0.25
  %v5764 = vmul.f32 %v5732, 0.25
  %v5765 = vmul.f32 %v5733, 0.25
  %v5766 = vmul.f32 %v5734, 0.25
  %v5767 = vmul.f32 %v5735, 0.25
  %5768 = vst [vmem:[%s5] sm:$0xff] %v5736
  %5769 = vst [vmem:[%s5 + $0x8] sm:$0xff] %v5737
  %5770 = vst [vmem:[%s5 + $0x10] sm:$0xff] %v5738
  %5771 = vst [vmem:[%s5 + $0x18] sm:$0xff] %v5739
  %5772 = vst [vmem:[%s5 + $0x20] sm:$0xff] %v5740
  %5773 = vst [vmem:[%s5 + $0x28] sm:$0xff] %v5741
  %5774 = vst [vmem:[%s5 + $0x30] sm:$0xff] %v5742
  %5775 = vst [vmem:[%s5 + $0x38] sm:$0xff] %v5743
  %5776 = vst [vmem:[%s5 + $0x40] sm:$0xff] %v5744
  %5777 = vst [vmem:[%s5 + $0x48] sm:$0xff] %v5745
  %5778 = vst [vmem:[%s5 + $0x50] sm:$0xff] %v5746
  %5779 = vst [vmem:[%s5 + $0x58] sm:$0xff] %v5747
  %5780 = vst [vmem:[%s5 + $0x60] sm:$0xff] %v5748
  %5781 = vst [vmem:[%s5 + $0x68] sm:$0xff] %v5749
  %5782 = vst [vmem:[%s5 + $0x70] sm:$0xff] %v5750
  %5783 = vst [vmem:[%s5 + $0x78] sm:$0xff] %v5751
  %5784 = vst [vmem:[%s5 + $0x80] sm:$0xff] %v5752
  %5785 = vst [vmem:[%s5 + $0x88] sm:$0xff] %v5753
  %5786 = vst [vmem:[%s5 + $0x90] sm:$0xff] %v5754
  %5787 = vst [vmem:[%s5 + $0x98] sm:$0xff] %v5755
  %5788 = vst [vmem:[%s5 + $0xa0] sm:$0xff] %v5756
  %5789 = vst [vmem:[%s5 + $0xa8] sm:$0xff] %v5757
  %5790 = vst [vmem:[%s5 + $0xb0] sm:$0xff] %v5758
  %5791 = vst [vmem:[%s5 + $0xb8] sm:$0xff] %v5759
  %5792 = vst [vmem:[%s5 + $0xc0] sm:$0xff] %v5760
  %5793 = vst [vmem:[%s5 + $0xc8] sm:$0xff] %v5761
  %5794 = vst [vmem:[%s5 + $0xd0] sm:$0xff] %v5762
  %5795 = vst [vmem:[%s5 + $0xd8] sm:$0xff] %v5763
  %5796 = vst [vmem:[%s5 + $0xe0] sm:$0xff] %v5764
  %5797 = vst [vmem:[%s5 + $0xe8] sm:$0xff] %v5765
  %5798 = vst [vmem:[%s5 + $0xf0] sm:$0xff] %v5766
  %5799 = vst [vmem:[%s5 + $0xf8] sm:$0xff] %v5767
  %v5800 = vld [vmem:[%s6] sm:$0xff]
  %v5801 = vld [vmem:[%s6 + $0x8] sm:$0xff]
  %v5802 = vld [vmem:[%s6 + $0x10] sm:$0xff]
  %v5803 = vld [vmem:[%s6 + $0x18] sm:$0xff]
  %v5804 = vld [vmem:[%s6 + $0x20] sm:$0xff]
  %v5805 = vld [vmem:[%s6 + $0x28] sm:$0xff]
  %v5806 = vld [vmem:[%s6 + $0x30] sm:$0xff]
  %v5807 = vld [vmem:[%s6 + $0x38] sm:$0xff]
  %v5808 = vld [vmem:[%s6 + $0x40] sm:$0xff]
  %v5809 = vld [vmem:[%s6 + $0x48] sm:$0xff]
  %v5810 = vld [vmem:[%s6 + $0x50] sm:$0xff]
  %v5811 = vld [vmem:[%s6 + $0x58] sm:$0xff]
  %v5812 = vld [vmem:[%s6 + $0x60] sm:$0xff]
  %v5813 = vld [vmem:[%s6 + $0x68] sm:$0xff]
  %v5814 = vld [vmem:[%s6 + $0x70] sm:$0xff]
  %v5815 = vld [vmem:[%s6 + $0x78] sm:$0xff]
  %v5816 = vld [vmem:[%s6 + $0x80] sm:$0xff]
  %v5817 = vld [vmem:[%s6 + $0x88] sm:$0xff]
  %v5818 = vld [vmem:[%s6 + $0x90] sm:$0xff]
  %v5819 = vld [vmem:[%s6 + $0x98] sm:$0xff]
  %v5820 = vld [vmem:[%s6 + $0xa0] sm:$0xff]
  %v5821 = vld [vmem:[%s6 + $0xa8] sm:$0xff]
  %v5822 = vld [vmem:[%s6 + $0xb0] sm:$0xff]
  %v5823 = vld [vmem:[%s6 + $0xb8] sm:$0xff]
  %v5824 = vld [vmem:[%s6 + $0xc0] sm:$0xff]
  %v5825 = vld [vmem:[%s6 + $0xc8] sm:$0xff]
  %v5826 = vld [vmem:[%s6 + $0xd0] sm:$0xff]
  %v5827 = vld [vmem:[%s6 + $0xd8] sm:$0xff]
  %v5828 = vld [vmem:[%s6 + $0xe0] sm:$0xff]
  %v5829 = vld [vmem:[%s6 + $0xe8] sm:$0xff]
  %v5830 = vld [vmem:[%s6 + $0xf0] sm:$0xff]
  %v5831 = vld [vmem:[%s6 + $0xf8] sm:$0xff]
  %v5832 = vmul.f32 %v5800, 0.25
  %v5833 = vmul.f32 %v5801, 0.25
  %v5834 = vmul.f32 %v5802, 0.25
  %v5835 = vmul.f32 %v5803, 0.25
  %v5836 = vmul.f32 %v5804, 0.25
  %v5837 = vmul.f32 %v5805, 0.25
  %v5838 = vmul.f32 %v5806, 0.25
  %v5839 = vmul.f32 %v5807, 0.25
  %v5840 = vmul.f32 %v5808, 0.25
  %v5841 = vmul.f32 %v5809, 0.25
  %v5842 = vmul.f32 %v5810, 0.25
  %v5843 = vmul.f32 %v5811, 0.25
  %v5844 = vmul.f32 %v5812, 0.25
  %v5845 = vmul.f32 %v5813, 0.25
  %v5846 = vmul.f32 %v5814, 0.25
  %v5847 = vmul.f32 %v5815, 0.25
  %v5848 = vmul.f32 %v5816, 0.25
  %v5849 = vmul.f32 %v5817, 0.25
  %v5850 = vmul.f32 %v5818, 0.25
  %v5851 = vmul.f32 %v5819, 0.25
  %v5852 = vmul.f32 %v5820, 0.25
  %v5853 = vmul.f32 %v5821, 0.25
  %v5854 = vmul.f32 %v5822, 0.25
  %v5855 = vmul.f32 %v5823, 0.25
  %v5856 = vmul.f32 %v5824, 0.25
  %v5857 = vmul.f32 %v5825, 0.25
  %v5858 = vmul.f32 %v5826, 0.25
  %v5859 = vmul.f32 %v5827, 0.25
  %v5860 = vmul.f32 %v5828, 0.25
  %v5861 = vmul.f32 %v5829, 0.25
  %v5862 = vmul.f32 %v5830, 0.25
  %v5863 = vmul.f32 %v5831, 0.25
  %5864 = vst [vmem:[%s6] sm:$0xff] %v5832
  %5865 = vst [vmem:[%s6 + $0x8] sm:$0xff] %v5833
  %5866 = vst [vmem:[%s6 + $0x10] sm:$0xff] %v5834
  %5867 = vst [vmem:[%s6 + $0x18] sm:$0xff] %v5835
  %5868 = vst [vmem:[%s6 + $0x20] sm:$0xff] %v5836
  %5869 = vst [vmem:[%s6 + $0x28] sm:$0xff] %v5837
  %5870 = vst [vmem:[%s6 + $0x30] sm:$0xff] %v5838
  %5871 = vst [vmem:[%s6 + $0x38] sm:$0xff] %v5839
  %5872 = vst [vmem:[%s6 + $0x40] sm:$0xff] %v5840
  %5873 = vst [vmem:[%s6 + $0x48] sm:$0xff] %v5841
  %5874 = vst [vmem:[%s6 + $0x50] sm:$0xff] %v5842
  %5875 = vst [vmem:[%s6 + $0x58] sm:$0xff] %v5843
  %5876 = vst [vmem:[%s6 + $0x60] sm:$0xff] %v5844
  %5877 = vst [vmem:[%s6 + $0x68] sm:$0xff] %v5845
  %5878 = vst [vmem:[%s6 + $0x70] sm:$0xff] %v5846
  %5879 = vst [vmem:[%s6 + $0x78] sm:$0xff] %v5847
  %5880 = vst [vmem:[%s6 + $0x80] sm:$0xff] %v5848
  %5881 = vst [vmem:[%s6 + $0x88] sm:$0xff] %v5849
  %5882 = vst [vmem:[%s6 + $0x90] sm:$0xff] %v5850
  %5883 = vst [vmem:[%s6 + $0x98] sm:$0xff] %v5851
  %5884 = vst [vmem:[%s6 + $0xa0] sm:$0xff] %v5852
  %5885 = vst [vmem:[%s6 + $0xa8] sm:$0xff] %v5853
  %5886 = vst [vmem:[%s6 + $0xb0] sm:$0xff] %v5854
  %5887 = vst [vmem:[%s6 + $0xb8] sm:$0xff] %v5855
  %5888 = vst [vmem:[%s6 + $0xc0] sm:$0xff] %v5856
  %5889 = vst [vmem:[%s6 + $0xc8] sm:$0xff] %v5857
  %5890 = vst [vmem:[%s6 + $0xd0] sm:$0xff] %v5858
  %5891 = vst [vmem:[%s6 + $0xd8] sm:$0xff] %v5859
  %5892 = vst [vmem:[%s6 + $0xe0] sm:$0xff] %v5860
  %5893 = vst [vmem:[%s6 + $0xe8] sm:$0xff] %v5861
  %5894 = vst [vmem:[%s6 + $0xf0] sm:$0xff] %v5862
  %5895 = vst [vmem:[%s6 + $0xf8] sm:$0xff] %v5863
  // Predicated region
  $region48: #{graph_convolution_forward.1} parent=0 // pred_check
    _
  $region49: #{graph_convolution_forward.1} parent=0 // pred_check_branch
    %5897 = sbr.rel (0) target = $region51
  $region50: #{graph_convolution_forward.1} parent=0 // pred_region
    _
  $region51: #{graph_convolution_forward.1} parent=0 // pred_fallthru
    _
  // Predicated region
  $region52: #{graph_convolution_forward.1} parent=0 // pred_check
    _
  $region53: #{graph_convolution_forward.1} parent=0 // pred_check_branch
    %5899 = sbr.rel (0) target = $region55
  $region54: #{graph_convolution_forward.1} parent=0 // pred_region
    _
  $region55: #{graph_convolution_forward.1} parent=0 // pred_fallthru
    _
  // Predicated region
  $region56: #{graph_convolution_forward.1} parent=0 // pred_check
    _
  $region57: #{graph_convolution_forward.1} parent=0 // pred_check_branch
    %5901 = sbr.rel (0) target = $region59
  $region58: #{graph_convolution_forward.1} parent=0 // pred_region
    _
  $region59: #{graph_convolution_forward.1} parent=0 // pred_fallthru
    _
  // Predicated region
  $region60: #{graph_convolution_forward.1} parent=0 // pred_check
    _
  $region61: #{graph_convolution_forward.1} parent=0 // pred_check_branch
    %5903 = sbr.rel (0) target = $region63
  $region62: #{graph_convolution_forward.1} parent=0 // pred_region
    _
  $region63: #{graph_convolution_forward.1} parent=0 // pred_fallthru
    _
  // Predicated region
  $region64: #{graph_convolution_forward.1} parent=0 // pred_check
    _
  $region65: #{graph_convolution_forward.1} parent=0 // pred_check_branch
    %5905 = sbr.rel (0) target = $region67
  $region66: #{graph_convolution_forward.1} parent=0 // pred_region
    _
  $region67: #{graph_convolution_forward.1} parent=0 // pred_fallthru
    _
  // Predicated region
  $region68: #{graph_convolution_forward.1} parent=0 // pred_check
    _
  $region69: #{graph_convolution_forward.1} parent=0 // pred_check_branch
    %5907 = sbr.rel (0) target = $region71
  $region70: #{graph_convolution_forward.1} parent=0 // pred_region
    _
  $region71: #{graph_convolution_forward.1} parent=0 // pred_fallthru
    _
  %5908 = vsyncmov [#allocation4]
  %s5909 = vpop.sfrf %5908
  %p5910 = scmp.eq.s32.totalorder %s5909, 0
  %p5911 = pneg %p5910
  %5913 = shalt.err (%p5911)
  %s5914 = scalar_lea.sflag [#allocation4], 1
  %5915 = vsyncmov %s5914
  %s5916 = vpop.sfrf %5915
  %p5917 = scmp.eq.s32.totalorder %s5916, 0
  %p5918 = pneg %p5917
  %5920 = shalt.err (%p5918)

</llo_original>
